<compile_context>
chip_gen: v7x
topology: tpu7x:2x2x1
jax: 0.10.0
libtpu: 0.0.40
codegen_flags: <defaults>
</compile_context>

<pallas_src>
import jax
import jax.numpy as jnp
from jax import lax
from jax.experimental import pallas as pl
from jax.experimental.pallas import tpu as pltpu

NEG_SLOPE = 0.01   # PyTorch LeakyReLU default
BN_EPS = 1e-5      # PyTorch BatchNorm2d default


def _make_fused_kernel(H, W, C_in, C_out):
    HW = H * W

    def kernel(x_ref, w1_ref, s1_ref, w2_ref, s2_ref, o_ref, y1p_ref):
        # ---- layer 1: implicit-GEMM 3x3 conv (BN scale folded into w1) + LeakyReLU ----
        acc1 = jnp.zeros((HW, C_out), jnp.float32)
        for t in range(9):
            dy, dx = divmod(t, 3)
            xs = x_ref[0, pl.ds(dy, H), pl.ds(dx, W), :].reshape(HW, C_in)   # bf16 tap
            acc1 = acc1 + jnp.dot(xs, w1_ref[t], preferred_element_type=jnp.float32)
        y1 = acc1 + s1_ref[...]                  # folded conv bias + BN shift
        y1 = jnp.maximum(y1, NEG_SLOPE * y1)     # LeakyReLU (Dropout = identity in eval)

        # layer-1 activation stays on-chip: zero-padded copy in VMEM scratch
        y1p_ref[...] = jnp.zeros((H + 2, W + 2, C_out), jnp.float32)
        y1p_ref[pl.ds(1, H), pl.ds(1, W), :] = y1.reshape(H, W, C_out)

        # ---- layer 2: implicit-GEMM 3x3 conv (BN scale folded into w2) + LeakyReLU ----
        acc2 = jnp.zeros((HW, C_out), jnp.float32)
        for t in range(9):
            dy, dx = divmod(t, 3)
            ys = y1p_ref[pl.ds(dy, H), pl.ds(dx, W), :].reshape(HW, C_out)
            acc2 = acc2 + jnp.dot(ys.astype(jnp.bfloat16), w2_ref[t],
                                  preferred_element_type=jnp.float32)
        y2 = acc2 + s2_ref[...]
        y2 = jnp.maximum(y2, NEG_SLOPE * y2)
        o_ref[...] = y2.reshape(1, H, W, C_out).astype(o_ref.dtype)

    return kernel


def fused_conv_block(x_pad_bf16, w1, s1, w2, s2):
    """x_pad_bf16: (N, H+2, W+2, C_in) bf16 (spatial zero halo already applied);
    w1: (9, C_in, C_out) bf16, w2: (9, C_out, C_out) bf16 (BN scale folded in);
    s1/s2: (1, C_out) f32 folded shifts.  Returns (N, H, W, C_out) f32."""
    N, Hp2, Wp2, C_in = x_pad_bf16.shape
    H, W = Hp2 - 2, Wp2 - 2
    C_out = w1.shape[-1]
    kernel = _make_fused_kernel(H, W, C_in, C_out)
    return pl.pallas_call(
        kernel,
        out_shape=jax.ShapeDtypeStruct((N, H, W, C_out), jnp.float32),
        grid_spec=pltpu.PrefetchScalarGridSpec(
            num_scalar_prefetch=0,
            grid=(N,),
            in_specs=[
                pl.BlockSpec((1, Hp2, Wp2, C_in), lambda n: (n, 0, 0, 0)),
                pl.BlockSpec((9, C_in, C_out), lambda n: (0, 0, 0)),
                pl.BlockSpec((1, C_out), lambda n: (0, 0)),
                pl.BlockSpec((9, C_out, C_out), lambda n: (0, 0, 0)),
                pl.BlockSpec((1, C_out), lambda n: (0, 0)),
            ],
            out_specs=pl.BlockSpec((1, H, W, C_out), lambda n: (n, 0, 0, 0)),
            scratch_shapes=[pltpu.VMEM((H + 2, W + 2, C_out), jnp.float32)],
        ),
        compiler_params=pltpu.CompilerParams(
            dimension_semantics=("parallel",),
            vmem_limit_bytes=32 * 1024 * 1024,   # safe on v5e (16MiB default) .. v7x
        ),
    )(x_pad_bf16, w1, s1, w2, s2)


def _fold_conv_bn(w_oihw, bias, gamma, beta, mean, var):
    """Fold eval-mode BatchNorm into the conv weights/bias.
    Returns (9, C_in, C_out) bf16 tap weights and (1, C_out) f32 shift."""
    scale = gamma / jnp.sqrt(var + BN_EPS)            # (C_out,)
    shift = (bias - mean) * scale + beta              # (C_out,)
    w = jnp.transpose(w_oihw, (2, 3, 1, 0))           # (3, 3, C_in, C_out) -> tap-major
    kh, kw, ci, co = w.shape
    w = (w * scale).reshape(kh * kw, ci, co)          # BN scale per output channel
    return w.astype(jnp.bfloat16), shift.reshape(1, -1).astype(jnp.float32)


@jax.jit
def conv_block_forward(x_nchw, params):
    """Equivalent of Conv(C_in, C_out).forward(x) in eval mode. x: (N, C_in, H, W) f32."""
    x = jnp.transpose(x_nchw, (0, 2, 3, 1))                                  # NHWC
    x = jnp.pad(x, ((0, 0), (1, 1), (1, 1), (0, 0))).astype(jnp.bfloat16)    # conv1 halo
    w1, s1 = _fold_conv_bn(params["w1"], params["b1"], params["bn1_gamma"],
                           params["bn1_beta"], params["bn1_mean"], params["bn1_var"])
    w2, s2 = _fold_conv_bn(params["w2"], params["b2"], params["bn2_gamma"],
                           params["bn2_beta"], params["bn2_mean"], params["bn2_var"])
    y = fused_conv_block(x, w1, s1, w2, s2)                                  # (N, H, W, C_out)
    return jnp.transpose(y, (0, 3, 1, 2))                                    # NCHW


def _ref_block(x_nchw, params):
    """Pure-JAX f32 reference mirroring the PyTorch module in eval mode."""
    def conv_bn_lrelu(x, w, b, g, bt, m, v):
        y = lax.conv_general_dilated(x, w, window_strides=(1, 1),
                                     padding=((1, 1), (1, 1)),
                                     dimension_numbers=("NCHW", "OIHW", "NCHW"))
        y = y + b[None, :, None, None]
        scale = g / jnp.sqrt(v + BN_EPS)
        y = (y - m[None, :, None, None]) * scale[None, :, None, None] + bt[None, :, None, None]
        return jnp.where(y > 0, y, NEG_SLOPE * y)

    y = conv_bn_lrelu(x_nchw, params["w1"], params["b1"], params["bn1_gamma"],
                      params["bn1_beta"], params["bn1_mean"], params["bn1_var"])
    y = conv_bn_lrelu(y, params["w2"], params["b2"], params["bn2_gamma"],
                      params["bn2_beta"], params["bn2_mean"], params["bn2_var"])
    return y


def init_params(key, c_in, c_out):
    ks = jax.random.split(key, 12)
    return {
        "w1": jax.random.normal(ks[0], (c_out, c_in, 3, 3), jnp.float32) / jnp.sqrt(9 * c_in),
        "b1": 0.01 * jax.random.normal(ks[1], (c_out,), jnp.float32),
        "w2": jax.random.normal(ks[2], (c_out, c_out, 3, 3), jnp.float32) / jnp.sqrt(9 * c_out),
        "b2": 0.01 * jax.random.normal(ks[3], (c_out,), jnp.float32),
        # non-trivial BN stats so the folding path is actually exercised
        "bn1_gamma": 1.0 + 0.1 * jax.random.normal(ks[4], (c_out,), jnp.float32),
        "bn1_beta": 0.1 * jax.random.normal(ks[5], (c_out,), jnp.float32),
        "bn1_mean": 0.1 * jax.random.normal(ks[6], (c_out,), jnp.float32),
        "bn1_var": jax.random.uniform(ks[7], (c_out,), jnp.float32, 0.5, 1.5),
        "bn2_gamma": 1.0 + 0.1 * jax.random.normal(ks[8], (c_out,), jnp.float32),
        "bn2_beta": 0.1 * jax.random.normal(ks[9], (c_out,), jnp.float32),
        "bn2_mean": 0.1 * jax.random.normal(ks[10], (c_out,), jnp.float32),
        "bn2_var": jax.random.uniform(ks[11], (c_out,), jnp.float32, 0.5, 1.5),
    }


if __name__ == "__main__":
    key = jax.random.PRNGKey(0)
    k_x, k_p = jax.random.split(key)

    N, C_in, C_out, H, W = 2, 4, 8, 16, 16
    x = jax.random.normal(k_x, (N, C_in, H, W), jnp.float32)
    params = init_params(k_p, C_in, C_out)

    out = jax.block_until_ready(conv_block_forward(x, params))
    assert out.shape == (N, C_out, H, W), out.shape

    # tolerance check against the f32 reference (bf16 MXU operands -> ~1e-2-level diffs)
    ref = jax.block_until_ready(_ref_block(x, params))
    assert jnp.allclose(out, ref, rtol=1e-1, atol=2e-1), float(jnp.max(jnp.abs(out - ref)))

    print("KERNEL_OK")
</pallas_src>

<mosaic_0001>
module attributes {stable_mosaic.version = 11 : i64} {
  func.func @kernel(%arg0: i32, %arg1: memref<1x18x18x4xbf16, #tpu.memory_space<vmem>>, %arg2: memref<9x4x8xbf16, #tpu.memory_space<vmem>>, %arg3: memref<1x8xf32, #tpu.memory_space<vmem>>, %arg4: memref<9x8x8xbf16, #tpu.memory_space<vmem>>, %arg5: memref<1x8xf32, #tpu.memory_space<vmem>>, %arg6: memref<1x16x16x8xf32, #tpu.memory_space<vmem>>, %arg7: memref<18x18x8xf32, #tpu.memory_space<vmem>>) attributes {dimension_semantics = [#tpu.dimension_semantics<parallel>], iteration_bounds = array<i64: 2>, scalar_prefetch = 0 : i64, scratch_operands = 1 : i64, tpu.core_type = #tpu.core_type<tc>, window_params = [{transform_indices = @transform_0, window_bounds = array<i64: 1, 18, 18, 4>}, {pipeline_mode = #tpu.pipeline_mode<synchronous>, transform_indices = @transform_1, window_bounds = array<i64: 9, 4, 8>}, {pipeline_mode = #tpu.pipeline_mode<synchronous>, transform_indices = @transform_2, window_bounds = array<i64: 1, 8>}, {pipeline_mode = #tpu.pipeline_mode<synchronous>, transform_indices = @transform_3, window_bounds = array<i64: 9, 8, 8>}, {pipeline_mode = #tpu.pipeline_mode<synchronous>, transform_indices = @transform_4, window_bounds = array<i64: 1, 8>}, {transform_indices = @transform_5, window_bounds = array<i64: 1, 16, 16, 8>}]} {
    %cst = arith.constant 0.000000e+00 : f32
    %0 = vector.broadcast %cst : f32 to vector<256x8xf32>
    %c0 = arith.constant 0 : index
    %c0_0 = arith.constant 0 : index
    %c0_1 = arith.constant 0 : index
    %c0_2 = arith.constant 0 : index
    %1 = vector.load %arg1[%c0, %c0_0, %c0_1, %c0_2] : memref<1x18x18x4xbf16, #tpu.memory_space<vmem>>, vector<1x16x16x4xbf16>
    %2 = vector.shape_cast %1 : vector<1x16x16x4xbf16> to vector<16x16x4xbf16>
    %3 = vector.shape_cast %2 : vector<16x16x4xbf16> to vector<256x4xbf16>
    %c0_3 = arith.constant 0 : index
    %c0_4 = arith.constant 0 : index
    %c0_5 = arith.constant 0 : index
    %4 = vector.load %arg2[%c0_3, %c0_4, %c0_5] : memref<9x4x8xbf16, #tpu.memory_space<vmem>>, vector<1x4x8xbf16>
    %5 = vector.shape_cast %4 : vector<1x4x8xbf16> to vector<4x8xbf16>
    %cst_6 = arith.constant dense<0.000000e+00> : vector<256x8xf32>
    %6 = tpu.matmul %3, %5, %cst_6 {dimension_numbers = #tpu.dot_dimension_numbers<[1], [0], [0], [1], [0, 0, 1, 1], [], []>} : vector<256x4xbf16>, vector<4x8xbf16>, vector<256x8xf32> -> vector<256x8xf32>
    %7 = arith.addf %0, %6 : vector<256x8xf32>
    %c0_7 = arith.constant 0 : index
    %c0_8 = arith.constant 0 : index
    %c1 = arith.constant 1 : index
    %c0_9 = arith.constant 0 : index
    %8 = vector.load %arg1[%c0_7, %c0_8, %c1, %c0_9] : memref<1x18x18x4xbf16, #tpu.memory_space<vmem>>, vector<1x16x16x4xbf16>
    %9 = vector.shape_cast %8 : vector<1x16x16x4xbf16> to vector<16x16x4xbf16>
    %10 = vector.shape_cast %9 : vector<16x16x4xbf16> to vector<256x4xbf16>
    %c1_10 = arith.constant 1 : index
    %c0_11 = arith.constant 0 : index
    %c0_12 = arith.constant 0 : index
    %11 = vector.load %arg2[%c1_10, %c0_11, %c0_12] : memref<9x4x8xbf16, #tpu.memory_space<vmem>>, vector<1x4x8xbf16>
    %12 = vector.shape_cast %11 : vector<1x4x8xbf16> to vector<4x8xbf16>
    %cst_13 = arith.constant dense<0.000000e+00> : vector<256x8xf32>
    %13 = tpu.matmul %10, %12, %cst_13 {dimension_numbers = #tpu.dot_dimension_numbers<[1], [0], [0], [1], [0, 0, 1, 1], [], []>} : vector<256x4xbf16>, vector<4x8xbf16>, vector<256x8xf32> -> vector<256x8xf32>
    %14 = arith.addf %7, %13 : vector<256x8xf32>
    %c0_14 = arith.constant 0 : index
    %c0_15 = arith.constant 0 : index
    %c2 = arith.constant 2 : index
    %c0_16 = arith.constant 0 : index
    %15 = vector.load %arg1[%c0_14, %c0_15, %c2, %c0_16] : memref<1x18x18x4xbf16, #tpu.memory_space<vmem>>, vector<1x16x16x4xbf16>
    %16 = vector.shape_cast %15 : vector<1x16x16x4xbf16> to vector<16x16x4xbf16>
    %17 = vector.shape_cast %16 : vector<16x16x4xbf16> to vector<256x4xbf16>
    %c2_17 = arith.constant 2 : index
    %c0_18 = arith.constant 0 : index
    %c0_19 = arith.constant 0 : index
    %18 = vector.load %arg2[%c2_17, %c0_18, %c0_19] : memref<9x4x8xbf16, #tpu.memory_space<vmem>>, vector<1x4x8xbf16>
    %19 = vector.shape_cast %18 : vector<1x4x8xbf16> to vector<4x8xbf16>
    %cst_20 = arith.constant dense<0.000000e+00> : vector<256x8xf32>
    %20 = tpu.matmul %17, %19, %cst_20 {dimension_numbers = #tpu.dot_dimension_numbers<[1], [0], [0], [1], [0, 0, 1, 1], [], []>} : vector<256x4xbf16>, vector<4x8xbf16>, vector<256x8xf32> -> vector<256x8xf32>
    %21 = arith.addf %14, %20 : vector<256x8xf32>
    %c0_21 = arith.constant 0 : index
    %c1_22 = arith.constant 1 : index
    %c0_23 = arith.constant 0 : index
    %c0_24 = arith.constant 0 : index
    %22 = vector.load %arg1[%c0_21, %c1_22, %c0_23, %c0_24] : memref<1x18x18x4xbf16, #tpu.memory_space<vmem>>, vector<1x16x16x4xbf16>
    %23 = vector.shape_cast %22 : vector<1x16x16x4xbf16> to vector<16x16x4xbf16>
    %24 = vector.shape_cast %23 : vector<16x16x4xbf16> to vector<256x4xbf16>
    %c3 = arith.constant 3 : index
    %c0_25 = arith.constant 0 : index
    %c0_26 = arith.constant 0 : index
    %25 = vector.load %arg2[%c3, %c0_25, %c0_26] : memref<9x4x8xbf16, #tpu.memory_space<vmem>>, vector<1x4x8xbf16>
    %26 = vector.shape_cast %25 : vector<1x4x8xbf16> to vector<4x8xbf16>
    %cst_27 = arith.constant dense<0.000000e+00> : vector<256x8xf32>
    %27 = tpu.matmul %24, %26, %cst_27 {dimension_numbers = #tpu.dot_dimension_numbers<[1], [0], [0], [1], [0, 0, 1, 1], [], []>} : vector<256x4xbf16>, vector<4x8xbf16>, vector<256x8xf32> -> vector<256x8xf32>
    %28 = arith.addf %21, %27 : vector<256x8xf32>
    %c0_28 = arith.constant 0 : index
    %c1_29 = arith.constant 1 : index
    %c1_30 = arith.constant 1 : index
    %c0_31 = arith.constant 0 : index
    %29 = vector.load %arg1[%c0_28, %c1_29, %c1_30, %c0_31] : memref<1x18x18x4xbf16, #tpu.memory_space<vmem>>, vector<1x16x16x4xbf16>
    %30 = vector.shape_cast %29 : vector<1x16x16x4xbf16> to vector<16x16x4xbf16>
    %31 = vector.shape_cast %30 : vector<16x16x4xbf16> to vector<256x4xbf16>
    %c4 = arith.constant 4 : index
    %c0_32 = arith.constant 0 : index
    %c0_33 = arith.constant 0 : index
    %32 = vector.load %arg2[%c4, %c0_32, %c0_33] : memref<9x4x8xbf16, #tpu.memory_space<vmem>>, vector<1x4x8xbf16>
    %33 = vector.shape_cast %32 : vector<1x4x8xbf16> to vector<4x8xbf16>
    %cst_34 = arith.constant dense<0.000000e+00> : vector<256x8xf32>
    %34 = tpu.matmul %31, %33, %cst_34 {dimension_numbers = #tpu.dot_dimension_numbers<[1], [0], [0], [1], [0, 0, 1, 1], [], []>} : vector<256x4xbf16>, vector<4x8xbf16>, vector<256x8xf32> -> vector<256x8xf32>
    %35 = arith.addf %28, %34 : vector<256x8xf32>
    %c0_35 = arith.constant 0 : index
    %c1_36 = arith.constant 1 : index
    %c2_37 = arith.constant 2 : index
    %c0_38 = arith.constant 0 : index
    %36 = vector.load %arg1[%c0_35, %c1_36, %c2_37, %c0_38] : memref<1x18x18x4xbf16, #tpu.memory_space<vmem>>, vector<1x16x16x4xbf16>
    %37 = vector.shape_cast %36 : vector<1x16x16x4xbf16> to vector<16x16x4xbf16>
    %38 = vector.shape_cast %37 : vector<16x16x4xbf16> to vector<256x4xbf16>
    %c5 = arith.constant 5 : index
    %c0_39 = arith.constant 0 : index
    %c0_40 = arith.constant 0 : index
    %39 = vector.load %arg2[%c5, %c0_39, %c0_40] : memref<9x4x8xbf16, #tpu.memory_space<vmem>>, vector<1x4x8xbf16>
    %40 = vector.shape_cast %39 : vector<1x4x8xbf16> to vector<4x8xbf16>
    %cst_41 = arith.constant dense<0.000000e+00> : vector<256x8xf32>
    %41 = tpu.matmul %38, %40, %cst_41 {dimension_numbers = #tpu.dot_dimension_numbers<[1], [0], [0], [1], [0, 0, 1, 1], [], []>} : vector<256x4xbf16>, vector<4x8xbf16>, vector<256x8xf32> -> vector<256x8xf32>
    %42 = arith.addf %35, %41 : vector<256x8xf32>
    %c0_42 = arith.constant 0 : index
    %c2_43 = arith.constant 2 : index
    %c0_44 = arith.constant 0 : index
    %c0_45 = arith.constant 0 : index
    %43 = vector.load %arg1[%c0_42, %c2_43, %c0_44, %c0_45] : memref<1x18x18x4xbf16, #tpu.memory_space<vmem>>, vector<1x16x16x4xbf16>
    %44 = vector.shape_cast %43 : vector<1x16x16x4xbf16> to vector<16x16x4xbf16>
    %45 = vector.shape_cast %44 : vector<16x16x4xbf16> to vector<256x4xbf16>
    %c6 = arith.constant 6 : index
    %c0_46 = arith.constant 0 : index
    %c0_47 = arith.constant 0 : index
    %46 = vector.load %arg2[%c6, %c0_46, %c0_47] : memref<9x4x8xbf16, #tpu.memory_space<vmem>>, vector<1x4x8xbf16>
    %47 = vector.shape_cast %46 : vector<1x4x8xbf16> to vector<4x8xbf16>
    %cst_48 = arith.constant dense<0.000000e+00> : vector<256x8xf32>
    %48 = tpu.matmul %45, %47, %cst_48 {dimension_numbers = #tpu.dot_dimension_numbers<[1], [0], [0], [1], [0, 0, 1, 1], [], []>} : vector<256x4xbf16>, vector<4x8xbf16>, vector<256x8xf32> -> vector<256x8xf32>
    %49 = arith.addf %42, %48 : vector<256x8xf32>
    %c0_49 = arith.constant 0 : index
    %c2_50 = arith.constant 2 : index
    %c1_51 = arith.constant 1 : index
    %c0_52 = arith.constant 0 : index
    %50 = vector.load %arg1[%c0_49, %c2_50, %c1_51, %c0_52] : memref<1x18x18x4xbf16, #tpu.memory_space<vmem>>, vector<1x16x16x4xbf16>
    %51 = vector.shape_cast %50 : vector<1x16x16x4xbf16> to vector<16x16x4xbf16>
    %52 = vector.shape_cast %51 : vector<16x16x4xbf16> to vector<256x4xbf16>
    %c7 = arith.constant 7 : index
    %c0_53 = arith.constant 0 : index
    %c0_54 = arith.constant 0 : index
    %53 = vector.load %arg2[%c7, %c0_53, %c0_54] : memref<9x4x8xbf16, #tpu.memory_space<vmem>>, vector<1x4x8xbf16>
    %54 = vector.shape_cast %53 : vector<1x4x8xbf16> to vector<4x8xbf16>
    %cst_55 = arith.constant dense<0.000000e+00> : vector<256x8xf32>
    %55 = tpu.matmul %52, %54, %cst_55 {dimension_numbers = #tpu.dot_dimension_numbers<[1], [0], [0], [1], [0, 0, 1, 1], [], []>} : vector<256x4xbf16>, vector<4x8xbf16>, vector<256x8xf32> -> vector<256x8xf32>
    %56 = arith.addf %49, %55 : vector<256x8xf32>
    %c0_56 = arith.constant 0 : index
    %c2_57 = arith.constant 2 : index
    %c2_58 = arith.constant 2 : index
    %c0_59 = arith.constant 0 : index
    %57 = vector.load %arg1[%c0_56, %c2_57, %c2_58, %c0_59] : memref<1x18x18x4xbf16, #tpu.memory_space<vmem>>, vector<1x16x16x4xbf16>
    %58 = vector.shape_cast %57 : vector<1x16x16x4xbf16> to vector<16x16x4xbf16>
    %59 = vector.shape_cast %58 : vector<16x16x4xbf16> to vector<256x4xbf16>
    %c8 = arith.constant 8 : index
    %c0_60 = arith.constant 0 : index
    %c0_61 = arith.constant 0 : index
    %60 = vector.load %arg2[%c8, %c0_60, %c0_61] : memref<9x4x8xbf16, #tpu.memory_space<vmem>>, vector<1x4x8xbf16>
    %61 = vector.shape_cast %60 : vector<1x4x8xbf16> to vector<4x8xbf16>
    %cst_62 = arith.constant dense<0.000000e+00> : vector<256x8xf32>
    %62 = tpu.matmul %59, %61, %cst_62 {dimension_numbers = #tpu.dot_dimension_numbers<[1], [0], [0], [1], [0, 0, 1, 1], [], []>} : vector<256x4xbf16>, vector<4x8xbf16>, vector<256x8xf32> -> vector<256x8xf32>
    %63 = arith.addf %56, %62 : vector<256x8xf32>
    %c0_63 = arith.constant 0 : index
    %c0_64 = arith.constant 0 : index
    %64 = vector.load %arg3[%c0_63, %c0_64] : memref<1x8xf32, #tpu.memory_space<vmem>>, vector<1x8xf32>
    %65 = vector.broadcast %64 : vector<1x8xf32> to vector<256x8xf32>
    %66 = arith.addf %63, %65 : vector<256x8xf32>
    %cst_65 = arith.constant 0.00999999977 : f32
    %67 = vector.broadcast %cst_65 : f32 to vector<256x8xf32>
    %68 = arith.mulf %67, %66 : vector<256x8xf32>
    %69 = arith.maximumf %66, %68 : vector<256x8xf32>
    %cst_66 = arith.constant 0.000000e+00 : f32
    %70 = vector.broadcast %cst_66 : f32 to vector<18x18x8xf32>
    %c0_67 = arith.constant 0 : index
    %c0_68 = arith.constant 0 : index
    %c0_69 = arith.constant 0 : index
    %71 = vector.load %arg7[%c0_67, %c0_68, %c0_69] : memref<18x18x8xf32, #tpu.memory_space<vmem>>, vector<18x18x8xf32>
    tpu.vector_store %arg7[%c0_67, %c0_68, %c0_69], %70 {strides = array<i32>} : memref<18x18x8xf32, #tpu.memory_space<vmem>>, vector<18x18x8xf32>,
    %72 = vector.shape_cast %69 : vector<256x8xf32> to vector<16x16x8xf32>
    %c1_70 = arith.constant 1 : index
    %c1_71 = arith.constant 1 : index
    %c0_72 = arith.constant 0 : index
    %73 = vector.load %arg7[%c1_70, %c1_71, %c0_72] : memref<18x18x8xf32, #tpu.memory_space<vmem>>, vector<16x16x8xf32>
    tpu.vector_store %arg7[%c1_70, %c1_71, %c0_72], %72 {strides = array<i32>} : memref<18x18x8xf32, #tpu.memory_space<vmem>>, vector<16x16x8xf32>,
    %cst_73 = arith.constant 0.000000e+00 : f32
    %74 = vector.broadcast %cst_73 : f32 to vector<256x8xf32>
    %c0_74 = arith.constant 0 : index
    %c0_75 = arith.constant 0 : index
    %c0_76 = arith.constant 0 : index
    %75 = vector.load %arg7[%c0_74, %c0_75, %c0_76] : memref<18x18x8xf32, #tpu.memory_space<vmem>>, vector<16x16x8xf32>
    %76 = vector.shape_cast %75 : vector<16x16x8xf32> to vector<256x8xf32>
    %77 = arith.truncf %76 : vector<256x8xf32> to vector<256x8xbf16>
    %c0_77 = arith.constant 0 : index
    %c0_78 = arith.constant 0 : index
    %c0_79 = arith.constant 0 : index
    %78 = vector.load %arg4[%c0_77, %c0_78, %c0_79] : memref<9x8x8xbf16, #tpu.memory_space<vmem>>, vector<1x8x8xbf16>
    %79 = vector.shape_cast %78 : vector<1x8x8xbf16> to vector<8x8xbf16>
    %cst_80 = arith.constant dense<0.000000e+00> : vector<256x8xf32>
    %80 = tpu.matmul %77, %79, %cst_80 {dimension_numbers = #tpu.dot_dimension_numbers<[1], [0], [0], [1], [0, 0, 1, 1], [], []>} : vector<256x8xbf16>, vector<8x8xbf16>, vector<256x8xf32> -> vector<256x8xf32>
    %81 = arith.addf %74, %80 : vector<256x8xf32>
    %c0_81 = arith.constant 0 : index
    %c1_82 = arith.constant 1 : index
    %c0_83 = arith.constant 0 : index
    %82 = vector.load %arg7[%c0_81, %c1_82, %c0_83] : memref<18x18x8xf32, #tpu.memory_space<vmem>>, vector<16x16x8xf32>
    %83 = vector.shape_cast %82 : vector<16x16x8xf32> to vector<256x8xf32>
    %84 = arith.truncf %83 : vector<256x8xf32> to vector<256x8xbf16>
    %c1_84 = arith.constant 1 : index
    %c0_85 = arith.constant 0 : index
    %c0_86 = arith.constant 0 : index
    %85 = vector.load %arg4[%c1_84, %c0_85, %c0_86] : memref<9x8x8xbf16, #tpu.memory_space<vmem>>, vector<1x8x8xbf16>
    %86 = vector.shape_cast %85 : vector<1x8x8xbf16> to vector<8x8xbf16>
    %cst_87 = arith.constant dense<0.000000e+00> : vector<256x8xf32>
    %87 = tpu.matmul %84, %86, %cst_87 {dimension_numbers = #tpu.dot_dimension_numbers<[1], [0], [0], [1], [0, 0, 1, 1], [], []>} : vector<256x8xbf16>, vector<8x8xbf16>, vector<256x8xf32> -> vector<256x8xf32>
    %88 = arith.addf %81, %87 : vector<256x8xf32>
    %c0_88 = arith.constant 0 : index
    %c2_89 = arith.constant 2 : index
    %c0_90 = arith.constant 0 : index
    %89 = vector.load %arg7[%c0_88, %c2_89, %c0_90] : memref<18x18x8xf32, #tpu.memory_space<vmem>>, vector<16x16x8xf32>
    %90 = vector.shape_cast %89 : vector<16x16x8xf32> to vector<256x8xf32>
    %91 = arith.truncf %90 : vector<256x8xf32> to vector<256x8xbf16>
    %c2_91 = arith.constant 2 : index
    %c0_92 = arith.constant 0 : index
    %c0_93 = arith.constant 0 : index
    %92 = vector.load %arg4[%c2_91, %c0_92, %c0_93] : memref<9x8x8xbf16, #tpu.memory_space<vmem>>, vector<1x8x8xbf16>
    %93 = vector.shape_cast %92 : vector<1x8x8xbf16> to vector<8x8xbf16>
    %cst_94 = arith.constant dense<0.000000e+00> : vector<256x8xf32>
    %94 = tpu.matmul %91, %93, %cst_94 {dimension_numbers = #tpu.dot_dimension_numbers<[1], [0], [0], [1], [0, 0, 1, 1], [], []>} : vector<256x8xbf16>, vector<8x8xbf16>, vector<256x8xf32> -> vector<256x8xf32>
    %95 = arith.addf %88, %94 : vector<256x8xf32>
    %c1_95 = arith.constant 1 : index
    %c0_96 = arith.constant 0 : index
    %c0_97 = arith.constant 0 : index
    %96 = vector.load %arg7[%c1_95, %c0_96, %c0_97] : memref<18x18x8xf32, #tpu.memory_space<vmem>>, vector<16x16x8xf32>
    %97 = vector.shape_cast %96 : vector<16x16x8xf32> to vector<256x8xf32>
    %98 = arith.truncf %97 : vector<256x8xf32> to vector<256x8xbf16>
    %c3_98 = arith.constant 3 : index
    %c0_99 = arith.constant 0 : index
    %c0_100 = arith.constant 0 : index
    %99 = vector.load %arg4[%c3_98, %c0_99, %c0_100] : memref<9x8x8xbf16, #tpu.memory_space<vmem>>, vector<1x8x8xbf16>
    %100 = vector.shape_cast %99 : vector<1x8x8xbf16> to vector<8x8xbf16>
    %cst_101 = arith.constant dense<0.000000e+00> : vector<256x8xf32>
    %101 = tpu.matmul %98, %100, %cst_101 {dimension_numbers = #tpu.dot_dimension_numbers<[1], [0], [0], [1], [0, 0, 1, 1], [], []>} : vector<256x8xbf16>, vector<8x8xbf16>, vector<256x8xf32> -> vector<256x8xf32>
    %102 = arith.addf %95, %101 : vector<256x8xf32>
    %c1_102 = arith.constant 1 : index
    %c1_103 = arith.constant 1 : index
    %c0_104 = arith.constant 0 : index
    %103 = vector.load %arg7[%c1_102, %c1_103, %c0_104] : memref<18x18x8xf32, #tpu.memory_space<vmem>>, vector<16x16x8xf32>
    %104 = vector.shape_cast %103 : vector<16x16x8xf32> to vector<256x8xf32>
    %105 = arith.truncf %104 : vector<256x8xf32> to vector<256x8xbf16>
    %c4_105 = arith.constant 4 : index
    %c0_106 = arith.constant 0 : index
    %c0_107 = arith.constant 0 : index
    %106 = vector.load %arg4[%c4_105, %c0_106, %c0_107] : memref<9x8x8xbf16, #tpu.memory_space<vmem>>, vector<1x8x8xbf16>
    %107 = vector.shape_cast %106 : vector<1x8x8xbf16> to vector<8x8xbf16>
    %cst_108 = arith.constant dense<0.000000e+00> : vector<256x8xf32>
    %108 = tpu.matmul %105, %107, %cst_108 {dimension_numbers = #tpu.dot_dimension_numbers<[1], [0], [0], [1], [0, 0, 1, 1], [], []>} : vector<256x8xbf16>, vector<8x8xbf16>, vector<256x8xf32> -> vector<256x8xf32>
    %109 = arith.addf %102, %108 : vector<256x8xf32>
    %c1_109 = arith.constant 1 : index
    %c2_110 = arith.constant 2 : index
    %c0_111 = arith.constant 0 : index
    %110 = vector.load %arg7[%c1_109, %c2_110, %c0_111] : memref<18x18x8xf32, #tpu.memory_space<vmem>>, vector<16x16x8xf32>
    %111 = vector.shape_cast %110 : vector<16x16x8xf32> to vector<256x8xf32>
    %112 = arith.truncf %111 : vector<256x8xf32> to vector<256x8xbf16>
    %c5_112 = arith.constant 5 : index
    %c0_113 = arith.constant 0 : index
    %c0_114 = arith.constant 0 : index
    %113 = vector.load %arg4[%c5_112, %c0_113, %c0_114] : memref<9x8x8xbf16, #tpu.memory_space<vmem>>, vector<1x8x8xbf16>
    %114 = vector.shape_cast %113 : vector<1x8x8xbf16> to vector<8x8xbf16>
    %cst_115 = arith.constant dense<0.000000e+00> : vector<256x8xf32>
    %115 = tpu.matmul %112, %114, %cst_115 {dimension_numbers = #tpu.dot_dimension_numbers<[1], [0], [0], [1], [0, 0, 1, 1], [], []>} : vector<256x8xbf16>, vector<8x8xbf16>, vector<256x8xf32> -> vector<256x8xf32>
    %116 = arith.addf %109, %115 : vector<256x8xf32>
    %c2_116 = arith.constant 2 : index
    %c0_117 = arith.constant 0 : index
    %c0_118 = arith.constant 0 : index
    %117 = vector.load %arg7[%c2_116, %c0_117, %c0_118] : memref<18x18x8xf32, #tpu.memory_space<vmem>>, vector<16x16x8xf32>
    %118 = vector.shape_cast %117 : vector<16x16x8xf32> to vector<256x8xf32>
    %119 = arith.truncf %118 : vector<256x8xf32> to vector<256x8xbf16>
    %c6_119 = arith.constant 6 : index
    %c0_120 = arith.constant 0 : index
    %c0_121 = arith.constant 0 : index
    %120 = vector.load %arg4[%c6_119, %c0_120, %c0_121] : memref<9x8x8xbf16, #tpu.memory_space<vmem>>, vector<1x8x8xbf16>
    %121 = vector.shape_cast %120 : vector<1x8x8xbf16> to vector<8x8xbf16>
    %cst_122 = arith.constant dense<0.000000e+00> : vector<256x8xf32>
    %122 = tpu.matmul %119, %121, %cst_122 {dimension_numbers = #tpu.dot_dimension_numbers<[1], [0], [0], [1], [0, 0, 1, 1], [], []>} : vector<256x8xbf16>, vector<8x8xbf16>, vector<256x8xf32> -> vector<256x8xf32>
    %123 = arith.addf %116, %122 : vector<256x8xf32>
    %c2_123 = arith.constant 2 : index
    %c1_124 = arith.constant 1 : index
    %c0_125 = arith.constant 0 : index
    %124 = vector.load %arg7[%c2_123, %c1_124, %c0_125] : memref<18x18x8xf32, #tpu.memory_space<vmem>>, vector<16x16x8xf32>
    %125 = vector.shape_cast %124 : vector<16x16x8xf32> to vector<256x8xf32>
    %126 = arith.truncf %125 : vector<256x8xf32> to vector<256x8xbf16>
    %c7_126 = arith.constant 7 : index
    %c0_127 = arith.constant 0 : index
    %c0_128 = arith.constant 0 : index
    %127 = vector.load %arg4[%c7_126, %c0_127, %c0_128] : memref<9x8x8xbf16, #tpu.memory_space<vmem>>, vector<1x8x8xbf16>
    %128 = vector.shape_cast %127 : vector<1x8x8xbf16> to vector<8x8xbf16>
    %cst_129 = arith.constant dense<0.000000e+00> : vector<256x8xf32>
    %129 = tpu.matmul %126, %128, %cst_129 {dimension_numbers = #tpu.dot_dimension_numbers<[1], [0], [0], [1], [0, 0, 1, 1], [], []>} : vector<256x8xbf16>, vector<8x8xbf16>, vector<256x8xf32> -> vector<256x8xf32>
    %130 = arith.addf %123, %129 : vector<256x8xf32>
    %c2_130 = arith.constant 2 : index
    %c2_131 = arith.constant 2 : index
    %c0_132 = arith.constant 0 : index
    %131 = vector.load %arg7[%c2_130, %c2_131, %c0_132] : memref<18x18x8xf32, #tpu.memory_space<vmem>>, vector<16x16x8xf32>
    %132 = vector.shape_cast %131 : vector<16x16x8xf32> to vector<256x8xf32>
    %133 = arith.truncf %132 : vector<256x8xf32> to vector<256x8xbf16>
    %c8_133 = arith.constant 8 : index
    %c0_134 = arith.constant 0 : index
    %c0_135 = arith.constant 0 : index
    %134 = vector.load %arg4[%c8_133, %c0_134, %c0_135] : memref<9x8x8xbf16, #tpu.memory_space<vmem>>, vector<1x8x8xbf16>
    %135 = vector.shape_cast %134 : vector<1x8x8xbf16> to vector<8x8xbf16>
    %cst_136 = arith.constant dense<0.000000e+00> : vector<256x8xf32>
    %136 = tpu.matmul %133, %135, %cst_136 {dimension_numbers = #tpu.dot_dimension_numbers<[1], [0], [0], [1], [0, 0, 1, 1], [], []>} : vector<256x8xbf16>, vector<8x8xbf16>, vector<256x8xf32> -> vector<256x8xf32>
    %137 = arith.addf %130, %136 : vector<256x8xf32>
    %c0_137 = arith.constant 0 : index
    %c0_138 = arith.constant 0 : index
    %138 = vector.load %arg5[%c0_137, %c0_138] : memref<1x8xf32, #tpu.memory_space<vmem>>, vector<1x8xf32>
    %139 = vector.broadcast %138 : vector<1x8xf32> to vector<256x8xf32>
    %140 = arith.addf %137, %139 : vector<256x8xf32>
    %cst_139 = arith.constant 0.00999999977 : f32
    %141 = vector.broadcast %cst_139 : f32 to vector<256x8xf32>
    %142 = arith.mulf %141, %140 : vector<256x8xf32>
    %143 = arith.maximumf %140, %142 : vector<256x8xf32>
    %144 = vector.shape_cast %143 : vector<256x8xf32> to vector<1x16x16x8xf32>
    %c0_140 = arith.constant 0 : index
    %c0_141 = arith.constant 0 : index
    %c0_142 = arith.constant 0 : index
    %c0_143 = arith.constant 0 : index
    %145 = vector.load %arg6[%c0_140, %c0_141, %c0_142, %c0_143] : memref<1x16x16x8xf32, #tpu.memory_space<vmem>>, vector<1x16x16x8xf32>
    tpu.vector_store %arg6[%c0_140, %c0_141, %c0_142, %c0_143], %144 {strides = array<i32>} : memref<1x16x16x8xf32, #tpu.memory_space<vmem>>, vector<1x16x16x8xf32>,
    return
  }
  func.func @transform_0(%arg0: i32) -> (i32, i32, i32, i32) {
    %c0_i32 = arith.constant 0 : i32
    %c0_i32_0 = arith.constant 0 : i32
    %c0_i32_1 = arith.constant 0 : i32
    %c0_i32_2 = arith.constant 0 : i32
    return %arg0, %c0_i32, %c0_i32_0, %c0_i32_1 : i32, i32, i32, i32
  }
  func.func @transform_1(%arg0: i32) -> (i32, i32, i32) {
    %c0_i32 = arith.constant 0 : i32
    %c0_i32_0 = arith.constant 0 : i32
    %c0_i32_1 = arith.constant 0 : i32
    %c0_i32_2 = arith.constant 0 : i32
    return %c0_i32, %c0_i32_0, %c0_i32_1 : i32, i32, i32
  }
  func.func @transform_2(%arg0: i32) -> (i32, i32) {
    %c0_i32 = arith.constant 0 : i32
    %c0_i32_0 = arith.constant 0 : i32
    %c0_i32_1 = arith.constant 0 : i32
    return %c0_i32, %c0_i32_0 : i32, i32
  }
  func.func @transform_3(%arg0: i32) -> (i32, i32, i32) {
    %c0_i32 = arith.constant 0 : i32
    %c0_i32_0 = arith.constant 0 : i32
    %c0_i32_1 = arith.constant 0 : i32
    %c0_i32_2 = arith.constant 0 : i32
    return %c0_i32, %c0_i32_0, %c0_i32_1 : i32, i32, i32
  }
  func.func @transform_4(%arg0: i32) -> (i32, i32) {
    %c0_i32 = arith.constant 0 : i32
    %c0_i32_0 = arith.constant 0 : i32
    %c0_i32_1 = arith.constant 0 : i32
    return %c0_i32, %c0_i32_0 : i32, i32
  }
  func.func @transform_5(%arg0: i32) -> (i32, i32, i32, i32) {
    %c0_i32 = arith.constant 0 : i32
    %c0_i32_0 = arith.constant 0 : i32
    %c0_i32_1 = arith.constant 0 : i32
    %c0_i32_2 = arith.constant 0 : i32
    return %arg0, %c0_i32, %c0_i32_0, %c0_i32_1 : i32, i32, i32, i32
  }
}

</mosaic_0001>

<llo_original>
// kernel: conv_block_forward.1
$region0: #{conv_block_forward.1}
  #allocation0 [shape = 'u32[]', space=smem, size = 0x4, offset = 0x4, fixed_abs, tag = 'smem constant byte address 0x4 - core index']
  #allocation1 [shape = 'u32[144,128]{1,0:T(1,128)}', space=vmem, size = 0x12000, scoped, tag = 'internal scratch']
  #allocation2 [shape = 'f32[18,18,8]{2,1,0:T(8,128)}', space=vmem, size = 0x36000, scoped, tag = 'scratch operand']
  %s0 = inlined_call_operand.vmem [shape: bf16[2,18,18,4], index: 0, kind: input, shape index: {}]
  %s1 = inlined_call_operand.vmem [shape: bf16[9,4,8], index: 1, kind: input, shape index: {}]
  %s2 = inlined_call_operand.vmem [shape: f32[1,8], index: 2, kind: input, shape index: {}]
  %s3 = inlined_call_operand.vmem [shape: bf16[9,8,8], index: 3, kind: input, shape index: {}]
  %s4 = inlined_call_operand.vmem [shape: f32[1,8], index: 4, kind: input, shape index: {}]
  %s5 = inlined_call_operand.vmem [shape: f32[2,16,16,8], index: 5, kind: output, shape index: {}]
  %s6 = sld [smem:[#allocation0]]
  $region53: #{conv_block_forward.1} parent=0
    _
  %s8 = ssub.s32 1, %s6
  %s9 = scalar_select 0, %s8, %s6
  loop: start=0, step=1, limit=4
  $region2: #{conv_block_forward.1} parent=0 // loop_pre_header
    _
  $region3: #{conv_block_forward.1} parent=0 // loop_header
    %s11 = sphi 0, %s15
    %p12 = scmp.ge.s32.totalorder %s11, 4
    %s21 = sphi 0, %s23
    %s24 = sphi 0, %s21
    %s25 = sphi 0, %s24
    %s41 = sphi 0, %s25
    %s45 = sphi 0, %s45
    %s47 = sphi 0, %s45
    %s48 = sphi 0, %s47
    %s62 = sphi 0, %s48
    %s66 = sphi 0, %s66
    %s68 = sphi 0, %s66
    %s69 = sphi 0, %s68
    %s83 = sphi 0, %s69
    %s87 = sphi 0, %s87
    %s89 = sphi 0, %s87
    %s90 = sphi 0, %s89
    %s104 = sphi 0, %s90
    %s108 = sphi 0, %s108
    %s110 = sphi 0, %s108
    %s111 = sphi 0, %s110
    %s125 = sphi 0, %s111
    %s131 = sphi 0, %s133
    %s134 = sphi 0, %s131
    %s135 = sphi 0, %s134
    %s151 = sphi 0, %s135
  $region4: #{conv_block_forward.1} parent=0 // loop_header_branch
    %14 = sbr.rel (%p12) target = $region8
  $region5: #{conv_block_forward.1} parent=0 // loop_body
    %s16 = ssub.s32 %s11, 1
    %s17 = ssub.s32 %s11, 2
    %s18 = sadd.s32 %s11, 1
    %s19 = ssub.s32 %s11, %s18
    %p20 = scmp.eq.s32.totalorder %s19, 0
    %s22 = sadd.s32 %s21, 1
    %s23 = scalar_select %p20, %s21, %s22
    %p26 = pneg %p20
    %p27 = scmp.eq.s32.totalorder %s11, 1
    %p28 = por %p26, %p27
    %p29 = scmp.ne.s32.totalorder %s21, %s24
    %p30 = scmp.eq.s32.totalorder %s11, 0
    %p31 = por %p29, %p30
    %p32 = scmp.ne.s32.totalorder %s21, %s24
    %p33 = scmp.eq.s32.totalorder %s16, 1
    %p34 = por %p32, %p33
    %p35 = scmp.ne.s32.totalorder %s24, %s25
    %p36 = scmp.eq.s32.totalorder %s16, 0
    %p37 = por %p35, %p36
    %p38 = scmp.ne.s32.totalorder %s24, %s25
    %p39 = scmp.eq.s32.totalorder %s17, 1
    %p40 = por %p38, %p39
    %p42 = scmp.ne.s32.totalorder %s25, %s41
    %p43 = scmp.eq.s32.totalorder %s17, 0
    %p44 = por %p42, %p43
    %s46 = sadd.s32 %s45, 1
    %p49 = scmp.eq.s32.totalorder %s11, 1
    %p50 = scmp.ne.s32.totalorder %s45, %s47
    %p51 = scmp.eq.s32.totalorder %s11, 0
    %p52 = por %p50, %p51
    %p53 = scmp.ne.s32.totalorder %s45, %s47
    %p54 = scmp.eq.s32.totalorder %s16, 1
    %p55 = por %p53, %p54
    %p56 = scmp.ne.s32.totalorder %s47, %s48
    %p57 = scmp.eq.s32.totalorder %s16, 0
    %p58 = por %p56, %p57
    %p59 = scmp.ne.s32.totalorder %s47, %s48
    %p60 = scmp.eq.s32.totalorder %s17, 1
    %p61 = por %p59, %p60
    %p63 = scmp.ne.s32.totalorder %s48, %s62
    %p64 = scmp.eq.s32.totalorder %s17, 0
    %p65 = por %p63, %p64
    %s67 = sadd.s32 %s66, 1
    %p70 = scmp.eq.s32.totalorder %s11, 1
    %p71 = scmp.ne.s32.totalorder %s66, %s68
    %p72 = scmp.eq.s32.totalorder %s11, 0
    %p73 = por %p71, %p72
    %p74 = scmp.ne.s32.totalorder %s66, %s68
    %p75 = scmp.eq.s32.totalorder %s16, 1
    %p76 = por %p74, %p75
    %p77 = scmp.ne.s32.totalorder %s68, %s69
    %p78 = scmp.eq.s32.totalorder %s16, 0
    %p79 = por %p77, %p78
    %p80 = scmp.ne.s32.totalorder %s68, %s69
    %p81 = scmp.eq.s32.totalorder %s17, 1
    %p82 = por %p80, %p81
    %p84 = scmp.ne.s32.totalorder %s69, %s83
    %p85 = scmp.eq.s32.totalorder %s17, 0
    %p86 = por %p84, %p85
    %s88 = sadd.s32 %s87, 1
    %p91 = scmp.eq.s32.totalorder %s11, 1
    %p92 = scmp.ne.s32.totalorder %s87, %s89
    %p93 = scmp.eq.s32.totalorder %s11, 0
    %p94 = por %p92, %p93
    %p95 = scmp.ne.s32.totalorder %s87, %s89
    %p96 = scmp.eq.s32.totalorder %s16, 1
    %p97 = por %p95, %p96
    %p98 = scmp.ne.s32.totalorder %s89, %s90
    %p99 = scmp.eq.s32.totalorder %s16, 0
    %p100 = por %p98, %p99
    %p101 = scmp.ne.s32.totalorder %s89, %s90
    %p102 = scmp.eq.s32.totalorder %s17, 1
    %p103 = por %p101, %p102
    %p105 = scmp.ne.s32.totalorder %s90, %s104
    %p106 = scmp.eq.s32.totalorder %s17, 0
    %p107 = por %p105, %p106
    %s109 = sadd.s32 %s108, 1
    %p112 = scmp.eq.s32.totalorder %s11, 1
    %p113 = scmp.ne.s32.totalorder %s108, %s110
    %p114 = scmp.eq.s32.totalorder %s11, 0
    %p115 = por %p113, %p114
    %p116 = scmp.ne.s32.totalorder %s108, %s110
    %p117 = scmp.eq.s32.totalorder %s16, 1
    %p118 = por %p116, %p117
    %p119 = scmp.ne.s32.totalorder %s110, %s111
    %p120 = scmp.eq.s32.totalorder %s16, 0
    %p121 = por %p119, %p120
    %p122 = scmp.ne.s32.totalorder %s110, %s111
    %p123 = scmp.eq.s32.totalorder %s17, 1
    %p124 = por %p122, %p123
    %p126 = scmp.ne.s32.totalorder %s111, %s125
    %p127 = scmp.eq.s32.totalorder %s17, 0
    %p128 = por %p126, %p127
    %s129 = ssub.s32 %s11, %s18
    %p130 = scmp.eq.s32.totalorder %s129, 0
    %s132 = sadd.s32 %s131, 1
    %s133 = scalar_select %p130, %s131, %s132
    %p136 = pneg %p130
    %p137 = scmp.eq.s32.totalorder %s11, 1
    %p138 = por %p136, %p137
    %p139 = scmp.ne.s32.totalorder %s131, %s134
    %p140 = scmp.eq.s32.totalorder %s11, 0
    %p141 = por %p139, %p140
    %p142 = scmp.ne.s32.totalorder %s131, %s134
    %p143 = scmp.eq.s32.totalorder %s16, 1
    %p144 = por %p142, %p143
    %p145 = scmp.ne.s32.totalorder %s134, %s135
    %p146 = scmp.eq.s32.totalorder %s16, 0
    %p147 = por %p145, %p146
    %p148 = scmp.ne.s32.totalorder %s134, %s135
    %p149 = scmp.eq.s32.totalorder %s17, 1
    %p150 = por %p148, %p149
    %p152 = scmp.ne.s32.totalorder %s135, %s151
    %p153 = scmp.eq.s32.totalorder %s17, 0
    %p154 = por %p152, %p153
    %p155 = scmp.le.s32.totalorder 1, %s11
    %p156 = scmp.lt.s32.totalorder %s11, 3
    %p157 = pnand %p155, %p156
    %p158 = pneg %p157
    // Predicated region
    $region9: #{conv_block_forward.1} parent=5 // pred_check
      _
    $region10: #{conv_block_forward.1} parent=5 // pred_check_branch
      %160 = sbr.rel (%p157) target = $region12
    $region11: #{conv_block_forward.1} parent=5 // pred_region
      %s161 = ssub.s32 %s11, 1
      // Predicated region
      $region13: #{conv_block_forward.1} parent=11 // pred_check
        %p162 = pneg %p58
      $region14: #{conv_block_forward.1} parent=11 // pred_check_branch
        %164 = sbr.rel (%p162) target = $region16
      $region15: #{conv_block_forward.1} parent=11 // pred_region
        _
      $region16: #{conv_block_forward.1} parent=11 // pred_fallthru
        _
      // Predicated region
      $region17: #{conv_block_forward.1} parent=11 // pred_check
        %p165 = pneg %p79
      $region18: #{conv_block_forward.1} parent=11 // pred_check_branch
        %167 = sbr.rel (%p165) target = $region20
      $region19: #{conv_block_forward.1} parent=11 // pred_region
        _
      $region20: #{conv_block_forward.1} parent=11 // pred_fallthru
        _
      // Predicated region
      $region21: #{conv_block_forward.1} parent=11 // pred_check
        %p168 = pneg %p100
      $region22: #{conv_block_forward.1} parent=11 // pred_check_branch
        %170 = sbr.rel (%p168) target = $region24
      $region23: #{conv_block_forward.1} parent=11 // pred_region
        _
      $region24: #{conv_block_forward.1} parent=11 // pred_fallthru
        _
      // Predicated region
      $region25: #{conv_block_forward.1} parent=11 // pred_check
        %p171 = pneg %p121
      $region26: #{conv_block_forward.1} parent=11 // pred_check_branch
        %173 = sbr.rel (%p171) target = $region28
      $region27: #{conv_block_forward.1} parent=11 // pred_region
        _
      $region28: #{conv_block_forward.1} parent=11 // pred_fallthru
        _
    $region12: #{conv_block_forward.1} parent=5 // pred_fallthru
      _
    %p174 = scmp.lt.s32.totalorder %s11, 2
    // Predicated region
    $region29: #{conv_block_forward.1} parent=5 // pred_check
      %p175 = pneg %p174
    $region30: #{conv_block_forward.1} parent=5 // pred_check_branch
      %177 = sbr.rel (%p175) target = $region32
    $region31: #{conv_block_forward.1} parent=5 // pred_region
      // Predicated region
      $region33: #{conv_block_forward.1} parent=31 // pred_check
        %p178 = pneg %p31
      $region34: #{conv_block_forward.1} parent=31 // pred_check_branch
        %180 = sbr.rel (%p178) target = $region36
      $region35: #{conv_block_forward.1} parent=31 // pred_region
        %p181 = scmp.lt.s32.totalorder %s11, 1
        %s182 = scalar_select %p181, %s11, 1
        %s183 = smul.addr %s182, 54
        %s184 = smul.addr %s183, 4
        %s185 = scalar_lea.vmem %s0, %s184
      $region36: #{conv_block_forward.1} parent=31 // pred_fallthru
        _
    $region32: #{conv_block_forward.1} parent=5 // pred_fallthru
      _
    %p186 = scmp.le.s32.totalorder 1, %s11
    %p187 = scmp.lt.s32.totalorder %s11, 3
    %p188 = pnand %p186, %p187
    %p189 = pneg %p188
    // Predicated region
    $region37: #{conv_block_forward.1} parent=5 // pred_check
      _
    $region38: #{conv_block_forward.1} parent=5 // pred_check_branch
      %191 = sbr.rel (%p188) target = $region40
    $region39: #{conv_block_forward.1} parent=5 // pred_region
      %s192 = ssub.s32 %s11, 1
      %p193 = scmp.lt.s32.totalorder %s16, 1
      %s194 = scalar_select %p193, %s16, 1
      %s195 = smul.addr %s194, 54
      %s196 = smul.addr %s195, 4
      %s197 = scalar_lea.vmem %s0, %s196
      %p198 = pneg %p37
      %p199 = pneg %p34
      %p200 = pneg %p58
      %p201 = pneg %p55
      %p202 = pneg %p79
      %p203 = pneg %p76
      %p204 = pneg %p100
      %p205 = pneg %p97
      %p206 = pneg %p121
      %p207 = pneg %p118
      %p208 = pneg %p147
      %p209 = pneg %p144
      %p210 = scmp.lt.s32.totalorder %s16, 1
      %s211 = scalar_select %p210, %s16, 1
      %s212 = smul.addr %s211, 32
      %s213 = smul.addr %s212, 8
      %s214 = scalar_lea.vmem %s5, %s213
      %p215 = scmp.lt.s32.totalorder %s16, 1
      %s216 = scalar_select %p215, %s16, 1
      %s217 = smul.addr %s216, 54
      %s218 = smul.addr %s217, 4
      %s219 = scalar_lea.vmem %s0, %s218
      %p220 = scmp.lt.s32.totalorder %s16, 1
      %s221 = scalar_select %p220, %s16, 1
      %s222 = smul.addr %s221, 32
      %s223 = smul.addr %s222, 8
      %s224 = scalar_lea.vmem %s5, %s223
      %v226 = vld [vmem:[%s219] sm:$0xf]
      %v227 = vld [vmem:[%s219 + $0x4] sm:$0xf]
      %v228 = vld [vmem:[%s219 + $0xc] sm:$0xf]
      %v229 = vld [vmem:[%s219 + $0x10] sm:$0xf]
      %v230 = vld [vmem:[%s219 + $0x18] sm:$0xf]
      %v231 = vld [vmem:[%s219 + $0x1c] sm:$0xf]
      %v232 = vld [vmem:[%s219 + $0x24] sm:$0xf]
      %v233 = vld [vmem:[%s219 + $0x28] sm:$0xf]
      %v234 = vld [vmem:[%s219 + $0x30] sm:$0xf]
      %v235 = vld [vmem:[%s219 + $0x34] sm:$0xf]
      %v236 = vld [vmem:[%s219 + $0x3c] sm:$0xf]
      %v237 = vld [vmem:[%s219 + $0x40] sm:$0xf]
      %v238 = vld [vmem:[%s219 + $0x48] sm:$0xf]
      %v239 = vld [vmem:[%s219 + $0x4c] sm:$0xf]
      %v240 = vld [vmem:[%s219 + $0x54] sm:$0xf]
      %v241 = vld [vmem:[%s219 + $0x58] sm:$0xf]
      %v242 = vld [vmem:[%s219 + $0x60] sm:$0xf]
      %v243 = vld [vmem:[%s219 + $0x64] sm:$0xf]
      %v244 = vld [vmem:[%s219 + $0x6c] sm:$0xf]
      %v245 = vld [vmem:[%s219 + $0x70] sm:$0xf]
      %v246 = vld [vmem:[%s219 + $0x78] sm:$0xf]
      %v247 = vld [vmem:[%s219 + $0x7c] sm:$0xf]
      %v248 = vld [vmem:[%s219 + $0x84] sm:$0xf]
      %v249 = vld [vmem:[%s219 + $0x88] sm:$0xf]
      %v250 = vld [vmem:[%s219 + $0x90] sm:$0xf]
      %v251 = vld [vmem:[%s219 + $0x94] sm:$0xf]
      %v252 = vld [vmem:[%s219 + $0x9c] sm:$0xf]
      %v253 = vld [vmem:[%s219 + $0xa0] sm:$0xf]
      %v254 = vld [vmem:[%s219 + $0xa8] sm:$0xf]
      %v255 = vld [vmem:[%s219 + $0xac] sm:$0xf]
      %v256 = vld [vmem:[%s219 + $0xb4] sm:$0xf]
      %v257 = vld [vmem:[%s219 + $0xb8] sm:$0xf]
      %v258 = vld [vmem:[%s1] sm:$0x3]
      %v259 = vld [vmem:[%s219 + $0x8] sm:$0x1]
      %v260 = vld [vmem:[%s219 + $0x14] sm:$0x1]
      %v261 = vld [vmem:[%s219 + $0x20] sm:$0x1]
      %v262 = vld [vmem:[%s219 + $0x2c] sm:$0x1]
      %v263 = vld [vmem:[%s219 + $0x38] sm:$0x1]
      %v264 = vld [vmem:[%s219 + $0x44] sm:$0x1]
      %v265 = vld [vmem:[%s219 + $0x50] sm:$0x1]
      %v266 = vld [vmem:[%s219 + $0x5c] sm:$0x1]
      %v267 = vld [vmem:[%s219 + $0x68] sm:$0x1]
      %v268 = vld [vmem:[%s219 + $0x74] sm:$0x1]
      %v269 = vld [vmem:[%s219 + $0x80] sm:$0x1]
      %v270 = vld [vmem:[%s219 + $0x8c] sm:$0x1]
      %v271 = vld [vmem:[%s219 + $0x98] sm:$0x1]
      %v272 = vld [vmem:[%s219 + $0xa4] sm:$0x1]
      %v273 = vld [vmem:[%s219 + $0xb0] sm:$0x1]
      %v274 = vld [vmem:[%s219 + $0xbc] sm:$0x1]
      %vm275 = vsmask.f32 3328
      %vm276 = vsmask.f32 7440
      %vm277 = vmor %vm275, %vm276
      %v279 = vshrl.u32 %v226, 16
      %v281 = vrot.slane %v279, 4
      %v282 = vshll.u32 %v226, 16
      %v284 = vrot.slane %v282, 5
      %v285 = vor.u32 %v281, %v284
      %v286 = vrot.slane %v285, 4
      %v288 = vshll.u32 %v227, 16
      %v290 = vrot.slane %v288, 5
      %v291 = vsel %vm277, %v286, %v290
      %v292 = vshrl.u32 %v227, 16
      %v294 = vrot.slane %v292, 4
      %v295 = vor.u32 %v294, %v290
      %v296 = vrot.slane %v295, 4
      %v298 = vshll.u32 %v259, 16
      %v300 = vrot.slane %v298, 5
      %v301 = vsel %vm277, %v296, %v300
      %v303 = vshrl.u32 %v228, 16
      %v305 = vrot.slane %v303, 4
      %v306 = vshll.u32 %v228, 16
      %v308 = vrot.slane %v306, 5
      %v309 = vor.u32 %v305, %v308
      %v310 = vrot.slane %v309, 4
      %v312 = vshll.u32 %v229, 16
      %v314 = vrot.slane %v312, 5
      %v315 = vsel %vm277, %v310, %v314
      %v316 = vshrl.u32 %v229, 16
      %v318 = vrot.slane %v316, 4
      %v319 = vor.u32 %v318, %v314
      %v320 = vrot.slane %v319, 4
      %v322 = vshll.u32 %v260, 16
      %v324 = vrot.slane %v322, 5
      %v325 = vsel %vm277, %v320, %v324
      %v327 = vshrl.u32 %v230, 16
      %v329 = vrot.slane %v327, 4
      %v330 = vshll.u32 %v230, 16
      %v332 = vrot.slane %v330, 5
      %v333 = vor.u32 %v329, %v332
      %v334 = vrot.slane %v333, 4
      %v336 = vshll.u32 %v231, 16
      %v338 = vrot.slane %v336, 5
      %v339 = vsel %vm277, %v334, %v338
      %v340 = vshrl.u32 %v231, 16
      %v342 = vrot.slane %v340, 4
      %v343 = vor.u32 %v342, %v338
      %v344 = vrot.slane %v343, 4
      %v346 = vshll.u32 %v261, 16
      %v348 = vrot.slane %v346, 5
      %v349 = vsel %vm277, %v344, %v348
      %v351 = vshrl.u32 %v232, 16
      %v353 = vrot.slane %v351, 4
      %v354 = vshll.u32 %v232, 16
      %v356 = vrot.slane %v354, 5
      %v357 = vor.u32 %v353, %v356
      %v358 = vrot.slane %v357, 4
      %v360 = vshll.u32 %v233, 16
      %v362 = vrot.slane %v360, 5
      %v363 = vsel %vm277, %v358, %v362
      %v364 = vshrl.u32 %v233, 16
      %v366 = vrot.slane %v364, 4
      %v367 = vor.u32 %v366, %v362
      %v368 = vrot.slane %v367, 4
      %v370 = vshll.u32 %v262, 16
      %v372 = vrot.slane %v370, 5
      %v373 = vsel %vm277, %v368, %v372
      %v375 = vshrl.u32 %v234, 16
      %v377 = vrot.slane %v375, 4
      %v378 = vshll.u32 %v234, 16
      %v380 = vrot.slane %v378, 5
      %v381 = vor.u32 %v377, %v380
      %v382 = vrot.slane %v381, 4
      %v384 = vshll.u32 %v235, 16
      %v386 = vrot.slane %v384, 5
      %v387 = vsel %vm277, %v382, %v386
      %v388 = vshrl.u32 %v235, 16
      %v390 = vrot.slane %v388, 4
      %v391 = vor.u32 %v390, %v386
      %v392 = vrot.slane %v391, 4
      %v394 = vshll.u32 %v263, 16
      %v396 = vrot.slane %v394, 5
      %v397 = vsel %vm277, %v392, %v396
      %v399 = vshrl.u32 %v236, 16
      %v401 = vrot.slane %v399, 4
      %v402 = vshll.u32 %v236, 16
      %v404 = vrot.slane %v402, 5
      %v405 = vor.u32 %v401, %v404
      %v406 = vrot.slane %v405, 4
      %v408 = vshll.u32 %v237, 16
      %v410 = vrot.slane %v408, 5
      %v411 = vsel %vm277, %v406, %v410
      %v412 = vshrl.u32 %v237, 16
      %v414 = vrot.slane %v412, 4
      %v415 = vor.u32 %v414, %v410
      %v416 = vrot.slane %v415, 4
      %v418 = vshll.u32 %v264, 16
      %v420 = vrot.slane %v418, 5
      %v421 = vsel %vm277, %v416, %v420
      %v423 = vshrl.u32 %v238, 16
      %v425 = vrot.slane %v423, 4
      %v426 = vshll.u32 %v238, 16
      %v428 = vrot.slane %v426, 5
      %v429 = vor.u32 %v425, %v428
      %v430 = vrot.slane %v429, 4
      %v432 = vshll.u32 %v239, 16
      %v434 = vrot.slane %v432, 5
      %v435 = vsel %vm277, %v430, %v434
      %v436 = vshrl.u32 %v239, 16
      %v438 = vrot.slane %v436, 4
      %v439 = vor.u32 %v438, %v434
      %v440 = vrot.slane %v439, 4
      %v442 = vshll.u32 %v265, 16
      %v444 = vrot.slane %v442, 5
      %v445 = vsel %vm277, %v440, %v444
      %v447 = vshrl.u32 %v240, 16
      %v449 = vrot.slane %v447, 4
      %v450 = vshll.u32 %v240, 16
      %v452 = vrot.slane %v450, 5
      %v453 = vor.u32 %v449, %v452
      %v454 = vrot.slane %v453, 4
      %v456 = vshll.u32 %v241, 16
      %v458 = vrot.slane %v456, 5
      %v459 = vsel %vm277, %v454, %v458
      %v460 = vshrl.u32 %v241, 16
      %v462 = vrot.slane %v460, 4
      %v463 = vor.u32 %v462, %v458
      %v464 = vrot.slane %v463, 4
      %v466 = vshll.u32 %v266, 16
      %v468 = vrot.slane %v466, 5
      %v469 = vsel %vm277, %v464, %v468
      %v471 = vshrl.u32 %v242, 16
      %v473 = vrot.slane %v471, 4
      %v474 = vshll.u32 %v242, 16
      %v476 = vrot.slane %v474, 5
      %v477 = vor.u32 %v473, %v476
      %v478 = vrot.slane %v477, 4
      %v480 = vshll.u32 %v243, 16
      %v482 = vrot.slane %v480, 5
      %v483 = vsel %vm277, %v478, %v482
      %v484 = vshrl.u32 %v243, 16
      %v486 = vrot.slane %v484, 4
      %v487 = vor.u32 %v486, %v482
      %v488 = vrot.slane %v487, 4
      %v490 = vshll.u32 %v267, 16
      %v492 = vrot.slane %v490, 5
      %v493 = vsel %vm277, %v488, %v492
      %v495 = vshrl.u32 %v244, 16
      %v497 = vrot.slane %v495, 4
      %v498 = vshll.u32 %v244, 16
      %v500 = vrot.slane %v498, 5
      %v501 = vor.u32 %v497, %v500
      %v502 = vrot.slane %v501, 4
      %v504 = vshll.u32 %v245, 16
      %v506 = vrot.slane %v504, 5
      %v507 = vsel %vm277, %v502, %v506
      %v508 = vshrl.u32 %v245, 16
      %v510 = vrot.slane %v508, 4
      %v511 = vor.u32 %v510, %v506
      %v512 = vrot.slane %v511, 4
      %v514 = vshll.u32 %v268, 16
      %v516 = vrot.slane %v514, 5
      %v517 = vsel %vm277, %v512, %v516
      %v519 = vshrl.u32 %v246, 16
      %v521 = vrot.slane %v519, 4
      %v522 = vshll.u32 %v246, 16
      %v524 = vrot.slane %v522, 5
      %v525 = vor.u32 %v521, %v524
      %v526 = vrot.slane %v525, 4
      %v528 = vshll.u32 %v247, 16
      %v530 = vrot.slane %v528, 5
      %v531 = vsel %vm277, %v526, %v530
      %v532 = vshrl.u32 %v247, 16
      %v534 = vrot.slane %v532, 4
      %v535 = vor.u32 %v534, %v530
      %v536 = vrot.slane %v535, 4
      %v538 = vshll.u32 %v269, 16
      %v540 = vrot.slane %v538, 5
      %v541 = vsel %vm277, %v536, %v540
      %v543 = vshrl.u32 %v248, 16
      %v545 = vrot.slane %v543, 4
      %v546 = vshll.u32 %v248, 16
      %v548 = vrot.slane %v546, 5
      %v549 = vor.u32 %v545, %v548
      %v550 = vrot.slane %v549, 4
      %v552 = vshll.u32 %v249, 16
      %v554 = vrot.slane %v552, 5
      %v555 = vsel %vm277, %v550, %v554
      %v556 = vshrl.u32 %v249, 16
      %v558 = vrot.slane %v556, 4
      %v559 = vor.u32 %v558, %v554
      %v560 = vrot.slane %v559, 4
      %v562 = vshll.u32 %v270, 16
      %v564 = vrot.slane %v562, 5
      %v565 = vsel %vm277, %v560, %v564
      %v567 = vshrl.u32 %v250, 16
      %v569 = vrot.slane %v567, 4
      %v570 = vshll.u32 %v250, 16
      %v572 = vrot.slane %v570, 5
      %v573 = vor.u32 %v569, %v572
      %v574 = vrot.slane %v573, 4
      %v576 = vshll.u32 %v251, 16
      %v578 = vrot.slane %v576, 5
      %v579 = vsel %vm277, %v574, %v578
      %v580 = vshrl.u32 %v251, 16
      %v582 = vrot.slane %v580, 4
      %v583 = vor.u32 %v582, %v578
      %v584 = vrot.slane %v583, 4
      %v586 = vshll.u32 %v271, 16
      %v588 = vrot.slane %v586, 5
      %v589 = vsel %vm277, %v584, %v588
      %v591 = vshrl.u32 %v252, 16
      %v593 = vrot.slane %v591, 4
      %v594 = vshll.u32 %v252, 16
      %v596 = vrot.slane %v594, 5
      %v597 = vor.u32 %v593, %v596
      %v598 = vrot.slane %v597, 4
      %v600 = vshll.u32 %v253, 16
      %v602 = vrot.slane %v600, 5
      %v603 = vsel %vm277, %v598, %v602
      %v604 = vshrl.u32 %v253, 16
      %v606 = vrot.slane %v604, 4
      %v607 = vor.u32 %v606, %v602
      %v608 = vrot.slane %v607, 4
      %v610 = vshll.u32 %v272, 16
      %v612 = vrot.slane %v610, 5
      %v613 = vsel %vm277, %v608, %v612
      %v615 = vshrl.u32 %v254, 16
      %v617 = vrot.slane %v615, 4
      %v618 = vshll.u32 %v254, 16
      %v620 = vrot.slane %v618, 5
      %v621 = vor.u32 %v617, %v620
      %v622 = vrot.slane %v621, 4
      %v624 = vshll.u32 %v255, 16
      %v626 = vrot.slane %v624, 5
      %v627 = vsel %vm277, %v622, %v626
      %v628 = vshrl.u32 %v255, 16
      %v630 = vrot.slane %v628, 4
      %v631 = vor.u32 %v630, %v626
      %v632 = vrot.slane %v631, 4
      %v634 = vshll.u32 %v273, 16
      %v636 = vrot.slane %v634, 5
      %v637 = vsel %vm277, %v632, %v636
      %v639 = vshrl.u32 %v256, 16
      %v641 = vrot.slane %v639, 4
      %v642 = vshll.u32 %v256, 16
      %v644 = vrot.slane %v642, 5
      %v645 = vor.u32 %v641, %v644
      %v646 = vrot.slane %v645, 4
      %v648 = vshll.u32 %v257, 16
      %v650 = vrot.slane %v648, 5
      %v651 = vsel %vm277, %v646, %v650
      %v652 = vshrl.u32 %v257, 16
      %v654 = vrot.slane %v652, 4
      %v655 = vor.u32 %v654, %v650
      %v656 = vrot.slane %v655, 4
      %v658 = vshll.u32 %v274, 16
      %v660 = vrot.slane %v658, 5
      %v661 = vsel %vm277, %v656, %v660
      %s662 = scalar_lea.vmem %s1, 2
      %v663 = vld [vmem:[%s662] sm:$0x3]
      %v664 = vunpack.c.l.b16 %v291
      %v665 = vunpack.c.l.b16 %v301
      %v666 = vunpack.c.l.b16 %v315
      %v667 = vunpack.c.l.b16 %v325
      %v668 = vunpack.c.l.b16 %v339
      %v669 = vunpack.c.l.b16 %v349
      %v670 = vunpack.c.l.b16 %v363
      %v671 = vunpack.c.l.b16 %v373
      %v672 = vunpack.c.l.b16 %v387
      %v673 = vunpack.c.l.b16 %v397
      %v674 = vunpack.c.l.b16 %v411
      %v675 = vunpack.c.l.b16 %v421
      %v676 = vunpack.c.l.b16 %v435
      %v677 = vunpack.c.l.b16 %v445
      %v678 = vunpack.c.l.b16 %v459
      %v679 = vunpack.c.l.b16 %v469
      %v680 = vunpack.c.l.b16 %v483
      %v681 = vunpack.c.l.b16 %v493
      %v682 = vunpack.c.l.b16 %v507
      %v683 = vunpack.c.l.b16 %v517
      %v684 = vunpack.c.l.b16 %v531
      %v685 = vunpack.c.l.b16 %v541
      %v686 = vunpack.c.l.b16 %v555
      %v687 = vunpack.c.l.b16 %v565
      %v688 = vunpack.c.l.b16 %v579
      %v689 = vunpack.c.l.b16 %v589
      %v690 = vunpack.c.l.b16 %v603
      %v691 = vunpack.c.l.b16 %v613
      %v692 = vunpack.c.l.b16 %v627
      %v693 = vunpack.c.l.b16 %v637
      %v694 = vunpack.c.l.b16 %v651
      %v695 = vunpack.c.l.b16 %v661
      %v696 = vpack.c.b16 %v665, %v664
      %v697 = vpack.c.b16 %v667, %v666
      %v698 = vpack.c.b16 %v669, %v668
      %v699 = vpack.c.b16 %v671, %v670
      %v700 = vpack.c.b16 %v673, %v672
      %v701 = vpack.c.b16 %v675, %v674
      %v702 = vpack.c.b16 %v677, %v676
      %v703 = vpack.c.b16 %v679, %v678
      %v704 = vpack.c.b16 %v681, %v680
      %v705 = vpack.c.b16 %v683, %v682
      %v706 = vpack.c.b16 %v685, %v684
      %v707 = vpack.c.b16 %v687, %v686
      %v708 = vpack.c.b16 %v689, %v688
      %v709 = vpack.c.b16 %v691, %v690
      %v710 = vpack.c.b16 %v693, %v692
      %v711 = vpack.c.b16 %v695, %v694
      %vm712 = vcmask 31744
      %v714 = vsel %vm712, %v696, 0
      %v717 = vsel %vm712, %v697, 0
      %v720 = vsel %vm712, %v698, 0
      %v723 = vsel %vm712, %v699, 0
      %v726 = vsel %vm712, %v700, 0
      %v729 = vsel %vm712, %v701, 0
      %v732 = vsel %vm712, %v702, 0
      %v735 = vsel %vm712, %v703, 0
      %v738 = vsel %vm712, %v704, 0
      %v741 = vsel %vm712, %v705, 0
      %v744 = vsel %vm712, %v706, 0
      %v747 = vsel %vm712, %v707, 0
      %v750 = vsel %vm712, %v708, 0
      %v753 = vsel %vm712, %v709, 0
      %v756 = vsel %vm712, %v710, 0
      %v759 = vsel %vm712, %v711, 0
      %vm761 = vcmask 1041408
      %v763 = vsel %vm761, %v663, 0
      %765 = vmatprep.subr.bf16.mxu0 0
      %766 = vmatpush1.bf16.msra.mxu0 %v763
      %767 = vmatprep.subr.bf16.mxu0 0
      %768 = vmatpush1.bf16.msra.mxu0 0
      %769 = vmatprep.subr.bf16.mxu0 0
      %770 = vmatpush1.bf16.msra.mxu0 0
      %771 = vmatprep.subr.bf16.mxu0 0
      %772 = vmatpush1.bf16.msra.mxu0 0
      %773 = vmatprep.subr.bf16.mxu0 0
      %774 = vmatpush1.bf16.msra.mxu0 0
      %775 = vmatprep.subr.bf16.mxu0 0
      %776 = vmatpush1.bf16.msra.mxu0 0
      %777 = vmatprep.subr.bf16.mxu0 0
      %778 = vmatpush1.bf16.msra.mxu0 0
      %779 = vmatprep.subr.bf16.mxu0 0
      %780 = vmatpush1.bf16.msra.mxu0 0
      %781 = vmatprep.subr.bf16.mxu0 0
      %782 = vmatpush1.bf16.msra.mxu0 0
      %783 = vmatprep.subr.bf16.mxu0 0
      %784 = vmatpush1.bf16.msra.mxu0 0
      %785 = vmatprep.subr.bf16.mxu0 0
      %786 = vmatpush1.bf16.msra.mxu0 0
      %787 = vmatprep.subr.bf16.mxu0 0
      %788 = vmatpush1.bf16.msra.mxu0 0
      %789 = vmatprep.subr.bf16.mxu0 0
      %790 = vmatpush1.bf16.msra.mxu0 0
      %791 = vmatprep.subr.bf16.mxu0 0
      %792 = vmatpush1.bf16.msra.mxu0 0
      %793 = vmatprep.subr.bf16.mxu0 0
      %794 = vmatpush1.bf16.msra.mxu0 0
      %795 = vmatprep.subr.bf16.mxu0 0
      %796 = vmatpush1.bf16.msra.mxu0 0
      %797 = vmatprep.mubr.bf16.mxu0 0
      %798 = vmatmul.mubr.bf16.gmra.mrb[0].mxu0 %v714
      %v799 = vpop.f32.mrb[0].mxu0
      %v800 = vadd.f32 0.0, %v799
      %v801 = vpop.f32.mrb[0].mxu0
      %v802 = vpop.f32.mrb[0].mxu0
      %v803 = vadd.f32 0.0, %v802
      %v804 = vpop.f32.mrb[0].mxu0
      %805 = vmatprep.mubr.bf16.mxu0 0
      %806 = vmatmul.mubr.bf16.gmra.mrb[0].mxu0 %v717
      %v807 = vpop.f32.mrb[0].mxu0
      %v808 = vadd.f32 0.0, %v807
      %v809 = vpop.f32.mrb[0].mxu0
      %v810 = vpop.f32.mrb[0].mxu0
      %v811 = vadd.f32 0.0, %v810
      %v812 = vpop.f32.mrb[0].mxu0
      %813 = vmatprep.mubr.bf16.mxu0 0
      %814 = vmatmul.mubr.bf16.gmra.mrb[0].mxu0 %v720
      %v815 = vpop.f32.mrb[0].mxu0
      %v816 = vadd.f32 0.0, %v815
      %v817 = vpop.f32.mrb[0].mxu0
      %v818 = vpop.f32.mrb[0].mxu0
      %v819 = vadd.f32 0.0, %v818
      %v820 = vpop.f32.mrb[0].mxu0
      %821 = vmatprep.mubr.bf16.mxu0 0
      %822 = vmatmul.mubr.bf16.gmra.mrb[0].mxu0 %v723
      %v823 = vpop.f32.mrb[0].mxu0
      %v824 = vadd.f32 0.0, %v823
      %v825 = vpop.f32.mrb[0].mxu0
      %v826 = vpop.f32.mrb[0].mxu0
      %v827 = vadd.f32 0.0, %v826
      %v828 = vpop.f32.mrb[0].mxu0
      %829 = vmatprep.mubr.bf16.mxu0 0
      %830 = vmatmul.mubr.bf16.gmra.mrb[0].mxu0 %v726
      %v831 = vpop.f32.mrb[0].mxu0
      %v832 = vadd.f32 0.0, %v831
      %v833 = vpop.f32.mrb[0].mxu0
      %v834 = vpop.f32.mrb[0].mxu0
      %v835 = vadd.f32 0.0, %v834
      %v836 = vpop.f32.mrb[0].mxu0
      %837 = vmatprep.mubr.bf16.mxu0 0
      %838 = vmatmul.mubr.bf16.gmra.mrb[0].mxu0 %v729
      %v839 = vpop.f32.mrb[0].mxu0
      %v840 = vadd.f32 0.0, %v839
      %v841 = vpop.f32.mrb[0].mxu0
      %v842 = vpop.f32.mrb[0].mxu0
      %v843 = vadd.f32 0.0, %v842
      %v844 = vpop.f32.mrb[0].mxu0
      %845 = vmatprep.mubr.bf16.mxu0 0
      %846 = vmatmul.mubr.bf16.gmra.mrb[0].mxu0 %v732
      %v847 = vpop.f32.mrb[0].mxu0
      %v848 = vadd.f32 0.0, %v847
      %v849 = vpop.f32.mrb[0].mxu0
      %v850 = vpop.f32.mrb[0].mxu0
      %v851 = vadd.f32 0.0, %v850
      %v852 = vpop.f32.mrb[0].mxu0
      %853 = vmatprep.mubr.bf16.mxu0 0
      %854 = vmatmul.mubr.bf16.gmra.mrb[0].mxu0 %v735
      %v855 = vpop.f32.mrb[0].mxu0
      %v856 = vadd.f32 0.0, %v855
      %v857 = vpop.f32.mrb[0].mxu0
      %v858 = vpop.f32.mrb[0].mxu0
      %v859 = vadd.f32 0.0, %v858
      %v860 = vpop.f32.mrb[0].mxu0
      %861 = vmatprep.mubr.bf16.mxu0 0
      %862 = vmatmul.mubr.bf16.gmra.mrb[0].mxu0 %v738
      %v863 = vpop.f32.mrb[0].mxu0
      %v864 = vadd.f32 0.0, %v863
      %v865 = vpop.f32.mrb[0].mxu0
      %v866 = vpop.f32.mrb[0].mxu0
      %v867 = vadd.f32 0.0, %v866
      %v868 = vpop.f32.mrb[0].mxu0
      %869 = vmatprep.mubr.bf16.mxu0 0
      %870 = vmatmul.mubr.bf16.gmra.mrb[0].mxu0 %v741
      %v871 = vpop.f32.mrb[0].mxu0
      %v872 = vadd.f32 0.0, %v871
      %v873 = vpop.f32.mrb[0].mxu0
      %v874 = vpop.f32.mrb[0].mxu0
      %v875 = vadd.f32 0.0, %v874
      %v876 = vpop.f32.mrb[0].mxu0
      %877 = vmatprep.mubr.bf16.mxu0 0
      %878 = vmatmul.mubr.bf16.gmra.mrb[0].mxu0 %v744
      %v879 = vpop.f32.mrb[0].mxu0
      %v880 = vadd.f32 0.0, %v879
      %v881 = vpop.f32.mrb[0].mxu0
      %v882 = vpop.f32.mrb[0].mxu0
      %v883 = vadd.f32 0.0, %v882
      %v884 = vpop.f32.mrb[0].mxu0
      %885 = vmatprep.mubr.bf16.mxu0 0
      %886 = vmatmul.mubr.bf16.gmra.mrb[0].mxu0 %v747
      %v887 = vpop.f32.mrb[0].mxu0
      %v888 = vadd.f32 0.0, %v887
      %v889 = vpop.f32.mrb[0].mxu0
      %v890 = vpop.f32.mrb[0].mxu0
      %v891 = vadd.f32 0.0, %v890
      %v892 = vpop.f32.mrb[0].mxu0
      %893 = vmatprep.mubr.bf16.mxu0 0
      %894 = vmatmul.mubr.bf16.gmra.mrb[0].mxu0 %v750
      %v895 = vpop.f32.mrb[0].mxu0
      %v896 = vadd.f32 0.0, %v895
      %v897 = vpop.f32.mrb[0].mxu0
      %v898 = vpop.f32.mrb[0].mxu0
      %v899 = vadd.f32 0.0, %v898
      %v900 = vpop.f32.mrb[0].mxu0
      %901 = vmatprep.mubr.bf16.mxu0 0
      %902 = vmatmul.mubr.bf16.gmra.mrb[0].mxu0 %v753
      %v903 = vpop.f32.mrb[0].mxu0
      %v904 = vadd.f32 0.0, %v903
      %v905 = vpop.f32.mrb[0].mxu0
      %v906 = vpop.f32.mrb[0].mxu0
      %v907 = vadd.f32 0.0, %v906
      %v908 = vpop.f32.mrb[0].mxu0
      %909 = vmatprep.mubr.bf16.mxu0 0
      %910 = vmatmul.mubr.bf16.gmra.mrb[0].mxu0 %v756
      %v911 = vpop.f32.mrb[0].mxu0
      %v912 = vadd.f32 0.0, %v911
      %v913 = vpop.f32.mrb[0].mxu0
      %v914 = vpop.f32.mrb[0].mxu0
      %v915 = vadd.f32 0.0, %v914
      %v916 = vpop.f32.mrb[0].mxu0
      %917 = vmatprep.mubr.bf16.mxu0 0
      %918 = vmatmul.mubr.bf16.gmra.mrb[0].mxu0 %v759
      %v919 = vpop.f32.mrb[0].mxu0
      %v920 = vadd.f32 0.0, %v919
      %v921 = vpop.f32.mrb[0].mxu0
      %v922 = vpop.f32.mrb[0].mxu0
      %v923 = vadd.f32 0.0, %v922
      %v924 = vpop.f32.mrb[0].mxu0
      %925 = vdwg.mxu0
      %v958 = vunpack.c.l.b16 %v226
      %v959 = vunpack.c.l.b16 %v227
      %v960 = vunpack.c.l.b16 %v228
      %v961 = vunpack.c.l.b16 %v229
      %v962 = vunpack.c.l.b16 %v230
      %v963 = vunpack.c.l.b16 %v231
      %v964 = vunpack.c.l.b16 %v232
      %v965 = vunpack.c.l.b16 %v233
      %v966 = vunpack.c.l.b16 %v234
      %v967 = vunpack.c.l.b16 %v235
      %v968 = vunpack.c.l.b16 %v236
      %v969 = vunpack.c.l.b16 %v237
      %v970 = vunpack.c.l.b16 %v238
      %v971 = vunpack.c.l.b16 %v239
      %v972 = vunpack.c.l.b16 %v240
      %v973 = vunpack.c.l.b16 %v241
      %v974 = vunpack.c.l.b16 %v242
      %v975 = vunpack.c.l.b16 %v243
      %v976 = vunpack.c.l.b16 %v244
      %v977 = vunpack.c.l.b16 %v245
      %v978 = vunpack.c.l.b16 %v246
      %v979 = vunpack.c.l.b16 %v247
      %v980 = vunpack.c.l.b16 %v248
      %v981 = vunpack.c.l.b16 %v249
      %v982 = vunpack.c.l.b16 %v250
      %v983 = vunpack.c.l.b16 %v251
      %v984 = vunpack.c.l.b16 %v252
      %v985 = vunpack.c.l.b16 %v253
      %v986 = vunpack.c.l.b16 %v254
      %v987 = vunpack.c.l.b16 %v255
      %v988 = vunpack.c.l.b16 %v256
      %v989 = vunpack.c.l.b16 %v257
      %v990 = vpack.c.b16 %v959, %v958
      %v991 = vpack.c.b16 %v961, %v960
      %v992 = vpack.c.b16 %v963, %v962
      %v993 = vpack.c.b16 %v965, %v964
      %v994 = vpack.c.b16 %v967, %v966
      %v995 = vpack.c.b16 %v969, %v968
      %v996 = vpack.c.b16 %v971, %v970
      %v997 = vpack.c.b16 %v973, %v972
      %v998 = vpack.c.b16 %v975, %v974
      %v999 = vpack.c.b16 %v977, %v976
      %v1000 = vpack.c.b16 %v979, %v978
      %v1001 = vpack.c.b16 %v981, %v980
      %v1002 = vpack.c.b16 %v983, %v982
      %v1003 = vpack.c.b16 %v985, %v984
      %v1004 = vpack.c.b16 %v987, %v986
      %v1005 = vpack.c.b16 %v989, %v988
      %v1007 = vsel %vm712, %v990, 0
      %v1010 = vsel %vm712, %v991, 0
      %v1013 = vsel %vm712, %v992, 0
      %v1016 = vsel %vm712, %v993, 0
      %v1019 = vsel %vm712, %v994, 0
      %v1022 = vsel %vm712, %v995, 0
      %v1025 = vsel %vm712, %v996, 0
      %v1028 = vsel %vm712, %v997, 0
      %v1031 = vsel %vm712, %v998, 0
      %v1034 = vsel %vm712, %v999, 0
      %v1037 = vsel %vm712, %v1000, 0
      %v1040 = vsel %vm712, %v1001, 0
      %v1043 = vsel %vm712, %v1002, 0
      %v1046 = vsel %vm712, %v1003, 0
      %v1049 = vsel %vm712, %v1004, 0
      %v1052 = vsel %vm712, %v1005, 0
      %v1055 = vsel %vm761, %v258, 0
      %1057 = vmatprep.subr.bf16.mxu0 0
      %1058 = vmatpush1.bf16.msra.mxu0 %v1055
      %1059 = vmatprep.subr.bf16.mxu0 0
      %1060 = vmatpush1.bf16.msra.mxu0 0
      %1061 = vmatprep.subr.bf16.mxu0 0
      %1062 = vmatpush1.bf16.msra.mxu0 0
      %1063 = vmatprep.subr.bf16.mxu0 0
      %1064 = vmatpush1.bf16.msra.mxu0 0
      %1065 = vmatprep.subr.bf16.mxu0 0
      %1066 = vmatpush1.bf16.msra.mxu0 0
      %1067 = vmatprep.subr.bf16.mxu0 0
      %1068 = vmatpush1.bf16.msra.mxu0 0
      %1069 = vmatprep.subr.bf16.mxu0 0
      %1070 = vmatpush1.bf16.msra.mxu0 0
      %1071 = vmatprep.subr.bf16.mxu0 0
      %1072 = vmatpush1.bf16.msra.mxu0 0
      %1073 = vmatprep.subr.bf16.mxu0 0
      %1074 = vmatpush1.bf16.msra.mxu0 0
      %1075 = vmatprep.subr.bf16.mxu0 0
      %1076 = vmatpush1.bf16.msra.mxu0 0
      %1077 = vmatprep.subr.bf16.mxu0 0
      %1078 = vmatpush1.bf16.msra.mxu0 0
      %1079 = vmatprep.subr.bf16.mxu0 0
      %1080 = vmatpush1.bf16.msra.mxu0 0
      %1081 = vmatprep.subr.bf16.mxu0 0
      %1082 = vmatpush1.bf16.msra.mxu0 0
      %1083 = vmatprep.subr.bf16.mxu0 0
      %1084 = vmatpush1.bf16.msra.mxu0 0
      %1085 = vmatprep.subr.bf16.mxu0 0
      %1086 = vmatpush1.bf16.msra.mxu0 0
      %1087 = vmatprep.subr.bf16.mxu0 0
      %1088 = vmatpush1.bf16.msra.mxu0 0
      %1089 = vmatprep.mubr.bf16.mxu0 0
      %1090 = vmatmul.mubr.bf16.gmra.mrb[0].mxu0 %v1007
      %v1091 = vpop.f32.mrb[0].mxu0
      %v1092 = vadd.f32 %v800, %v1091
      %v1093 = vpop.f32.mrb[0].mxu0
      %v1094 = vpop.f32.mrb[0].mxu0
      %v1095 = vadd.f32 %v803, %v1094
      %v1096 = vpop.f32.mrb[0].mxu0
      %1097 = vmatprep.mubr.bf16.mxu0 0
      %1098 = vmatmul.mubr.bf16.gmra.mrb[0].mxu0 %v1010
      %v1099 = vpop.f32.mrb[0].mxu0
      %v1100 = vadd.f32 %v808, %v1099
      %v1101 = vpop.f32.mrb[0].mxu0
      %v1102 = vpop.f32.mrb[0].mxu0
      %v1103 = vadd.f32 %v811, %v1102
      %v1104 = vpop.f32.mrb[0].mxu0
      %1105 = vmatprep.mubr.bf16.mxu0 0
      %1106 = vmatmul.mubr.bf16.gmra.mrb[0].mxu0 %v1013
      %v1107 = vpop.f32.mrb[0].mxu0
      %v1108 = vadd.f32 %v816, %v1107
      %v1109 = vpop.f32.mrb[0].mxu0
      %v1110 = vpop.f32.mrb[0].mxu0
      %v1111 = vadd.f32 %v819, %v1110
      %v1112 = vpop.f32.mrb[0].mxu0
      %1113 = vmatprep.mubr.bf16.mxu0 0
      %1114 = vmatmul.mubr.bf16.gmra.mrb[0].mxu0 %v1016
      %v1115 = vpop.f32.mrb[0].mxu0
      %v1116 = vadd.f32 %v824, %v1115
      %v1117 = vpop.f32.mrb[0].mxu0
      %v1118 = vpop.f32.mrb[0].mxu0
      %v1119 = vadd.f32 %v827, %v1118
      %v1120 = vpop.f32.mrb[0].mxu0
      %1121 = vmatprep.mubr.bf16.mxu0 0
      %1122 = vmatmul.mubr.bf16.gmra.mrb[0].mxu0 %v1019
      %v1123 = vpop.f32.mrb[0].mxu0
      %v1124 = vadd.f32 %v832, %v1123
      %v1125 = vpop.f32.mrb[0].mxu0
      %v1126 = vpop.f32.mrb[0].mxu0
      %v1127 = vadd.f32 %v835, %v1126
      %v1128 = vpop.f32.mrb[0].mxu0
      %1129 = vmatprep.mubr.bf16.mxu0 0
      %1130 = vmatmul.mubr.bf16.gmra.mrb[0].mxu0 %v1022
      %v1131 = vpop.f32.mrb[0].mxu0
      %v1132 = vadd.f32 %v840, %v1131
      %v1133 = vpop.f32.mrb[0].mxu0
      %v1134 = vpop.f32.mrb[0].mxu0
      %v1135 = vadd.f32 %v843, %v1134
      %v1136 = vpop.f32.mrb[0].mxu0
      %1137 = vmatprep.mubr.bf16.mxu0 0
      %1138 = vmatmul.mubr.bf16.gmra.mrb[0].mxu0 %v1025
      %v1139 = vpop.f32.mrb[0].mxu0
      %v1140 = vadd.f32 %v848, %v1139
      %v1141 = vpop.f32.mrb[0].mxu0
      %v1142 = vpop.f32.mrb[0].mxu0
      %v1143 = vadd.f32 %v851, %v1142
      %v1144 = vpop.f32.mrb[0].mxu0
      %1145 = vmatprep.mubr.bf16.mxu0 0
      %1146 = vmatmul.mubr.bf16.gmra.mrb[0].mxu0 %v1028
      %v1147 = vpop.f32.mrb[0].mxu0
      %v1148 = vadd.f32 %v856, %v1147
      %v1149 = vpop.f32.mrb[0].mxu0
      %v1150 = vpop.f32.mrb[0].mxu0
      %v1151 = vadd.f32 %v859, %v1150
      %v1152 = vpop.f32.mrb[0].mxu0
      %1153 = vmatprep.mubr.bf16.mxu0 0
      %1154 = vmatmul.mubr.bf16.gmra.mrb[0].mxu0 %v1031
      %v1155 = vpop.f32.mrb[0].mxu0
      %v1156 = vadd.f32 %v864, %v1155
      %v1157 = vpop.f32.mrb[0].mxu0
      %v1158 = vpop.f32.mrb[0].mxu0
      %v1159 = vadd.f32 %v867, %v1158
      %v1160 = vpop.f32.mrb[0].mxu0
      %1161 = vmatprep.mubr.bf16.mxu0 0
      %1162 = vmatmul.mubr.bf16.gmra.mrb[0].mxu0 %v1034
      %v1163 = vpop.f32.mrb[0].mxu0
      %v1164 = vadd.f32 %v872, %v1163
      %v1165 = vpop.f32.mrb[0].mxu0
      %v1166 = vpop.f32.mrb[0].mxu0
      %v1167 = vadd.f32 %v875, %v1166
      %v1168 = vpop.f32.mrb[0].mxu0
      %1169 = vmatprep.mubr.bf16.mxu0 0
      %1170 = vmatmul.mubr.bf16.gmra.mrb[0].mxu0 %v1037
      %v1171 = vpop.f32.mrb[0].mxu0
      %v1172 = vadd.f32 %v880, %v1171
      %v1173 = vpop.f32.mrb[0].mxu0
      %v1174 = vpop.f32.mrb[0].mxu0
      %v1175 = vadd.f32 %v883, %v1174
      %v1176 = vpop.f32.mrb[0].mxu0
      %1177 = vmatprep.mubr.bf16.mxu0 0
      %1178 = vmatmul.mubr.bf16.gmra.mrb[0].mxu0 %v1040
      %v1179 = vpop.f32.mrb[0].mxu0
      %v1180 = vadd.f32 %v888, %v1179
      %v1181 = vpop.f32.mrb[0].mxu0
      %v1182 = vpop.f32.mrb[0].mxu0
      %v1183 = vadd.f32 %v891, %v1182
      %v1184 = vpop.f32.mrb[0].mxu0
      %1185 = vmatprep.mubr.bf16.mxu0 0
      %1186 = vmatmul.mubr.bf16.gmra.mrb[0].mxu0 %v1043
      %v1187 = vpop.f32.mrb[0].mxu0
      %v1188 = vadd.f32 %v896, %v1187
      %v1189 = vpop.f32.mrb[0].mxu0
      %v1190 = vpop.f32.mrb[0].mxu0
      %v1191 = vadd.f32 %v899, %v1190
      %v1192 = vpop.f32.mrb[0].mxu0
      %1193 = vmatprep.mubr.bf16.mxu0 0
      %1194 = vmatmul.mubr.bf16.gmra.mrb[0].mxu0 %v1046
      %v1195 = vpop.f32.mrb[0].mxu0
      %v1196 = vadd.f32 %v904, %v1195
      %v1197 = vpop.f32.mrb[0].mxu0
      %v1198 = vpop.f32.mrb[0].mxu0
      %v1199 = vadd.f32 %v907, %v1198
      %v1200 = vpop.f32.mrb[0].mxu0
      %1201 = vmatprep.mubr.bf16.mxu0 0
      %1202 = vmatmul.mubr.bf16.gmra.mrb[0].mxu0 %v1049
      %v1203 = vpop.f32.mrb[0].mxu0
      %v1204 = vadd.f32 %v912, %v1203
      %v1205 = vpop.f32.mrb[0].mxu0
      %v1206 = vpop.f32.mrb[0].mxu0
      %v1207 = vadd.f32 %v915, %v1206
      %v1208 = vpop.f32.mrb[0].mxu0
      %1209 = vmatprep.mubr.bf16.mxu0 0
      %1210 = vmatmul.mubr.bf16.gmra.mrb[0].mxu0 %v1052
      %v1211 = vpop.f32.mrb[0].mxu0
      %v1212 = vadd.f32 %v920, %v1211
      %v1213 = vpop.f32.mrb[0].mxu0
      %v1214 = vpop.f32.mrb[0].mxu0
      %v1215 = vadd.f32 %v923, %v1214
      %v1216 = vpop.f32.mrb[0].mxu0
      %1217 = vdwg.mxu0
      %v1218 = vld [vmem:[%s219] sm:$0xe]
      %v1219 = vld [vmem:[%s219 + $0xc] sm:$0xe]
      %v1220 = vld [vmem:[%s219 + $0x18] sm:$0xe]
      %v1221 = vld [vmem:[%s219 + $0x24] sm:$0xe]
      %v1222 = vld [vmem:[%s219 + $0x30] sm:$0xe]
      %v1223 = vld [vmem:[%s219 + $0x3c] sm:$0xe]
      %v1224 = vld [vmem:[%s219 + $0x48] sm:$0xe]
      %v1225 = vld [vmem:[%s219 + $0x54] sm:$0xe]
      %v1226 = vld [vmem:[%s219 + $0x60] sm:$0xe]
      %v1227 = vld [vmem:[%s219 + $0x6c] sm:$0xe]
      %v1228 = vld [vmem:[%s219 + $0x78] sm:$0xe]
      %v1229 = vld [vmem:[%s219 + $0x84] sm:$0xe]
      %v1230 = vld [vmem:[%s219 + $0x90] sm:$0xe]
      %v1231 = vld [vmem:[%s219 + $0x9c] sm:$0xe]
      %v1232 = vld [vmem:[%s219 + $0xa8] sm:$0xe]
      %v1233 = vld [vmem:[%s219 + $0xb4] sm:$0xe]
      %vm1266 = vcmask 1042432
      %vm1267 = vcmask 1046532
      %vm1268 = vmor %vm1266, %vm1267
      %v1269 = vrot.slane %v1218, 5
      %v1270 = vrot.slane %v1269, 4
      %v1271 = vrot.slane %v227, 5
      %v1272 = vsel %vm1268, %v1270, %v1271
      %v1273 = vrot.slane %v1271, 4
      %v1274 = vrot.slane %v259, 5
      %v1275 = vsel %vm1268, %v1273, %v1274
      %v1276 = vrot.slane %v1219, 5
      %v1277 = vrot.slane %v1276, 4
      %v1278 = vrot.slane %v229, 5
      %v1279 = vsel %vm1268, %v1277, %v1278
      %v1280 = vrot.slane %v1278, 4
      %v1281 = vrot.slane %v260, 5
      %v1282 = vsel %vm1268, %v1280, %v1281
      %v1283 = vrot.slane %v1220, 5
      %v1284 = vrot.slane %v1283, 4
      %v1285 = vrot.slane %v231, 5
      %v1286 = vsel %vm1268, %v1284, %v1285
      %v1287 = vrot.slane %v1285, 4
      %v1288 = vrot.slane %v261, 5
      %v1289 = vsel %vm1268, %v1287, %v1288
      %v1290 = vrot.slane %v1221, 5
      %v1291 = vrot.slane %v1290, 4
      %v1292 = vrot.slane %v233, 5
      %v1293 = vsel %vm1268, %v1291, %v1292
      %v1294 = vrot.slane %v1292, 4
      %v1295 = vrot.slane %v262, 5
      %v1296 = vsel %vm1268, %v1294, %v1295
      %v1297 = vrot.slane %v1222, 5
      %v1298 = vrot.slane %v1297, 4
      %v1299 = vrot.slane %v235, 5
      %v1300 = vsel %vm1268, %v1298, %v1299
      %v1301 = vrot.slane %v1299, 4
      %v1302 = vrot.slane %v263, 5
      %v1303 = vsel %vm1268, %v1301, %v1302
      %v1304 = vrot.slane %v1223, 5
      %v1305 = vrot.slane %v1304, 4
      %v1306 = vrot.slane %v237, 5
      %v1307 = vsel %vm1268, %v1305, %v1306
      %v1308 = vrot.slane %v1306, 4
      %v1309 = vrot.slane %v264, 5
      %v1310 = vsel %vm1268, %v1308, %v1309
      %v1311 = vrot.slane %v1224, 5
      %v1312 = vrot.slane %v1311, 4
      %v1313 = vrot.slane %v239, 5
      %v1314 = vsel %vm1268, %v1312, %v1313
      %v1315 = vrot.slane %v1313, 4
      %v1316 = vrot.slane %v265, 5
      %v1317 = vsel %vm1268, %v1315, %v1316
      %v1318 = vrot.slane %v1225, 5
      %v1319 = vrot.slane %v1318, 4
      %v1320 = vrot.slane %v241, 5
      %v1321 = vsel %vm1268, %v1319, %v1320
      %v1322 = vrot.slane %v1320, 4
      %v1323 = vrot.slane %v266, 5
      %v1324 = vsel %vm1268, %v1322, %v1323
      %v1325 = vrot.slane %v1226, 5
      %v1326 = vrot.slane %v1325, 4
      %v1327 = vrot.slane %v243, 5
      %v1328 = vsel %vm1268, %v1326, %v1327
      %v1329 = vrot.slane %v1327, 4
      %v1330 = vrot.slane %v267, 5
      %v1331 = vsel %vm1268, %v1329, %v1330
      %v1332 = vrot.slane %v1227, 5
      %v1333 = vrot.slane %v1332, 4
      %v1334 = vrot.slane %v245, 5
      %v1335 = vsel %vm1268, %v1333, %v1334
      %v1336 = vrot.slane %v1334, 4
      %v1337 = vrot.slane %v268, 5
      %v1338 = vsel %vm1268, %v1336, %v1337
      %v1339 = vrot.slane %v1228, 5
      %v1340 = vrot.slane %v1339, 4
      %v1341 = vrot.slane %v247, 5
      %v1342 = vsel %vm1268, %v1340, %v1341
      %v1343 = vrot.slane %v1341, 4
      %v1344 = vrot.slane %v269, 5
      %v1345 = vsel %vm1268, %v1343, %v1344
      %v1346 = vrot.slane %v1229, 5
      %v1347 = vrot.slane %v1346, 4
      %v1348 = vrot.slane %v249, 5
      %v1349 = vsel %vm1268, %v1347, %v1348
      %v1350 = vrot.slane %v1348, 4
      %v1351 = vrot.slane %v270, 5
      %v1352 = vsel %vm1268, %v1350, %v1351
      %v1353 = vrot.slane %v1230, 5
      %v1354 = vrot.slane %v1353, 4
      %v1355 = vrot.slane %v251, 5
      %v1356 = vsel %vm1268, %v1354, %v1355
      %v1357 = vrot.slane %v1355, 4
      %v1358 = vrot.slane %v271, 5
      %v1359 = vsel %vm1268, %v1357, %v1358
      %v1360 = vrot.slane %v1231, 5
      %v1361 = vrot.slane %v1360, 4
      %v1362 = vrot.slane %v253, 5
      %v1363 = vsel %vm1268, %v1361, %v1362
      %v1364 = vrot.slane %v1362, 4
      %v1365 = vrot.slane %v272, 5
      %v1366 = vsel %vm1268, %v1364, %v1365
      %v1367 = vrot.slane %v1232, 5
      %v1368 = vrot.slane %v1367, 4
      %v1369 = vrot.slane %v255, 5
      %v1370 = vsel %vm1268, %v1368, %v1369
      %v1371 = vrot.slane %v1369, 4
      %v1372 = vrot.slane %v273, 5
      %v1373 = vsel %vm1268, %v1371, %v1372
      %v1374 = vrot.slane %v1233, 5
      %v1375 = vrot.slane %v1374, 4
      %v1376 = vrot.slane %v257, 5
      %v1377 = vsel %vm1268, %v1375, %v1376
      %v1378 = vrot.slane %v1376, 4
      %v1379 = vrot.slane %v274, 5
      %v1380 = vsel %vm1268, %v1378, %v1379
      %s1381 = scalar_lea.vmem %s1, 4
      %v1382 = vld [vmem:[%s1381] sm:$0x3]
      %v1383 = vunpack.c.l.b16 %v1272
      %v1384 = vunpack.c.l.b16 %v1275
      %v1385 = vunpack.c.l.b16 %v1279
      %v1386 = vunpack.c.l.b16 %v1282
      %v1387 = vunpack.c.l.b16 %v1286
      %v1388 = vunpack.c.l.b16 %v1289
      %v1389 = vunpack.c.l.b16 %v1293
      %v1390 = vunpack.c.l.b16 %v1296
      %v1391 = vunpack.c.l.b16 %v1300
      %v1392 = vunpack.c.l.b16 %v1303
      %v1393 = vunpack.c.l.b16 %v1307
      %v1394 = vunpack.c.l.b16 %v1310
      %v1395 = vunpack.c.l.b16 %v1314
      %v1396 = vunpack.c.l.b16 %v1317
      %v1397 = vunpack.c.l.b16 %v1321
      %v1398 = vunpack.c.l.b16 %v1324
      %v1399 = vunpack.c.l.b16 %v1328
      %v1400 = vunpack.c.l.b16 %v1331
      %v1401 = vunpack.c.l.b16 %v1335
      %v1402 = vunpack.c.l.b16 %v1338
      %v1403 = vunpack.c.l.b16 %v1342
      %v1404 = vunpack.c.l.b16 %v1345
      %v1405 = vunpack.c.l.b16 %v1349
      %v1406 = vunpack.c.l.b16 %v1352
      %v1407 = vunpack.c.l.b16 %v1356
      %v1408 = vunpack.c.l.b16 %v1359
      %v1409 = vunpack.c.l.b16 %v1363
      %v1410 = vunpack.c.l.b16 %v1366
      %v1411 = vunpack.c.l.b16 %v1370
      %v1412 = vunpack.c.l.b16 %v1373
      %v1413 = vunpack.c.l.b16 %v1377
      %v1414 = vunpack.c.l.b16 %v1380
      %v1415 = vpack.c.b16 %v1384, %v1383
      %v1416 = vpack.c.b16 %v1386, %v1385
      %v1417 = vpack.c.b16 %v1388, %v1387
      %v1418 = vpack.c.b16 %v1390, %v1389
      %v1419 = vpack.c.b16 %v1392, %v1391
      %v1420 = vpack.c.b16 %v1394, %v1393
      %v1421 = vpack.c.b16 %v1396, %v1395
      %v1422 = vpack.c.b16 %v1398, %v1397
      %v1423 = vpack.c.b16 %v1400, %v1399
      %v1424 = vpack.c.b16 %v1402, %v1401
      %v1425 = vpack.c.b16 %v1404, %v1403
      %v1426 = vpack.c.b16 %v1406, %v1405
      %v1427 = vpack.c.b16 %v1408, %v1407
      %v1428 = vpack.c.b16 %v1410, %v1409
      %v1429 = vpack.c.b16 %v1412, %v1411
      %v1430 = vpack.c.b16 %v1414, %v1413
      %v1432 = vsel %vm712, %v1415, 0
      %v1435 = vsel %vm712, %v1416, 0
      %v1438 = vsel %vm712, %v1417, 0
      %v1441 = vsel %vm712, %v1418, 0
      %v1444 = vsel %vm712, %v1419, 0
      %v1447 = vsel %vm712, %v1420, 0
      %v1450 = vsel %vm712, %v1421, 0
      %v1453 = vsel %vm712, %v1422, 0
      %v1456 = vsel %vm712, %v1423, 0
      %v1459 = vsel %vm712, %v1424, 0
      %v1462 = vsel %vm712, %v1425, 0
      %v1465 = vsel %vm712, %v1426, 0
      %v1468 = vsel %vm712, %v1427, 0
      %v1471 = vsel %vm712, %v1428, 0
      %v1474 = vsel %vm712, %v1429, 0
      %v1477 = vsel %vm712, %v1430, 0
      %v1480 = vsel %vm761, %v1382, 0
      %1482 = vmatprep.subr.bf16.mxu0 0
      %1483 = vmatpush1.bf16.msra.mxu0 %v1480
      %1484 = vmatprep.subr.bf16.mxu0 0
      %1485 = vmatpush1.bf16.msra.mxu0 0
      %1486 = vmatprep.subr.bf16.mxu0 0
      %1487 = vmatpush1.bf16.msra.mxu0 0
      %1488 = vmatprep.subr.bf16.mxu0 0
      %1489 = vmatpush1.bf16.msra.mxu0 0
      %1490 = vmatprep.subr.bf16.mxu0 0
      %1491 = vmatpush1.bf16.msra.mxu0 0
      %1492 = vmatprep.subr.bf16.mxu0 0
      %1493 = vmatpush1.bf16.msra.mxu0 0
      %1494 = vmatprep.subr.bf16.mxu0 0
      %1495 = vmatpush1.bf16.msra.mxu0 0
      %1496 = vmatprep.subr.bf16.mxu0 0
      %1497 = vmatpush1.bf16.msra.mxu0 0
      %1498 = vmatprep.subr.bf16.mxu0 0
      %1499 = vmatpush1.bf16.msra.mxu0 0
      %1500 = vmatprep.subr.bf16.mxu0 0
      %1501 = vmatpush1.bf16.msra.mxu0 0
      %1502 = vmatprep.subr.bf16.mxu0 0
      %1503 = vmatpush1.bf16.msra.mxu0 0
      %1504 = vmatprep.subr.bf16.mxu0 0
      %1505 = vmatpush1.bf16.msra.mxu0 0
      %1506 = vmatprep.subr.bf16.mxu0 0
      %1507 = vmatpush1.bf16.msra.mxu0 0
      %1508 = vmatprep.subr.bf16.mxu0 0
      %1509 = vmatpush1.bf16.msra.mxu0 0
      %1510 = vmatprep.subr.bf16.mxu0 0
      %1511 = vmatpush1.bf16.msra.mxu0 0
      %1512 = vmatprep.subr.bf16.mxu0 0
      %1513 = vmatpush1.bf16.msra.mxu0 0
      %1514 = vmatprep.mubr.bf16.mxu0 0
      %1515 = vmatmul.mubr.bf16.gmra.mrb[0].mxu0 %v1432
      %v1516 = vpop.f32.mrb[0].mxu0
      %v1517 = vadd.f32 0.0, %v1516
      %v1518 = vpop.f32.mrb[0].mxu0
      %v1519 = vpop.f32.mrb[0].mxu0
      %v1520 = vadd.f32 0.0, %v1519
      %v1521 = vpop.f32.mrb[0].mxu0
      %1522 = vmatprep.mubr.bf16.mxu0 0
      %1523 = vmatmul.mubr.bf16.gmra.mrb[0].mxu0 %v1435
      %v1524 = vpop.f32.mrb[0].mxu0
      %v1525 = vadd.f32 0.0, %v1524
      %v1526 = vpop.f32.mrb[0].mxu0
      %v1527 = vpop.f32.mrb[0].mxu0
      %v1528 = vadd.f32 0.0, %v1527
      %v1529 = vpop.f32.mrb[0].mxu0
      %1530 = vmatprep.mubr.bf16.mxu0 0
      %1531 = vmatmul.mubr.bf16.gmra.mrb[0].mxu0 %v1438
      %v1532 = vpop.f32.mrb[0].mxu0
      %v1533 = vadd.f32 0.0, %v1532
      %v1534 = vpop.f32.mrb[0].mxu0
      %v1535 = vpop.f32.mrb[0].mxu0
      %v1536 = vadd.f32 0.0, %v1535
      %v1537 = vpop.f32.mrb[0].mxu0
      %1538 = vmatprep.mubr.bf16.mxu0 0
      %1539 = vmatmul.mubr.bf16.gmra.mrb[0].mxu0 %v1441
      %v1540 = vpop.f32.mrb[0].mxu0
      %v1541 = vadd.f32 0.0, %v1540
      %v1542 = vpop.f32.mrb[0].mxu0
      %v1543 = vpop.f32.mrb[0].mxu0
      %v1544 = vadd.f32 0.0, %v1543
      %v1545 = vpop.f32.mrb[0].mxu0
      %1546 = vmatprep.mubr.bf16.mxu0 0
      %1547 = vmatmul.mubr.bf16.gmra.mrb[0].mxu0 %v1444
      %v1548 = vpop.f32.mrb[0].mxu0
      %v1549 = vadd.f32 0.0, %v1548
      %v1550 = vpop.f32.mrb[0].mxu0
      %v1551 = vpop.f32.mrb[0].mxu0
      %v1552 = vadd.f32 0.0, %v1551
      %v1553 = vpop.f32.mrb[0].mxu0
      %1554 = vmatprep.mubr.bf16.mxu0 0
      %1555 = vmatmul.mubr.bf16.gmra.mrb[0].mxu0 %v1447
      %v1556 = vpop.f32.mrb[0].mxu0
      %v1557 = vadd.f32 0.0, %v1556
      %v1558 = vpop.f32.mrb[0].mxu0
      %v1559 = vpop.f32.mrb[0].mxu0
      %v1560 = vadd.f32 0.0, %v1559
      %v1561 = vpop.f32.mrb[0].mxu0
      %1562 = vmatprep.mubr.bf16.mxu0 0
      %1563 = vmatmul.mubr.bf16.gmra.mrb[0].mxu0 %v1450
      %v1564 = vpop.f32.mrb[0].mxu0
      %v1565 = vadd.f32 0.0, %v1564
      %v1566 = vpop.f32.mrb[0].mxu0
      %v1567 = vpop.f32.mrb[0].mxu0
      %v1568 = vadd.f32 0.0, %v1567
      %v1569 = vpop.f32.mrb[0].mxu0
      %1570 = vmatprep.mubr.bf16.mxu0 0
      %1571 = vmatmul.mubr.bf16.gmra.mrb[0].mxu0 %v1453
      %v1572 = vpop.f32.mrb[0].mxu0
      %v1573 = vadd.f32 0.0, %v1572
      %v1574 = vpop.f32.mrb[0].mxu0
      %v1575 = vpop.f32.mrb[0].mxu0
      %v1576 = vadd.f32 0.0, %v1575
      %v1577 = vpop.f32.mrb[0].mxu0
      %1578 = vmatprep.mubr.bf16.mxu0 0
      %1579 = vmatmul.mubr.bf16.gmra.mrb[0].mxu0 %v1456
      %v1580 = vpop.f32.mrb[0].mxu0
      %v1581 = vadd.f32 0.0, %v1580
      %v1582 = vpop.f32.mrb[0].mxu0
      %v1583 = vpop.f32.mrb[0].mxu0
      %v1584 = vadd.f32 0.0, %v1583
      %v1585 = vpop.f32.mrb[0].mxu0
      %1586 = vmatprep.mubr.bf16.mxu0 0
      %1587 = vmatmul.mubr.bf16.gmra.mrb[0].mxu0 %v1459
      %v1588 = vpop.f32.mrb[0].mxu0
      %v1589 = vadd.f32 0.0, %v1588
      %v1590 = vpop.f32.mrb[0].mxu0
      %v1591 = vpop.f32.mrb[0].mxu0
      %v1592 = vadd.f32 0.0, %v1591
      %v1593 = vpop.f32.mrb[0].mxu0
      %1594 = vmatprep.mubr.bf16.mxu0 0
      %1595 = vmatmul.mubr.bf16.gmra.mrb[0].mxu0 %v1462
      %v1596 = vpop.f32.mrb[0].mxu0
      %v1597 = vadd.f32 0.0, %v1596
      %v1598 = vpop.f32.mrb[0].mxu0
      %v1599 = vpop.f32.mrb[0].mxu0
      %v1600 = vadd.f32 0.0, %v1599
      %v1601 = vpop.f32.mrb[0].mxu0
      %1602 = vmatprep.mubr.bf16.mxu0 0
      %1603 = vmatmul.mubr.bf16.gmra.mrb[0].mxu0 %v1465
      %v1604 = vpop.f32.mrb[0].mxu0
      %v1605 = vadd.f32 0.0, %v1604
      %v1606 = vpop.f32.mrb[0].mxu0
      %v1607 = vpop.f32.mrb[0].mxu0
      %v1608 = vadd.f32 0.0, %v1607
      %v1609 = vpop.f32.mrb[0].mxu0
      %1610 = vmatprep.mubr.bf16.mxu0 0
      %1611 = vmatmul.mubr.bf16.gmra.mrb[0].mxu0 %v1468
      %v1612 = vpop.f32.mrb[0].mxu0
      %v1613 = vadd.f32 0.0, %v1612
      %v1614 = vpop.f32.mrb[0].mxu0
      %v1615 = vpop.f32.mrb[0].mxu0
      %v1616 = vadd.f32 0.0, %v1615
      %v1617 = vpop.f32.mrb[0].mxu0
      %1618 = vmatprep.mubr.bf16.mxu0 0
      %1619 = vmatmul.mubr.bf16.gmra.mrb[0].mxu0 %v1471
      %v1620 = vpop.f32.mrb[0].mxu0
      %v1621 = vadd.f32 0.0, %v1620
      %v1622 = vpop.f32.mrb[0].mxu0
      %v1623 = vpop.f32.mrb[0].mxu0
      %v1624 = vadd.f32 0.0, %v1623
      %v1625 = vpop.f32.mrb[0].mxu0
      %1626 = vmatprep.mubr.bf16.mxu0 0
      %1627 = vmatmul.mubr.bf16.gmra.mrb[0].mxu0 %v1474
      %v1628 = vpop.f32.mrb[0].mxu0
      %v1629 = vadd.f32 0.0, %v1628
      %v1630 = vpop.f32.mrb[0].mxu0
      %v1631 = vpop.f32.mrb[0].mxu0
      %v1632 = vadd.f32 0.0, %v1631
      %v1633 = vpop.f32.mrb[0].mxu0
      %1634 = vmatprep.mubr.bf16.mxu0 0
      %1635 = vmatmul.mubr.bf16.gmra.mrb[0].mxu0 %v1477
      %v1636 = vpop.f32.mrb[0].mxu0
      %v1637 = vadd.f32 0.0, %v1636
      %v1638 = vpop.f32.mrb[0].mxu0
      %v1639 = vpop.f32.mrb[0].mxu0
      %v1640 = vadd.f32 0.0, %v1639
      %v1641 = vpop.f32.mrb[0].mxu0
      %1642 = vdwg.mxu0
      %v1643 = vadd.f32 %v1092, %v1517
      %v1644 = vadd.f32 %v1095, %v1520
      %v1645 = vadd.f32 %v1100, %v1525
      %v1646 = vadd.f32 %v1103, %v1528
      %v1647 = vadd.f32 %v1108, %v1533
      %v1648 = vadd.f32 %v1111, %v1536
      %v1649 = vadd.f32 %v1116, %v1541
      %v1650 = vadd.f32 %v1119, %v1544
      %v1651 = vadd.f32 %v1124, %v1549
      %v1652 = vadd.f32 %v1127, %v1552
      %v1653 = vadd.f32 %v1132, %v1557
      %v1654 = vadd.f32 %v1135, %v1560
      %v1655 = vadd.f32 %v1140, %v1565
      %v1656 = vadd.f32 %v1143, %v1568
      %v1657 = vadd.f32 %v1148, %v1573
      %v1658 = vadd.f32 %v1151, %v1576
      %v1659 = vadd.f32 %v1156, %v1581
      %v1660 = vadd.f32 %v1159, %v1584
      %v1661 = vadd.f32 %v1164, %v1589
      %v1662 = vadd.f32 %v1167, %v1592
      %v1663 = vadd.f32 %v1172, %v1597
      %v1664 = vadd.f32 %v1175, %v1600
      %v1665 = vadd.f32 %v1180, %v1605
      %v1666 = vadd.f32 %v1183, %v1608
      %v1667 = vadd.f32 %v1188, %v1613
      %v1668 = vadd.f32 %v1191, %v1616
      %v1669 = vadd.f32 %v1196, %v1621
      %v1670 = vadd.f32 %v1199, %v1624
      %v1671 = vadd.f32 %v1204, %v1629
      %v1672 = vadd.f32 %v1207, %v1632
      %v1673 = vadd.f32 %v1212, %v1637
      %v1674 = vadd.f32 %v1215, %v1640
      %s1675 = scalar_lea.vmem %s219, 12
      %v1676 = vld [vmem:[%s1675] sm:$0xf]
      %v1677 = vld [vmem:[%s1675 + $0x4] sm:$0xf]
      %v1678 = vld [vmem:[%s1675 + $0xc] sm:$0xf]
      %v1679 = vld [vmem:[%s1675 + $0x10] sm:$0xf]
      %v1680 = vld [vmem:[%s1675 + $0x18] sm:$0xf]
      %v1681 = vld [vmem:[%s1675 + $0x1c] sm:$0xf]
      %v1682 = vld [vmem:[%s1675 + $0x24] sm:$0xf]
      %v1683 = vld [vmem:[%s1675 + $0x28] sm:$0xf]
      %v1684 = vld [vmem:[%s1675 + $0x30] sm:$0xf]
      %v1685 = vld [vmem:[%s1675 + $0x34] sm:$0xf]
      %v1686 = vld [vmem:[%s1675 + $0x3c] sm:$0xf]
      %v1687 = vld [vmem:[%s1675 + $0x40] sm:$0xf]
      %v1688 = vld [vmem:[%s1675 + $0x48] sm:$0xf]
      %v1689 = vld [vmem:[%s1675 + $0x4c] sm:$0xf]
      %v1690 = vld [vmem:[%s1675 + $0x54] sm:$0xf]
      %v1691 = vld [vmem:[%s1675 + $0x58] sm:$0xf]
      %v1692 = vld [vmem:[%s1675 + $0x60] sm:$0xf]
      %v1693 = vld [vmem:[%s1675 + $0x64] sm:$0xf]
      %v1694 = vld [vmem:[%s1675 + $0x6c] sm:$0xf]
      %v1695 = vld [vmem:[%s1675 + $0x70] sm:$0xf]
      %v1696 = vld [vmem:[%s1675 + $0x78] sm:$0xf]
      %v1697 = vld [vmem:[%s1675 + $0x7c] sm:$0xf]
      %v1698 = vld [vmem:[%s1675 + $0x84] sm:$0xf]
      %v1699 = vld [vmem:[%s1675 + $0x88] sm:$0xf]
      %v1700 = vld [vmem:[%s1675 + $0x90] sm:$0xf]
      %v1701 = vld [vmem:[%s1675 + $0x94] sm:$0xf]
      %v1702 = vld [vmem:[%s1675 + $0x9c] sm:$0xf]
      %v1703 = vld [vmem:[%s1675 + $0xa0] sm:$0xf]
      %v1704 = vld [vmem:[%s1675 + $0xa8] sm:$0xf]
      %v1705 = vld [vmem:[%s1675 + $0xac] sm:$0xf]
      %v1706 = vld [vmem:[%s1675 + $0xb4] sm:$0xf]
      %v1707 = vld [vmem:[%s1675 + $0xb8] sm:$0xf]
      %s1708 = scalar_lea.vmem %s1, 6
      %v1709 = vld [vmem:[%s1708] sm:$0x3]
      %v1742 = vunpack.c.l.b16 %v1676
      %v1743 = vunpack.c.l.b16 %v1677
      %v1744 = vunpack.c.l.b16 %v1678
      %v1745 = vunpack.c.l.b16 %v1679
      %v1746 = vunpack.c.l.b16 %v1680
      %v1747 = vunpack.c.l.b16 %v1681
      %v1748 = vunpack.c.l.b16 %v1682
      %v1749 = vunpack.c.l.b16 %v1683
      %v1750 = vunpack.c.l.b16 %v1684
      %v1751 = vunpack.c.l.b16 %v1685
      %v1752 = vunpack.c.l.b16 %v1686
      %v1753 = vunpack.c.l.b16 %v1687
      %v1754 = vunpack.c.l.b16 %v1688
      %v1755 = vunpack.c.l.b16 %v1689
      %v1756 = vunpack.c.l.b16 %v1690
      %v1757 = vunpack.c.l.b16 %v1691
      %v1758 = vunpack.c.l.b16 %v1692
      %v1759 = vunpack.c.l.b16 %v1693
      %v1760 = vunpack.c.l.b16 %v1694
      %v1761 = vunpack.c.l.b16 %v1695
      %v1762 = vunpack.c.l.b16 %v1696
      %v1763 = vunpack.c.l.b16 %v1697
      %v1764 = vunpack.c.l.b16 %v1698
      %v1765 = vunpack.c.l.b16 %v1699
      %v1766 = vunpack.c.l.b16 %v1700
      %v1767 = vunpack.c.l.b16 %v1701
      %v1768 = vunpack.c.l.b16 %v1702
      %v1769 = vunpack.c.l.b16 %v1703
      %v1770 = vunpack.c.l.b16 %v1704
      %v1771 = vunpack.c.l.b16 %v1705
      %v1772 = vunpack.c.l.b16 %v1706
      %v1773 = vunpack.c.l.b16 %v1707
      %v1774 = vpack.c.b16 %v1743, %v1742
      %v1775 = vpack.c.b16 %v1745, %v1744
      %v1776 = vpack.c.b16 %v1747, %v1746
      %v1777 = vpack.c.b16 %v1749, %v1748
      %v1778 = vpack.c.b16 %v1751, %v1750
      %v1779 = vpack.c.b16 %v1753, %v1752
      %v1780 = vpack.c.b16 %v1755, %v1754
      %v1781 = vpack.c.b16 %v1757, %v1756
      %v1782 = vpack.c.b16 %v1759, %v1758
      %v1783 = vpack.c.b16 %v1761, %v1760
      %v1784 = vpack.c.b16 %v1763, %v1762
      %v1785 = vpack.c.b16 %v1765, %v1764
      %v1786 = vpack.c.b16 %v1767, %v1766
      %v1787 = vpack.c.b16 %v1769, %v1768
      %v1788 = vpack.c.b16 %v1771, %v1770
      %v1789 = vpack.c.b16 %v1773, %v1772
      %v1791 = vsel %vm712, %v1774, 0
      %v1794 = vsel %vm712, %v1775, 0
      %v1797 = vsel %vm712, %v1776, 0
      %v1800 = vsel %vm712, %v1777, 0
      %v1803 = vsel %vm712, %v1778, 0
      %v1806 = vsel %vm712, %v1779, 0
      %v1809 = vsel %vm712, %v1780, 0
      %v1812 = vsel %vm712, %v1781, 0
      %v1815 = vsel %vm712, %v1782, 0
      %v1818 = vsel %vm712, %v1783, 0
      %v1821 = vsel %vm712, %v1784, 0
      %v1824 = vsel %vm712, %v1785, 0
      %v1827 = vsel %vm712, %v1786, 0
      %v1830 = vsel %vm712, %v1787, 0
      %v1833 = vsel %vm712, %v1788, 0
      %v1836 = vsel %vm712, %v1789, 0
      %v1839 = vsel %vm761, %v1709, 0
      %1841 = vmatprep.subr.bf16.mxu0 0
      %1842 = vmatpush1.bf16.msra.mxu0 %v1839
      %1843 = vmatprep.subr.bf16.mxu0 0
      %1844 = vmatpush1.bf16.msra.mxu0 0
      %1845 = vmatprep.subr.bf16.mxu0 0
      %1846 = vmatpush1.bf16.msra.mxu0 0
      %1847 = vmatprep.subr.bf16.mxu0 0
      %1848 = vmatpush1.bf16.msra.mxu0 0
      %1849 = vmatprep.subr.bf16.mxu0 0
      %1850 = vmatpush1.bf16.msra.mxu0 0
      %1851 = vmatprep.subr.bf16.mxu0 0
      %1852 = vmatpush1.bf16.msra.mxu0 0
      %1853 = vmatprep.subr.bf16.mxu0 0
      %1854 = vmatpush1.bf16.msra.mxu0 0
      %1855 = vmatprep.subr.bf16.mxu0 0
      %1856 = vmatpush1.bf16.msra.mxu0 0
      %1857 = vmatprep.subr.bf16.mxu0 0
      %1858 = vmatpush1.bf16.msra.mxu0 0
      %1859 = vmatprep.subr.bf16.mxu0 0
      %1860 = vmatpush1.bf16.msra.mxu0 0
      %1861 = vmatprep.subr.bf16.mxu0 0
      %1862 = vmatpush1.bf16.msra.mxu0 0
      %1863 = vmatprep.subr.bf16.mxu0 0
      %1864 = vmatpush1.bf16.msra.mxu0 0
      %1865 = vmatprep.subr.bf16.mxu0 0
      %1866 = vmatpush1.bf16.msra.mxu0 0
      %1867 = vmatprep.subr.bf16.mxu0 0
      %1868 = vmatpush1.bf16.msra.mxu0 0
      %1869 = vmatprep.subr.bf16.mxu0 0
      %1870 = vmatpush1.bf16.msra.mxu0 0
      %1871 = vmatprep.subr.bf16.mxu0 0
      %1872 = vmatpush1.bf16.msra.mxu0 0
      %1873 = vmatprep.mubr.bf16.mxu0 0
      %1874 = vmatmul.mubr.bf16.gmra.mrb[0].mxu0 %v1791
      %v1875 = vpop.f32.mrb[0].mxu0
      %v1876 = vadd.f32 0.0, %v1875
      %v1877 = vpop.f32.mrb[0].mxu0
      %v1878 = vpop.f32.mrb[0].mxu0
      %v1879 = vadd.f32 0.0, %v1878
      %v1880 = vpop.f32.mrb[0].mxu0
      %1881 = vmatprep.mubr.bf16.mxu0 0
      %1882 = vmatmul.mubr.bf16.gmra.mrb[0].mxu0 %v1794
      %v1883 = vpop.f32.mrb[0].mxu0
      %v1884 = vadd.f32 0.0, %v1883
      %v1885 = vpop.f32.mrb[0].mxu0
      %v1886 = vpop.f32.mrb[0].mxu0
      %v1887 = vadd.f32 0.0, %v1886
      %v1888 = vpop.f32.mrb[0].mxu0
      %1889 = vmatprep.mubr.bf16.mxu0 0
      %1890 = vmatmul.mubr.bf16.gmra.mrb[0].mxu0 %v1797
      %v1891 = vpop.f32.mrb[0].mxu0
      %v1892 = vadd.f32 0.0, %v1891
      %v1893 = vpop.f32.mrb[0].mxu0
      %v1894 = vpop.f32.mrb[0].mxu0
      %v1895 = vadd.f32 0.0, %v1894
      %v1896 = vpop.f32.mrb[0].mxu0
      %1897 = vmatprep.mubr.bf16.mxu0 0
      %1898 = vmatmul.mubr.bf16.gmra.mrb[0].mxu0 %v1800
      %v1899 = vpop.f32.mrb[0].mxu0
      %v1900 = vadd.f32 0.0, %v1899
      %v1901 = vpop.f32.mrb[0].mxu0
      %v1902 = vpop.f32.mrb[0].mxu0
      %v1903 = vadd.f32 0.0, %v1902
      %v1904 = vpop.f32.mrb[0].mxu0
      %1905 = vmatprep.mubr.bf16.mxu0 0
      %1906 = vmatmul.mubr.bf16.gmra.mrb[0].mxu0 %v1803
      %v1907 = vpop.f32.mrb[0].mxu0
      %v1908 = vadd.f32 0.0, %v1907
      %v1909 = vpop.f32.mrb[0].mxu0
      %v1910 = vpop.f32.mrb[0].mxu0
      %v1911 = vadd.f32 0.0, %v1910
      %v1912 = vpop.f32.mrb[0].mxu0
      %1913 = vmatprep.mubr.bf16.mxu0 0
      %1914 = vmatmul.mubr.bf16.gmra.mrb[0].mxu0 %v1806
      %v1915 = vpop.f32.mrb[0].mxu0
      %v1916 = vadd.f32 0.0, %v1915
      %v1917 = vpop.f32.mrb[0].mxu0
      %v1918 = vpop.f32.mrb[0].mxu0
      %v1919 = vadd.f32 0.0, %v1918
      %v1920 = vpop.f32.mrb[0].mxu0
      %1921 = vmatprep.mubr.bf16.mxu0 0
      %1922 = vmatmul.mubr.bf16.gmra.mrb[0].mxu0 %v1809
      %v1923 = vpop.f32.mrb[0].mxu0
      %v1924 = vadd.f32 0.0, %v1923
      %v1925 = vpop.f32.mrb[0].mxu0
      %v1926 = vpop.f32.mrb[0].mxu0
      %v1927 = vadd.f32 0.0, %v1926
      %v1928 = vpop.f32.mrb[0].mxu0
      %1929 = vmatprep.mubr.bf16.mxu0 0
      %1930 = vmatmul.mubr.bf16.gmra.mrb[0].mxu0 %v1812
      %v1931 = vpop.f32.mrb[0].mxu0
      %v1932 = vadd.f32 0.0, %v1931
      %v1933 = vpop.f32.mrb[0].mxu0
      %v1934 = vpop.f32.mrb[0].mxu0
      %v1935 = vadd.f32 0.0, %v1934
      %v1936 = vpop.f32.mrb[0].mxu0
      %1937 = vmatprep.mubr.bf16.mxu0 0
      %1938 = vmatmul.mubr.bf16.gmra.mrb[0].mxu0 %v1815
      %v1939 = vpop.f32.mrb[0].mxu0
      %v1940 = vadd.f32 0.0, %v1939
      %v1941 = vpop.f32.mrb[0].mxu0
      %v1942 = vpop.f32.mrb[0].mxu0
      %v1943 = vadd.f32 0.0, %v1942
      %v1944 = vpop.f32.mrb[0].mxu0
      %1945 = vmatprep.mubr.bf16.mxu0 0
      %1946 = vmatmul.mubr.bf16.gmra.mrb[0].mxu0 %v1818
      %v1947 = vpop.f32.mrb[0].mxu0
      %v1948 = vadd.f32 0.0, %v1947
      %v1949 = vpop.f32.mrb[0].mxu0
      %v1950 = vpop.f32.mrb[0].mxu0
      %v1951 = vadd.f32 0.0, %v1950
      %v1952 = vpop.f32.mrb[0].mxu0
      %1953 = vmatprep.mubr.bf16.mxu0 0
      %1954 = vmatmul.mubr.bf16.gmra.mrb[0].mxu0 %v1821
      %v1955 = vpop.f32.mrb[0].mxu0
      %v1956 = vadd.f32 0.0, %v1955
      %v1957 = vpop.f32.mrb[0].mxu0
      %v1958 = vpop.f32.mrb[0].mxu0
      %v1959 = vadd.f32 0.0, %v1958
      %v1960 = vpop.f32.mrb[0].mxu0
      %1961 = vmatprep.mubr.bf16.mxu0 0
      %1962 = vmatmul.mubr.bf16.gmra.mrb[0].mxu0 %v1824
      %v1963 = vpop.f32.mrb[0].mxu0
      %v1964 = vadd.f32 0.0, %v1963
      %v1965 = vpop.f32.mrb[0].mxu0
      %v1966 = vpop.f32.mrb[0].mxu0
      %v1967 = vadd.f32 0.0, %v1966
      %v1968 = vpop.f32.mrb[0].mxu0
      %1969 = vmatprep.mubr.bf16.mxu0 0
      %1970 = vmatmul.mubr.bf16.gmra.mrb[0].mxu0 %v1827
      %v1971 = vpop.f32.mrb[0].mxu0
      %v1972 = vadd.f32 0.0, %v1971
      %v1973 = vpop.f32.mrb[0].mxu0
      %v1974 = vpop.f32.mrb[0].mxu0
      %v1975 = vadd.f32 0.0, %v1974
      %v1976 = vpop.f32.mrb[0].mxu0
      %1977 = vmatprep.mubr.bf16.mxu0 0
      %1978 = vmatmul.mubr.bf16.gmra.mrb[0].mxu0 %v1830
      %v1979 = vpop.f32.mrb[0].mxu0
      %v1980 = vadd.f32 0.0, %v1979
      %v1981 = vpop.f32.mrb[0].mxu0
      %v1982 = vpop.f32.mrb[0].mxu0
      %v1983 = vadd.f32 0.0, %v1982
      %v1984 = vpop.f32.mrb[0].mxu0
      %1985 = vmatprep.mubr.bf16.mxu0 0
      %1986 = vmatmul.mubr.bf16.gmra.mrb[0].mxu0 %v1833
      %v1987 = vpop.f32.mrb[0].mxu0
      %v1988 = vadd.f32 0.0, %v1987
      %v1989 = vpop.f32.mrb[0].mxu0
      %v1990 = vpop.f32.mrb[0].mxu0
      %v1991 = vadd.f32 0.0, %v1990
      %v1992 = vpop.f32.mrb[0].mxu0
      %1993 = vmatprep.mubr.bf16.mxu0 0
      %1994 = vmatmul.mubr.bf16.gmra.mrb[0].mxu0 %v1836
      %v1995 = vpop.f32.mrb[0].mxu0
      %v1996 = vadd.f32 0.0, %v1995
      %v1997 = vpop.f32.mrb[0].mxu0
      %v1998 = vpop.f32.mrb[0].mxu0
      %v1999 = vadd.f32 0.0, %v1998
      %v2000 = vpop.f32.mrb[0].mxu0
      %2001 = vdwg.mxu0
      %v2002 = vadd.f32 %v1643, %v1876
      %v2003 = vadd.f32 %v1644, %v1879
      %v2004 = vadd.f32 %v1645, %v1884
      %v2005 = vadd.f32 %v1646, %v1887
      %v2006 = vadd.f32 %v1647, %v1892
      %v2007 = vadd.f32 %v1648, %v1895
      %v2008 = vadd.f32 %v1649, %v1900
      %v2009 = vadd.f32 %v1650, %v1903
      %v2010 = vadd.f32 %v1651, %v1908
      %v2011 = vadd.f32 %v1652, %v1911
      %v2012 = vadd.f32 %v1653, %v1916
      %v2013 = vadd.f32 %v1654, %v1919
      %v2014 = vadd.f32 %v1655, %v1924
      %v2015 = vadd.f32 %v1656, %v1927
      %v2016 = vadd.f32 %v1657, %v1932
      %v2017 = vadd.f32 %v1658, %v1935
      %v2018 = vadd.f32 %v1659, %v1940
      %v2019 = vadd.f32 %v1660, %v1943
      %v2020 = vadd.f32 %v1661, %v1948
      %v2021 = vadd.f32 %v1662, %v1951
      %v2022 = vadd.f32 %v1663, %v1956
      %v2023 = vadd.f32 %v1664, %v1959
      %v2024 = vadd.f32 %v1665, %v1964
      %v2025 = vadd.f32 %v1666, %v1967
      %v2026 = vadd.f32 %v1667, %v1972
      %v2027 = vadd.f32 %v1668, %v1975
      %v2028 = vadd.f32 %v1669, %v1980
      %v2029 = vadd.f32 %v1670, %v1983
      %v2030 = vadd.f32 %v1671, %v1988
      %v2031 = vadd.f32 %v1672, %v1991
      %v2032 = vadd.f32 %v1673, %v1996
      %v2033 = vadd.f32 %v1674, %v1999
      %v2034 = vld [vmem:[%s1675] sm:$0xf]
      %v2035 = vld [vmem:[%s1675 + $0x4] sm:$0xf]
      %v2036 = vld [vmem:[%s1675 + $0x8] sm:$0x1]
      %v2037 = vld [vmem:[%s1675 + $0xc] sm:$0xf]
      %v2038 = vld [vmem:[%s1675 + $0x10] sm:$0xf]
      %v2039 = vld [vmem:[%s1675 + $0x14] sm:$0x1]
      %v2040 = vld [vmem:[%s1675 + $0x18] sm:$0xf]
      %v2041 = vld [vmem:[%s1675 + $0x1c] sm:$0xf]
      %v2042 = vld [vmem:[%s1675 + $0x20] sm:$0x1]
      %v2043 = vld [vmem:[%s1675 + $0x24] sm:$0xf]
      %v2044 = vld [vmem:[%s1675 + $0x28] sm:$0xf]
      %v2045 = vld [vmem:[%s1675 + $0x2c] sm:$0x1]
      %v2046 = vld [vmem:[%s1675 + $0x30] sm:$0xf]
      %v2047 = vld [vmem:[%s1675 + $0x34] sm:$0xf]
      %v2048 = vld [vmem:[%s1675 + $0x38] sm:$0x1]
      %v2049 = vld [vmem:[%s1675 + $0x3c] sm:$0xf]
      %v2050 = vld [vmem:[%s1675 + $0x40] sm:$0xf]
      %v2051 = vld [vmem:[%s1675 + $0x44] sm:$0x1]
      %v2052 = vld [vmem:[%s1675 + $0x48] sm:$0xf]
      %v2053 = vld [vmem:[%s1675 + $0x4c] sm:$0xf]
      %v2054 = vld [vmem:[%s1675 + $0x50] sm:$0x1]
      %v2055 = vld [vmem:[%s1675 + $0x54] sm:$0xf]
      %v2056 = vld [vmem:[%s1675 + $0x58] sm:$0xf]
      %v2057 = vld [vmem:[%s1675 + $0x5c] sm:$0x1]
      %v2058 = vld [vmem:[%s1675 + $0x60] sm:$0xf]
      %v2059 = vld [vmem:[%s1675 + $0x64] sm:$0xf]
      %v2060 = vld [vmem:[%s1675 + $0x68] sm:$0x1]
      %v2061 = vld [vmem:[%s1675 + $0x6c] sm:$0xf]
      %v2062 = vld [vmem:[%s1675 + $0x70] sm:$0xf]
      %v2063 = vld [vmem:[%s1675 + $0x74] sm:$0x1]
      %v2064 = vld [vmem:[%s1675 + $0x78] sm:$0xf]
      %v2065 = vld [vmem:[%s1675 + $0x7c] sm:$0xf]
      %v2066 = vld [vmem:[%s1675 + $0x80] sm:$0x1]
      %v2067 = vld [vmem:[%s1675 + $0x84] sm:$0xf]
      %v2068 = vld [vmem:[%s1675 + $0x88] sm:$0xf]
      %v2069 = vld [vmem:[%s1675 + $0x8c] sm:$0x1]
      %v2070 = vld [vmem:[%s1675 + $0x90] sm:$0xf]
      %v2071 = vld [vmem:[%s1675 + $0x94] sm:$0xf]
      %v2072 = vld [vmem:[%s1675 + $0x98] sm:$0x1]
      %v2073 = vld [vmem:[%s1675 + $0x9c] sm:$0xf]
      %v2074 = vld [vmem:[%s1675 + $0xa0] sm:$0xf]
      %v2075 = vld [vmem:[%s1675 + $0xa4] sm:$0x1]
      %v2076 = vld [vmem:[%s1675 + $0xa8] sm:$0xf]
      %v2077 = vld [vmem:[%s1675 + $0xac] sm:$0xf]
      %v2078 = vld [vmem:[%s1675 + $0xb0] sm:$0x1]
      %v2079 = vld [vmem:[%s1675 + $0xb4] sm:$0xf]
      %v2080 = vld [vmem:[%s1675 + $0xb8] sm:$0xf]
      %v2081 = vld [vmem:[%s1675 + $0xbc] sm:$0x1]
      %v2083 = vshrl.u32 %v2034, 16
      %v2085 = vrot.slane %v2083, 4
      %v2086 = vshll.u32 %v2034, 16
      %v2088 = vrot.slane %v2086, 5
      %v2089 = vor.u32 %v2085, %v2088
      %v2090 = vrot.slane %v2089, 4
      %v2092 = vshll.u32 %v2035, 16
      %v2094 = vrot.slane %v2092, 5
      %v2095 = vsel %vm277, %v2090, %v2094
      %v2096 = vshrl.u32 %v2035, 16
      %v2098 = vrot.slane %v2096, 4
      %v2099 = vor.u32 %v2098, %v2094
      %v2100 = vrot.slane %v2099, 4
      %v2102 = vshll.u32 %v2036, 16
      %v2104 = vrot.slane %v2102, 5
      %v2105 = vsel %vm277, %v2100, %v2104
      %v2107 = vshrl.u32 %v2037, 16
      %v2109 = vrot.slane %v2107, 4
      %v2110 = vshll.u32 %v2037, 16
      %v2112 = vrot.slane %v2110, 5
      %v2113 = vor.u32 %v2109, %v2112
      %v2114 = vrot.slane %v2113, 4
      %v2116 = vshll.u32 %v2038, 16
      %v2118 = vrot.slane %v2116, 5
      %v2119 = vsel %vm277, %v2114, %v2118
      %v2120 = vshrl.u32 %v2038, 16
      %v2122 = vrot.slane %v2120, 4
      %v2123 = vor.u32 %v2122, %v2118
      %v2124 = vrot.slane %v2123, 4
      %v2126 = vshll.u32 %v2039, 16
      %v2128 = vrot.slane %v2126, 5
      %v2129 = vsel %vm277, %v2124, %v2128
      %v2131 = vshrl.u32 %v2040, 16
      %v2133 = vrot.slane %v2131, 4
      %v2134 = vshll.u32 %v2040, 16
      %v2136 = vrot.slane %v2134, 5
      %v2137 = vor.u32 %v2133, %v2136
      %v2138 = vrot.slane %v2137, 4
      %v2140 = vshll.u32 %v2041, 16
      %v2142 = vrot.slane %v2140, 5
      %v2143 = vsel %vm277, %v2138, %v2142
      %v2144 = vshrl.u32 %v2041, 16
      %v2146 = vrot.slane %v2144, 4
      %v2147 = vor.u32 %v2146, %v2142
      %v2148 = vrot.slane %v2147, 4
      %v2150 = vshll.u32 %v2042, 16
      %v2152 = vrot.slane %v2150, 5
      %v2153 = vsel %vm277, %v2148, %v2152
      %v2155 = vshrl.u32 %v2043, 16
      %v2157 = vrot.slane %v2155, 4
      %v2158 = vshll.u32 %v2043, 16
      %v2160 = vrot.slane %v2158, 5
      %v2161 = vor.u32 %v2157, %v2160
      %v2162 = vrot.slane %v2161, 4
      %v2164 = vshll.u32 %v2044, 16
      %v2166 = vrot.slane %v2164, 5
      %v2167 = vsel %vm277, %v2162, %v2166
      %v2168 = vshrl.u32 %v2044, 16
      %v2170 = vrot.slane %v2168, 4
      %v2171 = vor.u32 %v2170, %v2166
      %v2172 = vrot.slane %v2171, 4
      %v2174 = vshll.u32 %v2045, 16
      %v2176 = vrot.slane %v2174, 5
      %v2177 = vsel %vm277, %v2172, %v2176
      %v2179 = vshrl.u32 %v2046, 16
      %v2181 = vrot.slane %v2179, 4
      %v2182 = vshll.u32 %v2046, 16
      %v2184 = vrot.slane %v2182, 5
      %v2185 = vor.u32 %v2181, %v2184
      %v2186 = vrot.slane %v2185, 4
      %v2188 = vshll.u32 %v2047, 16
      %v2190 = vrot.slane %v2188, 5
      %v2191 = vsel %vm277, %v2186, %v2190
      %v2192 = vshrl.u32 %v2047, 16
      %v2194 = vrot.slane %v2192, 4
      %v2195 = vor.u32 %v2194, %v2190
      %v2196 = vrot.slane %v2195, 4
      %v2198 = vshll.u32 %v2048, 16
      %v2200 = vrot.slane %v2198, 5
      %v2201 = vsel %vm277, %v2196, %v2200
      %v2203 = vshrl.u32 %v2049, 16
      %v2205 = vrot.slane %v2203, 4
      %v2206 = vshll.u32 %v2049, 16
      %v2208 = vrot.slane %v2206, 5
      %v2209 = vor.u32 %v2205, %v2208
      %v2210 = vrot.slane %v2209, 4
      %v2212 = vshll.u32 %v2050, 16
      %v2214 = vrot.slane %v2212, 5
      %v2215 = vsel %vm277, %v2210, %v2214
      %v2216 = vshrl.u32 %v2050, 16
      %v2218 = vrot.slane %v2216, 4
      %v2219 = vor.u32 %v2218, %v2214
      %v2220 = vrot.slane %v2219, 4
      %v2222 = vshll.u32 %v2051, 16
      %v2224 = vrot.slane %v2222, 5
      %v2225 = vsel %vm277, %v2220, %v2224
      %v2227 = vshrl.u32 %v2052, 16
      %v2229 = vrot.slane %v2227, 4
      %v2230 = vshll.u32 %v2052, 16
      %v2232 = vrot.slane %v2230, 5
      %v2233 = vor.u32 %v2229, %v2232
      %v2234 = vrot.slane %v2233, 4
      %v2236 = vshll.u32 %v2053, 16
      %v2238 = vrot.slane %v2236, 5
      %v2239 = vsel %vm277, %v2234, %v2238
      %v2240 = vshrl.u32 %v2053, 16
      %v2242 = vrot.slane %v2240, 4
      %v2243 = vor.u32 %v2242, %v2238
      %v2244 = vrot.slane %v2243, 4
      %v2246 = vshll.u32 %v2054, 16
      %v2248 = vrot.slane %v2246, 5
      %v2249 = vsel %vm277, %v2244, %v2248
      %v2251 = vshrl.u32 %v2055, 16
      %v2253 = vrot.slane %v2251, 4
      %v2254 = vshll.u32 %v2055, 16
      %v2256 = vrot.slane %v2254, 5
      %v2257 = vor.u32 %v2253, %v2256
      %v2258 = vrot.slane %v2257, 4
      %v2260 = vshll.u32 %v2056, 16
      %v2262 = vrot.slane %v2260, 5
      %v2263 = vsel %vm277, %v2258, %v2262
      %v2264 = vshrl.u32 %v2056, 16
      %v2266 = vrot.slane %v2264, 4
      %v2267 = vor.u32 %v2266, %v2262
      %v2268 = vrot.slane %v2267, 4
      %v2270 = vshll.u32 %v2057, 16
      %v2272 = vrot.slane %v2270, 5
      %v2273 = vsel %vm277, %v2268, %v2272
      %v2275 = vshrl.u32 %v2058, 16
      %v2277 = vrot.slane %v2275, 4
      %v2278 = vshll.u32 %v2058, 16
      %v2280 = vrot.slane %v2278, 5
      %v2281 = vor.u32 %v2277, %v2280
      %v2282 = vrot.slane %v2281, 4
      %v2284 = vshll.u32 %v2059, 16
      %v2286 = vrot.slane %v2284, 5
      %v2287 = vsel %vm277, %v2282, %v2286
      %v2288 = vshrl.u32 %v2059, 16
      %v2290 = vrot.slane %v2288, 4
      %v2291 = vor.u32 %v2290, %v2286
      %v2292 = vrot.slane %v2291, 4
      %v2294 = vshll.u32 %v2060, 16
      %v2296 = vrot.slane %v2294, 5
      %v2297 = vsel %vm277, %v2292, %v2296
      %v2299 = vshrl.u32 %v2061, 16
      %v2301 = vrot.slane %v2299, 4
      %v2302 = vshll.u32 %v2061, 16
      %v2304 = vrot.slane %v2302, 5
      %v2305 = vor.u32 %v2301, %v2304
      %v2306 = vrot.slane %v2305, 4
      %v2308 = vshll.u32 %v2062, 16
      %v2310 = vrot.slane %v2308, 5
      %v2311 = vsel %vm277, %v2306, %v2310
      %v2312 = vshrl.u32 %v2062, 16
      %v2314 = vrot.slane %v2312, 4
      %v2315 = vor.u32 %v2314, %v2310
      %v2316 = vrot.slane %v2315, 4
      %v2318 = vshll.u32 %v2063, 16
      %v2320 = vrot.slane %v2318, 5
      %v2321 = vsel %vm277, %v2316, %v2320
      %v2323 = vshrl.u32 %v2064, 16
      %v2325 = vrot.slane %v2323, 4
      %v2326 = vshll.u32 %v2064, 16
      %v2328 = vrot.slane %v2326, 5
      %v2329 = vor.u32 %v2325, %v2328
      %v2330 = vrot.slane %v2329, 4
      %v2332 = vshll.u32 %v2065, 16
      %v2334 = vrot.slane %v2332, 5
      %v2335 = vsel %vm277, %v2330, %v2334
      %v2336 = vshrl.u32 %v2065, 16
      %v2338 = vrot.slane %v2336, 4
      %v2339 = vor.u32 %v2338, %v2334
      %v2340 = vrot.slane %v2339, 4
      %v2342 = vshll.u32 %v2066, 16
      %v2344 = vrot.slane %v2342, 5
      %v2345 = vsel %vm277, %v2340, %v2344
      %v2347 = vshrl.u32 %v2067, 16
      %v2349 = vrot.slane %v2347, 4
      %v2350 = vshll.u32 %v2067, 16
      %v2352 = vrot.slane %v2350, 5
      %v2353 = vor.u32 %v2349, %v2352
      %v2354 = vrot.slane %v2353, 4
      %v2356 = vshll.u32 %v2068, 16
      %v2358 = vrot.slane %v2356, 5
      %v2359 = vsel %vm277, %v2354, %v2358
      %v2360 = vshrl.u32 %v2068, 16
      %v2362 = vrot.slane %v2360, 4
      %v2363 = vor.u32 %v2362, %v2358
      %v2364 = vrot.slane %v2363, 4
      %v2366 = vshll.u32 %v2069, 16
      %v2368 = vrot.slane %v2366, 5
      %v2369 = vsel %vm277, %v2364, %v2368
      %v2371 = vshrl.u32 %v2070, 16
      %v2373 = vrot.slane %v2371, 4
      %v2374 = vshll.u32 %v2070, 16
      %v2376 = vrot.slane %v2374, 5
      %v2377 = vor.u32 %v2373, %v2376
      %v2378 = vrot.slane %v2377, 4
      %v2380 = vshll.u32 %v2071, 16
      %v2382 = vrot.slane %v2380, 5
      %v2383 = vsel %vm277, %v2378, %v2382
      %v2384 = vshrl.u32 %v2071, 16
      %v2386 = vrot.slane %v2384, 4
      %v2387 = vor.u32 %v2386, %v2382
      %v2388 = vrot.slane %v2387, 4
      %v2390 = vshll.u32 %v2072, 16
      %v2392 = vrot.slane %v2390, 5
      %v2393 = vsel %vm277, %v2388, %v2392
      %v2395 = vshrl.u32 %v2073, 16
      %v2397 = vrot.slane %v2395, 4
      %v2398 = vshll.u32 %v2073, 16
      %v2400 = vrot.slane %v2398, 5
      %v2401 = vor.u32 %v2397, %v2400
      %v2402 = vrot.slane %v2401, 4
      %v2404 = vshll.u32 %v2074, 16
      %v2406 = vrot.slane %v2404, 5
      %v2407 = vsel %vm277, %v2402, %v2406
      %v2408 = vshrl.u32 %v2074, 16
      %v2410 = vrot.slane %v2408, 4
      %v2411 = vor.u32 %v2410, %v2406
      %v2412 = vrot.slane %v2411, 4
      %v2414 = vshll.u32 %v2075, 16
      %v2416 = vrot.slane %v2414, 5
      %v2417 = vsel %vm277, %v2412, %v2416
      %v2419 = vshrl.u32 %v2076, 16
      %v2421 = vrot.slane %v2419, 4
      %v2422 = vshll.u32 %v2076, 16
      %v2424 = vrot.slane %v2422, 5
      %v2425 = vor.u32 %v2421, %v2424
      %v2426 = vrot.slane %v2425, 4
      %v2428 = vshll.u32 %v2077, 16
      %v2430 = vrot.slane %v2428, 5
      %v2431 = vsel %vm277, %v2426, %v2430
      %v2432 = vshrl.u32 %v2077, 16
      %v2434 = vrot.slane %v2432, 4
      %v2435 = vor.u32 %v2434, %v2430
      %v2436 = vrot.slane %v2435, 4
      %v2438 = vshll.u32 %v2078, 16
      %v2440 = vrot.slane %v2438, 5
      %v2441 = vsel %vm277, %v2436, %v2440
      %v2443 = vshrl.u32 %v2079, 16
      %v2445 = vrot.slane %v2443, 4
      %v2446 = vshll.u32 %v2079, 16
      %v2448 = vrot.slane %v2446, 5
      %v2449 = vor.u32 %v2445, %v2448
      %v2450 = vrot.slane %v2449, 4
      %v2452 = vshll.u32 %v2080, 16
      %v2454 = vrot.slane %v2452, 5
      %v2455 = vsel %vm277, %v2450, %v2454
      %v2456 = vshrl.u32 %v2080, 16
      %v2458 = vrot.slane %v2456, 4
      %v2459 = vor.u32 %v2458, %v2454
      %v2460 = vrot.slane %v2459, 4
      %v2462 = vshll.u32 %v2081, 16
      %v2464 = vrot.slane %v2462, 5
      %v2465 = vsel %vm277, %v2460, %v2464
      %s2466 = scalar_lea.vmem %s1, 8
      %v2467 = vld [vmem:[%s2466] sm:$0x3]
      %v2468 = vunpack.c.l.b16 %v2095
      %v2469 = vunpack.c.l.b16 %v2105
      %v2470 = vunpack.c.l.b16 %v2119
      %v2471 = vunpack.c.l.b16 %v2129
      %v2472 = vunpack.c.l.b16 %v2143
      %v2473 = vunpack.c.l.b16 %v2153
      %v2474 = vunpack.c.l.b16 %v2167
      %v2475 = vunpack.c.l.b16 %v2177
      %v2476 = vunpack.c.l.b16 %v2191
      %v2477 = vunpack.c.l.b16 %v2201
      %v2478 = vunpack.c.l.b16 %v2215
      %v2479 = vunpack.c.l.b16 %v2225
      %v2480 = vunpack.c.l.b16 %v2239
      %v2481 = vunpack.c.l.b16 %v2249
      %v2482 = vunpack.c.l.b16 %v2263
      %v2483 = vunpack.c.l.b16 %v2273
      %v2484 = vunpack.c.l.b16 %v2287
      %v2485 = vunpack.c.l.b16 %v2297
      %v2486 = vunpack.c.l.b16 %v2311
      %v2487 = vunpack.c.l.b16 %v2321
      %v2488 = vunpack.c.l.b16 %v2335
      %v2489 = vunpack.c.l.b16 %v2345
      %v2490 = vunpack.c.l.b16 %v2359
      %v2491 = vunpack.c.l.b16 %v2369
      %v2492 = vunpack.c.l.b16 %v2383
      %v2493 = vunpack.c.l.b16 %v2393
      %v2494 = vunpack.c.l.b16 %v2407
      %v2495 = vunpack.c.l.b16 %v2417
      %v2496 = vunpack.c.l.b16 %v2431
      %v2497 = vunpack.c.l.b16 %v2441
      %v2498 = vunpack.c.l.b16 %v2455
      %v2499 = vunpack.c.l.b16 %v2465
      %v2500 = vpack.c.b16 %v2469, %v2468
      %v2501 = vpack.c.b16 %v2471, %v2470
      %v2502 = vpack.c.b16 %v2473, %v2472
      %v2503 = vpack.c.b16 %v2475, %v2474
      %v2504 = vpack.c.b16 %v2477, %v2476
      %v2505 = vpack.c.b16 %v2479, %v2478
      %v2506 = vpack.c.b16 %v2481, %v2480
      %v2507 = vpack.c.b16 %v2483, %v2482
      %v2508 = vpack.c.b16 %v2485, %v2484
      %v2509 = vpack.c.b16 %v2487, %v2486
      %v2510 = vpack.c.b16 %v2489, %v2488
      %v2511 = vpack.c.b16 %v2491, %v2490
      %v2512 = vpack.c.b16 %v2493, %v2492
      %v2513 = vpack.c.b16 %v2495, %v2494
      %v2514 = vpack.c.b16 %v2497, %v2496
      %v2515 = vpack.c.b16 %v2499, %v2498
      %v2517 = vsel %vm712, %v2500, 0
      %v2520 = vsel %vm712, %v2501, 0
      %v2523 = vsel %vm712, %v2502, 0
      %v2526 = vsel %vm712, %v2503, 0
      %v2529 = vsel %vm712, %v2504, 0
      %v2532 = vsel %vm712, %v2505, 0
      %v2535 = vsel %vm712, %v2506, 0
      %v2538 = vsel %vm712, %v2507, 0
      %v2541 = vsel %vm712, %v2508, 0
      %v2544 = vsel %vm712, %v2509, 0
      %v2547 = vsel %vm712, %v2510, 0
      %v2550 = vsel %vm712, %v2511, 0
      %v2553 = vsel %vm712, %v2512, 0
      %v2556 = vsel %vm712, %v2513, 0
      %v2559 = vsel %vm712, %v2514, 0
      %v2562 = vsel %vm712, %v2515, 0
      %v2565 = vsel %vm761, %v2467, 0
      %2567 = vmatprep.subr.bf16.mxu0 0
      %2568 = vmatpush1.bf16.msra.mxu0 %v2565
      %2569 = vmatprep.subr.bf16.mxu0 0
      %2570 = vmatpush1.bf16.msra.mxu0 0
      %2571 = vmatprep.subr.bf16.mxu0 0
      %2572 = vmatpush1.bf16.msra.mxu0 0
      %2573 = vmatprep.subr.bf16.mxu0 0
      %2574 = vmatpush1.bf16.msra.mxu0 0
      %2575 = vmatprep.subr.bf16.mxu0 0
      %2576 = vmatpush1.bf16.msra.mxu0 0
      %2577 = vmatprep.subr.bf16.mxu0 0
      %2578 = vmatpush1.bf16.msra.mxu0 0
      %2579 = vmatprep.subr.bf16.mxu0 0
      %2580 = vmatpush1.bf16.msra.mxu0 0
      %2581 = vmatprep.subr.bf16.mxu0 0
      %2582 = vmatpush1.bf16.msra.mxu0 0
      %2583 = vmatprep.subr.bf16.mxu0 0
      %2584 = vmatpush1.bf16.msra.mxu0 0
      %2585 = vmatprep.subr.bf16.mxu0 0
      %2586 = vmatpush1.bf16.msra.mxu0 0
      %2587 = vmatprep.subr.bf16.mxu0 0
      %2588 = vmatpush1.bf16.msra.mxu0 0
      %2589 = vmatprep.subr.bf16.mxu0 0
      %2590 = vmatpush1.bf16.msra.mxu0 0
      %2591 = vmatprep.subr.bf16.mxu0 0
      %2592 = vmatpush1.bf16.msra.mxu0 0
      %2593 = vmatprep.subr.bf16.mxu0 0
      %2594 = vmatpush1.bf16.msra.mxu0 0
      %2595 = vmatprep.subr.bf16.mxu0 0
      %2596 = vmatpush1.bf16.msra.mxu0 0
      %2597 = vmatprep.subr.bf16.mxu0 0
      %2598 = vmatpush1.bf16.msra.mxu0 0
      %2599 = vmatprep.mubr.bf16.mxu0 0
      %2600 = vmatmul.mubr.bf16.gmra.mrb[0].mxu0 %v2517
      %v2601 = vpop.f32.mrb[0].mxu0
      %v2602 = vadd.f32 0.0, %v2601
      %v2603 = vpop.f32.mrb[0].mxu0
      %v2604 = vpop.f32.mrb[0].mxu0
      %v2605 = vadd.f32 0.0, %v2604
      %v2606 = vpop.f32.mrb[0].mxu0
      %2607 = vmatprep.mubr.bf16.mxu0 0
      %2608 = vmatmul.mubr.bf16.gmra.mrb[0].mxu0 %v2520
      %v2609 = vpop.f32.mrb[0].mxu0
      %v2610 = vadd.f32 0.0, %v2609
      %v2611 = vpop.f32.mrb[0].mxu0
      %v2612 = vpop.f32.mrb[0].mxu0
      %v2613 = vadd.f32 0.0, %v2612
      %v2614 = vpop.f32.mrb[0].mxu0
      %2615 = vmatprep.mubr.bf16.mxu0 0
      %2616 = vmatmul.mubr.bf16.gmra.mrb[0].mxu0 %v2523
      %v2617 = vpop.f32.mrb[0].mxu0
      %v2618 = vadd.f32 0.0, %v2617
      %v2619 = vpop.f32.mrb[0].mxu0
      %v2620 = vpop.f32.mrb[0].mxu0
      %v2621 = vadd.f32 0.0, %v2620
      %v2622 = vpop.f32.mrb[0].mxu0
      %2623 = vmatprep.mubr.bf16.mxu0 0
      %2624 = vmatmul.mubr.bf16.gmra.mrb[0].mxu0 %v2526
      %v2625 = vpop.f32.mrb[0].mxu0
      %v2626 = vadd.f32 0.0, %v2625
      %v2627 = vpop.f32.mrb[0].mxu0
      %v2628 = vpop.f32.mrb[0].mxu0
      %v2629 = vadd.f32 0.0, %v2628
      %v2630 = vpop.f32.mrb[0].mxu0
      %2631 = vmatprep.mubr.bf16.mxu0 0
      %2632 = vmatmul.mubr.bf16.gmra.mrb[0].mxu0 %v2529
      %v2633 = vpop.f32.mrb[0].mxu0
      %v2634 = vadd.f32 0.0, %v2633
      %v2635 = vpop.f32.mrb[0].mxu0
      %v2636 = vpop.f32.mrb[0].mxu0
      %v2637 = vadd.f32 0.0, %v2636
      %v2638 = vpop.f32.mrb[0].mxu0
      %2639 = vmatprep.mubr.bf16.mxu0 0
      %2640 = vmatmul.mubr.bf16.gmra.mrb[0].mxu0 %v2532
      %v2641 = vpop.f32.mrb[0].mxu0
      %v2642 = vadd.f32 0.0, %v2641
      %v2643 = vpop.f32.mrb[0].mxu0
      %v2644 = vpop.f32.mrb[0].mxu0
      %v2645 = vadd.f32 0.0, %v2644
      %v2646 = vpop.f32.mrb[0].mxu0
      %2647 = vmatprep.mubr.bf16.mxu0 0
      %2648 = vmatmul.mubr.bf16.gmra.mrb[0].mxu0 %v2535
      %v2649 = vpop.f32.mrb[0].mxu0
      %v2650 = vadd.f32 0.0, %v2649
      %v2651 = vpop.f32.mrb[0].mxu0
      %v2652 = vpop.f32.mrb[0].mxu0
      %v2653 = vadd.f32 0.0, %v2652
      %v2654 = vpop.f32.mrb[0].mxu0
      %2655 = vmatprep.mubr.bf16.mxu0 0
      %2656 = vmatmul.mubr.bf16.gmra.mrb[0].mxu0 %v2538
      %v2657 = vpop.f32.mrb[0].mxu0
      %v2658 = vadd.f32 0.0, %v2657
      %v2659 = vpop.f32.mrb[0].mxu0
      %v2660 = vpop.f32.mrb[0].mxu0
      %v2661 = vadd.f32 0.0, %v2660
      %v2662 = vpop.f32.mrb[0].mxu0
      %2663 = vmatprep.mubr.bf16.mxu0 0
      %2664 = vmatmul.mubr.bf16.gmra.mrb[0].mxu0 %v2541
      %v2665 = vpop.f32.mrb[0].mxu0
      %v2666 = vadd.f32 0.0, %v2665
      %v2667 = vpop.f32.mrb[0].mxu0
      %v2668 = vpop.f32.mrb[0].mxu0
      %v2669 = vadd.f32 0.0, %v2668
      %v2670 = vpop.f32.mrb[0].mxu0
      %2671 = vmatprep.mubr.bf16.mxu0 0
      %2672 = vmatmul.mubr.bf16.gmra.mrb[0].mxu0 %v2544
      %v2673 = vpop.f32.mrb[0].mxu0
      %v2674 = vadd.f32 0.0, %v2673
      %v2675 = vpop.f32.mrb[0].mxu0
      %v2676 = vpop.f32.mrb[0].mxu0
      %v2677 = vadd.f32 0.0, %v2676
      %v2678 = vpop.f32.mrb[0].mxu0
      %2679 = vmatprep.mubr.bf16.mxu0 0
      %2680 = vmatmul.mubr.bf16.gmra.mrb[0].mxu0 %v2547
      %v2681 = vpop.f32.mrb[0].mxu0
      %v2682 = vadd.f32 0.0, %v2681
      %v2683 = vpop.f32.mrb[0].mxu0
      %v2684 = vpop.f32.mrb[0].mxu0
      %v2685 = vadd.f32 0.0, %v2684
      %v2686 = vpop.f32.mrb[0].mxu0
      %2687 = vmatprep.mubr.bf16.mxu0 0
      %2688 = vmatmul.mubr.bf16.gmra.mrb[0].mxu0 %v2550
      %v2689 = vpop.f32.mrb[0].mxu0
      %v2690 = vadd.f32 0.0, %v2689
      %v2691 = vpop.f32.mrb[0].mxu0
      %v2692 = vpop.f32.mrb[0].mxu0
      %v2693 = vadd.f32 0.0, %v2692
      %v2694 = vpop.f32.mrb[0].mxu0
      %2695 = vmatprep.mubr.bf16.mxu0 0
      %2696 = vmatmul.mubr.bf16.gmra.mrb[0].mxu0 %v2553
      %v2697 = vpop.f32.mrb[0].mxu0
      %v2698 = vadd.f32 0.0, %v2697
      %v2699 = vpop.f32.mrb[0].mxu0
      %v2700 = vpop.f32.mrb[0].mxu0
      %v2701 = vadd.f32 0.0, %v2700
      %v2702 = vpop.f32.mrb[0].mxu0
      %2703 = vmatprep.mubr.bf16.mxu0 0
      %2704 = vmatmul.mubr.bf16.gmra.mrb[0].mxu0 %v2556
      %v2705 = vpop.f32.mrb[0].mxu0
      %v2706 = vadd.f32 0.0, %v2705
      %v2707 = vpop.f32.mrb[0].mxu0
      %v2708 = vpop.f32.mrb[0].mxu0
      %v2709 = vadd.f32 0.0, %v2708
      %v2710 = vpop.f32.mrb[0].mxu0
      %2711 = vmatprep.mubr.bf16.mxu0 0
      %2712 = vmatmul.mubr.bf16.gmra.mrb[0].mxu0 %v2559
      %v2713 = vpop.f32.mrb[0].mxu0
      %v2714 = vadd.f32 0.0, %v2713
      %v2715 = vpop.f32.mrb[0].mxu0
      %v2716 = vpop.f32.mrb[0].mxu0
      %v2717 = vadd.f32 0.0, %v2716
      %v2718 = vpop.f32.mrb[0].mxu0
      %2719 = vmatprep.mubr.bf16.mxu0 0
      %2720 = vmatmul.mubr.bf16.gmra.mrb[0].mxu0 %v2562
      %v2721 = vpop.f32.mrb[0].mxu0
      %v2722 = vadd.f32 0.0, %v2721
      %v2723 = vpop.f32.mrb[0].mxu0
      %v2724 = vpop.f32.mrb[0].mxu0
      %v2725 = vadd.f32 0.0, %v2724
      %v2726 = vpop.f32.mrb[0].mxu0
      %2727 = vdwg.mxu0
      %v2728 = vadd.f32 %v2002, %v2602
      %v2729 = vadd.f32 %v2003, %v2605
      %v2730 = vadd.f32 %v2004, %v2610
      %v2731 = vadd.f32 %v2005, %v2613
      %v2732 = vadd.f32 %v2006, %v2618
      %v2733 = vadd.f32 %v2007, %v2621
      %v2734 = vadd.f32 %v2008, %v2626
      %v2735 = vadd.f32 %v2009, %v2629
      %v2736 = vadd.f32 %v2010, %v2634
      %v2737 = vadd.f32 %v2011, %v2637
      %v2738 = vadd.f32 %v2012, %v2642
      %v2739 = vadd.f32 %v2013, %v2645
      %v2740 = vadd.f32 %v2014, %v2650
      %v2741 = vadd.f32 %v2015, %v2653
      %v2742 = vadd.f32 %v2016, %v2658
      %v2743 = vadd.f32 %v2017, %v2661
      %v2744 = vadd.f32 %v2018, %v2666
      %v2745 = vadd.f32 %v2019, %v2669
      %v2746 = vadd.f32 %v2020, %v2674
      %v2747 = vadd.f32 %v2021, %v2677
      %v2748 = vadd.f32 %v2022, %v2682
      %v2749 = vadd.f32 %v2023, %v2685
      %v2750 = vadd.f32 %v2024, %v2690
      %v2751 = vadd.f32 %v2025, %v2693
      %v2752 = vadd.f32 %v2026, %v2698
      %v2753 = vadd.f32 %v2027, %v2701
      %v2754 = vadd.f32 %v2028, %v2706
      %v2755 = vadd.f32 %v2029, %v2709
      %v2756 = vadd.f32 %v2030, %v2714
      %v2757 = vadd.f32 %v2031, %v2717
      %v2758 = vadd.f32 %v2032, %v2722
      %v2759 = vadd.f32 %v2033, %v2725
      %v2760 = vld [vmem:[%s1675] sm:$0xe]
      %v2761 = vld [vmem:[%s1675 + $0xc] sm:$0xe]
      %v2762 = vld [vmem:[%s1675 + $0x18] sm:$0xe]
      %v2763 = vld [vmem:[%s1675 + $0x24] sm:$0xe]
      %v2764 = vld [vmem:[%s1675 + $0x30] sm:$0xe]
      %v2765 = vld [vmem:[%s1675 + $0x3c] sm:$0xe]
      %v2766 = vld [vmem:[%s1675 + $0x48] sm:$0xe]
      %v2767 = vld [vmem:[%s1675 + $0x54] sm:$0xe]
      %v2768 = vld [vmem:[%s1675 + $0x60] sm:$0xe]
      %v2769 = vld [vmem:[%s1675 + $0x6c] sm:$0xe]
      %v2770 = vld [vmem:[%s1675 + $0x78] sm:$0xe]
      %v2771 = vld [vmem:[%s1675 + $0x84] sm:$0xe]
      %v2772 = vld [vmem:[%s1675 + $0x90] sm:$0xe]
      %v2773 = vld [vmem:[%s1675 + $0x9c] sm:$0xe]
      %v2774 = vld [vmem:[%s1675 + $0xa8] sm:$0xe]
      %v2775 = vld [vmem:[%s1675 + $0xb4] sm:$0xe]
      %v2824 = vrot.slane %v2760, 5
      %v2825 = vrot.slane %v2824, 4
      %v2826 = vrot.slane %v2035, 5
      %v2827 = vsel %vm1268, %v2825, %v2826
      %v2828 = vrot.slane %v2826, 4
      %v2829 = vrot.slane %v2036, 5
      %v2830 = vsel %vm1268, %v2828, %v2829
      %v2831 = vrot.slane %v2761, 5
      %v2832 = vrot.slane %v2831, 4
      %v2833 = vrot.slane %v2038, 5
      %v2834 = vsel %vm1268, %v2832, %v2833
      %v2835 = vrot.slane %v2833, 4
      %v2836 = vrot.slane %v2039, 5
      %v2837 = vsel %vm1268, %v2835, %v2836
      %v2838 = vrot.slane %v2762, 5
      %v2839 = vrot.slane %v2838, 4
      %v2840 = vrot.slane %v2041, 5
      %v2841 = vsel %vm1268, %v2839, %v2840
      %v2842 = vrot.slane %v2840, 4
      %v2843 = vrot.slane %v2042, 5
      %v2844 = vsel %vm1268, %v2842, %v2843
      %v2845 = vrot.slane %v2763, 5
      %v2846 = vrot.slane %v2845, 4
      %v2847 = vrot.slane %v2044, 5
      %v2848 = vsel %vm1268, %v2846, %v2847
      %v2849 = vrot.slane %v2847, 4
      %v2850 = vrot.slane %v2045, 5
      %v2851 = vsel %vm1268, %v2849, %v2850
      %v2852 = vrot.slane %v2764, 5
      %v2853 = vrot.slane %v2852, 4
      %v2854 = vrot.slane %v2047, 5
      %v2855 = vsel %vm1268, %v2853, %v2854
      %v2856 = vrot.slane %v2854, 4
      %v2857 = vrot.slane %v2048, 5
      %v2858 = vsel %vm1268, %v2856, %v2857
      %v2859 = vrot.slane %v2765, 5
      %v2860 = vrot.slane %v2859, 4
      %v2861 = vrot.slane %v2050, 5
      %v2862 = vsel %vm1268, %v2860, %v2861
      %v2863 = vrot.slane %v2861, 4
      %v2864 = vrot.slane %v2051, 5
      %v2865 = vsel %vm1268, %v2863, %v2864
      %v2866 = vrot.slane %v2766, 5
      %v2867 = vrot.slane %v2866, 4
      %v2868 = vrot.slane %v2053, 5
      %v2869 = vsel %vm1268, %v2867, %v2868
      %v2870 = vrot.slane %v2868, 4
      %v2871 = vrot.slane %v2054, 5
      %v2872 = vsel %vm1268, %v2870, %v2871
      %v2873 = vrot.slane %v2767, 5
      %v2874 = vrot.slane %v2873, 4
      %v2875 = vrot.slane %v2056, 5
      %v2876 = vsel %vm1268, %v2874, %v2875
      %v2877 = vrot.slane %v2875, 4
      %v2878 = vrot.slane %v2057, 5
      %v2879 = vsel %vm1268, %v2877, %v2878
      %v2880 = vrot.slane %v2768, 5
      %v2881 = vrot.slane %v2880, 4
      %v2882 = vrot.slane %v2059, 5
      %v2883 = vsel %vm1268, %v2881, %v2882
      %v2884 = vrot.slane %v2882, 4
      %v2885 = vrot.slane %v2060, 5
      %v2886 = vsel %vm1268, %v2884, %v2885
      %v2887 = vrot.slane %v2769, 5
      %v2888 = vrot.slane %v2887, 4
      %v2889 = vrot.slane %v2062, 5
      %v2890 = vsel %vm1268, %v2888, %v2889
      %v2891 = vrot.slane %v2889, 4
      %v2892 = vrot.slane %v2063, 5
      %v2893 = vsel %vm1268, %v2891, %v2892
      %v2894 = vrot.slane %v2770, 5
      %v2895 = vrot.slane %v2894, 4
      %v2896 = vrot.slane %v2065, 5
      %v2897 = vsel %vm1268, %v2895, %v2896
      %v2898 = vrot.slane %v2896, 4
      %v2899 = vrot.slane %v2066, 5
      %v2900 = vsel %vm1268, %v2898, %v2899
      %v2901 = vrot.slane %v2771, 5
      %v2902 = vrot.slane %v2901, 4
      %v2903 = vrot.slane %v2068, 5
      %v2904 = vsel %vm1268, %v2902, %v2903
      %v2905 = vrot.slane %v2903, 4
      %v2906 = vrot.slane %v2069, 5
      %v2907 = vsel %vm1268, %v2905, %v2906
      %v2908 = vrot.slane %v2772, 5
      %v2909 = vrot.slane %v2908, 4
      %v2910 = vrot.slane %v2071, 5
      %v2911 = vsel %vm1268, %v2909, %v2910
      %v2912 = vrot.slane %v2910, 4
      %v2913 = vrot.slane %v2072, 5
      %v2914 = vsel %vm1268, %v2912, %v2913
      %v2915 = vrot.slane %v2773, 5
      %v2916 = vrot.slane %v2915, 4
      %v2917 = vrot.slane %v2074, 5
      %v2918 = vsel %vm1268, %v2916, %v2917
      %v2919 = vrot.slane %v2917, 4
      %v2920 = vrot.slane %v2075, 5
      %v2921 = vsel %vm1268, %v2919, %v2920
      %v2922 = vrot.slane %v2774, 5
      %v2923 = vrot.slane %v2922, 4
      %v2924 = vrot.slane %v2077, 5
      %v2925 = vsel %vm1268, %v2923, %v2924
      %v2926 = vrot.slane %v2924, 4
      %v2927 = vrot.slane %v2078, 5
      %v2928 = vsel %vm1268, %v2926, %v2927
      %v2929 = vrot.slane %v2775, 5
      %v2930 = vrot.slane %v2929, 4
      %v2931 = vrot.slane %v2080, 5
      %v2932 = vsel %vm1268, %v2930, %v2931
      %v2933 = vrot.slane %v2931, 4
      %v2934 = vrot.slane %v2081, 5
      %v2935 = vsel %vm1268, %v2933, %v2934
      %s2936 = scalar_lea.vmem %s1, 10
      %v2937 = vld [vmem:[%s2936] sm:$0x3]
      %v2938 = vunpack.c.l.b16 %v2827
      %v2939 = vunpack.c.l.b16 %v2830
      %v2940 = vunpack.c.l.b16 %v2834
      %v2941 = vunpack.c.l.b16 %v2837
      %v2942 = vunpack.c.l.b16 %v2841
      %v2943 = vunpack.c.l.b16 %v2844
      %v2944 = vunpack.c.l.b16 %v2848
      %v2945 = vunpack.c.l.b16 %v2851
      %v2946 = vunpack.c.l.b16 %v2855
      %v2947 = vunpack.c.l.b16 %v2858
      %v2948 = vunpack.c.l.b16 %v2862
      %v2949 = vunpack.c.l.b16 %v2865
      %v2950 = vunpack.c.l.b16 %v2869
      %v2951 = vunpack.c.l.b16 %v2872
      %v2952 = vunpack.c.l.b16 %v2876
      %v2953 = vunpack.c.l.b16 %v2879
      %v2954 = vunpack.c.l.b16 %v2883
      %v2955 = vunpack.c.l.b16 %v2886
      %v2956 = vunpack.c.l.b16 %v2890
      %v2957 = vunpack.c.l.b16 %v2893
      %v2958 = vunpack.c.l.b16 %v2897
      %v2959 = vunpack.c.l.b16 %v2900
      %v2960 = vunpack.c.l.b16 %v2904
      %v2961 = vunpack.c.l.b16 %v2907
      %v2962 = vunpack.c.l.b16 %v2911
      %v2963 = vunpack.c.l.b16 %v2914
      %v2964 = vunpack.c.l.b16 %v2918
      %v2965 = vunpack.c.l.b16 %v2921
      %v2966 = vunpack.c.l.b16 %v2925
      %v2967 = vunpack.c.l.b16 %v2928
      %v2968 = vunpack.c.l.b16 %v2932
      %v2969 = vunpack.c.l.b16 %v2935
      %v2970 = vpack.c.b16 %v2939, %v2938
      %v2971 = vpack.c.b16 %v2941, %v2940
      %v2972 = vpack.c.b16 %v2943, %v2942
      %v2973 = vpack.c.b16 %v2945, %v2944
      %v2974 = vpack.c.b16 %v2947, %v2946
      %v2975 = vpack.c.b16 %v2949, %v2948
      %v2976 = vpack.c.b16 %v2951, %v2950
      %v2977 = vpack.c.b16 %v2953, %v2952
      %v2978 = vpack.c.b16 %v2955, %v2954
      %v2979 = vpack.c.b16 %v2957, %v2956
      %v2980 = vpack.c.b16 %v2959, %v2958
      %v2981 = vpack.c.b16 %v2961, %v2960
      %v2982 = vpack.c.b16 %v2963, %v2962
      %v2983 = vpack.c.b16 %v2965, %v2964
      %v2984 = vpack.c.b16 %v2967, %v2966
      %v2985 = vpack.c.b16 %v2969, %v2968
      %v2987 = vsel %vm712, %v2970, 0
      %v2990 = vsel %vm712, %v2971, 0
      %v2993 = vsel %vm712, %v2972, 0
      %v2996 = vsel %vm712, %v2973, 0
      %v2999 = vsel %vm712, %v2974, 0
      %v3002 = vsel %vm712, %v2975, 0
      %v3005 = vsel %vm712, %v2976, 0
      %v3008 = vsel %vm712, %v2977, 0
      %v3011 = vsel %vm712, %v2978, 0
      %v3014 = vsel %vm712, %v2979, 0
      %v3017 = vsel %vm712, %v2980, 0
      %v3020 = vsel %vm712, %v2981, 0
      %v3023 = vsel %vm712, %v2982, 0
      %v3026 = vsel %vm712, %v2983, 0
      %v3029 = vsel %vm712, %v2984, 0
      %v3032 = vsel %vm712, %v2985, 0
      %v3035 = vsel %vm761, %v2937, 0
      %3037 = vmatprep.subr.bf16.mxu0 0
      %3038 = vmatpush1.bf16.msra.mxu0 %v3035
      %3039 = vmatprep.subr.bf16.mxu0 0
      %3040 = vmatpush1.bf16.msra.mxu0 0
      %3041 = vmatprep.subr.bf16.mxu0 0
      %3042 = vmatpush1.bf16.msra.mxu0 0
      %3043 = vmatprep.subr.bf16.mxu0 0
      %3044 = vmatpush1.bf16.msra.mxu0 0
      %3045 = vmatprep.subr.bf16.mxu0 0
      %3046 = vmatpush1.bf16.msra.mxu0 0
      %3047 = vmatprep.subr.bf16.mxu0 0
      %3048 = vmatpush1.bf16.msra.mxu0 0
      %3049 = vmatprep.subr.bf16.mxu0 0
      %3050 = vmatpush1.bf16.msra.mxu0 0
      %3051 = vmatprep.subr.bf16.mxu0 0
      %3052 = vmatpush1.bf16.msra.mxu0 0
      %3053 = vmatprep.subr.bf16.mxu0 0
      %3054 = vmatpush1.bf16.msra.mxu0 0
      %3055 = vmatprep.subr.bf16.mxu0 0
      %3056 = vmatpush1.bf16.msra.mxu0 0
      %3057 = vmatprep.subr.bf16.mxu0 0
      %3058 = vmatpush1.bf16.msra.mxu0 0
      %3059 = vmatprep.subr.bf16.mxu0 0
      %3060 = vmatpush1.bf16.msra.mxu0 0
      %3061 = vmatprep.subr.bf16.mxu0 0
      %3062 = vmatpush1.bf16.msra.mxu0 0
      %3063 = vmatprep.subr.bf16.mxu0 0
      %3064 = vmatpush1.bf16.msra.mxu0 0
      %3065 = vmatprep.subr.bf16.mxu0 0
      %3066 = vmatpush1.bf16.msra.mxu0 0
      %3067 = vmatprep.subr.bf16.mxu0 0
      %3068 = vmatpush1.bf16.msra.mxu0 0
      %3069 = vmatprep.mubr.bf16.mxu0 0
      %3070 = vmatmul.mubr.bf16.gmra.mrb[0].mxu0 %v2987
      %v3071 = vpop.f32.mrb[0].mxu0
      %v3072 = vadd.f32 0.0, %v3071
      %v3073 = vpop.f32.mrb[0].mxu0
      %v3074 = vpop.f32.mrb[0].mxu0
      %v3075 = vadd.f32 0.0, %v3074
      %v3076 = vpop.f32.mrb[0].mxu0
      %3077 = vmatprep.mubr.bf16.mxu0 0
      %3078 = vmatmul.mubr.bf16.gmra.mrb[0].mxu0 %v2990
      %v3079 = vpop.f32.mrb[0].mxu0
      %v3080 = vadd.f32 0.0, %v3079
      %v3081 = vpop.f32.mrb[0].mxu0
      %v3082 = vpop.f32.mrb[0].mxu0
      %v3083 = vadd.f32 0.0, %v3082
      %v3084 = vpop.f32.mrb[0].mxu0
      %3085 = vmatprep.mubr.bf16.mxu0 0
      %3086 = vmatmul.mubr.bf16.gmra.mrb[0].mxu0 %v2993
      %v3087 = vpop.f32.mrb[0].mxu0
      %v3088 = vadd.f32 0.0, %v3087
      %v3089 = vpop.f32.mrb[0].mxu0
      %v3090 = vpop.f32.mrb[0].mxu0
      %v3091 = vadd.f32 0.0, %v3090
      %v3092 = vpop.f32.mrb[0].mxu0
      %3093 = vmatprep.mubr.bf16.mxu0 0
      %3094 = vmatmul.mubr.bf16.gmra.mrb[0].mxu0 %v2996
      %v3095 = vpop.f32.mrb[0].mxu0
      %v3096 = vadd.f32 0.0, %v3095
      %v3097 = vpop.f32.mrb[0].mxu0
      %v3098 = vpop.f32.mrb[0].mxu0
      %v3099 = vadd.f32 0.0, %v3098
      %v3100 = vpop.f32.mrb[0].mxu0
      %3101 = vmatprep.mubr.bf16.mxu0 0
      %3102 = vmatmul.mubr.bf16.gmra.mrb[0].mxu0 %v2999
      %v3103 = vpop.f32.mrb[0].mxu0
      %v3104 = vadd.f32 0.0, %v3103
      %v3105 = vpop.f32.mrb[0].mxu0
      %v3106 = vpop.f32.mrb[0].mxu0
      %v3107 = vadd.f32 0.0, %v3106
      %v3108 = vpop.f32.mrb[0].mxu0
      %3109 = vmatprep.mubr.bf16.mxu0 0
      %3110 = vmatmul.mubr.bf16.gmra.mrb[0].mxu0 %v3002
      %v3111 = vpop.f32.mrb[0].mxu0
      %v3112 = vadd.f32 0.0, %v3111
      %v3113 = vpop.f32.mrb[0].mxu0
      %v3114 = vpop.f32.mrb[0].mxu0
      %v3115 = vadd.f32 0.0, %v3114
      %v3116 = vpop.f32.mrb[0].mxu0
      %3117 = vmatprep.mubr.bf16.mxu0 0
      %3118 = vmatmul.mubr.bf16.gmra.mrb[0].mxu0 %v3005
      %v3119 = vpop.f32.mrb[0].mxu0
      %v3120 = vadd.f32 0.0, %v3119
      %v3121 = vpop.f32.mrb[0].mxu0
      %v3122 = vpop.f32.mrb[0].mxu0
      %v3123 = vadd.f32 0.0, %v3122
      %v3124 = vpop.f32.mrb[0].mxu0
      %3125 = vmatprep.mubr.bf16.mxu0 0
      %3126 = vmatmul.mubr.bf16.gmra.mrb[0].mxu0 %v3008
      %v3127 = vpop.f32.mrb[0].mxu0
      %v3128 = vadd.f32 0.0, %v3127
      %v3129 = vpop.f32.mrb[0].mxu0
      %v3130 = vpop.f32.mrb[0].mxu0
      %v3131 = vadd.f32 0.0, %v3130
      %v3132 = vpop.f32.mrb[0].mxu0
      %3133 = vmatprep.mubr.bf16.mxu0 0
      %3134 = vmatmul.mubr.bf16.gmra.mrb[0].mxu0 %v3011
      %v3135 = vpop.f32.mrb[0].mxu0
      %v3136 = vadd.f32 0.0, %v3135
      %v3137 = vpop.f32.mrb[0].mxu0
      %v3138 = vpop.f32.mrb[0].mxu0
      %v3139 = vadd.f32 0.0, %v3138
      %v3140 = vpop.f32.mrb[0].mxu0
      %3141 = vmatprep.mubr.bf16.mxu0 0
      %3142 = vmatmul.mubr.bf16.gmra.mrb[0].mxu0 %v3014
      %v3143 = vpop.f32.mrb[0].mxu0
      %v3144 = vadd.f32 0.0, %v3143
      %v3145 = vpop.f32.mrb[0].mxu0
      %v3146 = vpop.f32.mrb[0].mxu0
      %v3147 = vadd.f32 0.0, %v3146
      %v3148 = vpop.f32.mrb[0].mxu0
      %3149 = vmatprep.mubr.bf16.mxu0 0
      %3150 = vmatmul.mubr.bf16.gmra.mrb[0].mxu0 %v3017
      %v3151 = vpop.f32.mrb[0].mxu0
      %v3152 = vadd.f32 0.0, %v3151
      %v3153 = vpop.f32.mrb[0].mxu0
      %v3154 = vpop.f32.mrb[0].mxu0
      %v3155 = vadd.f32 0.0, %v3154
      %v3156 = vpop.f32.mrb[0].mxu0
      %3157 = vmatprep.mubr.bf16.mxu0 0
      %3158 = vmatmul.mubr.bf16.gmra.mrb[0].mxu0 %v3020
      %v3159 = vpop.f32.mrb[0].mxu0
      %v3160 = vadd.f32 0.0, %v3159
      %v3161 = vpop.f32.mrb[0].mxu0
      %v3162 = vpop.f32.mrb[0].mxu0
      %v3163 = vadd.f32 0.0, %v3162
      %v3164 = vpop.f32.mrb[0].mxu0
      %3165 = vmatprep.mubr.bf16.mxu0 0
      %3166 = vmatmul.mubr.bf16.gmra.mrb[0].mxu0 %v3023
      %v3167 = vpop.f32.mrb[0].mxu0
      %v3168 = vadd.f32 0.0, %v3167
      %v3169 = vpop.f32.mrb[0].mxu0
      %v3170 = vpop.f32.mrb[0].mxu0
      %v3171 = vadd.f32 0.0, %v3170
      %v3172 = vpop.f32.mrb[0].mxu0
      %3173 = vmatprep.mubr.bf16.mxu0 0
      %3174 = vmatmul.mubr.bf16.gmra.mrb[0].mxu0 %v3026
      %v3175 = vpop.f32.mrb[0].mxu0
      %v3176 = vadd.f32 0.0, %v3175
      %v3177 = vpop.f32.mrb[0].mxu0
      %v3178 = vpop.f32.mrb[0].mxu0
      %v3179 = vadd.f32 0.0, %v3178
      %v3180 = vpop.f32.mrb[0].mxu0
      %3181 = vmatprep.mubr.bf16.mxu0 0
      %3182 = vmatmul.mubr.bf16.gmra.mrb[0].mxu0 %v3029
      %v3183 = vpop.f32.mrb[0].mxu0
      %v3184 = vadd.f32 0.0, %v3183
      %v3185 = vpop.f32.mrb[0].mxu0
      %v3186 = vpop.f32.mrb[0].mxu0
      %v3187 = vadd.f32 0.0, %v3186
      %v3188 = vpop.f32.mrb[0].mxu0
      %3189 = vmatprep.mubr.bf16.mxu0 0
      %3190 = vmatmul.mubr.bf16.gmra.mrb[0].mxu0 %v3032
      %v3191 = vpop.f32.mrb[0].mxu0
      %v3192 = vadd.f32 0.0, %v3191
      %v3193 = vpop.f32.mrb[0].mxu0
      %v3194 = vpop.f32.mrb[0].mxu0
      %v3195 = vadd.f32 0.0, %v3194
      %v3196 = vpop.f32.mrb[0].mxu0
      %3197 = vdwg.mxu0
      %v3198 = vadd.f32 %v2728, %v3072
      %v3199 = vadd.f32 %v2729, %v3075
      %v3200 = vadd.f32 %v2730, %v3080
      %v3201 = vadd.f32 %v2731, %v3083
      %v3202 = vadd.f32 %v2732, %v3088
      %v3203 = vadd.f32 %v2733, %v3091
      %v3204 = vadd.f32 %v2734, %v3096
      %v3205 = vadd.f32 %v2735, %v3099
      %v3206 = vadd.f32 %v2736, %v3104
      %v3207 = vadd.f32 %v2737, %v3107
      %v3208 = vadd.f32 %v2738, %v3112
      %v3209 = vadd.f32 %v2739, %v3115
      %v3210 = vadd.f32 %v2740, %v3120
      %v3211 = vadd.f32 %v2741, %v3123
      %v3212 = vadd.f32 %v2742, %v3128
      %v3213 = vadd.f32 %v2743, %v3131
      %v3214 = vadd.f32 %v2744, %v3136
      %v3215 = vadd.f32 %v2745, %v3139
      %v3216 = vadd.f32 %v2746, %v3144
      %v3217 = vadd.f32 %v2747, %v3147
      %v3218 = vadd.f32 %v2748, %v3152
      %v3219 = vadd.f32 %v2749, %v3155
      %v3220 = vadd.f32 %v2750, %v3160
      %v3221 = vadd.f32 %v2751, %v3163
      %v3222 = vadd.f32 %v2752, %v3168
      %v3223 = vadd.f32 %v2753, %v3171
      %v3224 = vadd.f32 %v2754, %v3176
      %v3225 = vadd.f32 %v2755, %v3179
      %v3226 = vadd.f32 %v2756, %v3184
      %v3227 = vadd.f32 %v2757, %v3187
      %v3228 = vadd.f32 %v2758, %v3192
      %v3229 = vadd.f32 %v2759, %v3195
      %s3230 = scalar_lea.vmem %s219, 24
      %v3231 = vld [vmem:[%s3230] sm:$0xf]
      %v3232 = vld [vmem:[%s3230 + $0x4] sm:$0xf]
      %v3233 = vld [vmem:[%s3230 + $0xc] sm:$0xf]
      %v3234 = vld [vmem:[%s3230 + $0x10] sm:$0xf]
      %v3235 = vld [vmem:[%s3230 + $0x18] sm:$0xf]
      %v3236 = vld [vmem:[%s3230 + $0x1c] sm:$0xf]
      %v3237 = vld [vmem:[%s3230 + $0x24] sm:$0xf]
      %v3238 = vld [vmem:[%s3230 + $0x28] sm:$0xf]
      %v3239 = vld [vmem:[%s3230 + $0x30] sm:$0xf]
      %v3240 = vld [vmem:[%s3230 + $0x34] sm:$0xf]
      %v3241 = vld [vmem:[%s3230 + $0x3c] sm:$0xf]
      %v3242 = vld [vmem:[%s3230 + $0x40] sm:$0xf]
      %v3243 = vld [vmem:[%s3230 + $0x48] sm:$0xf]
      %v3244 = vld [vmem:[%s3230 + $0x4c] sm:$0xf]
      %v3245 = vld [vmem:[%s3230 + $0x54] sm:$0xf]
      %v3246 = vld [vmem:[%s3230 + $0x58] sm:$0xf]
      %v3247 = vld [vmem:[%s3230 + $0x60] sm:$0xf]
      %v3248 = vld [vmem:[%s3230 + $0x64] sm:$0xf]
      %v3249 = vld [vmem:[%s3230 + $0x6c] sm:$0xf]
      %v3250 = vld [vmem:[%s3230 + $0x70] sm:$0xf]
      %v3251 = vld [vmem:[%s3230 + $0x78] sm:$0xf]
      %v3252 = vld [vmem:[%s3230 + $0x7c] sm:$0xf]
      %v3253 = vld [vmem:[%s3230 + $0x84] sm:$0xf]
      %v3254 = vld [vmem:[%s3230 + $0x88] sm:$0xf]
      %v3255 = vld [vmem:[%s3230 + $0x90] sm:$0xf]
      %v3256 = vld [vmem:[%s3230 + $0x94] sm:$0xf]
      %v3257 = vld [vmem:[%s3230 + $0x9c] sm:$0xf]
      %v3258 = vld [vmem:[%s3230 + $0xa0] sm:$0xf]
      %v3259 = vld [vmem:[%s3230 + $0xa8] sm:$0xf]
      %v3260 = vld [vmem:[%s3230 + $0xac] sm:$0xf]
      %v3261 = vld [vmem:[%s3230 + $0xb4] sm:$0xf]
      %v3262 = vld [vmem:[%s3230 + $0xb8] sm:$0xf]
      %s3263 = scalar_lea.vmem %s1, 12
      %v3264 = vld [vmem:[%s3263] sm:$0x3]
      %v3297 = vunpack.c.l.b16 %v3231
      %v3298 = vunpack.c.l.b16 %v3232
      %v3299 = vunpack.c.l.b16 %v3233
      %v3300 = vunpack.c.l.b16 %v3234
      %v3301 = vunpack.c.l.b16 %v3235
      %v3302 = vunpack.c.l.b16 %v3236
      %v3303 = vunpack.c.l.b16 %v3237
      %v3304 = vunpack.c.l.b16 %v3238
      %v3305 = vunpack.c.l.b16 %v3239
      %v3306 = vunpack.c.l.b16 %v3240
      %v3307 = vunpack.c.l.b16 %v3241
      %v3308 = vunpack.c.l.b16 %v3242
      %v3309 = vunpack.c.l.b16 %v3243
      %v3310 = vunpack.c.l.b16 %v3244
      %v3311 = vunpack.c.l.b16 %v3245
      %v3312 = vunpack.c.l.b16 %v3246
      %v3313 = vunpack.c.l.b16 %v3247
      %v3314 = vunpack.c.l.b16 %v3248
      %v3315 = vunpack.c.l.b16 %v3249
      %v3316 = vunpack.c.l.b16 %v3250
      %v3317 = vunpack.c.l.b16 %v3251
      %v3318 = vunpack.c.l.b16 %v3252
      %v3319 = vunpack.c.l.b16 %v3253
      %v3320 = vunpack.c.l.b16 %v3254
      %v3321 = vunpack.c.l.b16 %v3255
      %v3322 = vunpack.c.l.b16 %v3256
      %v3323 = vunpack.c.l.b16 %v3257
      %v3324 = vunpack.c.l.b16 %v3258
      %v3325 = vunpack.c.l.b16 %v3259
      %v3326 = vunpack.c.l.b16 %v3260
      %v3327 = vunpack.c.l.b16 %v3261
      %v3328 = vunpack.c.l.b16 %v3262
      %v3329 = vpack.c.b16 %v3298, %v3297
      %v3330 = vpack.c.b16 %v3300, %v3299
      %v3331 = vpack.c.b16 %v3302, %v3301
      %v3332 = vpack.c.b16 %v3304, %v3303
      %v3333 = vpack.c.b16 %v3306, %v3305
      %v3334 = vpack.c.b16 %v3308, %v3307
      %v3335 = vpack.c.b16 %v3310, %v3309
      %v3336 = vpack.c.b16 %v3312, %v3311
      %v3337 = vpack.c.b16 %v3314, %v3313
      %v3338 = vpack.c.b16 %v3316, %v3315
      %v3339 = vpack.c.b16 %v3318, %v3317
      %v3340 = vpack.c.b16 %v3320, %v3319
      %v3341 = vpack.c.b16 %v3322, %v3321
      %v3342 = vpack.c.b16 %v3324, %v3323
      %v3343 = vpack.c.b16 %v3326, %v3325
      %v3344 = vpack.c.b16 %v3328, %v3327
      %v3346 = vsel %vm712, %v3329, 0
      %v3349 = vsel %vm712, %v3330, 0
      %v3352 = vsel %vm712, %v3331, 0
      %v3355 = vsel %vm712, %v3332, 0
      %v3358 = vsel %vm712, %v3333, 0
      %v3361 = vsel %vm712, %v3334, 0
      %v3364 = vsel %vm712, %v3335, 0
      %v3367 = vsel %vm712, %v3336, 0
      %v3370 = vsel %vm712, %v3337, 0
      %v3373 = vsel %vm712, %v3338, 0
      %v3376 = vsel %vm712, %v3339, 0
      %v3379 = vsel %vm712, %v3340, 0
      %v3382 = vsel %vm712, %v3341, 0
      %v3385 = vsel %vm712, %v3342, 0
      %v3388 = vsel %vm712, %v3343, 0
      %v3391 = vsel %vm712, %v3344, 0
      %v3394 = vsel %vm761, %v3264, 0
      %3396 = vmatprep.subr.bf16.mxu0 0
      %3397 = vmatpush1.bf16.msra.mxu0 %v3394
      %3398 = vmatprep.subr.bf16.mxu0 0
      %3399 = vmatpush1.bf16.msra.mxu0 0
      %3400 = vmatprep.subr.bf16.mxu0 0
      %3401 = vmatpush1.bf16.msra.mxu0 0
      %3402 = vmatprep.subr.bf16.mxu0 0
      %3403 = vmatpush1.bf16.msra.mxu0 0
      %3404 = vmatprep.subr.bf16.mxu0 0
      %3405 = vmatpush1.bf16.msra.mxu0 0
      %3406 = vmatprep.subr.bf16.mxu0 0
      %3407 = vmatpush1.bf16.msra.mxu0 0
      %3408 = vmatprep.subr.bf16.mxu0 0
      %3409 = vmatpush1.bf16.msra.mxu0 0
      %3410 = vmatprep.subr.bf16.mxu0 0
      %3411 = vmatpush1.bf16.msra.mxu0 0
      %3412 = vmatprep.subr.bf16.mxu0 0
      %3413 = vmatpush1.bf16.msra.mxu0 0
      %3414 = vmatprep.subr.bf16.mxu0 0
      %3415 = vmatpush1.bf16.msra.mxu0 0
      %3416 = vmatprep.subr.bf16.mxu0 0
      %3417 = vmatpush1.bf16.msra.mxu0 0
      %3418 = vmatprep.subr.bf16.mxu0 0
      %3419 = vmatpush1.bf16.msra.mxu0 0
      %3420 = vmatprep.subr.bf16.mxu0 0
      %3421 = vmatpush1.bf16.msra.mxu0 0
      %3422 = vmatprep.subr.bf16.mxu0 0
      %3423 = vmatpush1.bf16.msra.mxu0 0
      %3424 = vmatprep.subr.bf16.mxu0 0
      %3425 = vmatpush1.bf16.msra.mxu0 0
      %3426 = vmatprep.subr.bf16.mxu0 0
      %3427 = vmatpush1.bf16.msra.mxu0 0
      %3428 = vmatprep.mubr.bf16.mxu0 0
      %3429 = vmatmul.mubr.bf16.gmra.mrb[0].mxu0 %v3346
      %v3430 = vpop.f32.mrb[0].mxu0
      %v3431 = vadd.f32 0.0, %v3430
      %v3432 = vpop.f32.mrb[0].mxu0
      %v3433 = vpop.f32.mrb[0].mxu0
      %v3434 = vadd.f32 0.0, %v3433
      %v3435 = vpop.f32.mrb[0].mxu0
      %3436 = vmatprep.mubr.bf16.mxu0 0
      %3437 = vmatmul.mubr.bf16.gmra.mrb[0].mxu0 %v3349
      %v3438 = vpop.f32.mrb[0].mxu0
      %v3439 = vadd.f32 0.0, %v3438
      %v3440 = vpop.f32.mrb[0].mxu0
      %v3441 = vpop.f32.mrb[0].mxu0
      %v3442 = vadd.f32 0.0, %v3441
      %v3443 = vpop.f32.mrb[0].mxu0
      %3444 = vmatprep.mubr.bf16.mxu0 0
      %3445 = vmatmul.mubr.bf16.gmra.mrb[0].mxu0 %v3352
      %v3446 = vpop.f32.mrb[0].mxu0
      %v3447 = vadd.f32 0.0, %v3446
      %v3448 = vpop.f32.mrb[0].mxu0
      %v3449 = vpop.f32.mrb[0].mxu0
      %v3450 = vadd.f32 0.0, %v3449
      %v3451 = vpop.f32.mrb[0].mxu0
      %3452 = vmatprep.mubr.bf16.mxu0 0
      %3453 = vmatmul.mubr.bf16.gmra.mrb[0].mxu0 %v3355
      %v3454 = vpop.f32.mrb[0].mxu0
      %v3455 = vadd.f32 0.0, %v3454
      %v3456 = vpop.f32.mrb[0].mxu0
      %v3457 = vpop.f32.mrb[0].mxu0
      %v3458 = vadd.f32 0.0, %v3457
      %v3459 = vpop.f32.mrb[0].mxu0
      %3460 = vmatprep.mubr.bf16.mxu0 0
      %3461 = vmatmul.mubr.bf16.gmra.mrb[0].mxu0 %v3358
      %v3462 = vpop.f32.mrb[0].mxu0
      %v3463 = vadd.f32 0.0, %v3462
      %v3464 = vpop.f32.mrb[0].mxu0
      %v3465 = vpop.f32.mrb[0].mxu0
      %v3466 = vadd.f32 0.0, %v3465
      %v3467 = vpop.f32.mrb[0].mxu0
      %3468 = vmatprep.mubr.bf16.mxu0 0
      %3469 = vmatmul.mubr.bf16.gmra.mrb[0].mxu0 %v3361
      %v3470 = vpop.f32.mrb[0].mxu0
      %v3471 = vadd.f32 0.0, %v3470
      %v3472 = vpop.f32.mrb[0].mxu0
      %v3473 = vpop.f32.mrb[0].mxu0
      %v3474 = vadd.f32 0.0, %v3473
      %v3475 = vpop.f32.mrb[0].mxu0
      %3476 = vmatprep.mubr.bf16.mxu0 0
      %3477 = vmatmul.mubr.bf16.gmra.mrb[0].mxu0 %v3364
      %v3478 = vpop.f32.mrb[0].mxu0
      %v3479 = vadd.f32 0.0, %v3478
      %v3480 = vpop.f32.mrb[0].mxu0
      %v3481 = vpop.f32.mrb[0].mxu0
      %v3482 = vadd.f32 0.0, %v3481
      %v3483 = vpop.f32.mrb[0].mxu0
      %3484 = vmatprep.mubr.bf16.mxu0 0
      %3485 = vmatmul.mubr.bf16.gmra.mrb[0].mxu0 %v3367
      %v3486 = vpop.f32.mrb[0].mxu0
      %v3487 = vadd.f32 0.0, %v3486
      %v3488 = vpop.f32.mrb[0].mxu0
      %v3489 = vpop.f32.mrb[0].mxu0
      %v3490 = vadd.f32 0.0, %v3489
      %v3491 = vpop.f32.mrb[0].mxu0
      %3492 = vmatprep.mubr.bf16.mxu0 0
      %3493 = vmatmul.mubr.bf16.gmra.mrb[0].mxu0 %v3370
      %v3494 = vpop.f32.mrb[0].mxu0
      %v3495 = vadd.f32 0.0, %v3494
      %v3496 = vpop.f32.mrb[0].mxu0
      %v3497 = vpop.f32.mrb[0].mxu0
      %v3498 = vadd.f32 0.0, %v3497
      %v3499 = vpop.f32.mrb[0].mxu0
      %3500 = vmatprep.mubr.bf16.mxu0 0
      %3501 = vmatmul.mubr.bf16.gmra.mrb[0].mxu0 %v3373
      %v3502 = vpop.f32.mrb[0].mxu0
      %v3503 = vadd.f32 0.0, %v3502
      %v3504 = vpop.f32.mrb[0].mxu0
      %v3505 = vpop.f32.mrb[0].mxu0
      %v3506 = vadd.f32 0.0, %v3505
      %v3507 = vpop.f32.mrb[0].mxu0
      %3508 = vmatprep.mubr.bf16.mxu0 0
      %3509 = vmatmul.mubr.bf16.gmra.mrb[0].mxu0 %v3376
      %v3510 = vpop.f32.mrb[0].mxu0
      %v3511 = vadd.f32 0.0, %v3510
      %v3512 = vpop.f32.mrb[0].mxu0
      %v3513 = vpop.f32.mrb[0].mxu0
      %v3514 = vadd.f32 0.0, %v3513
      %v3515 = vpop.f32.mrb[0].mxu0
      %3516 = vmatprep.mubr.bf16.mxu0 0
      %3517 = vmatmul.mubr.bf16.gmra.mrb[0].mxu0 %v3379
      %v3518 = vpop.f32.mrb[0].mxu0
      %v3519 = vadd.f32 0.0, %v3518
      %v3520 = vpop.f32.mrb[0].mxu0
      %v3521 = vpop.f32.mrb[0].mxu0
      %v3522 = vadd.f32 0.0, %v3521
      %v3523 = vpop.f32.mrb[0].mxu0
      %3524 = vmatprep.mubr.bf16.mxu0 0
      %3525 = vmatmul.mubr.bf16.gmra.mrb[0].mxu0 %v3382
      %v3526 = vpop.f32.mrb[0].mxu0
      %v3527 = vadd.f32 0.0, %v3526
      %v3528 = vpop.f32.mrb[0].mxu0
      %v3529 = vpop.f32.mrb[0].mxu0
      %v3530 = vadd.f32 0.0, %v3529
      %v3531 = vpop.f32.mrb[0].mxu0
      %3532 = vmatprep.mubr.bf16.mxu0 0
      %3533 = vmatmul.mubr.bf16.gmra.mrb[0].mxu0 %v3385
      %v3534 = vpop.f32.mrb[0].mxu0
      %v3535 = vadd.f32 0.0, %v3534
      %v3536 = vpop.f32.mrb[0].mxu0
      %v3537 = vpop.f32.mrb[0].mxu0
      %v3538 = vadd.f32 0.0, %v3537
      %v3539 = vpop.f32.mrb[0].mxu0
      %3540 = vmatprep.mubr.bf16.mxu0 0
      %3541 = vmatmul.mubr.bf16.gmra.mrb[0].mxu0 %v3388
      %v3542 = vpop.f32.mrb[0].mxu0
      %v3543 = vadd.f32 0.0, %v3542
      %v3544 = vpop.f32.mrb[0].mxu0
      %v3545 = vpop.f32.mrb[0].mxu0
      %v3546 = vadd.f32 0.0, %v3545
      %v3547 = vpop.f32.mrb[0].mxu0
      %3548 = vmatprep.mubr.bf16.mxu0 0
      %3549 = vmatmul.mubr.bf16.gmra.mrb[0].mxu0 %v3391
      %v3550 = vpop.f32.mrb[0].mxu0
      %v3551 = vadd.f32 0.0, %v3550
      %v3552 = vpop.f32.mrb[0].mxu0
      %v3553 = vpop.f32.mrb[0].mxu0
      %v3554 = vadd.f32 0.0, %v3553
      %v3555 = vpop.f32.mrb[0].mxu0
      %3556 = vdwg.mxu0
      %v3557 = vadd.f32 %v3198, %v3431
      %v3558 = vadd.f32 %v3199, %v3434
      %v3559 = vadd.f32 %v3200, %v3439
      %v3560 = vadd.f32 %v3201, %v3442
      %v3561 = vadd.f32 %v3202, %v3447
      %v3562 = vadd.f32 %v3203, %v3450
      %v3563 = vadd.f32 %v3204, %v3455
      %v3564 = vadd.f32 %v3205, %v3458
      %v3565 = vadd.f32 %v3206, %v3463
      %v3566 = vadd.f32 %v3207, %v3466
      %v3567 = vadd.f32 %v3208, %v3471
      %v3568 = vadd.f32 %v3209, %v3474
      %v3569 = vadd.f32 %v3210, %v3479
      %v3570 = vadd.f32 %v3211, %v3482
      %v3571 = vadd.f32 %v3212, %v3487
      %v3572 = vadd.f32 %v3213, %v3490
      %v3573 = vadd.f32 %v3214, %v3495
      %v3574 = vadd.f32 %v3215, %v3498
      %v3575 = vadd.f32 %v3216, %v3503
      %v3576 = vadd.f32 %v3217, %v3506
      %v3577 = vadd.f32 %v3218, %v3511
      %v3578 = vadd.f32 %v3219, %v3514
      %v3579 = vadd.f32 %v3220, %v3519
      %v3580 = vadd.f32 %v3221, %v3522
      %v3581 = vadd.f32 %v3222, %v3527
      %v3582 = vadd.f32 %v3223, %v3530
      %v3583 = vadd.f32 %v3224, %v3535
      %v3584 = vadd.f32 %v3225, %v3538
      %v3585 = vadd.f32 %v3226, %v3543
      %v3586 = vadd.f32 %v3227, %v3546
      %v3587 = vadd.f32 %v3228, %v3551
      %v3588 = vadd.f32 %v3229, %v3554
      %v3589 = vld [vmem:[%s3230] sm:$0xf]
      %v3590 = vld [vmem:[%s3230 + $0x4] sm:$0xf]
      %v3591 = vld [vmem:[%s3230 + $0x8] sm:$0x1]
      %v3592 = vld [vmem:[%s3230 + $0xc] sm:$0xf]
      %v3593 = vld [vmem:[%s3230 + $0x10] sm:$0xf]
      %v3594 = vld [vmem:[%s3230 + $0x14] sm:$0x1]
      %v3595 = vld [vmem:[%s3230 + $0x18] sm:$0xf]
      %v3596 = vld [vmem:[%s3230 + $0x1c] sm:$0xf]
      %v3597 = vld [vmem:[%s3230 + $0x20] sm:$0x1]
      %v3598 = vld [vmem:[%s3230 + $0x24] sm:$0xf]
      %v3599 = vld [vmem:[%s3230 + $0x28] sm:$0xf]
      %v3600 = vld [vmem:[%s3230 + $0x2c] sm:$0x1]
      %v3601 = vld [vmem:[%s3230 + $0x30] sm:$0xf]
      %v3602 = vld [vmem:[%s3230 + $0x34] sm:$0xf]
      %v3603 = vld [vmem:[%s3230 + $0x38] sm:$0x1]
      %v3604 = vld [vmem:[%s3230 + $0x3c] sm:$0xf]
      %v3605 = vld [vmem:[%s3230 + $0x40] sm:$0xf]
      %v3606 = vld [vmem:[%s3230 + $0x44] sm:$0x1]
      %v3607 = vld [vmem:[%s3230 + $0x48] sm:$0xf]
      %v3608 = vld [vmem:[%s3230 + $0x4c] sm:$0xf]
      %v3609 = vld [vmem:[%s3230 + $0x50] sm:$0x1]
      %v3610 = vld [vmem:[%s3230 + $0x54] sm:$0xf]
      %v3611 = vld [vmem:[%s3230 + $0x58] sm:$0xf]
      %v3612 = vld [vmem:[%s3230 + $0x5c] sm:$0x1]
      %v3613 = vld [vmem:[%s3230 + $0x60] sm:$0xf]
      %v3614 = vld [vmem:[%s3230 + $0x64] sm:$0xf]
      %v3615 = vld [vmem:[%s3230 + $0x68] sm:$0x1]
      %v3616 = vld [vmem:[%s3230 + $0x6c] sm:$0xf]
      %v3617 = vld [vmem:[%s3230 + $0x70] sm:$0xf]
      %v3618 = vld [vmem:[%s3230 + $0x74] sm:$0x1]
      %v3619 = vld [vmem:[%s3230 + $0x78] sm:$0xf]
      %v3620 = vld [vmem:[%s3230 + $0x7c] sm:$0xf]
      %v3621 = vld [vmem:[%s3230 + $0x80] sm:$0x1]
      %v3622 = vld [vmem:[%s3230 + $0x84] sm:$0xf]
      %v3623 = vld [vmem:[%s3230 + $0x88] sm:$0xf]
      %v3624 = vld [vmem:[%s3230 + $0x8c] sm:$0x1]
      %v3625 = vld [vmem:[%s3230 + $0x90] sm:$0xf]
      %v3626 = vld [vmem:[%s3230 + $0x94] sm:$0xf]
      %v3627 = vld [vmem:[%s3230 + $0x98] sm:$0x1]
      %v3628 = vld [vmem:[%s3230 + $0x9c] sm:$0xf]
      %v3629 = vld [vmem:[%s3230 + $0xa0] sm:$0xf]
      %v3630 = vld [vmem:[%s3230 + $0xa4] sm:$0x1]
      %v3631 = vld [vmem:[%s3230 + $0xa8] sm:$0xf]
      %v3632 = vld [vmem:[%s3230 + $0xac] sm:$0xf]
      %v3633 = vld [vmem:[%s3230 + $0xb0] sm:$0x1]
      %v3634 = vld [vmem:[%s3230 + $0xb4] sm:$0xf]
      %v3635 = vld [vmem:[%s3230 + $0xb8] sm:$0xf]
      %v3636 = vld [vmem:[%s3230 + $0xbc] sm:$0x1]
      %v3638 = vshrl.u32 %v3589, 16
      %v3640 = vrot.slane %v3638, 4
      %v3641 = vshll.u32 %v3589, 16
      %v3643 = vrot.slane %v3641, 5
      %v3644 = vor.u32 %v3640, %v3643
      %v3645 = vrot.slane %v3644, 4
      %v3647 = vshll.u32 %v3590, 16
      %v3649 = vrot.slane %v3647, 5
      %v3650 = vsel %vm277, %v3645, %v3649
      %v3651 = vshrl.u32 %v3590, 16
      %v3653 = vrot.slane %v3651, 4
      %v3654 = vor.u32 %v3653, %v3649
      %v3655 = vrot.slane %v3654, 4
      %v3657 = vshll.u32 %v3591, 16
      %v3659 = vrot.slane %v3657, 5
      %v3660 = vsel %vm277, %v3655, %v3659
      %v3662 = vshrl.u32 %v3592, 16
      %v3664 = vrot.slane %v3662, 4
      %v3665 = vshll.u32 %v3592, 16
      %v3667 = vrot.slane %v3665, 5
      %v3668 = vor.u32 %v3664, %v3667
      %v3669 = vrot.slane %v3668, 4
      %v3671 = vshll.u32 %v3593, 16
      %v3673 = vrot.slane %v3671, 5
      %v3674 = vsel %vm277, %v3669, %v3673
      %v3675 = vshrl.u32 %v3593, 16
      %v3677 = vrot.slane %v3675, 4
      %v3678 = vor.u32 %v3677, %v3673
      %v3679 = vrot.slane %v3678, 4
      %v3681 = vshll.u32 %v3594, 16
      %v3683 = vrot.slane %v3681, 5
      %v3684 = vsel %vm277, %v3679, %v3683
      %v3686 = vshrl.u32 %v3595, 16
      %v3688 = vrot.slane %v3686, 4
      %v3689 = vshll.u32 %v3595, 16
      %v3691 = vrot.slane %v3689, 5
      %v3692 = vor.u32 %v3688, %v3691
      %v3693 = vrot.slane %v3692, 4
      %v3695 = vshll.u32 %v3596, 16
      %v3697 = vrot.slane %v3695, 5
      %v3698 = vsel %vm277, %v3693, %v3697
      %v3699 = vshrl.u32 %v3596, 16
      %v3701 = vrot.slane %v3699, 4
      %v3702 = vor.u32 %v3701, %v3697
      %v3703 = vrot.slane %v3702, 4
      %v3705 = vshll.u32 %v3597, 16
      %v3707 = vrot.slane %v3705, 5
      %v3708 = vsel %vm277, %v3703, %v3707
      %v3710 = vshrl.u32 %v3598, 16
      %v3712 = vrot.slane %v3710, 4
      %v3713 = vshll.u32 %v3598, 16
      %v3715 = vrot.slane %v3713, 5
      %v3716 = vor.u32 %v3712, %v3715
      %v3717 = vrot.slane %v3716, 4
      %v3719 = vshll.u32 %v3599, 16
      %v3721 = vrot.slane %v3719, 5
      %v3722 = vsel %vm277, %v3717, %v3721
      %v3723 = vshrl.u32 %v3599, 16
      %v3725 = vrot.slane %v3723, 4
      %v3726 = vor.u32 %v3725, %v3721
      %v3727 = vrot.slane %v3726, 4
      %v3729 = vshll.u32 %v3600, 16
      %v3731 = vrot.slane %v3729, 5
      %v3732 = vsel %vm277, %v3727, %v3731
      %v3734 = vshrl.u32 %v3601, 16
      %v3736 = vrot.slane %v3734, 4
      %v3737 = vshll.u32 %v3601, 16
      %v3739 = vrot.slane %v3737, 5
      %v3740 = vor.u32 %v3736, %v3739
      %v3741 = vrot.slane %v3740, 4
      %v3743 = vshll.u32 %v3602, 16
      %v3745 = vrot.slane %v3743, 5
      %v3746 = vsel %vm277, %v3741, %v3745
      %v3747 = vshrl.u32 %v3602, 16
      %v3749 = vrot.slane %v3747, 4
      %v3750 = vor.u32 %v3749, %v3745
      %v3751 = vrot.slane %v3750, 4
      %v3753 = vshll.u32 %v3603, 16
      %v3755 = vrot.slane %v3753, 5
      %v3756 = vsel %vm277, %v3751, %v3755
      %v3758 = vshrl.u32 %v3604, 16
      %v3760 = vrot.slane %v3758, 4
      %v3761 = vshll.u32 %v3604, 16
      %v3763 = vrot.slane %v3761, 5
      %v3764 = vor.u32 %v3760, %v3763
      %v3765 = vrot.slane %v3764, 4
      %v3767 = vshll.u32 %v3605, 16
      %v3769 = vrot.slane %v3767, 5
      %v3770 = vsel %vm277, %v3765, %v3769
      %v3771 = vshrl.u32 %v3605, 16
      %v3773 = vrot.slane %v3771, 4
      %v3774 = vor.u32 %v3773, %v3769
      %v3775 = vrot.slane %v3774, 4
      %v3777 = vshll.u32 %v3606, 16
      %v3779 = vrot.slane %v3777, 5
      %v3780 = vsel %vm277, %v3775, %v3779
      %v3782 = vshrl.u32 %v3607, 16
      %v3784 = vrot.slane %v3782, 4
      %v3785 = vshll.u32 %v3607, 16
      %v3787 = vrot.slane %v3785, 5
      %v3788 = vor.u32 %v3784, %v3787
      %v3789 = vrot.slane %v3788, 4
      %v3791 = vshll.u32 %v3608, 16
      %v3793 = vrot.slane %v3791, 5
      %v3794 = vsel %vm277, %v3789, %v3793
      %v3795 = vshrl.u32 %v3608, 16
      %v3797 = vrot.slane %v3795, 4
      %v3798 = vor.u32 %v3797, %v3793
      %v3799 = vrot.slane %v3798, 4
      %v3801 = vshll.u32 %v3609, 16
      %v3803 = vrot.slane %v3801, 5
      %v3804 = vsel %vm277, %v3799, %v3803
      %v3806 = vshrl.u32 %v3610, 16
      %v3808 = vrot.slane %v3806, 4
      %v3809 = vshll.u32 %v3610, 16
      %v3811 = vrot.slane %v3809, 5
      %v3812 = vor.u32 %v3808, %v3811
      %v3813 = vrot.slane %v3812, 4
      %v3815 = vshll.u32 %v3611, 16
      %v3817 = vrot.slane %v3815, 5
      %v3818 = vsel %vm277, %v3813, %v3817
      %v3819 = vshrl.u32 %v3611, 16
      %v3821 = vrot.slane %v3819, 4
      %v3822 = vor.u32 %v3821, %v3817
      %v3823 = vrot.slane %v3822, 4
      %v3825 = vshll.u32 %v3612, 16
      %v3827 = vrot.slane %v3825, 5
      %v3828 = vsel %vm277, %v3823, %v3827
      %v3830 = vshrl.u32 %v3613, 16
      %v3832 = vrot.slane %v3830, 4
      %v3833 = vshll.u32 %v3613, 16
      %v3835 = vrot.slane %v3833, 5
      %v3836 = vor.u32 %v3832, %v3835
      %v3837 = vrot.slane %v3836, 4
      %v3839 = vshll.u32 %v3614, 16
      %v3841 = vrot.slane %v3839, 5
      %v3842 = vsel %vm277, %v3837, %v3841
      %v3843 = vshrl.u32 %v3614, 16
      %v3845 = vrot.slane %v3843, 4
      %v3846 = vor.u32 %v3845, %v3841
      %v3847 = vrot.slane %v3846, 4
      %v3849 = vshll.u32 %v3615, 16
      %v3851 = vrot.slane %v3849, 5
      %v3852 = vsel %vm277, %v3847, %v3851
      %v3854 = vshrl.u32 %v3616, 16
      %v3856 = vrot.slane %v3854, 4
      %v3857 = vshll.u32 %v3616, 16
      %v3859 = vrot.slane %v3857, 5
      %v3860 = vor.u32 %v3856, %v3859
      %v3861 = vrot.slane %v3860, 4
      %v3863 = vshll.u32 %v3617, 16
      %v3865 = vrot.slane %v3863, 5
      %v3866 = vsel %vm277, %v3861, %v3865
      %v3867 = vshrl.u32 %v3617, 16
      %v3869 = vrot.slane %v3867, 4
      %v3870 = vor.u32 %v3869, %v3865
      %v3871 = vrot.slane %v3870, 4
      %v3873 = vshll.u32 %v3618, 16
      %v3875 = vrot.slane %v3873, 5
      %v3876 = vsel %vm277, %v3871, %v3875
      %v3878 = vshrl.u32 %v3619, 16
      %v3880 = vrot.slane %v3878, 4
      %v3881 = vshll.u32 %v3619, 16
      %v3883 = vrot.slane %v3881, 5
      %v3884 = vor.u32 %v3880, %v3883
      %v3885 = vrot.slane %v3884, 4
      %v3887 = vshll.u32 %v3620, 16
      %v3889 = vrot.slane %v3887, 5
      %v3890 = vsel %vm277, %v3885, %v3889
      %v3891 = vshrl.u32 %v3620, 16
      %v3893 = vrot.slane %v3891, 4
      %v3894 = vor.u32 %v3893, %v3889
      %v3895 = vrot.slane %v3894, 4
      %v3897 = vshll.u32 %v3621, 16
      %v3899 = vrot.slane %v3897, 5
      %v3900 = vsel %vm277, %v3895, %v3899
      %v3902 = vshrl.u32 %v3622, 16
      %v3904 = vrot.slane %v3902, 4
      %v3905 = vshll.u32 %v3622, 16
      %v3907 = vrot.slane %v3905, 5
      %v3908 = vor.u32 %v3904, %v3907
      %v3909 = vrot.slane %v3908, 4
      %v3911 = vshll.u32 %v3623, 16
      %v3913 = vrot.slane %v3911, 5
      %v3914 = vsel %vm277, %v3909, %v3913
      %v3915 = vshrl.u32 %v3623, 16
      %v3917 = vrot.slane %v3915, 4
      %v3918 = vor.u32 %v3917, %v3913
      %v3919 = vrot.slane %v3918, 4
      %v3921 = vshll.u32 %v3624, 16
      %v3923 = vrot.slane %v3921, 5
      %v3924 = vsel %vm277, %v3919, %v3923
      %v3926 = vshrl.u32 %v3625, 16
      %v3928 = vrot.slane %v3926, 4
      %v3929 = vshll.u32 %v3625, 16
      %v3931 = vrot.slane %v3929, 5
      %v3932 = vor.u32 %v3928, %v3931
      %v3933 = vrot.slane %v3932, 4
      %v3935 = vshll.u32 %v3626, 16
      %v3937 = vrot.slane %v3935, 5
      %v3938 = vsel %vm277, %v3933, %v3937
      %v3939 = vshrl.u32 %v3626, 16
      %v3941 = vrot.slane %v3939, 4
      %v3942 = vor.u32 %v3941, %v3937
      %v3943 = vrot.slane %v3942, 4
      %v3945 = vshll.u32 %v3627, 16
      %v3947 = vrot.slane %v3945, 5
      %v3948 = vsel %vm277, %v3943, %v3947
      %v3950 = vshrl.u32 %v3628, 16
      %v3952 = vrot.slane %v3950, 4
      %v3953 = vshll.u32 %v3628, 16
      %v3955 = vrot.slane %v3953, 5
      %v3956 = vor.u32 %v3952, %v3955
      %v3957 = vrot.slane %v3956, 4
      %v3959 = vshll.u32 %v3629, 16
      %v3961 = vrot.slane %v3959, 5
      %v3962 = vsel %vm277, %v3957, %v3961
      %v3963 = vshrl.u32 %v3629, 16
      %v3965 = vrot.slane %v3963, 4
      %v3966 = vor.u32 %v3965, %v3961
      %v3967 = vrot.slane %v3966, 4
      %v3969 = vshll.u32 %v3630, 16
      %v3971 = vrot.slane %v3969, 5
      %v3972 = vsel %vm277, %v3967, %v3971
      %v3974 = vshrl.u32 %v3631, 16
      %v3976 = vrot.slane %v3974, 4
      %v3977 = vshll.u32 %v3631, 16
      %v3979 = vrot.slane %v3977, 5
      %v3980 = vor.u32 %v3976, %v3979
      %v3981 = vrot.slane %v3980, 4
      %v3983 = vshll.u32 %v3632, 16
      %v3985 = vrot.slane %v3983, 5
      %v3986 = vsel %vm277, %v3981, %v3985
      %v3987 = vshrl.u32 %v3632, 16
      %v3989 = vrot.slane %v3987, 4
      %v3990 = vor.u32 %v3989, %v3985
      %v3991 = vrot.slane %v3990, 4
      %v3993 = vshll.u32 %v3633, 16
      %v3995 = vrot.slane %v3993, 5
      %v3996 = vsel %vm277, %v3991, %v3995
      %v3998 = vshrl.u32 %v3634, 16
      %v4000 = vrot.slane %v3998, 4
      %v4001 = vshll.u32 %v3634, 16
      %v4003 = vrot.slane %v4001, 5
      %v4004 = vor.u32 %v4000, %v4003
      %v4005 = vrot.slane %v4004, 4
      %v4007 = vshll.u32 %v3635, 16
      %v4009 = vrot.slane %v4007, 5
      %v4010 = vsel %vm277, %v4005, %v4009
      %v4011 = vshrl.u32 %v3635, 16
      %v4013 = vrot.slane %v4011, 4
      %v4014 = vor.u32 %v4013, %v4009
      %v4015 = vrot.slane %v4014, 4
      %v4017 = vshll.u32 %v3636, 16
      %v4019 = vrot.slane %v4017, 5
      %v4020 = vsel %vm277, %v4015, %v4019
      %s4021 = scalar_lea.vmem %s1, 14
      %v4022 = vld [vmem:[%s4021] sm:$0x3]
      %v4023 = vunpack.c.l.b16 %v3650
      %v4024 = vunpack.c.l.b16 %v3660
      %v4025 = vunpack.c.l.b16 %v3674
      %v4026 = vunpack.c.l.b16 %v3684
      %v4027 = vunpack.c.l.b16 %v3698
      %v4028 = vunpack.c.l.b16 %v3708
      %v4029 = vunpack.c.l.b16 %v3722
      %v4030 = vunpack.c.l.b16 %v3732
      %v4031 = vunpack.c.l.b16 %v3746
      %v4032 = vunpack.c.l.b16 %v3756
      %v4033 = vunpack.c.l.b16 %v3770
      %v4034 = vunpack.c.l.b16 %v3780
      %v4035 = vunpack.c.l.b16 %v3794
      %v4036 = vunpack.c.l.b16 %v3804
      %v4037 = vunpack.c.l.b16 %v3818
      %v4038 = vunpack.c.l.b16 %v3828
      %v4039 = vunpack.c.l.b16 %v3842
      %v4040 = vunpack.c.l.b16 %v3852
      %v4041 = vunpack.c.l.b16 %v3866
      %v4042 = vunpack.c.l.b16 %v3876
      %v4043 = vunpack.c.l.b16 %v3890
      %v4044 = vunpack.c.l.b16 %v3900
      %v4045 = vunpack.c.l.b16 %v3914
      %v4046 = vunpack.c.l.b16 %v3924
      %v4047 = vunpack.c.l.b16 %v3938
      %v4048 = vunpack.c.l.b16 %v3948
      %v4049 = vunpack.c.l.b16 %v3962
      %v4050 = vunpack.c.l.b16 %v3972
      %v4051 = vunpack.c.l.b16 %v3986
      %v4052 = vunpack.c.l.b16 %v3996
      %v4053 = vunpack.c.l.b16 %v4010
      %v4054 = vunpack.c.l.b16 %v4020
      %v4055 = vpack.c.b16 %v4024, %v4023
      %v4056 = vpack.c.b16 %v4026, %v4025
      %v4057 = vpack.c.b16 %v4028, %v4027
      %v4058 = vpack.c.b16 %v4030, %v4029
      %v4059 = vpack.c.b16 %v4032, %v4031
      %v4060 = vpack.c.b16 %v4034, %v4033
      %v4061 = vpack.c.b16 %v4036, %v4035
      %v4062 = vpack.c.b16 %v4038, %v4037
      %v4063 = vpack.c.b16 %v4040, %v4039
      %v4064 = vpack.c.b16 %v4042, %v4041
      %v4065 = vpack.c.b16 %v4044, %v4043
      %v4066 = vpack.c.b16 %v4046, %v4045
      %v4067 = vpack.c.b16 %v4048, %v4047
      %v4068 = vpack.c.b16 %v4050, %v4049
      %v4069 = vpack.c.b16 %v4052, %v4051
      %v4070 = vpack.c.b16 %v4054, %v4053
      %v4072 = vsel %vm712, %v4055, 0
      %v4075 = vsel %vm712, %v4056, 0
      %v4078 = vsel %vm712, %v4057, 0
      %v4081 = vsel %vm712, %v4058, 0
      %v4084 = vsel %vm712, %v4059, 0
      %v4087 = vsel %vm712, %v4060, 0
      %v4090 = vsel %vm712, %v4061, 0
      %v4093 = vsel %vm712, %v4062, 0
      %v4096 = vsel %vm712, %v4063, 0
      %v4099 = vsel %vm712, %v4064, 0
      %v4102 = vsel %vm712, %v4065, 0
      %v4105 = vsel %vm712, %v4066, 0
      %v4108 = vsel %vm712, %v4067, 0
      %v4111 = vsel %vm712, %v4068, 0
      %v4114 = vsel %vm712, %v4069, 0
      %v4117 = vsel %vm712, %v4070, 0
      %v4120 = vsel %vm761, %v4022, 0
      %4122 = vmatprep.subr.bf16.mxu0 0
      %4123 = vmatpush1.bf16.msra.mxu0 %v4120
      %4124 = vmatprep.subr.bf16.mxu0 0
      %4125 = vmatpush1.bf16.msra.mxu0 0
      %4126 = vmatprep.subr.bf16.mxu0 0
      %4127 = vmatpush1.bf16.msra.mxu0 0
      %4128 = vmatprep.subr.bf16.mxu0 0
      %4129 = vmatpush1.bf16.msra.mxu0 0
      %4130 = vmatprep.subr.bf16.mxu0 0
      %4131 = vmatpush1.bf16.msra.mxu0 0
      %4132 = vmatprep.subr.bf16.mxu0 0
      %4133 = vmatpush1.bf16.msra.mxu0 0
      %4134 = vmatprep.subr.bf16.mxu0 0
      %4135 = vmatpush1.bf16.msra.mxu0 0
      %4136 = vmatprep.subr.bf16.mxu0 0
      %4137 = vmatpush1.bf16.msra.mxu0 0
      %4138 = vmatprep.subr.bf16.mxu0 0
      %4139 = vmatpush1.bf16.msra.mxu0 0
      %4140 = vmatprep.subr.bf16.mxu0 0
      %4141 = vmatpush1.bf16.msra.mxu0 0
      %4142 = vmatprep.subr.bf16.mxu0 0
      %4143 = vmatpush1.bf16.msra.mxu0 0
      %4144 = vmatprep.subr.bf16.mxu0 0
      %4145 = vmatpush1.bf16.msra.mxu0 0
      %4146 = vmatprep.subr.bf16.mxu0 0
      %4147 = vmatpush1.bf16.msra.mxu0 0
      %4148 = vmatprep.subr.bf16.mxu0 0
      %4149 = vmatpush1.bf16.msra.mxu0 0
      %4150 = vmatprep.subr.bf16.mxu0 0
      %4151 = vmatpush1.bf16.msra.mxu0 0
      %4152 = vmatprep.subr.bf16.mxu0 0
      %4153 = vmatpush1.bf16.msra.mxu0 0
      %4154 = vmatprep.mubr.bf16.mxu0 0
      %4155 = vmatmul.mubr.bf16.gmra.mrb[0].mxu0 %v4072
      %v4156 = vpop.f32.mrb[0].mxu0
      %v4157 = vadd.f32 0.0, %v4156
      %v4158 = vpop.f32.mrb[0].mxu0
      %v4159 = vpop.f32.mrb[0].mxu0
      %v4160 = vadd.f32 0.0, %v4159
      %v4161 = vpop.f32.mrb[0].mxu0
      %4162 = vmatprep.mubr.bf16.mxu0 0
      %4163 = vmatmul.mubr.bf16.gmra.mrb[0].mxu0 %v4075
      %v4164 = vpop.f32.mrb[0].mxu0
      %v4165 = vadd.f32 0.0, %v4164
      %v4166 = vpop.f32.mrb[0].mxu0
      %v4167 = vpop.f32.mrb[0].mxu0
      %v4168 = vadd.f32 0.0, %v4167
      %v4169 = vpop.f32.mrb[0].mxu0
      %4170 = vmatprep.mubr.bf16.mxu0 0
      %4171 = vmatmul.mubr.bf16.gmra.mrb[0].mxu0 %v4078
      %v4172 = vpop.f32.mrb[0].mxu0
      %v4173 = vadd.f32 0.0, %v4172
      %v4174 = vpop.f32.mrb[0].mxu0
      %v4175 = vpop.f32.mrb[0].mxu0
      %v4176 = vadd.f32 0.0, %v4175
      %v4177 = vpop.f32.mrb[0].mxu0
      %4178 = vmatprep.mubr.bf16.mxu0 0
      %4179 = vmatmul.mubr.bf16.gmra.mrb[0].mxu0 %v4081
      %v4180 = vpop.f32.mrb[0].mxu0
      %v4181 = vadd.f32 0.0, %v4180
      %v4182 = vpop.f32.mrb[0].mxu0
      %v4183 = vpop.f32.mrb[0].mxu0
      %v4184 = vadd.f32 0.0, %v4183
      %v4185 = vpop.f32.mrb[0].mxu0
      %4186 = vmatprep.mubr.bf16.mxu0 0
      %4187 = vmatmul.mubr.bf16.gmra.mrb[0].mxu0 %v4084
      %v4188 = vpop.f32.mrb[0].mxu0
      %v4189 = vadd.f32 0.0, %v4188
      %v4190 = vpop.f32.mrb[0].mxu0
      %v4191 = vpop.f32.mrb[0].mxu0
      %v4192 = vadd.f32 0.0, %v4191
      %v4193 = vpop.f32.mrb[0].mxu0
      %4194 = vmatprep.mubr.bf16.mxu0 0
      %4195 = vmatmul.mubr.bf16.gmra.mrb[0].mxu0 %v4087
      %v4196 = vpop.f32.mrb[0].mxu0
      %v4197 = vadd.f32 0.0, %v4196
      %v4198 = vpop.f32.mrb[0].mxu0
      %v4199 = vpop.f32.mrb[0].mxu0
      %v4200 = vadd.f32 0.0, %v4199
      %v4201 = vpop.f32.mrb[0].mxu0
      %4202 = vmatprep.mubr.bf16.mxu0 0
      %4203 = vmatmul.mubr.bf16.gmra.mrb[0].mxu0 %v4090
      %v4204 = vpop.f32.mrb[0].mxu0
      %v4205 = vadd.f32 0.0, %v4204
      %v4206 = vpop.f32.mrb[0].mxu0
      %v4207 = vpop.f32.mrb[0].mxu0
      %v4208 = vadd.f32 0.0, %v4207
      %v4209 = vpop.f32.mrb[0].mxu0
      %4210 = vmatprep.mubr.bf16.mxu0 0
      %4211 = vmatmul.mubr.bf16.gmra.mrb[0].mxu0 %v4093
      %v4212 = vpop.f32.mrb[0].mxu0
      %v4213 = vadd.f32 0.0, %v4212
      %v4214 = vpop.f32.mrb[0].mxu0
      %v4215 = vpop.f32.mrb[0].mxu0
      %v4216 = vadd.f32 0.0, %v4215
      %v4217 = vpop.f32.mrb[0].mxu0
      %4218 = vmatprep.mubr.bf16.mxu0 0
      %4219 = vmatmul.mubr.bf16.gmra.mrb[0].mxu0 %v4096
      %v4220 = vpop.f32.mrb[0].mxu0
      %v4221 = vadd.f32 0.0, %v4220
      %v4222 = vpop.f32.mrb[0].mxu0
      %v4223 = vpop.f32.mrb[0].mxu0
      %v4224 = vadd.f32 0.0, %v4223
      %v4225 = vpop.f32.mrb[0].mxu0
      %4226 = vmatprep.mubr.bf16.mxu0 0
      %4227 = vmatmul.mubr.bf16.gmra.mrb[0].mxu0 %v4099
      %v4228 = vpop.f32.mrb[0].mxu0
      %v4229 = vadd.f32 0.0, %v4228
      %v4230 = vpop.f32.mrb[0].mxu0
      %v4231 = vpop.f32.mrb[0].mxu0
      %v4232 = vadd.f32 0.0, %v4231
      %v4233 = vpop.f32.mrb[0].mxu0
      %4234 = vmatprep.mubr.bf16.mxu0 0
      %4235 = vmatmul.mubr.bf16.gmra.mrb[0].mxu0 %v4102
      %v4236 = vpop.f32.mrb[0].mxu0
      %v4237 = vadd.f32 0.0, %v4236
      %v4238 = vpop.f32.mrb[0].mxu0
      %v4239 = vpop.f32.mrb[0].mxu0
      %v4240 = vadd.f32 0.0, %v4239
      %v4241 = vpop.f32.mrb[0].mxu0
      %4242 = vmatprep.mubr.bf16.mxu0 0
      %4243 = vmatmul.mubr.bf16.gmra.mrb[0].mxu0 %v4105
      %v4244 = vpop.f32.mrb[0].mxu0
      %v4245 = vadd.f32 0.0, %v4244
      %v4246 = vpop.f32.mrb[0].mxu0
      %v4247 = vpop.f32.mrb[0].mxu0
      %v4248 = vadd.f32 0.0, %v4247
      %v4249 = vpop.f32.mrb[0].mxu0
      %4250 = vmatprep.mubr.bf16.mxu0 0
      %4251 = vmatmul.mubr.bf16.gmra.mrb[0].mxu0 %v4108
      %v4252 = vpop.f32.mrb[0].mxu0
      %v4253 = vadd.f32 0.0, %v4252
      %v4254 = vpop.f32.mrb[0].mxu0
      %v4255 = vpop.f32.mrb[0].mxu0
      %v4256 = vadd.f32 0.0, %v4255
      %v4257 = vpop.f32.mrb[0].mxu0
      %4258 = vmatprep.mubr.bf16.mxu0 0
      %4259 = vmatmul.mubr.bf16.gmra.mrb[0].mxu0 %v4111
      %v4260 = vpop.f32.mrb[0].mxu0
      %v4261 = vadd.f32 0.0, %v4260
      %v4262 = vpop.f32.mrb[0].mxu0
      %v4263 = vpop.f32.mrb[0].mxu0
      %v4264 = vadd.f32 0.0, %v4263
      %v4265 = vpop.f32.mrb[0].mxu0
      %4266 = vmatprep.mubr.bf16.mxu0 0
      %4267 = vmatmul.mubr.bf16.gmra.mrb[0].mxu0 %v4114
      %v4268 = vpop.f32.mrb[0].mxu0
      %v4269 = vadd.f32 0.0, %v4268
      %v4270 = vpop.f32.mrb[0].mxu0
      %v4271 = vpop.f32.mrb[0].mxu0
      %v4272 = vadd.f32 0.0, %v4271
      %v4273 = vpop.f32.mrb[0].mxu0
      %4274 = vmatprep.mubr.bf16.mxu0 0
      %4275 = vmatmul.mubr.bf16.gmra.mrb[0].mxu0 %v4117
      %v4276 = vpop.f32.mrb[0].mxu0
      %v4277 = vadd.f32 0.0, %v4276
      %v4278 = vpop.f32.mrb[0].mxu0
      %v4279 = vpop.f32.mrb[0].mxu0
      %v4280 = vadd.f32 0.0, %v4279
      %v4281 = vpop.f32.mrb[0].mxu0
      %4282 = vdwg.mxu0
      %v4283 = vadd.f32 %v3557, %v4157
      %v4284 = vadd.f32 %v3558, %v4160
      %v4285 = vadd.f32 %v3559, %v4165
      %v4286 = vadd.f32 %v3560, %v4168
      %v4287 = vadd.f32 %v3561, %v4173
      %v4288 = vadd.f32 %v3562, %v4176
      %v4289 = vadd.f32 %v3563, %v4181
      %v4290 = vadd.f32 %v3564, %v4184
      %v4291 = vadd.f32 %v3565, %v4189
      %v4292 = vadd.f32 %v3566, %v4192
      %v4293 = vadd.f32 %v3567, %v4197
      %v4294 = vadd.f32 %v3568, %v4200
      %v4295 = vadd.f32 %v3569, %v4205
      %v4296 = vadd.f32 %v3570, %v4208
      %v4297 = vadd.f32 %v3571, %v4213
      %v4298 = vadd.f32 %v3572, %v4216
      %v4299 = vadd.f32 %v3573, %v4221
      %v4300 = vadd.f32 %v3574, %v4224
      %v4301 = vadd.f32 %v3575, %v4229
      %v4302 = vadd.f32 %v3576, %v4232
      %v4303 = vadd.f32 %v3577, %v4237
      %v4304 = vadd.f32 %v3578, %v4240
      %v4305 = vadd.f32 %v3579, %v4245
      %v4306 = vadd.f32 %v3580, %v4248
      %v4307 = vadd.f32 %v3581, %v4253
      %v4308 = vadd.f32 %v3582, %v4256
      %v4309 = vadd.f32 %v3583, %v4261
      %v4310 = vadd.f32 %v3584, %v4264
      %v4311 = vadd.f32 %v3585, %v4269
      %v4312 = vadd.f32 %v3586, %v4272
      %v4313 = vadd.f32 %v3587, %v4277
      %v4314 = vadd.f32 %v3588, %v4280
      %v4315 = vld [vmem:[%s3230] sm:$0xe]
      %v4316 = vld [vmem:[%s3230 + $0xc] sm:$0xe]
      %v4317 = vld [vmem:[%s3230 + $0x18] sm:$0xe]
      %v4318 = vld [vmem:[%s3230 + $0x24] sm:$0xe]
      %v4319 = vld [vmem:[%s3230 + $0x30] sm:$0xe]
      %v4320 = vld [vmem:[%s3230 + $0x3c] sm:$0xe]
      %v4321 = vld [vmem:[%s3230 + $0x48] sm:$0xe]
      %v4322 = vld [vmem:[%s3230 + $0x54] sm:$0xe]
      %v4323 = vld [vmem:[%s3230 + $0x60] sm:$0xe]
      %v4324 = vld [vmem:[%s3230 + $0x6c] sm:$0xe]
      %v4325 = vld [vmem:[%s3230 + $0x78] sm:$0xe]
      %v4326 = vld [vmem:[%s3230 + $0x84] sm:$0xe]
      %v4327 = vld [vmem:[%s3230 + $0x90] sm:$0xe]
      %v4328 = vld [vmem:[%s3230 + $0x9c] sm:$0xe]
      %v4329 = vld [vmem:[%s3230 + $0xa8] sm:$0xe]
      %v4330 = vld [vmem:[%s3230 + $0xb4] sm:$0xe]
      %v4379 = vrot.slane %v4315, 5
      %v4380 = vrot.slane %v4379, 4
      %v4381 = vrot.slane %v3590, 5
      %v4382 = vsel %vm1268, %v4380, %v4381
      %v4383 = vrot.slane %v4381, 4
      %v4384 = vrot.slane %v3591, 5
      %v4385 = vsel %vm1268, %v4383, %v4384
      %v4386 = vrot.slane %v4316, 5
      %v4387 = vrot.slane %v4386, 4
      %v4388 = vrot.slane %v3593, 5
      %v4389 = vsel %vm1268, %v4387, %v4388
      %v4390 = vrot.slane %v4388, 4
      %v4391 = vrot.slane %v3594, 5
      %v4392 = vsel %vm1268, %v4390, %v4391
      %v4393 = vrot.slane %v4317, 5
      %v4394 = vrot.slane %v4393, 4
      %v4395 = vrot.slane %v3596, 5
      %v4396 = vsel %vm1268, %v4394, %v4395
      %v4397 = vrot.slane %v4395, 4
      %v4398 = vrot.slane %v3597, 5
      %v4399 = vsel %vm1268, %v4397, %v4398
      %v4400 = vrot.slane %v4318, 5
      %v4401 = vrot.slane %v4400, 4
      %v4402 = vrot.slane %v3599, 5
      %v4403 = vsel %vm1268, %v4401, %v4402
      %v4404 = vrot.slane %v4402, 4
      %v4405 = vrot.slane %v3600, 5
      %v4406 = vsel %vm1268, %v4404, %v4405
      %v4407 = vrot.slane %v4319, 5
      %v4408 = vrot.slane %v4407, 4
      %v4409 = vrot.slane %v3602, 5
      %v4410 = vsel %vm1268, %v4408, %v4409
      %v4411 = vrot.slane %v4409, 4
      %v4412 = vrot.slane %v3603, 5
      %v4413 = vsel %vm1268, %v4411, %v4412
      %v4414 = vrot.slane %v4320, 5
      %v4415 = vrot.slane %v4414, 4
      %v4416 = vrot.slane %v3605, 5
      %v4417 = vsel %vm1268, %v4415, %v4416
      %v4418 = vrot.slane %v4416, 4
      %v4419 = vrot.slane %v3606, 5
      %v4420 = vsel %vm1268, %v4418, %v4419
      %v4421 = vrot.slane %v4321, 5
      %v4422 = vrot.slane %v4421, 4
      %v4423 = vrot.slane %v3608, 5
      %v4424 = vsel %vm1268, %v4422, %v4423
      %v4425 = vrot.slane %v4423, 4
      %v4426 = vrot.slane %v3609, 5
      %v4427 = vsel %vm1268, %v4425, %v4426
      %v4428 = vrot.slane %v4322, 5
      %v4429 = vrot.slane %v4428, 4
      %v4430 = vrot.slane %v3611, 5
      %v4431 = vsel %vm1268, %v4429, %v4430
      %v4432 = vrot.slane %v4430, 4
      %v4433 = vrot.slane %v3612, 5
      %v4434 = vsel %vm1268, %v4432, %v4433
      %v4435 = vrot.slane %v4323, 5
      %v4436 = vrot.slane %v4435, 4
      %v4437 = vrot.slane %v3614, 5
      %v4438 = vsel %vm1268, %v4436, %v4437
      %v4439 = vrot.slane %v4437, 4
      %v4440 = vrot.slane %v3615, 5
      %v4441 = vsel %vm1268, %v4439, %v4440
      %v4442 = vrot.slane %v4324, 5
      %v4443 = vrot.slane %v4442, 4
      %v4444 = vrot.slane %v3617, 5
      %v4445 = vsel %vm1268, %v4443, %v4444
      %v4446 = vrot.slane %v4444, 4
      %v4447 = vrot.slane %v3618, 5
      %v4448 = vsel %vm1268, %v4446, %v4447
      %v4449 = vrot.slane %v4325, 5
      %v4450 = vrot.slane %v4449, 4
      %v4451 = vrot.slane %v3620, 5
      %v4452 = vsel %vm1268, %v4450, %v4451
      %v4453 = vrot.slane %v4451, 4
      %v4454 = vrot.slane %v3621, 5
      %v4455 = vsel %vm1268, %v4453, %v4454
      %v4456 = vrot.slane %v4326, 5
      %v4457 = vrot.slane %v4456, 4
      %v4458 = vrot.slane %v3623, 5
      %v4459 = vsel %vm1268, %v4457, %v4458
      %v4460 = vrot.slane %v4458, 4
      %v4461 = vrot.slane %v3624, 5
      %v4462 = vsel %vm1268, %v4460, %v4461
      %v4463 = vrot.slane %v4327, 5
      %v4464 = vrot.slane %v4463, 4
      %v4465 = vrot.slane %v3626, 5
      %v4466 = vsel %vm1268, %v4464, %v4465
      %v4467 = vrot.slane %v4465, 4
      %v4468 = vrot.slane %v3627, 5
      %v4469 = vsel %vm1268, %v4467, %v4468
      %v4470 = vrot.slane %v4328, 5
      %v4471 = vrot.slane %v4470, 4
      %v4472 = vrot.slane %v3629, 5
      %v4473 = vsel %vm1268, %v4471, %v4472
      %v4474 = vrot.slane %v4472, 4
      %v4475 = vrot.slane %v3630, 5
      %v4476 = vsel %vm1268, %v4474, %v4475
      %v4477 = vrot.slane %v4329, 5
      %v4478 = vrot.slane %v4477, 4
      %v4479 = vrot.slane %v3632, 5
      %v4480 = vsel %vm1268, %v4478, %v4479
      %v4481 = vrot.slane %v4479, 4
      %v4482 = vrot.slane %v3633, 5
      %v4483 = vsel %vm1268, %v4481, %v4482
      %v4484 = vrot.slane %v4330, 5
      %v4485 = vrot.slane %v4484, 4
      %v4486 = vrot.slane %v3635, 5
      %v4487 = vsel %vm1268, %v4485, %v4486
      %v4488 = vrot.slane %v4486, 4
      %v4489 = vrot.slane %v3636, 5
      %v4490 = vsel %vm1268, %v4488, %v4489
      %s4491 = scalar_lea.vmem %s1, 16
      %v4492 = vld [vmem:[%s4491] sm:$0x3]
      %v4493 = vunpack.c.l.b16 %v4382
      %v4494 = vunpack.c.l.b16 %v4385
      %v4495 = vunpack.c.l.b16 %v4389
      %v4496 = vunpack.c.l.b16 %v4392
      %v4497 = vunpack.c.l.b16 %v4396
      %v4498 = vunpack.c.l.b16 %v4399
      %v4499 = vunpack.c.l.b16 %v4403
      %v4500 = vunpack.c.l.b16 %v4406
      %v4501 = vunpack.c.l.b16 %v4410
      %v4502 = vunpack.c.l.b16 %v4413
      %v4503 = vunpack.c.l.b16 %v4417
      %v4504 = vunpack.c.l.b16 %v4420
      %v4505 = vunpack.c.l.b16 %v4424
      %v4506 = vunpack.c.l.b16 %v4427
      %v4507 = vunpack.c.l.b16 %v4431
      %v4508 = vunpack.c.l.b16 %v4434
      %v4509 = vunpack.c.l.b16 %v4438
      %v4510 = vunpack.c.l.b16 %v4441
      %v4511 = vunpack.c.l.b16 %v4445
      %v4512 = vunpack.c.l.b16 %v4448
      %v4513 = vunpack.c.l.b16 %v4452
      %v4514 = vunpack.c.l.b16 %v4455
      %v4515 = vunpack.c.l.b16 %v4459
      %v4516 = vunpack.c.l.b16 %v4462
      %v4517 = vunpack.c.l.b16 %v4466
      %v4518 = vunpack.c.l.b16 %v4469
      %v4519 = vunpack.c.l.b16 %v4473
      %v4520 = vunpack.c.l.b16 %v4476
      %v4521 = vunpack.c.l.b16 %v4480
      %v4522 = vunpack.c.l.b16 %v4483
      %v4523 = vunpack.c.l.b16 %v4487
      %v4524 = vunpack.c.l.b16 %v4490
      %v4525 = vpack.c.b16 %v4494, %v4493
      %v4526 = vpack.c.b16 %v4496, %v4495
      %v4527 = vpack.c.b16 %v4498, %v4497
      %v4528 = vpack.c.b16 %v4500, %v4499
      %v4529 = vpack.c.b16 %v4502, %v4501
      %v4530 = vpack.c.b16 %v4504, %v4503
      %v4531 = vpack.c.b16 %v4506, %v4505
      %v4532 = vpack.c.b16 %v4508, %v4507
      %v4533 = vpack.c.b16 %v4510, %v4509
      %v4534 = vpack.c.b16 %v4512, %v4511
      %v4535 = vpack.c.b16 %v4514, %v4513
      %v4536 = vpack.c.b16 %v4516, %v4515
      %v4537 = vpack.c.b16 %v4518, %v4517
      %v4538 = vpack.c.b16 %v4520, %v4519
      %v4539 = vpack.c.b16 %v4522, %v4521
      %v4540 = vpack.c.b16 %v4524, %v4523
      %v4542 = vsel %vm712, %v4525, 0
      %v4545 = vsel %vm712, %v4526, 0
      %v4548 = vsel %vm712, %v4527, 0
      %v4551 = vsel %vm712, %v4528, 0
      %v4554 = vsel %vm712, %v4529, 0
      %v4557 = vsel %vm712, %v4530, 0
      %v4560 = vsel %vm712, %v4531, 0
      %v4563 = vsel %vm712, %v4532, 0
      %v4566 = vsel %vm712, %v4533, 0
      %v4569 = vsel %vm712, %v4534, 0
      %v4572 = vsel %vm712, %v4535, 0
      %v4575 = vsel %vm712, %v4536, 0
      %v4578 = vsel %vm712, %v4537, 0
      %v4581 = vsel %vm712, %v4538, 0
      %v4584 = vsel %vm712, %v4539, 0
      %v4587 = vsel %vm712, %v4540, 0
      %v4590 = vsel %vm761, %v4492, 0
      %4592 = vmatprep.subr.bf16.mxu0 0
      %4593 = vmatpush1.bf16.msra.mxu0 %v4590
      %4594 = vmatprep.subr.bf16.mxu0 0
      %4595 = vmatpush1.bf16.msra.mxu0 0
      %4596 = vmatprep.subr.bf16.mxu0 0
      %4597 = vmatpush1.bf16.msra.mxu0 0
      %4598 = vmatprep.subr.bf16.mxu0 0
      %4599 = vmatpush1.bf16.msra.mxu0 0
      %4600 = vmatprep.subr.bf16.mxu0 0
      %4601 = vmatpush1.bf16.msra.mxu0 0
      %4602 = vmatprep.subr.bf16.mxu0 0
      %4603 = vmatpush1.bf16.msra.mxu0 0
      %4604 = vmatprep.subr.bf16.mxu0 0
      %4605 = vmatpush1.bf16.msra.mxu0 0
      %4606 = vmatprep.subr.bf16.mxu0 0
      %4607 = vmatpush1.bf16.msra.mxu0 0
      %4608 = vmatprep.subr.bf16.mxu0 0
      %4609 = vmatpush1.bf16.msra.mxu0 0
      %4610 = vmatprep.subr.bf16.mxu0 0
      %4611 = vmatpush1.bf16.msra.mxu0 0
      %4612 = vmatprep.subr.bf16.mxu0 0
      %4613 = vmatpush1.bf16.msra.mxu0 0
      %4614 = vmatprep.subr.bf16.mxu0 0
      %4615 = vmatpush1.bf16.msra.mxu0 0
      %4616 = vmatprep.subr.bf16.mxu0 0
      %4617 = vmatpush1.bf16.msra.mxu0 0
      %4618 = vmatprep.subr.bf16.mxu0 0
      %4619 = vmatpush1.bf16.msra.mxu0 0
      %4620 = vmatprep.subr.bf16.mxu0 0
      %4621 = vmatpush1.bf16.msra.mxu0 0
      %4622 = vmatprep.subr.bf16.mxu0 0
      %4623 = vmatpush1.bf16.msra.mxu0 0
      %4624 = vmatprep.mubr.bf16.mxu0 0
      %4625 = vmatmul.mubr.bf16.gmra.mrb[0].mxu0 %v4542
      %v4626 = vpop.f32.mrb[0].mxu0
      %v4627 = vadd.f32 0.0, %v4626
      %v4628 = vpop.f32.mrb[0].mxu0
      %v4629 = vpop.f32.mrb[0].mxu0
      %v4630 = vadd.f32 0.0, %v4629
      %v4631 = vpop.f32.mrb[0].mxu0
      %4632 = vmatprep.mubr.bf16.mxu0 0
      %4633 = vmatmul.mubr.bf16.gmra.mrb[0].mxu0 %v4545
      %v4634 = vpop.f32.mrb[0].mxu0
      %v4635 = vadd.f32 0.0, %v4634
      %v4636 = vpop.f32.mrb[0].mxu0
      %v4637 = vpop.f32.mrb[0].mxu0
      %v4638 = vadd.f32 0.0, %v4637
      %v4639 = vpop.f32.mrb[0].mxu0
      %4640 = vmatprep.mubr.bf16.mxu0 0
      %4641 = vmatmul.mubr.bf16.gmra.mrb[0].mxu0 %v4548
      %v4642 = vpop.f32.mrb[0].mxu0
      %v4643 = vadd.f32 0.0, %v4642
      %v4644 = vpop.f32.mrb[0].mxu0
      %v4645 = vpop.f32.mrb[0].mxu0
      %v4646 = vadd.f32 0.0, %v4645
      %v4647 = vpop.f32.mrb[0].mxu0
      %4648 = vmatprep.mubr.bf16.mxu0 0
      %4649 = vmatmul.mubr.bf16.gmra.mrb[0].mxu0 %v4551
      %v4650 = vpop.f32.mrb[0].mxu0
      %v4651 = vadd.f32 0.0, %v4650
      %v4652 = vpop.f32.mrb[0].mxu0
      %v4653 = vpop.f32.mrb[0].mxu0
      %v4654 = vadd.f32 0.0, %v4653
      %v4655 = vpop.f32.mrb[0].mxu0
      %4656 = vmatprep.mubr.bf16.mxu0 0
      %4657 = vmatmul.mubr.bf16.gmra.mrb[0].mxu0 %v4554
      %v4658 = vpop.f32.mrb[0].mxu0
      %v4659 = vadd.f32 0.0, %v4658
      %v4660 = vpop.f32.mrb[0].mxu0
      %v4661 = vpop.f32.mrb[0].mxu0
      %v4662 = vadd.f32 0.0, %v4661
      %v4663 = vpop.f32.mrb[0].mxu0
      %4664 = vmatprep.mubr.bf16.mxu0 0
      %4665 = vmatmul.mubr.bf16.gmra.mrb[0].mxu0 %v4557
      %v4666 = vpop.f32.mrb[0].mxu0
      %v4667 = vadd.f32 0.0, %v4666
      %v4668 = vpop.f32.mrb[0].mxu0
      %v4669 = vpop.f32.mrb[0].mxu0
      %v4670 = vadd.f32 0.0, %v4669
      %v4671 = vpop.f32.mrb[0].mxu0
      %4672 = vmatprep.mubr.bf16.mxu0 0
      %4673 = vmatmul.mubr.bf16.gmra.mrb[0].mxu0 %v4560
      %v4674 = vpop.f32.mrb[0].mxu0
      %v4675 = vadd.f32 0.0, %v4674
      %v4676 = vpop.f32.mrb[0].mxu0
      %v4677 = vpop.f32.mrb[0].mxu0
      %v4678 = vadd.f32 0.0, %v4677
      %v4679 = vpop.f32.mrb[0].mxu0
      %4680 = vmatprep.mubr.bf16.mxu0 0
      %4681 = vmatmul.mubr.bf16.gmra.mrb[0].mxu0 %v4563
      %v4682 = vpop.f32.mrb[0].mxu0
      %v4683 = vadd.f32 0.0, %v4682
      %v4684 = vpop.f32.mrb[0].mxu0
      %v4685 = vpop.f32.mrb[0].mxu0
      %v4686 = vadd.f32 0.0, %v4685
      %v4687 = vpop.f32.mrb[0].mxu0
      %4688 = vmatprep.mubr.bf16.mxu0 0
      %4689 = vmatmul.mubr.bf16.gmra.mrb[0].mxu0 %v4566
      %v4690 = vpop.f32.mrb[0].mxu0
      %v4691 = vadd.f32 0.0, %v4690
      %v4692 = vpop.f32.mrb[0].mxu0
      %v4693 = vpop.f32.mrb[0].mxu0
      %v4694 = vadd.f32 0.0, %v4693
      %v4695 = vpop.f32.mrb[0].mxu0
      %4696 = vmatprep.mubr.bf16.mxu0 0
      %4697 = vmatmul.mubr.bf16.gmra.mrb[0].mxu0 %v4569
      %v4698 = vpop.f32.mrb[0].mxu0
      %v4699 = vadd.f32 0.0, %v4698
      %v4700 = vpop.f32.mrb[0].mxu0
      %v4701 = vpop.f32.mrb[0].mxu0
      %v4702 = vadd.f32 0.0, %v4701
      %v4703 = vpop.f32.mrb[0].mxu0
      %4704 = vmatprep.mubr.bf16.mxu0 0
      %4705 = vmatmul.mubr.bf16.gmra.mrb[0].mxu0 %v4572
      %v4706 = vpop.f32.mrb[0].mxu0
      %v4707 = vadd.f32 0.0, %v4706
      %v4708 = vpop.f32.mrb[0].mxu0
      %v4709 = vpop.f32.mrb[0].mxu0
      %v4710 = vadd.f32 0.0, %v4709
      %v4711 = vpop.f32.mrb[0].mxu0
      %4712 = vmatprep.mubr.bf16.mxu0 0
      %4713 = vmatmul.mubr.bf16.gmra.mrb[0].mxu0 %v4575
      %v4714 = vpop.f32.mrb[0].mxu0
      %v4715 = vadd.f32 0.0, %v4714
      %v4716 = vpop.f32.mrb[0].mxu0
      %v4717 = vpop.f32.mrb[0].mxu0
      %v4718 = vadd.f32 0.0, %v4717
      %v4719 = vpop.f32.mrb[0].mxu0
      %4720 = vmatprep.mubr.bf16.mxu0 0
      %4721 = vmatmul.mubr.bf16.gmra.mrb[0].mxu0 %v4578
      %v4722 = vpop.f32.mrb[0].mxu0
      %v4723 = vadd.f32 0.0, %v4722
      %v4724 = vpop.f32.mrb[0].mxu0
      %v4725 = vpop.f32.mrb[0].mxu0
      %v4726 = vadd.f32 0.0, %v4725
      %v4727 = vpop.f32.mrb[0].mxu0
      %4728 = vmatprep.mubr.bf16.mxu0 0
      %4729 = vmatmul.mubr.bf16.gmra.mrb[0].mxu0 %v4581
      %v4730 = vpop.f32.mrb[0].mxu0
      %v4731 = vadd.f32 0.0, %v4730
      %v4732 = vpop.f32.mrb[0].mxu0
      %v4733 = vpop.f32.mrb[0].mxu0
      %v4734 = vadd.f32 0.0, %v4733
      %v4735 = vpop.f32.mrb[0].mxu0
      %4736 = vmatprep.mubr.bf16.mxu0 0
      %4737 = vmatmul.mubr.bf16.gmra.mrb[0].mxu0 %v4584
      %v4738 = vpop.f32.mrb[0].mxu0
      %v4739 = vadd.f32 0.0, %v4738
      %v4740 = vpop.f32.mrb[0].mxu0
      %v4741 = vpop.f32.mrb[0].mxu0
      %v4742 = vadd.f32 0.0, %v4741
      %v4743 = vpop.f32.mrb[0].mxu0
      %4744 = vmatprep.mubr.bf16.mxu0 0
      %4745 = vmatmul.mubr.bf16.gmra.mrb[0].mxu0 %v4587
      %v4746 = vpop.f32.mrb[0].mxu0
      %v4747 = vadd.f32 0.0, %v4746
      %v4748 = vpop.f32.mrb[0].mxu0
      %v4749 = vpop.f32.mrb[0].mxu0
      %v4750 = vadd.f32 0.0, %v4749
      %v4751 = vpop.f32.mrb[0].mxu0
      %4752 = vdwg.mxu0
      %v4753 = vadd.f32 %v4283, %v4627
      %v4754 = vadd.f32 %v4284, %v4630
      %v4755 = vadd.f32 %v4285, %v4635
      %v4756 = vadd.f32 %v4286, %v4638
      %v4757 = vadd.f32 %v4287, %v4643
      %v4758 = vadd.f32 %v4288, %v4646
      %v4759 = vadd.f32 %v4289, %v4651
      %v4760 = vadd.f32 %v4290, %v4654
      %v4761 = vadd.f32 %v4291, %v4659
      %v4762 = vadd.f32 %v4292, %v4662
      %v4763 = vadd.f32 %v4293, %v4667
      %v4764 = vadd.f32 %v4294, %v4670
      %v4765 = vadd.f32 %v4295, %v4675
      %v4766 = vadd.f32 %v4296, %v4678
      %v4767 = vadd.f32 %v4297, %v4683
      %v4768 = vadd.f32 %v4298, %v4686
      %v4769 = vadd.f32 %v4299, %v4691
      %v4770 = vadd.f32 %v4300, %v4694
      %v4771 = vadd.f32 %v4301, %v4699
      %v4772 = vadd.f32 %v4302, %v4702
      %v4773 = vadd.f32 %v4303, %v4707
      %v4774 = vadd.f32 %v4304, %v4710
      %v4775 = vadd.f32 %v4305, %v4715
      %v4776 = vadd.f32 %v4306, %v4718
      %v4777 = vadd.f32 %v4307, %v4723
      %v4778 = vadd.f32 %v4308, %v4726
      %v4779 = vadd.f32 %v4309, %v4731
      %v4780 = vadd.f32 %v4310, %v4734
      %v4781 = vadd.f32 %v4311, %v4739
      %v4782 = vadd.f32 %v4312, %v4742
      %v4783 = vadd.f32 %v4313, %v4747
      %v4784 = vadd.f32 %v4314, %v4750
      %v4785 = vld [vmem:[%s2] sm:$0x1]
      %v4787 = vlaneseq
      %v4788 = vshrl.u32 %v4787, 7
      %v4789 = vsub.s32 0, %v4788
      %v4790 = vrot.slane %v4785, %v4789
      %v4792 = vadd.f32 %v4753, %v4790
      %v4793 = vadd.f32 %v4754, %v4790
      %v4794 = vadd.f32 %v4755, %v4790
      %v4795 = vadd.f32 %v4756, %v4790
      %v4796 = vadd.f32 %v4757, %v4790
      %v4797 = vadd.f32 %v4758, %v4790
      %v4798 = vadd.f32 %v4759, %v4790
      %v4799 = vadd.f32 %v4760, %v4790
      %v4800 = vadd.f32 %v4761, %v4790
      %v4801 = vadd.f32 %v4762, %v4790
      %v4802 = vadd.f32 %v4763, %v4790
      %v4803 = vadd.f32 %v4764, %v4790
      %v4804 = vadd.f32 %v4765, %v4790
      %v4805 = vadd.f32 %v4766, %v4790
      %v4806 = vadd.f32 %v4767, %v4790
      %v4807 = vadd.f32 %v4768, %v4790
      %v4808 = vadd.f32 %v4769, %v4790
      %v4809 = vadd.f32 %v4770, %v4790
      %v4810 = vadd.f32 %v4771, %v4790
      %v4811 = vadd.f32 %v4772, %v4790
      %v4812 = vadd.f32 %v4773, %v4790
      %v4813 = vadd.f32 %v4774, %v4790
      %v4814 = vadd.f32 %v4775, %v4790
      %v4815 = vadd.f32 %v4776, %v4790
      %v4816 = vadd.f32 %v4777, %v4790
      %v4817 = vadd.f32 %v4778, %v4790
      %v4818 = vadd.f32 %v4779, %v4790
      %v4819 = vadd.f32 %v4780, %v4790
      %v4820 = vadd.f32 %v4781, %v4790
      %v4821 = vadd.f32 %v4782, %v4790
      %v4822 = vadd.f32 %v4783, %v4790
      %v4823 = vadd.f32 %v4784, %v4790
      %v4824 = vmul.f32 %v4792, 0.01
      %v4825 = vmul.f32 %v4793, 0.01
      %v4826 = vmul.f32 %v4794, 0.01
      %v4827 = vmul.f32 %v4795, 0.01
      %v4828 = vmul.f32 %v4796, 0.01
      %v4829 = vmul.f32 %v4797, 0.01
      %v4830 = vmul.f32 %v4798, 0.01
      %v4831 = vmul.f32 %v4799, 0.01
      %v4832 = vmul.f32 %v4800, 0.01
      %v4833 = vmul.f32 %v4801, 0.01
      %v4834 = vmul.f32 %v4802, 0.01
      %v4835 = vmul.f32 %v4803, 0.01
      %v4836 = vmul.f32 %v4804, 0.01
      %v4837 = vmul.f32 %v4805, 0.01
      %v4838 = vmul.f32 %v4806, 0.01
      %v4839 = vmul.f32 %v4807, 0.01
      %v4840 = vmul.f32 %v4808, 0.01
      %v4841 = vmul.f32 %v4809, 0.01
      %v4842 = vmul.f32 %v4810, 0.01
      %v4843 = vmul.f32 %v4811, 0.01
      %v4844 = vmul.f32 %v4812, 0.01
      %v4845 = vmul.f32 %v4813, 0.01
      %v4846 = vmul.f32 %v4814, 0.01
      %v4847 = vmul.f32 %v4815, 0.01
      %v4848 = vmul.f32 %v4816, 0.01
      %v4849 = vmul.f32 %v4817, 0.01
      %v4850 = vmul.f32 %v4818, 0.01
      %v4851 = vmul.f32 %v4819, 0.01
      %v4852 = vmul.f32 %v4820, 0.01
      %v4853 = vmul.f32 %v4821, 0.01
      %v4854 = vmul.f32 %v4822, 0.01
      %v4855 = vmul.f32 %v4823, 0.01
      %v4856 = vmax.f32 %v4792, %v4824
      %v4857 = vmax.f32 %v4793, %v4825
      %v4858 = vmax.f32 %v4794, %v4826
      %v4859 = vmax.f32 %v4795, %v4827
      %v4860 = vmax.f32 %v4796, %v4828
      %v4861 = vmax.f32 %v4797, %v4829
      %v4862 = vmax.f32 %v4798, %v4830
      %v4863 = vmax.f32 %v4799, %v4831
      %v4864 = vmax.f32 %v4800, %v4832
      %v4865 = vmax.f32 %v4801, %v4833
      %v4866 = vmax.f32 %v4802, %v4834
      %v4867 = vmax.f32 %v4803, %v4835
      %v4868 = vmax.f32 %v4804, %v4836
      %v4869 = vmax.f32 %v4805, %v4837
      %v4870 = vmax.f32 %v4806, %v4838
      %v4871 = vmax.f32 %v4807, %v4839
      %v4872 = vmax.f32 %v4808, %v4840
      %v4873 = vmax.f32 %v4809, %v4841
      %v4874 = vmax.f32 %v4810, %v4842
      %v4875 = vmax.f32 %v4811, %v4843
      %v4876 = vmax.f32 %v4812, %v4844
      %v4877 = vmax.f32 %v4813, %v4845
      %v4878 = vmax.f32 %v4814, %v4846
      %v4879 = vmax.f32 %v4815, %v4847
      %v4880 = vmax.f32 %v4816, %v4848
      %v4881 = vmax.f32 %v4817, %v4849
      %v4882 = vmax.f32 %v4818, %v4850
      %v4883 = vmax.f32 %v4819, %v4851
      %v4884 = vmax.f32 %v4820, %v4852
      %v4885 = vmax.f32 %v4821, %v4853
      %v4886 = vmax.f32 %v4822, %v4854
      %v4887 = vmax.f32 %v4823, %v4855
      %vm4888 = vcmask 64512
      %4889 = vst.msk [vmem:[#allocation2] sm:$0xff] %vm4888, 0.0
      %4890 = vst.msk [vmem:[#allocation2 + $0x8] sm:$0xff] %vm4888, 0.0
      %vm4891 = vcmask 58368
      %4892 = vst.msk [vmem:[#allocation2 + $0x10] sm:$0x3] %vm4891, 0.0
      %4893 = vst.msk [vmem:[#allocation2 + $0x18] sm:$0xff] %vm4888, 0.0
      %4894 = vst.msk [vmem:[#allocation2 + $0x20] sm:$0xff] %vm4888, 0.0
      %4895 = vst.msk [vmem:[#allocation2 + $0x28] sm:$0x3] %vm4891, 0.0
      %4896 = vst.msk [vmem:[#allocation2 + $0x30] sm:$0xff] %vm4888, 0.0
      %4897 = vst.msk [vmem:[#allocation2 + $0x38] sm:$0xff] %vm4888, 0.0
      %4898 = vst.msk [vmem:[#allocation2 + $0x40] sm:$0x3] %vm4891, 0.0
      %4899 = vst.msk [vmem:[#allocation2 + $0x48] sm:$0xff] %vm4888, 0.0
      %4900 = vst.msk [vmem:[#allocation2 + $0x50] sm:$0xff] %vm4888, 0.0
      %4901 = vst.msk [vmem:[#allocation2 + $0x58] sm:$0x3] %vm4891, 0.0
      %4902 = vst.msk [vmem:[#allocation2 + $0x60] sm:$0xff] %vm4888, 0.0
      %4903 = vst.msk [vmem:[#allocation2 + $0x68] sm:$0xff] %vm4888, 0.0
      %4904 = vst.msk [vmem:[#allocation2 + $0x70] sm:$0x3] %vm4891, 0.0
      %4905 = vst.msk [vmem:[#allocation2 + $0x78] sm:$0xff] %vm4888, 0.0
      %4906 = vst.msk [vmem:[#allocation2 + $0x80] sm:$0xff] %vm4888, 0.0
      %4907 = vst.msk [vmem:[#allocation2 + $0x88] sm:$0x3] %vm4891, 0.0
      %4908 = vst.msk [vmem:[#allocation2 + $0x90] sm:$0xff] %vm4888, 0.0
      %4909 = vst.msk [vmem:[#allocation2 + $0x98] sm:$0xff] %vm4888, 0.0
      %4910 = vst.msk [vmem:[#allocation2 + $0xa0] sm:$0x3] %vm4891, 0.0
      %4911 = vst.msk [vmem:[#allocation2 + $0xa8] sm:$0xff] %vm4888, 0.0
      %4912 = vst.msk [vmem:[#allocation2 + $0xb0] sm:$0xff] %vm4888, 0.0
      %4913 = vst.msk [vmem:[#allocation2 + $0xb8] sm:$0x3] %vm4891, 0.0
      %4914 = vst.msk [vmem:[#allocation2 + $0xc0] sm:$0xff] %vm4888, 0.0
      %4915 = vst.msk [vmem:[#allocation2 + $0xc8] sm:$0xff] %vm4888, 0.0
      %4916 = vst.msk [vmem:[#allocation2 + $0xd0] sm:$0x3] %vm4891, 0.0
      %4917 = vst.msk [vmem:[#allocation2 + $0xd8] sm:$0xff] %vm4888, 0.0
      %4918 = vst.msk [vmem:[#allocation2 + $0xe0] sm:$0xff] %vm4888, 0.0
      %4919 = vst.msk [vmem:[#allocation2 + $0xe8] sm:$0x3] %vm4891, 0.0
      %4920 = vst.msk [vmem:[#allocation2 + $0xf0] sm:$0xff] %vm4888, 0.0
      %4921 = vst.msk [vmem:[#allocation2 + $0xf8] sm:$0xff] %vm4888, 0.0
      %4922 = vst.msk [vmem:[#allocation2 + $0x100] sm:$0x3] %vm4891, 0.0
      %4923 = vst.msk [vmem:[#allocation2 + $0x108] sm:$0xff] %vm4888, 0.0
      %4924 = vst.msk [vmem:[#allocation2 + $0x110] sm:$0xff] %vm4888, 0.0
      %4925 = vst.msk [vmem:[#allocation2 + $0x118] sm:$0x3] %vm4891, 0.0
      %4926 = vst.msk [vmem:[#allocation2 + $0x120] sm:$0xff] %vm4888, 0.0
      %4927 = vst.msk [vmem:[#allocation2 + $0x128] sm:$0xff] %vm4888, 0.0
      %4928 = vst.msk [vmem:[#allocation2 + $0x130] sm:$0x3] %vm4891, 0.0
      %4929 = vst.msk [vmem:[#allocation2 + $0x138] sm:$0xff] %vm4888, 0.0
      %4930 = vst.msk [vmem:[#allocation2 + $0x140] sm:$0xff] %vm4888, 0.0
      %4931 = vst.msk [vmem:[#allocation2 + $0x148] sm:$0x3] %vm4891, 0.0
      %4932 = vst.msk [vmem:[#allocation2 + $0x150] sm:$0xff] %vm4888, 0.0
      %4933 = vst.msk [vmem:[#allocation2 + $0x158] sm:$0xff] %vm4888, 0.0
      %4934 = vst.msk [vmem:[#allocation2 + $0x160] sm:$0x3] %vm4891, 0.0
      %4935 = vst.msk [vmem:[#allocation2 + $0x168] sm:$0xff] %vm4888, 0.0
      %4936 = vst.msk [vmem:[#allocation2 + $0x170] sm:$0xff] %vm4888, 0.0
      %4937 = vst.msk [vmem:[#allocation2 + $0x178] sm:$0x3] %vm4891, 0.0
      %4938 = vst.msk [vmem:[#allocation2 + $0x180] sm:$0xff] %vm4888, 0.0
      %4939 = vst.msk [vmem:[#allocation2 + $0x188] sm:$0xff] %vm4888, 0.0
      %4940 = vst.msk [vmem:[#allocation2 + $0x190] sm:$0x3] %vm4891, 0.0
      %4941 = vst.msk [vmem:[#allocation2 + $0x198] sm:$0xff] %vm4888, 0.0
      %4942 = vst.msk [vmem:[#allocation2 + $0x1a0] sm:$0xff] %vm4888, 0.0
      %4943 = vst.msk [vmem:[#allocation2 + $0x1a8] sm:$0x3] %vm4891, 0.0
      %s4944 = scalar_lea.vmem [#allocation2], 24
      %4945 = vst.msk [vmem:[%s4944 + $0x1] sm:$0xff] %vm4888, %v4856
      %4946 = vst.msk [vmem:[%s4944 + $0x9] sm:$0xff] %vm4888, %v4857
      %4947 = vst.msk [vmem:[%s4944 + $0x19] sm:$0xff] %vm4888, %v4858
      %4948 = vst.msk [vmem:[%s4944 + $0x21] sm:$0xff] %vm4888, %v4859
      %4949 = vst.msk [vmem:[%s4944 + $0x31] sm:$0xff] %vm4888, %v4860
      %4950 = vst.msk [vmem:[%s4944 + $0x39] sm:$0xff] %vm4888, %v4861
      %4951 = vst.msk [vmem:[%s4944 + $0x49] sm:$0xff] %vm4888, %v4862
      %4952 = vst.msk [vmem:[%s4944 + $0x51] sm:$0xff] %vm4888, %v4863
      %4953 = vst.msk [vmem:[%s4944 + $0x61] sm:$0xff] %vm4888, %v4864
      %4954 = vst.msk [vmem:[%s4944 + $0x69] sm:$0xff] %vm4888, %v4865
      %4955 = vst.msk [vmem:[%s4944 + $0x79] sm:$0xff] %vm4888, %v4866
      %4956 = vst.msk [vmem:[%s4944 + $0x81] sm:$0xff] %vm4888, %v4867
      %4957 = vst.msk [vmem:[%s4944 + $0x91] sm:$0xff] %vm4888, %v4868
      %4958 = vst.msk [vmem:[%s4944 + $0x99] sm:$0xff] %vm4888, %v4869
      %4959 = vst.msk [vmem:[%s4944 + $0xa9] sm:$0xff] %vm4888, %v4870
      %4960 = vst.msk [vmem:[%s4944 + $0xb1] sm:$0xff] %vm4888, %v4871
      %4961 = vst.msk [vmem:[%s4944 + $0xc1] sm:$0xff] %vm4888, %v4872
      %4962 = vst.msk [vmem:[%s4944 + $0xc9] sm:$0xff] %vm4888, %v4873
      %4963 = vst.msk [vmem:[%s4944 + $0xd9] sm:$0xff] %vm4888, %v4874
      %4964 = vst.msk [vmem:[%s4944 + $0xe1] sm:$0xff] %vm4888, %v4875
      %4965 = vst.msk [vmem:[%s4944 + $0xf1] sm:$0xff] %vm4888, %v4876
      %4966 = vst.msk [vmem:[%s4944 + $0xf9] sm:$0xff] %vm4888, %v4877
      %4967 = vst.msk [vmem:[%s4944 + $0x109] sm:$0xff] %vm4888, %v4878
      %4968 = vst.msk [vmem:[%s4944 + $0x111] sm:$0xff] %vm4888, %v4879
      %4969 = vst.msk [vmem:[%s4944 + $0x121] sm:$0xff] %vm4888, %v4880
      %4970 = vst.msk [vmem:[%s4944 + $0x129] sm:$0xff] %vm4888, %v4881
      %4971 = vst.msk [vmem:[%s4944 + $0x139] sm:$0xff] %vm4888, %v4882
      %4972 = vst.msk [vmem:[%s4944 + $0x141] sm:$0xff] %vm4888, %v4883
      %4973 = vst.msk [vmem:[%s4944 + $0x151] sm:$0xff] %vm4888, %v4884
      %4974 = vst.msk [vmem:[%s4944 + $0x159] sm:$0xff] %vm4888, %v4885
      %4975 = vst.msk [vmem:[%s4944 + $0x169] sm:$0xff] %vm4888, %v4886
      %4976 = vst.msk [vmem:[%s4944 + $0x171] sm:$0xff] %vm4888, %v4887
      %v4977 = vld [vmem:[#allocation2] sm:$0xff]
      %v4978 = vld [vmem:[#allocation2 + $0x8] sm:$0xff]
      %v4979 = vld [vmem:[#allocation2 + $0x18] sm:$0xff]
      %v4980 = vld [vmem:[#allocation2 + $0x20] sm:$0xff]
      %v4981 = vld [vmem:[#allocation2 + $0x30] sm:$0xff]
      %v4982 = vld [vmem:[#allocation2 + $0x38] sm:$0xff]
      %v4983 = vld [vmem:[#allocation2 + $0x48] sm:$0xff]
      %v4984 = vld [vmem:[#allocation2 + $0x50] sm:$0xff]
      %v4985 = vld [vmem:[#allocation2 + $0x60] sm:$0xff]
      %v4986 = vld [vmem:[#allocation2 + $0x68] sm:$0xff]
      %v4987 = vld [vmem:[#allocation2 + $0x78] sm:$0xff]
      %v4988 = vld [vmem:[#allocation2 + $0x80] sm:$0xff]
      %v4989 = vld [vmem:[#allocation2 + $0x90] sm:$0xff]
      %v4990 = vld [vmem:[#allocation2 + $0x98] sm:$0xff]
      %v4991 = vld [vmem:[#allocation2 + $0xa8] sm:$0xff]
      %v4992 = vld [vmem:[#allocation2 + $0xb0] sm:$0xff]
      %v4993 = vld [vmem:[#allocation2 + $0xc0] sm:$0xff]
      %v4994 = vld [vmem:[#allocation2 + $0xc8] sm:$0xff]
      %v4995 = vld [vmem:[#allocation2 + $0xd8] sm:$0xff]
      %v4996 = vld [vmem:[#allocation2 + $0xe0] sm:$0xff]
      %v4997 = vld [vmem:[#allocation2 + $0xf0] sm:$0xff]
      %v4998 = vld [vmem:[#allocation2 + $0xf8] sm:$0xff]
      %v4999 = vld [vmem:[#allocation2 + $0x108] sm:$0xff]
      %v5000 = vld [vmem:[#allocation2 + $0x110] sm:$0xff]
      %v5001 = vld [vmem:[#allocation2 + $0x120] sm:$0xff]
      %v5002 = vld [vmem:[#allocation2 + $0x128] sm:$0xff]
      %v5003 = vld [vmem:[#allocation2 + $0x138] sm:$0xff]
      %v5004 = vld [vmem:[#allocation2 + $0x140] sm:$0xff]
      %v5005 = vld [vmem:[#allocation2 + $0x150] sm:$0xff]
      %v5006 = vld [vmem:[#allocation2 + $0x158] sm:$0xff]
      %v5007 = vld [vmem:[#allocation2 + $0x168] sm:$0xff]
      %v5008 = vld [vmem:[#allocation2 + $0x170] sm:$0xff]
      %v5009 = vpack.c.bf16 %v4978, %v4977
      %v5010 = vpack.c.bf16 %v4980, %v4979
      %v5011 = vpack.c.bf16 %v4982, %v4981
      %v5012 = vpack.c.bf16 %v4984, %v4983
      %v5013 = vpack.c.bf16 %v4986, %v4985
      %v5014 = vpack.c.bf16 %v4988, %v4987
      %v5015 = vpack.c.bf16 %v4990, %v4989
      %v5016 = vpack.c.bf16 %v4992, %v4991
      %v5017 = vpack.c.bf16 %v4994, %v4993
      %v5018 = vpack.c.bf16 %v4996, %v4995
      %v5019 = vpack.c.bf16 %v4998, %v4997
      %v5020 = vpack.c.bf16 %v5000, %v4999
      %v5021 = vpack.c.bf16 %v5002, %v5001
      %v5022 = vpack.c.bf16 %v5004, %v5003
      %v5023 = vpack.c.bf16 %v5006, %v5005
      %v5024 = vpack.c.bf16 %v5008, %v5007
      %v5025 = vld [vmem:[%s3] sm:$0xf]
      %v5026 = vld [vmem:[#allocation2 + $0x1] sm:$0xff]
      %v5027 = vld [vmem:[#allocation2 + $0x9] sm:$0xff]
      %v5028 = vld [vmem:[#allocation2 + $0x19] sm:$0xff]
      %v5029 = vld [vmem:[#allocation2 + $0x21] sm:$0xff]
      %v5030 = vld [vmem:[#allocation2 + $0x31] sm:$0xff]
      %v5031 = vld [vmem:[#allocation2 + $0x39] sm:$0xff]
      %v5032 = vld [vmem:[#allocation2 + $0x49] sm:$0xff]
      %v5033 = vld [vmem:[#allocation2 + $0x51] sm:$0xff]
      %v5034 = vld [vmem:[#allocation2 + $0x61] sm:$0xff]
      %v5035 = vld [vmem:[#allocation2 + $0x69] sm:$0xff]
      %v5036 = vld [vmem:[#allocation2 + $0x79] sm:$0xff]
      %v5037 = vld [vmem:[#allocation2 + $0x81] sm:$0xff]
      %v5038 = vld [vmem:[#allocation2 + $0x91] sm:$0xff]
      %v5039 = vld [vmem:[#allocation2 + $0x99] sm:$0xff]
      %v5040 = vld [vmem:[#allocation2 + $0xa9] sm:$0xff]
      %v5041 = vld [vmem:[#allocation2 + $0xb1] sm:$0xff]
      %v5042 = vld [vmem:[#allocation2 + $0xc1] sm:$0xff]
      %v5043 = vld [vmem:[#allocation2 + $0xc9] sm:$0xff]
      %v5044 = vld [vmem:[#allocation2 + $0xd9] sm:$0xff]
      %v5045 = vld [vmem:[#allocation2 + $0xe1] sm:$0xff]
      %v5046 = vld [vmem:[#allocation2 + $0xf1] sm:$0xff]
      %v5047 = vld [vmem:[#allocation2 + $0xf9] sm:$0xff]
      %v5048 = vld [vmem:[#allocation2 + $0x109] sm:$0xff]
      %v5049 = vld [vmem:[#allocation2 + $0x111] sm:$0xff]
      %v5050 = vld [vmem:[#allocation2 + $0x121] sm:$0xff]
      %v5051 = vld [vmem:[#allocation2 + $0x129] sm:$0xff]
      %v5052 = vld [vmem:[#allocation2 + $0x139] sm:$0xff]
      %v5053 = vld [vmem:[#allocation2 + $0x141] sm:$0xff]
      %v5054 = vld [vmem:[#allocation2 + $0x151] sm:$0xff]
      %v5055 = vld [vmem:[#allocation2 + $0x159] sm:$0xff]
      %v5056 = vld [vmem:[#allocation2 + $0x169] sm:$0xff]
      %v5057 = vld [vmem:[#allocation2 + $0x171] sm:$0xff]
      %v5058 = vpack.c.bf16 %v5027, %v5026
      %v5059 = vpack.c.bf16 %v5029, %v5028
      %v5060 = vpack.c.bf16 %v5031, %v5030
      %v5061 = vpack.c.bf16 %v5033, %v5032
      %v5062 = vpack.c.bf16 %v5035, %v5034
      %v5063 = vpack.c.bf16 %v5037, %v5036
      %v5064 = vpack.c.bf16 %v5039, %v5038
      %v5065 = vpack.c.bf16 %v5041, %v5040
      %v5066 = vpack.c.bf16 %v5043, %v5042
      %v5067 = vpack.c.bf16 %v5045, %v5044
      %v5068 = vpack.c.bf16 %v5047, %v5046
      %v5069 = vpack.c.bf16 %v5049, %v5048
      %v5070 = vpack.c.bf16 %v5051, %v5050
      %v5071 = vpack.c.bf16 %v5053, %v5052
      %v5072 = vpack.c.bf16 %v5055, %v5054
      %v5073 = vpack.c.bf16 %v5057, %v5056
      %s5074 = scalar_lea.vmem %s3, 4
      %v5075 = vld [vmem:[%s5074] sm:$0xf]
      %v5077 = vsel %vm4888, %v5058, 0
      %v5080 = vsel %vm4888, %v5059, 0
      %v5083 = vsel %vm4888, %v5060, 0
      %v5086 = vsel %vm4888, %v5061, 0
      %v5089 = vsel %vm4888, %v5062, 0
      %v5092 = vsel %vm4888, %v5063, 0
      %v5095 = vsel %vm4888, %v5064, 0
      %v5098 = vsel %vm4888, %v5065, 0
      %v5101 = vsel %vm4888, %v5066, 0
      %v5104 = vsel %vm4888, %v5067, 0
      %v5107 = vsel %vm4888, %v5068, 0
      %v5110 = vsel %vm4888, %v5069, 0
      %v5113 = vsel %vm4888, %v5070, 0
      %v5116 = vsel %vm4888, %v5071, 0
      %v5119 = vsel %vm4888, %v5072, 0
      %v5122 = vsel %vm4888, %v5073, 0
      %vm5124 = vcmask 1043456
      %v5126 = vsel %vm5124, %v5075, 0
      %5128 = vmatprep.subr.bf16.mxu0 0
      %5129 = vmatpush1.bf16.msra.mxu0 %v5126
      %5130 = vmatprep.subr.bf16.mxu0 0
      %5131 = vmatpush1.bf16.msra.mxu0 0
      %5132 = vmatprep.subr.bf16.mxu0 0
      %5133 = vmatpush1.bf16.msra.mxu0 0
      %5134 = vmatprep.subr.bf16.mxu0 0
      %5135 = vmatpush1.bf16.msra.mxu0 0
      %5136 = vmatprep.subr.bf16.mxu0 0
      %5137 = vmatpush1.bf16.msra.mxu0 0
      %5138 = vmatprep.subr.bf16.mxu0 0
      %5139 = vmatpush1.bf16.msra.mxu0 0
      %5140 = vmatprep.subr.bf16.mxu0 0
      %5141 = vmatpush1.bf16.msra.mxu0 0
      %5142 = vmatprep.subr.bf16.mxu0 0
      %5143 = vmatpush1.bf16.msra.mxu0 0
      %5144 = vmatprep.subr.bf16.mxu0 0
      %5145 = vmatpush1.bf16.msra.mxu0 0
      %5146 = vmatprep.subr.bf16.mxu0 0
      %5147 = vmatpush1.bf16.msra.mxu0 0
      %5148 = vmatprep.subr.bf16.mxu0 0
      %5149 = vmatpush1.bf16.msra.mxu0 0
      %5150 = vmatprep.subr.bf16.mxu0 0
      %5151 = vmatpush1.bf16.msra.mxu0 0
      %5152 = vmatprep.subr.bf16.mxu0 0
      %5153 = vmatpush1.bf16.msra.mxu0 0
      %5154 = vmatprep.subr.bf16.mxu0 0
      %5155 = vmatpush1.bf16.msra.mxu0 0
      %5156 = vmatprep.subr.bf16.mxu0 0
      %5157 = vmatpush1.bf16.msra.mxu0 0
      %5158 = vmatprep.subr.bf16.mxu0 0
      %5159 = vmatpush1.bf16.msra.mxu0 0
      %5160 = vmatprep.mubr.bf16.mxu0 0
      %5161 = vmatmul.mubr.bf16.gmra.mrb[0].mxu0 %v5077
      %v5162 = vpop.f32.mrb[0].mxu0
      %v5163 = vadd.f32 0.0, %v5162
      %v5164 = vpop.f32.mrb[0].mxu0
      %v5165 = vpop.f32.mrb[0].mxu0
      %v5166 = vadd.f32 0.0, %v5165
      %v5167 = vpop.f32.mrb[0].mxu0
      %5168 = vmatprep.mubr.bf16.mxu0 0
      %5169 = vmatmul.mubr.bf16.gmra.mrb[0].mxu0 %v5080
      %v5170 = vpop.f32.mrb[0].mxu0
      %v5171 = vadd.f32 0.0, %v5170
      %v5172 = vpop.f32.mrb[0].mxu0
      %v5173 = vpop.f32.mrb[0].mxu0
      %v5174 = vadd.f32 0.0, %v5173
      %v5175 = vpop.f32.mrb[0].mxu0
      %5176 = vmatprep.mubr.bf16.mxu0 0
      %5177 = vmatmul.mubr.bf16.gmra.mrb[0].mxu0 %v5083
      %v5178 = vpop.f32.mrb[0].mxu0
      %v5179 = vadd.f32 0.0, %v5178
      %v5180 = vpop.f32.mrb[0].mxu0
      %v5181 = vpop.f32.mrb[0].mxu0
      %v5182 = vadd.f32 0.0, %v5181
      %v5183 = vpop.f32.mrb[0].mxu0
      %5184 = vmatprep.mubr.bf16.mxu0 0
      %5185 = vmatmul.mubr.bf16.gmra.mrb[0].mxu0 %v5086
      %v5186 = vpop.f32.mrb[0].mxu0
      %v5187 = vadd.f32 0.0, %v5186
      %v5188 = vpop.f32.mrb[0].mxu0
      %v5189 = vpop.f32.mrb[0].mxu0
      %v5190 = vadd.f32 0.0, %v5189
      %v5191 = vpop.f32.mrb[0].mxu0
      %5192 = vmatprep.mubr.bf16.mxu0 0
      %5193 = vmatmul.mubr.bf16.gmra.mrb[0].mxu0 %v5089
      %v5194 = vpop.f32.mrb[0].mxu0
      %v5195 = vadd.f32 0.0, %v5194
      %v5196 = vpop.f32.mrb[0].mxu0
      %v5197 = vpop.f32.mrb[0].mxu0
      %v5198 = vadd.f32 0.0, %v5197
      %v5199 = vpop.f32.mrb[0].mxu0
      %5200 = vmatprep.mubr.bf16.mxu0 0
      %5201 = vmatmul.mubr.bf16.gmra.mrb[0].mxu0 %v5092
      %v5202 = vpop.f32.mrb[0].mxu0
      %v5203 = vadd.f32 0.0, %v5202
      %v5204 = vpop.f32.mrb[0].mxu0
      %v5205 = vpop.f32.mrb[0].mxu0
      %v5206 = vadd.f32 0.0, %v5205
      %v5207 = vpop.f32.mrb[0].mxu0
      %5208 = vmatprep.mubr.bf16.mxu0 0
      %5209 = vmatmul.mubr.bf16.gmra.mrb[0].mxu0 %v5095
      %v5210 = vpop.f32.mrb[0].mxu0
      %v5211 = vadd.f32 0.0, %v5210
      %v5212 = vpop.f32.mrb[0].mxu0
      %v5213 = vpop.f32.mrb[0].mxu0
      %v5214 = vadd.f32 0.0, %v5213
      %v5215 = vpop.f32.mrb[0].mxu0
      %5216 = vmatprep.mubr.bf16.mxu0 0
      %5217 = vmatmul.mubr.bf16.gmra.mrb[0].mxu0 %v5098
      %v5218 = vpop.f32.mrb[0].mxu0
      %v5219 = vadd.f32 0.0, %v5218
      %v5220 = vpop.f32.mrb[0].mxu0
      %v5221 = vpop.f32.mrb[0].mxu0
      %v5222 = vadd.f32 0.0, %v5221
      %v5223 = vpop.f32.mrb[0].mxu0
      %5224 = vmatprep.mubr.bf16.mxu0 0
      %5225 = vmatmul.mubr.bf16.gmra.mrb[0].mxu0 %v5101
      %v5226 = vpop.f32.mrb[0].mxu0
      %v5227 = vadd.f32 0.0, %v5226
      %v5228 = vpop.f32.mrb[0].mxu0
      %v5229 = vpop.f32.mrb[0].mxu0
      %v5230 = vadd.f32 0.0, %v5229
      %v5231 = vpop.f32.mrb[0].mxu0
      %5232 = vmatprep.mubr.bf16.mxu0 0
      %5233 = vmatmul.mubr.bf16.gmra.mrb[0].mxu0 %v5104
      %v5234 = vpop.f32.mrb[0].mxu0
      %v5235 = vadd.f32 0.0, %v5234
      %v5236 = vpop.f32.mrb[0].mxu0
      %v5237 = vpop.f32.mrb[0].mxu0
      %v5238 = vadd.f32 0.0, %v5237
      %v5239 = vpop.f32.mrb[0].mxu0
      %5240 = vmatprep.mubr.bf16.mxu0 0
      %5241 = vmatmul.mubr.bf16.gmra.mrb[0].mxu0 %v5107
      %v5242 = vpop.f32.mrb[0].mxu0
      %v5243 = vadd.f32 0.0, %v5242
      %v5244 = vpop.f32.mrb[0].mxu0
      %v5245 = vpop.f32.mrb[0].mxu0
      %v5246 = vadd.f32 0.0, %v5245
      %v5247 = vpop.f32.mrb[0].mxu0
      %5248 = vmatprep.mubr.bf16.mxu0 0
      %5249 = vmatmul.mubr.bf16.gmra.mrb[0].mxu0 %v5110
      %v5250 = vpop.f32.mrb[0].mxu0
      %v5251 = vadd.f32 0.0, %v5250
      %v5252 = vpop.f32.mrb[0].mxu0
      %v5253 = vpop.f32.mrb[0].mxu0
      %v5254 = vadd.f32 0.0, %v5253
      %v5255 = vpop.f32.mrb[0].mxu0
      %5256 = vmatprep.mubr.bf16.mxu0 0
      %5257 = vmatmul.mubr.bf16.gmra.mrb[0].mxu0 %v5113
      %v5258 = vpop.f32.mrb[0].mxu0
      %v5259 = vadd.f32 0.0, %v5258
      %v5260 = vpop.f32.mrb[0].mxu0
      %v5261 = vpop.f32.mrb[0].mxu0
      %v5262 = vadd.f32 0.0, %v5261
      %v5263 = vpop.f32.mrb[0].mxu0
      %5264 = vmatprep.mubr.bf16.mxu0 0
      %5265 = vmatmul.mubr.bf16.gmra.mrb[0].mxu0 %v5116
      %v5266 = vpop.f32.mrb[0].mxu0
      %v5267 = vadd.f32 0.0, %v5266
      %v5268 = vpop.f32.mrb[0].mxu0
      %v5269 = vpop.f32.mrb[0].mxu0
      %v5270 = vadd.f32 0.0, %v5269
      %v5271 = vpop.f32.mrb[0].mxu0
      %5272 = vmatprep.mubr.bf16.mxu0 0
      %5273 = vmatmul.mubr.bf16.gmra.mrb[0].mxu0 %v5119
      %v5274 = vpop.f32.mrb[0].mxu0
      %v5275 = vadd.f32 0.0, %v5274
      %v5276 = vpop.f32.mrb[0].mxu0
      %v5277 = vpop.f32.mrb[0].mxu0
      %v5278 = vadd.f32 0.0, %v5277
      %v5279 = vpop.f32.mrb[0].mxu0
      %5280 = vmatprep.mubr.bf16.mxu0 0
      %5281 = vmatmul.mubr.bf16.gmra.mrb[0].mxu0 %v5122
      %v5282 = vpop.f32.mrb[0].mxu0
      %v5283 = vadd.f32 0.0, %v5282
      %v5284 = vpop.f32.mrb[0].mxu0
      %v5285 = vpop.f32.mrb[0].mxu0
      %v5286 = vadd.f32 0.0, %v5285
      %v5287 = vpop.f32.mrb[0].mxu0
      %5288 = vdwg.mxu0
      %v5290 = vsel %vm4888, %v5009, 0
      %v5293 = vsel %vm4888, %v5010, 0
      %v5296 = vsel %vm4888, %v5011, 0
      %v5299 = vsel %vm4888, %v5012, 0
      %v5302 = vsel %vm4888, %v5013, 0
      %v5305 = vsel %vm4888, %v5014, 0
      %v5308 = vsel %vm4888, %v5015, 0
      %v5311 = vsel %vm4888, %v5016, 0
      %v5314 = vsel %vm4888, %v5017, 0
      %v5317 = vsel %vm4888, %v5018, 0
      %v5320 = vsel %vm4888, %v5019, 0
      %v5323 = vsel %vm4888, %v5020, 0
      %v5326 = vsel %vm4888, %v5021, 0
      %v5329 = vsel %vm4888, %v5022, 0
      %v5332 = vsel %vm4888, %v5023, 0
      %v5335 = vsel %vm4888, %v5024, 0
      %v5338 = vsel %vm5124, %v5025, 0
      %5340 = vmatprep.subr.bf16.mxu0 0
      %5341 = vmatpush1.bf16.msra.mxu0 %v5338
      %5342 = vmatprep.subr.bf16.mxu0 0
      %5343 = vmatpush1.bf16.msra.mxu0 0
      %5344 = vmatprep.subr.bf16.mxu0 0
      %5345 = vmatpush1.bf16.msra.mxu0 0
      %5346 = vmatprep.subr.bf16.mxu0 0
      %5347 = vmatpush1.bf16.msra.mxu0 0
      %5348 = vmatprep.subr.bf16.mxu0 0
      %5349 = vmatpush1.bf16.msra.mxu0 0
      %5350 = vmatprep.subr.bf16.mxu0 0
      %5351 = vmatpush1.bf16.msra.mxu0 0
      %5352 = vmatprep.subr.bf16.mxu0 0
      %5353 = vmatpush1.bf16.msra.mxu0 0
      %5354 = vmatprep.subr.bf16.mxu0 0
      %5355 = vmatpush1.bf16.msra.mxu0 0
      %5356 = vmatprep.subr.bf16.mxu0 0
      %5357 = vmatpush1.bf16.msra.mxu0 0
      %5358 = vmatprep.subr.bf16.mxu0 0
      %5359 = vmatpush1.bf16.msra.mxu0 0
      %5360 = vmatprep.subr.bf16.mxu0 0
      %5361 = vmatpush1.bf16.msra.mxu0 0
      %5362 = vmatprep.subr.bf16.mxu0 0
      %5363 = vmatpush1.bf16.msra.mxu0 0
      %5364 = vmatprep.subr.bf16.mxu0 0
      %5365 = vmatpush1.bf16.msra.mxu0 0
      %5366 = vmatprep.subr.bf16.mxu0 0
      %5367 = vmatpush1.bf16.msra.mxu0 0
      %5368 = vmatprep.subr.bf16.mxu0 0
      %5369 = vmatpush1.bf16.msra.mxu0 0
      %5370 = vmatprep.subr.bf16.mxu0 0
      %5371 = vmatpush1.bf16.msra.mxu0 0
      %5372 = vmatprep.mubr.bf16.mxu0 0
      %5373 = vmatmul.mubr.bf16.gmra.mrb[0].mxu0 %v5290
      %v5374 = vpop.f32.mrb[0].mxu0
      %v5375 = vadd.f32 %v5163, %v5374
      %v5376 = vpop.f32.mrb[0].mxu0
      %v5377 = vpop.f32.mrb[0].mxu0
      %v5378 = vadd.f32 %v5166, %v5377
      %v5379 = vpop.f32.mrb[0].mxu0
      %5380 = vmatprep.mubr.bf16.mxu0 0
      %5381 = vmatmul.mubr.bf16.gmra.mrb[0].mxu0 %v5293
      %v5382 = vpop.f32.mrb[0].mxu0
      %v5383 = vadd.f32 %v5171, %v5382
      %v5384 = vpop.f32.mrb[0].mxu0
      %v5385 = vpop.f32.mrb[0].mxu0
      %v5386 = vadd.f32 %v5174, %v5385
      %v5387 = vpop.f32.mrb[0].mxu0
      %5388 = vmatprep.mubr.bf16.mxu0 0
      %5389 = vmatmul.mubr.bf16.gmra.mrb[0].mxu0 %v5296
      %v5390 = vpop.f32.mrb[0].mxu0
      %v5391 = vadd.f32 %v5179, %v5390
      %v5392 = vpop.f32.mrb[0].mxu0
      %v5393 = vpop.f32.mrb[0].mxu0
      %v5394 = vadd.f32 %v5182, %v5393
      %v5395 = vpop.f32.mrb[0].mxu0
      %5396 = vmatprep.mubr.bf16.mxu0 0
      %5397 = vmatmul.mubr.bf16.gmra.mrb[0].mxu0 %v5299
      %v5398 = vpop.f32.mrb[0].mxu0
      %v5399 = vadd.f32 %v5187, %v5398
      %v5400 = vpop.f32.mrb[0].mxu0
      %v5401 = vpop.f32.mrb[0].mxu0
      %v5402 = vadd.f32 %v5190, %v5401
      %v5403 = vpop.f32.mrb[0].mxu0
      %5404 = vmatprep.mubr.bf16.mxu0 0
      %5405 = vmatmul.mubr.bf16.gmra.mrb[0].mxu0 %v5302
      %v5406 = vpop.f32.mrb[0].mxu0
      %v5407 = vadd.f32 %v5195, %v5406
      %v5408 = vpop.f32.mrb[0].mxu0
      %v5409 = vpop.f32.mrb[0].mxu0
      %v5410 = vadd.f32 %v5198, %v5409
      %v5411 = vpop.f32.mrb[0].mxu0
      %5412 = vmatprep.mubr.bf16.mxu0 0
      %5413 = vmatmul.mubr.bf16.gmra.mrb[0].mxu0 %v5305
      %v5414 = vpop.f32.mrb[0].mxu0
      %v5415 = vadd.f32 %v5203, %v5414
      %v5416 = vpop.f32.mrb[0].mxu0
      %v5417 = vpop.f32.mrb[0].mxu0
      %v5418 = vadd.f32 %v5206, %v5417
      %v5419 = vpop.f32.mrb[0].mxu0
      %5420 = vmatprep.mubr.bf16.mxu0 0
      %5421 = vmatmul.mubr.bf16.gmra.mrb[0].mxu0 %v5308
      %v5422 = vpop.f32.mrb[0].mxu0
      %v5423 = vadd.f32 %v5211, %v5422
      %v5424 = vpop.f32.mrb[0].mxu0
      %v5425 = vpop.f32.mrb[0].mxu0
      %v5426 = vadd.f32 %v5214, %v5425
      %v5427 = vpop.f32.mrb[0].mxu0
      %5428 = vmatprep.mubr.bf16.mxu0 0
      %5429 = vmatmul.mubr.bf16.gmra.mrb[0].mxu0 %v5311
      %v5430 = vpop.f32.mrb[0].mxu0
      %v5431 = vadd.f32 %v5219, %v5430
      %v5432 = vpop.f32.mrb[0].mxu0
      %v5433 = vpop.f32.mrb[0].mxu0
      %v5434 = vadd.f32 %v5222, %v5433
      %v5435 = vpop.f32.mrb[0].mxu0
      %5436 = vmatprep.mubr.bf16.mxu0 0
      %5437 = vmatmul.mubr.bf16.gmra.mrb[0].mxu0 %v5314
      %v5438 = vpop.f32.mrb[0].mxu0
      %v5439 = vadd.f32 %v5227, %v5438
      %v5440 = vpop.f32.mrb[0].mxu0
      %v5441 = vpop.f32.mrb[0].mxu0
      %v5442 = vadd.f32 %v5230, %v5441
      %v5443 = vpop.f32.mrb[0].mxu0
      %5444 = vmatprep.mubr.bf16.mxu0 0
      %5445 = vmatmul.mubr.bf16.gmra.mrb[0].mxu0 %v5317
      %v5446 = vpop.f32.mrb[0].mxu0
      %v5447 = vadd.f32 %v5235, %v5446
      %v5448 = vpop.f32.mrb[0].mxu0
      %v5449 = vpop.f32.mrb[0].mxu0
      %v5450 = vadd.f32 %v5238, %v5449
      %v5451 = vpop.f32.mrb[0].mxu0
      %5452 = vmatprep.mubr.bf16.mxu0 0
      %5453 = vmatmul.mubr.bf16.gmra.mrb[0].mxu0 %v5320
      %v5454 = vpop.f32.mrb[0].mxu0
      %v5455 = vadd.f32 %v5243, %v5454
      %v5456 = vpop.f32.mrb[0].mxu0
      %v5457 = vpop.f32.mrb[0].mxu0
      %v5458 = vadd.f32 %v5246, %v5457
      %v5459 = vpop.f32.mrb[0].mxu0
      %5460 = vmatprep.mubr.bf16.mxu0 0
      %5461 = vmatmul.mubr.bf16.gmra.mrb[0].mxu0 %v5323
      %v5462 = vpop.f32.mrb[0].mxu0
      %v5463 = vadd.f32 %v5251, %v5462
      %v5464 = vpop.f32.mrb[0].mxu0
      %v5465 = vpop.f32.mrb[0].mxu0
      %v5466 = vadd.f32 %v5254, %v5465
      %v5467 = vpop.f32.mrb[0].mxu0
      %5468 = vmatprep.mubr.bf16.mxu0 0
      %5469 = vmatmul.mubr.bf16.gmra.mrb[0].mxu0 %v5326
      %v5470 = vpop.f32.mrb[0].mxu0
      %v5471 = vadd.f32 %v5259, %v5470
      %v5472 = vpop.f32.mrb[0].mxu0
      %v5473 = vpop.f32.mrb[0].mxu0
      %v5474 = vadd.f32 %v5262, %v5473
      %v5475 = vpop.f32.mrb[0].mxu0
      %5476 = vmatprep.mubr.bf16.mxu0 0
      %5477 = vmatmul.mubr.bf16.gmra.mrb[0].mxu0 %v5329
      %v5478 = vpop.f32.mrb[0].mxu0
      %v5479 = vadd.f32 %v5267, %v5478
      %v5480 = vpop.f32.mrb[0].mxu0
      %v5481 = vpop.f32.mrb[0].mxu0
      %v5482 = vadd.f32 %v5270, %v5481
      %v5483 = vpop.f32.mrb[0].mxu0
      %5484 = vmatprep.mubr.bf16.mxu0 0
      %5485 = vmatmul.mubr.bf16.gmra.mrb[0].mxu0 %v5332
      %v5486 = vpop.f32.mrb[0].mxu0
      %v5487 = vadd.f32 %v5275, %v5486
      %v5488 = vpop.f32.mrb[0].mxu0
      %v5489 = vpop.f32.mrb[0].mxu0
      %v5490 = vadd.f32 %v5278, %v5489
      %v5491 = vpop.f32.mrb[0].mxu0
      %5492 = vmatprep.mubr.bf16.mxu0 0
      %5493 = vmatmul.mubr.bf16.gmra.mrb[0].mxu0 %v5335
      %v5494 = vpop.f32.mrb[0].mxu0
      %v5495 = vadd.f32 %v5283, %v5494
      %v5496 = vpop.f32.mrb[0].mxu0
      %v5497 = vpop.f32.mrb[0].mxu0
      %v5498 = vadd.f32 %v5286, %v5497
      %v5499 = vpop.f32.mrb[0].mxu0
      %5500 = vdwg.mxu0
      %v5501 = vld [vmem:[#allocation2 + $0x2] sm:$0xff]
      %v5502 = vld [vmem:[#allocation2 + $0xa] sm:$0xff]
      %v5503 = vld [vmem:[#allocation2 + $0x1a] sm:$0xff]
      %v5504 = vld [vmem:[#allocation2 + $0x22] sm:$0xff]
      %v5505 = vld [vmem:[#allocation2 + $0x32] sm:$0xff]
      %v5506 = vld [vmem:[#allocation2 + $0x3a] sm:$0xff]
      %v5507 = vld [vmem:[#allocation2 + $0x4a] sm:$0xff]
      %v5508 = vld [vmem:[#allocation2 + $0x52] sm:$0xff]
      %v5509 = vld [vmem:[#allocation2 + $0x62] sm:$0xff]
      %v5510 = vld [vmem:[#allocation2 + $0x6a] sm:$0xff]
      %v5511 = vld [vmem:[#allocation2 + $0x7a] sm:$0xff]
      %v5512 = vld [vmem:[#allocation2 + $0x82] sm:$0xff]
      %v5513 = vld [vmem:[#allocation2 + $0x92] sm:$0xff]
      %v5514 = vld [vmem:[#allocation2 + $0x9a] sm:$0xff]
      %v5515 = vld [vmem:[#allocation2 + $0xaa] sm:$0xff]
      %v5516 = vld [vmem:[#allocation2 + $0xb2] sm:$0xff]
      %v5517 = vld [vmem:[#allocation2 + $0xc2] sm:$0xff]
      %v5518 = vld [vmem:[#allocation2 + $0xca] sm:$0xff]
      %v5519 = vld [vmem:[#allocation2 + $0xda] sm:$0xff]
      %v5520 = vld [vmem:[#allocation2 + $0xe2] sm:$0xff]
      %v5521 = vld [vmem:[#allocation2 + $0xf2] sm:$0xff]
      %v5522 = vld [vmem:[#allocation2 + $0xfa] sm:$0xff]
      %v5523 = vld [vmem:[#allocation2 + $0x10a] sm:$0xff]
      %v5524 = vld [vmem:[#allocation2 + $0x112] sm:$0xff]
      %v5525 = vld [vmem:[#allocation2 + $0x122] sm:$0xff]
      %v5526 = vld [vmem:[#allocation2 + $0x12a] sm:$0xff]
      %v5527 = vld [vmem:[#allocation2 + $0x13a] sm:$0xff]
      %v5528 = vld [vmem:[#allocation2 + $0x142] sm:$0xff]
      %v5529 = vld [vmem:[#allocation2 + $0x152] sm:$0xff]
      %v5530 = vld [vmem:[#allocation2 + $0x15a] sm:$0xff]
      %v5531 = vld [vmem:[#allocation2 + $0x16a] sm:$0xff]
      %v5532 = vld [vmem:[#allocation2 + $0x172] sm:$0xff]
      %v5533 = vpack.c.bf16 %v5502, %v5501
      %v5534 = vpack.c.bf16 %v5504, %v5503
      %v5535 = vpack.c.bf16 %v5506, %v5505
      %v5536 = vpack.c.bf16 %v5508, %v5507
      %v5537 = vpack.c.bf16 %v5510, %v5509
      %v5538 = vpack.c.bf16 %v5512, %v5511
      %v5539 = vpack.c.bf16 %v5514, %v5513
      %v5540 = vpack.c.bf16 %v5516, %v5515
      %v5541 = vpack.c.bf16 %v5518, %v5517
      %v5542 = vpack.c.bf16 %v5520, %v5519
      %v5543 = vpack.c.bf16 %v5522, %v5521
      %v5544 = vpack.c.bf16 %v5524, %v5523
      %v5545 = vpack.c.bf16 %v5526, %v5525
      %v5546 = vpack.c.bf16 %v5528, %v5527
      %v5547 = vpack.c.bf16 %v5530, %v5529
      %v5548 = vpack.c.bf16 %v5532, %v5531
      %s5549 = scalar_lea.vmem %s3, 8
      %v5550 = vld [vmem:[%s5549] sm:$0xf]
      %v5552 = vsel %vm4888, %v5533, 0
      %v5555 = vsel %vm4888, %v5534, 0
      %v5558 = vsel %vm4888, %v5535, 0
      %v5561 = vsel %vm4888, %v5536, 0
      %v5564 = vsel %vm4888, %v5537, 0
      %v5567 = vsel %vm4888, %v5538, 0
      %v5570 = vsel %vm4888, %v5539, 0
      %v5573 = vsel %vm4888, %v5540, 0
      %v5576 = vsel %vm4888, %v5541, 0
      %v5579 = vsel %vm4888, %v5542, 0
      %v5582 = vsel %vm4888, %v5543, 0
      %v5585 = vsel %vm4888, %v5544, 0
      %v5588 = vsel %vm4888, %v5545, 0
      %v5591 = vsel %vm4888, %v5546, 0
      %v5594 = vsel %vm4888, %v5547, 0
      %v5597 = vsel %vm4888, %v5548, 0
      %v5600 = vsel %vm5124, %v5550, 0
      %5602 = vmatprep.subr.bf16.mxu0 0
      %5603 = vmatpush1.bf16.msra.mxu0 %v5600
      %5604 = vmatprep.subr.bf16.mxu0 0
      %5605 = vmatpush1.bf16.msra.mxu0 0
      %5606 = vmatprep.subr.bf16.mxu0 0
      %5607 = vmatpush1.bf16.msra.mxu0 0
      %5608 = vmatprep.subr.bf16.mxu0 0
      %5609 = vmatpush1.bf16.msra.mxu0 0
      %5610 = vmatprep.subr.bf16.mxu0 0
      %5611 = vmatpush1.bf16.msra.mxu0 0
      %5612 = vmatprep.subr.bf16.mxu0 0
      %5613 = vmatpush1.bf16.msra.mxu0 0
      %5614 = vmatprep.subr.bf16.mxu0 0
      %5615 = vmatpush1.bf16.msra.mxu0 0
      %5616 = vmatprep.subr.bf16.mxu0 0
      %5617 = vmatpush1.bf16.msra.mxu0 0
      %5618 = vmatprep.subr.bf16.mxu0 0
      %5619 = vmatpush1.bf16.msra.mxu0 0
      %5620 = vmatprep.subr.bf16.mxu0 0
      %5621 = vmatpush1.bf16.msra.mxu0 0
      %5622 = vmatprep.subr.bf16.mxu0 0
      %5623 = vmatpush1.bf16.msra.mxu0 0
      %5624 = vmatprep.subr.bf16.mxu0 0
      %5625 = vmatpush1.bf16.msra.mxu0 0
      %5626 = vmatprep.subr.bf16.mxu0 0
      %5627 = vmatpush1.bf16.msra.mxu0 0
      %5628 = vmatprep.subr.bf16.mxu0 0
      %5629 = vmatpush1.bf16.msra.mxu0 0
      %5630 = vmatprep.subr.bf16.mxu0 0
      %5631 = vmatpush1.bf16.msra.mxu0 0
      %5632 = vmatprep.subr.bf16.mxu0 0
      %5633 = vmatpush1.bf16.msra.mxu0 0
      %5634 = vmatprep.mubr.bf16.mxu0 0
      %5635 = vmatmul.mubr.bf16.gmra.mrb[0].mxu0 %v5552
      %v5636 = vpop.f32.mrb[0].mxu0
      %v5637 = vadd.f32 0.0, %v5636
      %v5638 = vpop.f32.mrb[0].mxu0
      %v5639 = vpop.f32.mrb[0].mxu0
      %v5640 = vadd.f32 0.0, %v5639
      %v5641 = vpop.f32.mrb[0].mxu0
      %5642 = vmatprep.mubr.bf16.mxu0 0
      %5643 = vmatmul.mubr.bf16.gmra.mrb[0].mxu0 %v5555
      %v5644 = vpop.f32.mrb[0].mxu0
      %v5645 = vadd.f32 0.0, %v5644
      %v5646 = vpop.f32.mrb[0].mxu0
      %v5647 = vpop.f32.mrb[0].mxu0
      %v5648 = vadd.f32 0.0, %v5647
      %v5649 = vpop.f32.mrb[0].mxu0
      %5650 = vmatprep.mubr.bf16.mxu0 0
      %5651 = vmatmul.mubr.bf16.gmra.mrb[0].mxu0 %v5558
      %v5652 = vpop.f32.mrb[0].mxu0
      %v5653 = vadd.f32 0.0, %v5652
      %v5654 = vpop.f32.mrb[0].mxu0
      %v5655 = vpop.f32.mrb[0].mxu0
      %v5656 = vadd.f32 0.0, %v5655
      %v5657 = vpop.f32.mrb[0].mxu0
      %5658 = vmatprep.mubr.bf16.mxu0 0
      %5659 = vmatmul.mubr.bf16.gmra.mrb[0].mxu0 %v5561
      %v5660 = vpop.f32.mrb[0].mxu0
      %v5661 = vadd.f32 0.0, %v5660
      %v5662 = vpop.f32.mrb[0].mxu0
      %v5663 = vpop.f32.mrb[0].mxu0
      %v5664 = vadd.f32 0.0, %v5663
      %v5665 = vpop.f32.mrb[0].mxu0
      %5666 = vmatprep.mubr.bf16.mxu0 0
      %5667 = vmatmul.mubr.bf16.gmra.mrb[0].mxu0 %v5564
      %v5668 = vpop.f32.mrb[0].mxu0
      %v5669 = vadd.f32 0.0, %v5668
      %v5670 = vpop.f32.mrb[0].mxu0
      %v5671 = vpop.f32.mrb[0].mxu0
      %v5672 = vadd.f32 0.0, %v5671
      %v5673 = vpop.f32.mrb[0].mxu0
      %5674 = vmatprep.mubr.bf16.mxu0 0
      %5675 = vmatmul.mubr.bf16.gmra.mrb[0].mxu0 %v5567
      %v5676 = vpop.f32.mrb[0].mxu0
      %v5677 = vadd.f32 0.0, %v5676
      %v5678 = vpop.f32.mrb[0].mxu0
      %v5679 = vpop.f32.mrb[0].mxu0
      %v5680 = vadd.f32 0.0, %v5679
      %v5681 = vpop.f32.mrb[0].mxu0
      %5682 = vmatprep.mubr.bf16.mxu0 0
      %5683 = vmatmul.mubr.bf16.gmra.mrb[0].mxu0 %v5570
      %v5684 = vpop.f32.mrb[0].mxu0
      %v5685 = vadd.f32 0.0, %v5684
      %v5686 = vpop.f32.mrb[0].mxu0
      %v5687 = vpop.f32.mrb[0].mxu0
      %v5688 = vadd.f32 0.0, %v5687
      %v5689 = vpop.f32.mrb[0].mxu0
      %5690 = vmatprep.mubr.bf16.mxu0 0
      %5691 = vmatmul.mubr.bf16.gmra.mrb[0].mxu0 %v5573
      %v5692 = vpop.f32.mrb[0].mxu0
      %v5693 = vadd.f32 0.0, %v5692
      %v5694 = vpop.f32.mrb[0].mxu0
      %v5695 = vpop.f32.mrb[0].mxu0
      %v5696 = vadd.f32 0.0, %v5695
      %v5697 = vpop.f32.mrb[0].mxu0
      %5698 = vmatprep.mubr.bf16.mxu0 0
      %5699 = vmatmul.mubr.bf16.gmra.mrb[0].mxu0 %v5576
      %v5700 = vpop.f32.mrb[0].mxu0
      %v5701 = vadd.f32 0.0, %v5700
      %v5702 = vpop.f32.mrb[0].mxu0
      %v5703 = vpop.f32.mrb[0].mxu0
      %v5704 = vadd.f32 0.0, %v5703
      %v5705 = vpop.f32.mrb[0].mxu0
      %5706 = vmatprep.mubr.bf16.mxu0 0
      %5707 = vmatmul.mubr.bf16.gmra.mrb[0].mxu0 %v5579
      %v5708 = vpop.f32.mrb[0].mxu0
      %v5709 = vadd.f32 0.0, %v5708
      %v5710 = vpop.f32.mrb[0].mxu0
      %v5711 = vpop.f32.mrb[0].mxu0
      %v5712 = vadd.f32 0.0, %v5711
      %v5713 = vpop.f32.mrb[0].mxu0
      %5714 = vmatprep.mubr.bf16.mxu0 0
      %5715 = vmatmul.mubr.bf16.gmra.mrb[0].mxu0 %v5582
      %v5716 = vpop.f32.mrb[0].mxu0
      %v5717 = vadd.f32 0.0, %v5716
      %v5718 = vpop.f32.mrb[0].mxu0
      %v5719 = vpop.f32.mrb[0].mxu0
      %v5720 = vadd.f32 0.0, %v5719
      %v5721 = vpop.f32.mrb[0].mxu0
      %5722 = vmatprep.mubr.bf16.mxu0 0
      %5723 = vmatmul.mubr.bf16.gmra.mrb[0].mxu0 %v5585
      %v5724 = vpop.f32.mrb[0].mxu0
      %v5725 = vadd.f32 0.0, %v5724
      %v5726 = vpop.f32.mrb[0].mxu0
      %v5727 = vpop.f32.mrb[0].mxu0
      %v5728 = vadd.f32 0.0, %v5727
      %v5729 = vpop.f32.mrb[0].mxu0
      %5730 = vmatprep.mubr.bf16.mxu0 0
      %5731 = vmatmul.mubr.bf16.gmra.mrb[0].mxu0 %v5588
      %v5732 = vpop.f32.mrb[0].mxu0
      %v5733 = vadd.f32 0.0, %v5732
      %v5734 = vpop.f32.mrb[0].mxu0
      %v5735 = vpop.f32.mrb[0].mxu0
      %v5736 = vadd.f32 0.0, %v5735
      %v5737 = vpop.f32.mrb[0].mxu0
      %5738 = vmatprep.mubr.bf16.mxu0 0
      %5739 = vmatmul.mubr.bf16.gmra.mrb[0].mxu0 %v5591
      %v5740 = vpop.f32.mrb[0].mxu0
      %v5741 = vadd.f32 0.0, %v5740
      %v5742 = vpop.f32.mrb[0].mxu0
      %v5743 = vpop.f32.mrb[0].mxu0
      %v5744 = vadd.f32 0.0, %v5743
      %v5745 = vpop.f32.mrb[0].mxu0
      %5746 = vmatprep.mubr.bf16.mxu0 0
      %5747 = vmatmul.mubr.bf16.gmra.mrb[0].mxu0 %v5594
      %v5748 = vpop.f32.mrb[0].mxu0
      %v5749 = vadd.f32 0.0, %v5748
      %v5750 = vpop.f32.mrb[0].mxu0
      %v5751 = vpop.f32.mrb[0].mxu0
      %v5752 = vadd.f32 0.0, %v5751
      %v5753 = vpop.f32.mrb[0].mxu0
      %5754 = vmatprep.mubr.bf16.mxu0 0
      %5755 = vmatmul.mubr.bf16.gmra.mrb[0].mxu0 %v5597
      %v5756 = vpop.f32.mrb[0].mxu0
      %v5757 = vadd.f32 0.0, %v5756
      %v5758 = vpop.f32.mrb[0].mxu0
      %v5759 = vpop.f32.mrb[0].mxu0
      %v5760 = vadd.f32 0.0, %v5759
      %v5761 = vpop.f32.mrb[0].mxu0
      %5762 = vdwg.mxu0
      %v5763 = vadd.f32 %v5375, %v5637
      %v5764 = vadd.f32 %v5378, %v5640
      %v5765 = vadd.f32 %v5383, %v5645
      %v5766 = vadd.f32 %v5386, %v5648
      %v5767 = vadd.f32 %v5391, %v5653
      %v5768 = vadd.f32 %v5394, %v5656
      %v5769 = vadd.f32 %v5399, %v5661
      %v5770 = vadd.f32 %v5402, %v5664
      %v5771 = vadd.f32 %v5407, %v5669
      %v5772 = vadd.f32 %v5410, %v5672
      %v5773 = vadd.f32 %v5415, %v5677
      %v5774 = vadd.f32 %v5418, %v5680
      %v5775 = vadd.f32 %v5423, %v5685
      %v5776 = vadd.f32 %v5426, %v5688
      %v5777 = vadd.f32 %v5431, %v5693
      %v5778 = vadd.f32 %v5434, %v5696
      %v5779 = vadd.f32 %v5439, %v5701
      %v5780 = vadd.f32 %v5442, %v5704
      %v5781 = vadd.f32 %v5447, %v5709
      %v5782 = vadd.f32 %v5450, %v5712
      %v5783 = vadd.f32 %v5455, %v5717
      %v5784 = vadd.f32 %v5458, %v5720
      %v5785 = vadd.f32 %v5463, %v5725
      %v5786 = vadd.f32 %v5466, %v5728
      %v5787 = vadd.f32 %v5471, %v5733
      %v5788 = vadd.f32 %v5474, %v5736
      %v5789 = vadd.f32 %v5479, %v5741
      %v5790 = vadd.f32 %v5482, %v5744
      %v5791 = vadd.f32 %v5487, %v5749
      %v5792 = vadd.f32 %v5490, %v5752
      %v5793 = vadd.f32 %v5495, %v5757
      %v5794 = vadd.f32 %v5498, %v5760
      %v5795 = vld [vmem:[%s4944] sm:$0xff]
      %v5796 = vld [vmem:[%s4944 + $0x8] sm:$0xff]
      %v5797 = vld [vmem:[%s4944 + $0x18] sm:$0xff]
      %v5798 = vld [vmem:[%s4944 + $0x20] sm:$0xff]
      %v5799 = vld [vmem:[%s4944 + $0x30] sm:$0xff]
      %v5800 = vld [vmem:[%s4944 + $0x38] sm:$0xff]
      %v5801 = vld [vmem:[%s4944 + $0x48] sm:$0xff]
      %v5802 = vld [vmem:[%s4944 + $0x50] sm:$0xff]
      %v5803 = vld [vmem:[%s4944 + $0x60] sm:$0xff]
      %v5804 = vld [vmem:[%s4944 + $0x68] sm:$0xff]
      %v5805 = vld [vmem:[%s4944 + $0x78] sm:$0xff]
      %v5806 = vld [vmem:[%s4944 + $0x80] sm:$0xff]
      %v5807 = vld [vmem:[%s4944 + $0x90] sm:$0xff]
      %v5808 = vld [vmem:[%s4944 + $0x98] sm:$0xff]
      %v5809 = vld [vmem:[%s4944 + $0xa8] sm:$0xff]
      %v5810 = vld [vmem:[%s4944 + $0xb0] sm:$0xff]
      %v5811 = vld [vmem:[%s4944 + $0xc0] sm:$0xff]
      %v5812 = vld [vmem:[%s4944 + $0xc8] sm:$0xff]
      %v5813 = vld [vmem:[%s4944 + $0xd8] sm:$0xff]
      %v5814 = vld [vmem:[%s4944 + $0xe0] sm:$0xff]
      %v5815 = vld [vmem:[%s4944 + $0xf0] sm:$0xff]
      %v5816 = vld [vmem:[%s4944 + $0xf8] sm:$0xff]
      %v5817 = vld [vmem:[%s4944 + $0x108] sm:$0xff]
      %v5818 = vld [vmem:[%s4944 + $0x110] sm:$0xff]
      %v5819 = vld [vmem:[%s4944 + $0x120] sm:$0xff]
      %v5820 = vld [vmem:[%s4944 + $0x128] sm:$0xff]
      %v5821 = vld [vmem:[%s4944 + $0x138] sm:$0xff]
      %v5822 = vld [vmem:[%s4944 + $0x140] sm:$0xff]
      %v5823 = vld [vmem:[%s4944 + $0x150] sm:$0xff]
      %v5824 = vld [vmem:[%s4944 + $0x158] sm:$0xff]
      %v5825 = vld [vmem:[%s4944 + $0x168] sm:$0xff]
      %v5826 = vld [vmem:[%s4944 + $0x170] sm:$0xff]
      %v5827 = vpack.c.bf16 %v5796, %v5795
      %v5828 = vpack.c.bf16 %v5798, %v5797
      %v5829 = vpack.c.bf16 %v5800, %v5799
      %v5830 = vpack.c.bf16 %v5802, %v5801
      %v5831 = vpack.c.bf16 %v5804, %v5803
      %v5832 = vpack.c.bf16 %v5806, %v5805
      %v5833 = vpack.c.bf16 %v5808, %v5807
      %v5834 = vpack.c.bf16 %v5810, %v5809
      %v5835 = vpack.c.bf16 %v5812, %v5811
      %v5836 = vpack.c.bf16 %v5814, %v5813
      %v5837 = vpack.c.bf16 %v5816, %v5815
      %v5838 = vpack.c.bf16 %v5818, %v5817
      %v5839 = vpack.c.bf16 %v5820, %v5819
      %v5840 = vpack.c.bf16 %v5822, %v5821
      %v5841 = vpack.c.bf16 %v5824, %v5823
      %v5842 = vpack.c.bf16 %v5826, %v5825
      %s5843 = scalar_lea.vmem %s3, 12
      %v5844 = vld [vmem:[%s5843] sm:$0xf]
      %v5846 = vsel %vm4888, %v5827, 0
      %v5849 = vsel %vm4888, %v5828, 0
      %v5852 = vsel %vm4888, %v5829, 0
      %v5855 = vsel %vm4888, %v5830, 0
      %v5858 = vsel %vm4888, %v5831, 0
      %v5861 = vsel %vm4888, %v5832, 0
      %v5864 = vsel %vm4888, %v5833, 0
      %v5867 = vsel %vm4888, %v5834, 0
      %v5870 = vsel %vm4888, %v5835, 0
      %v5873 = vsel %vm4888, %v5836, 0
      %v5876 = vsel %vm4888, %v5837, 0
      %v5879 = vsel %vm4888, %v5838, 0
      %v5882 = vsel %vm4888, %v5839, 0
      %v5885 = vsel %vm4888, %v5840, 0
      %v5888 = vsel %vm4888, %v5841, 0
      %v5891 = vsel %vm4888, %v5842, 0
      %v5894 = vsel %vm5124, %v5844, 0
      %5896 = vmatprep.subr.bf16.mxu0 0
      %5897 = vmatpush1.bf16.msra.mxu0 %v5894
      %5898 = vmatprep.subr.bf16.mxu0 0
      %5899 = vmatpush1.bf16.msra.mxu0 0
      %5900 = vmatprep.subr.bf16.mxu0 0
      %5901 = vmatpush1.bf16.msra.mxu0 0
      %5902 = vmatprep.subr.bf16.mxu0 0
      %5903 = vmatpush1.bf16.msra.mxu0 0
      %5904 = vmatprep.subr.bf16.mxu0 0
      %5905 = vmatpush1.bf16.msra.mxu0 0
      %5906 = vmatprep.subr.bf16.mxu0 0
      %5907 = vmatpush1.bf16.msra.mxu0 0
      %5908 = vmatprep.subr.bf16.mxu0 0
      %5909 = vmatpush1.bf16.msra.mxu0 0
      %5910 = vmatprep.subr.bf16.mxu0 0
      %5911 = vmatpush1.bf16.msra.mxu0 0
      %5912 = vmatprep.subr.bf16.mxu0 0
      %5913 = vmatpush1.bf16.msra.mxu0 0
      %5914 = vmatprep.subr.bf16.mxu0 0
      %5915 = vmatpush1.bf16.msra.mxu0 0
      %5916 = vmatprep.subr.bf16.mxu0 0
      %5917 = vmatpush1.bf16.msra.mxu0 0
      %5918 = vmatprep.subr.bf16.mxu0 0
      %5919 = vmatpush1.bf16.msra.mxu0 0
      %5920 = vmatprep.subr.bf16.mxu0 0
      %5921 = vmatpush1.bf16.msra.mxu0 0
      %5922 = vmatprep.subr.bf16.mxu0 0
      %5923 = vmatpush1.bf16.msra.mxu0 0
      %5924 = vmatprep.subr.bf16.mxu0 0
      %5925 = vmatpush1.bf16.msra.mxu0 0
      %5926 = vmatprep.subr.bf16.mxu0 0
      %5927 = vmatpush1.bf16.msra.mxu0 0
      %5928 = vmatprep.mubr.bf16.mxu0 0
      %5929 = vmatmul.mubr.bf16.gmra.mrb[0].mxu0 %v5846
      %v5930 = vpop.f32.mrb[0].mxu0
      %v5931 = vadd.f32 0.0, %v5930
      %v5932 = vpop.f32.mrb[0].mxu0
      %v5933 = vpop.f32.mrb[0].mxu0
      %v5934 = vadd.f32 0.0, %v5933
      %v5935 = vpop.f32.mrb[0].mxu0
      %5936 = vmatprep.mubr.bf16.mxu0 0
      %5937 = vmatmul.mubr.bf16.gmra.mrb[0].mxu0 %v5849
      %v5938 = vpop.f32.mrb[0].mxu0
      %v5939 = vadd.f32 0.0, %v5938
      %v5940 = vpop.f32.mrb[0].mxu0
      %v5941 = vpop.f32.mrb[0].mxu0
      %v5942 = vadd.f32 0.0, %v5941
      %v5943 = vpop.f32.mrb[0].mxu0
      %5944 = vmatprep.mubr.bf16.mxu0 0
      %5945 = vmatmul.mubr.bf16.gmra.mrb[0].mxu0 %v5852
      %v5946 = vpop.f32.mrb[0].mxu0
      %v5947 = vadd.f32 0.0, %v5946
      %v5948 = vpop.f32.mrb[0].mxu0
      %v5949 = vpop.f32.mrb[0].mxu0
      %v5950 = vadd.f32 0.0, %v5949
      %v5951 = vpop.f32.mrb[0].mxu0
      %5952 = vmatprep.mubr.bf16.mxu0 0
      %5953 = vmatmul.mubr.bf16.gmra.mrb[0].mxu0 %v5855
      %v5954 = vpop.f32.mrb[0].mxu0
      %v5955 = vadd.f32 0.0, %v5954
      %v5956 = vpop.f32.mrb[0].mxu0
      %v5957 = vpop.f32.mrb[0].mxu0
      %v5958 = vadd.f32 0.0, %v5957
      %v5959 = vpop.f32.mrb[0].mxu0
      %5960 = vmatprep.mubr.bf16.mxu0 0
      %5961 = vmatmul.mubr.bf16.gmra.mrb[0].mxu0 %v5858
      %v5962 = vpop.f32.mrb[0].mxu0
      %v5963 = vadd.f32 0.0, %v5962
      %v5964 = vpop.f32.mrb[0].mxu0
      %v5965 = vpop.f32.mrb[0].mxu0
      %v5966 = vadd.f32 0.0, %v5965
      %v5967 = vpop.f32.mrb[0].mxu0
      %5968 = vmatprep.mubr.bf16.mxu0 0
      %5969 = vmatmul.mubr.bf16.gmra.mrb[0].mxu0 %v5861
      %v5970 = vpop.f32.mrb[0].mxu0
      %v5971 = vadd.f32 0.0, %v5970
      %v5972 = vpop.f32.mrb[0].mxu0
      %v5973 = vpop.f32.mrb[0].mxu0
      %v5974 = vadd.f32 0.0, %v5973
      %v5975 = vpop.f32.mrb[0].mxu0
      %5976 = vmatprep.mubr.bf16.mxu0 0
      %5977 = vmatmul.mubr.bf16.gmra.mrb[0].mxu0 %v5864
      %v5978 = vpop.f32.mrb[0].mxu0
      %v5979 = vadd.f32 0.0, %v5978
      %v5980 = vpop.f32.mrb[0].mxu0
      %v5981 = vpop.f32.mrb[0].mxu0
      %v5982 = vadd.f32 0.0, %v5981
      %v5983 = vpop.f32.mrb[0].mxu0
      %5984 = vmatprep.mubr.bf16.mxu0 0
      %5985 = vmatmul.mubr.bf16.gmra.mrb[0].mxu0 %v5867
      %v5986 = vpop.f32.mrb[0].mxu0
      %v5987 = vadd.f32 0.0, %v5986
      %v5988 = vpop.f32.mrb[0].mxu0
      %v5989 = vpop.f32.mrb[0].mxu0
      %v5990 = vadd.f32 0.0, %v5989
      %v5991 = vpop.f32.mrb[0].mxu0
      %5992 = vmatprep.mubr.bf16.mxu0 0
      %5993 = vmatmul.mubr.bf16.gmra.mrb[0].mxu0 %v5870
      %v5994 = vpop.f32.mrb[0].mxu0
      %v5995 = vadd.f32 0.0, %v5994
      %v5996 = vpop.f32.mrb[0].mxu0
      %v5997 = vpop.f32.mrb[0].mxu0
      %v5998 = vadd.f32 0.0, %v5997
      %v5999 = vpop.f32.mrb[0].mxu0
      %6000 = vmatprep.mubr.bf16.mxu0 0
      %6001 = vmatmul.mubr.bf16.gmra.mrb[0].mxu0 %v5873
      %v6002 = vpop.f32.mrb[0].mxu0
      %v6003 = vadd.f32 0.0, %v6002
      %v6004 = vpop.f32.mrb[0].mxu0
      %v6005 = vpop.f32.mrb[0].mxu0
      %v6006 = vadd.f32 0.0, %v6005
      %v6007 = vpop.f32.mrb[0].mxu0
      %6008 = vmatprep.mubr.bf16.mxu0 0
      %6009 = vmatmul.mubr.bf16.gmra.mrb[0].mxu0 %v5876
      %v6010 = vpop.f32.mrb[0].mxu0
      %v6011 = vadd.f32 0.0, %v6010
      %v6012 = vpop.f32.mrb[0].mxu0
      %v6013 = vpop.f32.mrb[0].mxu0
      %v6014 = vadd.f32 0.0, %v6013
      %v6015 = vpop.f32.mrb[0].mxu0
      %6016 = vmatprep.mubr.bf16.mxu0 0
      %6017 = vmatmul.mubr.bf16.gmra.mrb[0].mxu0 %v5879
      %v6018 = vpop.f32.mrb[0].mxu0
      %v6019 = vadd.f32 0.0, %v6018
      %v6020 = vpop.f32.mrb[0].mxu0
      %v6021 = vpop.f32.mrb[0].mxu0
      %v6022 = vadd.f32 0.0, %v6021
      %v6023 = vpop.f32.mrb[0].mxu0
      %6024 = vmatprep.mubr.bf16.mxu0 0
      %6025 = vmatmul.mubr.bf16.gmra.mrb[0].mxu0 %v5882
      %v6026 = vpop.f32.mrb[0].mxu0
      %v6027 = vadd.f32 0.0, %v6026
      %v6028 = vpop.f32.mrb[0].mxu0
      %v6029 = vpop.f32.mrb[0].mxu0
      %v6030 = vadd.f32 0.0, %v6029
      %v6031 = vpop.f32.mrb[0].mxu0
      %6032 = vmatprep.mubr.bf16.mxu0 0
      %6033 = vmatmul.mubr.bf16.gmra.mrb[0].mxu0 %v5885
      %v6034 = vpop.f32.mrb[0].mxu0
      %v6035 = vadd.f32 0.0, %v6034
      %v6036 = vpop.f32.mrb[0].mxu0
      %v6037 = vpop.f32.mrb[0].mxu0
      %v6038 = vadd.f32 0.0, %v6037
      %v6039 = vpop.f32.mrb[0].mxu0
      %6040 = vmatprep.mubr.bf16.mxu0 0
      %6041 = vmatmul.mubr.bf16.gmra.mrb[0].mxu0 %v5888
      %v6042 = vpop.f32.mrb[0].mxu0
      %v6043 = vadd.f32 0.0, %v6042
      %v6044 = vpop.f32.mrb[0].mxu0
      %v6045 = vpop.f32.mrb[0].mxu0
      %v6046 = vadd.f32 0.0, %v6045
      %v6047 = vpop.f32.mrb[0].mxu0
      %6048 = vmatprep.mubr.bf16.mxu0 0
      %6049 = vmatmul.mubr.bf16.gmra.mrb[0].mxu0 %v5891
      %v6050 = vpop.f32.mrb[0].mxu0
      %v6051 = vadd.f32 0.0, %v6050
      %v6052 = vpop.f32.mrb[0].mxu0
      %v6053 = vpop.f32.mrb[0].mxu0
      %v6054 = vadd.f32 0.0, %v6053
      %v6055 = vpop.f32.mrb[0].mxu0
      %6056 = vdwg.mxu0
      %v6057 = vadd.f32 %v5763, %v5931
      %v6058 = vadd.f32 %v5764, %v5934
      %v6059 = vadd.f32 %v5765, %v5939
      %v6060 = vadd.f32 %v5766, %v5942
      %v6061 = vadd.f32 %v5767, %v5947
      %v6062 = vadd.f32 %v5768, %v5950
      %v6063 = vadd.f32 %v5769, %v5955
      %v6064 = vadd.f32 %v5770, %v5958
      %v6065 = vadd.f32 %v5771, %v5963
      %v6066 = vadd.f32 %v5772, %v5966
      %v6067 = vadd.f32 %v5773, %v5971
      %v6068 = vadd.f32 %v5774, %v5974
      %v6069 = vadd.f32 %v5775, %v5979
      %v6070 = vadd.f32 %v5776, %v5982
      %v6071 = vadd.f32 %v5777, %v5987
      %v6072 = vadd.f32 %v5778, %v5990
      %v6073 = vadd.f32 %v5779, %v5995
      %v6074 = vadd.f32 %v5780, %v5998
      %v6075 = vadd.f32 %v5781, %v6003
      %v6076 = vadd.f32 %v5782, %v6006
      %v6077 = vadd.f32 %v5783, %v6011
      %v6078 = vadd.f32 %v5784, %v6014
      %v6079 = vadd.f32 %v5785, %v6019
      %v6080 = vadd.f32 %v5786, %v6022
      %v6081 = vadd.f32 %v5787, %v6027
      %v6082 = vadd.f32 %v5788, %v6030
      %v6083 = vadd.f32 %v5789, %v6035
      %v6084 = vadd.f32 %v5790, %v6038
      %v6085 = vadd.f32 %v5791, %v6043
      %v6086 = vadd.f32 %v5792, %v6046
      %v6087 = vadd.f32 %v5793, %v6051
      %v6088 = vadd.f32 %v5794, %v6054
      %v6089 = vld [vmem:[%s4944 + $0x1] sm:$0xff]
      %v6090 = vld [vmem:[%s4944 + $0x9] sm:$0xff]
      %v6091 = vld [vmem:[%s4944 + $0x19] sm:$0xff]
      %v6092 = vld [vmem:[%s4944 + $0x21] sm:$0xff]
      %v6093 = vld [vmem:[%s4944 + $0x31] sm:$0xff]
      %v6094 = vld [vmem:[%s4944 + $0x39] sm:$0xff]
      %v6095 = vld [vmem:[%s4944 + $0x49] sm:$0xff]
      %v6096 = vld [vmem:[%s4944 + $0x51] sm:$0xff]
      %v6097 = vld [vmem:[%s4944 + $0x61] sm:$0xff]
      %v6098 = vld [vmem:[%s4944 + $0x69] sm:$0xff]
      %v6099 = vld [vmem:[%s4944 + $0x79] sm:$0xff]
      %v6100 = vld [vmem:[%s4944 + $0x81] sm:$0xff]
      %v6101 = vld [vmem:[%s4944 + $0x91] sm:$0xff]
      %v6102 = vld [vmem:[%s4944 + $0x99] sm:$0xff]
      %v6103 = vld [vmem:[%s4944 + $0xa9] sm:$0xff]
      %v6104 = vld [vmem:[%s4944 + $0xb1] sm:$0xff]
      %v6105 = vld [vmem:[%s4944 + $0xc1] sm:$0xff]
      %v6106 = vld [vmem:[%s4944 + $0xc9] sm:$0xff]
      %v6107 = vld [vmem:[%s4944 + $0xd9] sm:$0xff]
      %v6108 = vld [vmem:[%s4944 + $0xe1] sm:$0xff]
      %v6109 = vld [vmem:[%s4944 + $0xf1] sm:$0xff]
      %v6110 = vld [vmem:[%s4944 + $0xf9] sm:$0xff]
      %v6111 = vld [vmem:[%s4944 + $0x109] sm:$0xff]
      %v6112 = vld [vmem:[%s4944 + $0x111] sm:$0xff]
      %v6113 = vld [vmem:[%s4944 + $0x121] sm:$0xff]
      %v6114 = vld [vmem:[%s4944 + $0x129] sm:$0xff]
      %v6115 = vld [vmem:[%s4944 + $0x139] sm:$0xff]
      %v6116 = vld [vmem:[%s4944 + $0x141] sm:$0xff]
      %v6117 = vld [vmem:[%s4944 + $0x151] sm:$0xff]
      %v6118 = vld [vmem:[%s4944 + $0x159] sm:$0xff]
      %v6119 = vld [vmem:[%s4944 + $0x169] sm:$0xff]
      %v6120 = vld [vmem:[%s4944 + $0x171] sm:$0xff]
      %v6121 = vpack.c.bf16 %v6090, %v6089
      %v6122 = vpack.c.bf16 %v6092, %v6091
      %v6123 = vpack.c.bf16 %v6094, %v6093
      %v6124 = vpack.c.bf16 %v6096, %v6095
      %v6125 = vpack.c.bf16 %v6098, %v6097
      %v6126 = vpack.c.bf16 %v6100, %v6099
      %v6127 = vpack.c.bf16 %v6102, %v6101
      %v6128 = vpack.c.bf16 %v6104, %v6103
      %v6129 = vpack.c.bf16 %v6106, %v6105
      %v6130 = vpack.c.bf16 %v6108, %v6107
      %v6131 = vpack.c.bf16 %v6110, %v6109
      %v6132 = vpack.c.bf16 %v6112, %v6111
      %v6133 = vpack.c.bf16 %v6114, %v6113
      %v6134 = vpack.c.bf16 %v6116, %v6115
      %v6135 = vpack.c.bf16 %v6118, %v6117
      %v6136 = vpack.c.bf16 %v6120, %v6119
      %s6137 = scalar_lea.vmem %s3, 16
      %v6138 = vld [vmem:[%s6137] sm:$0xf]
      %v6140 = vsel %vm4888, %v6121, 0
      %v6143 = vsel %vm4888, %v6122, 0
      %v6146 = vsel %vm4888, %v6123, 0
      %v6149 = vsel %vm4888, %v6124, 0
      %v6152 = vsel %vm4888, %v6125, 0
      %v6155 = vsel %vm4888, %v6126, 0
      %v6158 = vsel %vm4888, %v6127, 0
      %v6161 = vsel %vm4888, %v6128, 0
      %v6164 = vsel %vm4888, %v6129, 0
      %v6167 = vsel %vm4888, %v6130, 0
      %v6170 = vsel %vm4888, %v6131, 0
      %v6173 = vsel %vm4888, %v6132, 0
      %v6176 = vsel %vm4888, %v6133, 0
      %v6179 = vsel %vm4888, %v6134, 0
      %v6182 = vsel %vm4888, %v6135, 0
      %v6185 = vsel %vm4888, %v6136, 0
      %v6188 = vsel %vm5124, %v6138, 0
      %6190 = vmatprep.subr.bf16.mxu0 0
      %6191 = vmatpush1.bf16.msra.mxu0 %v6188
      %6192 = vmatprep.subr.bf16.mxu0 0
      %6193 = vmatpush1.bf16.msra.mxu0 0
      %6194 = vmatprep.subr.bf16.mxu0 0
      %6195 = vmatpush1.bf16.msra.mxu0 0
      %6196 = vmatprep.subr.bf16.mxu0 0
      %6197 = vmatpush1.bf16.msra.mxu0 0
      %6198 = vmatprep.subr.bf16.mxu0 0
      %6199 = vmatpush1.bf16.msra.mxu0 0
      %6200 = vmatprep.subr.bf16.mxu0 0
      %6201 = vmatpush1.bf16.msra.mxu0 0
      %6202 = vmatprep.subr.bf16.mxu0 0
      %6203 = vmatpush1.bf16.msra.mxu0 0
      %6204 = vmatprep.subr.bf16.mxu0 0
      %6205 = vmatpush1.bf16.msra.mxu0 0
      %6206 = vmatprep.subr.bf16.mxu0 0
      %6207 = vmatpush1.bf16.msra.mxu0 0
      %6208 = vmatprep.subr.bf16.mxu0 0
      %6209 = vmatpush1.bf16.msra.mxu0 0
      %6210 = vmatprep.subr.bf16.mxu0 0
      %6211 = vmatpush1.bf16.msra.mxu0 0
      %6212 = vmatprep.subr.bf16.mxu0 0
      %6213 = vmatpush1.bf16.msra.mxu0 0
      %6214 = vmatprep.subr.bf16.mxu0 0
      %6215 = vmatpush1.bf16.msra.mxu0 0
      %6216 = vmatprep.subr.bf16.mxu0 0
      %6217 = vmatpush1.bf16.msra.mxu0 0
      %6218 = vmatprep.subr.bf16.mxu0 0
      %6219 = vmatpush1.bf16.msra.mxu0 0
      %6220 = vmatprep.subr.bf16.mxu0 0
      %6221 = vmatpush1.bf16.msra.mxu0 0
      %6222 = vmatprep.mubr.bf16.mxu0 0
      %6223 = vmatmul.mubr.bf16.gmra.mrb[0].mxu0 %v6140
      %v6224 = vpop.f32.mrb[0].mxu0
      %v6225 = vadd.f32 0.0, %v6224
      %v6226 = vpop.f32.mrb[0].mxu0
      %v6227 = vpop.f32.mrb[0].mxu0
      %v6228 = vadd.f32 0.0, %v6227
      %v6229 = vpop.f32.mrb[0].mxu0
      %6230 = vmatprep.mubr.bf16.mxu0 0
      %6231 = vmatmul.mubr.bf16.gmra.mrb[0].mxu0 %v6143
      %v6232 = vpop.f32.mrb[0].mxu0
      %v6233 = vadd.f32 0.0, %v6232
      %v6234 = vpop.f32.mrb[0].mxu0
      %v6235 = vpop.f32.mrb[0].mxu0
      %v6236 = vadd.f32 0.0, %v6235
      %v6237 = vpop.f32.mrb[0].mxu0
      %6238 = vmatprep.mubr.bf16.mxu0 0
      %6239 = vmatmul.mubr.bf16.gmra.mrb[0].mxu0 %v6146
      %v6240 = vpop.f32.mrb[0].mxu0
      %v6241 = vadd.f32 0.0, %v6240
      %v6242 = vpop.f32.mrb[0].mxu0
      %v6243 = vpop.f32.mrb[0].mxu0
      %v6244 = vadd.f32 0.0, %v6243
      %v6245 = vpop.f32.mrb[0].mxu0
      %6246 = vmatprep.mubr.bf16.mxu0 0
      %6247 = vmatmul.mubr.bf16.gmra.mrb[0].mxu0 %v6149
      %v6248 = vpop.f32.mrb[0].mxu0
      %v6249 = vadd.f32 0.0, %v6248
      %v6250 = vpop.f32.mrb[0].mxu0
      %v6251 = vpop.f32.mrb[0].mxu0
      %v6252 = vadd.f32 0.0, %v6251
      %v6253 = vpop.f32.mrb[0].mxu0
      %6254 = vmatprep.mubr.bf16.mxu0 0
      %6255 = vmatmul.mubr.bf16.gmra.mrb[0].mxu0 %v6152
      %v6256 = vpop.f32.mrb[0].mxu0
      %v6257 = vadd.f32 0.0, %v6256
      %v6258 = vpop.f32.mrb[0].mxu0
      %v6259 = vpop.f32.mrb[0].mxu0
      %v6260 = vadd.f32 0.0, %v6259
      %v6261 = vpop.f32.mrb[0].mxu0
      %6262 = vmatprep.mubr.bf16.mxu0 0
      %6263 = vmatmul.mubr.bf16.gmra.mrb[0].mxu0 %v6155
      %v6264 = vpop.f32.mrb[0].mxu0
      %v6265 = vadd.f32 0.0, %v6264
      %v6266 = vpop.f32.mrb[0].mxu0
      %v6267 = vpop.f32.mrb[0].mxu0
      %v6268 = vadd.f32 0.0, %v6267
      %v6269 = vpop.f32.mrb[0].mxu0
      %6270 = vmatprep.mubr.bf16.mxu0 0
      %6271 = vmatmul.mubr.bf16.gmra.mrb[0].mxu0 %v6158
      %v6272 = vpop.f32.mrb[0].mxu0
      %v6273 = vadd.f32 0.0, %v6272
      %v6274 = vpop.f32.mrb[0].mxu0
      %v6275 = vpop.f32.mrb[0].mxu0
      %v6276 = vadd.f32 0.0, %v6275
      %v6277 = vpop.f32.mrb[0].mxu0
      %6278 = vmatprep.mubr.bf16.mxu0 0
      %6279 = vmatmul.mubr.bf16.gmra.mrb[0].mxu0 %v6161
      %v6280 = vpop.f32.mrb[0].mxu0
      %v6281 = vadd.f32 0.0, %v6280
      %v6282 = vpop.f32.mrb[0].mxu0
      %v6283 = vpop.f32.mrb[0].mxu0
      %v6284 = vadd.f32 0.0, %v6283
      %v6285 = vpop.f32.mrb[0].mxu0
      %6286 = vmatprep.mubr.bf16.mxu0 0
      %6287 = vmatmul.mubr.bf16.gmra.mrb[0].mxu0 %v6164
      %v6288 = vpop.f32.mrb[0].mxu0
      %v6289 = vadd.f32 0.0, %v6288
      %v6290 = vpop.f32.mrb[0].mxu0
      %v6291 = vpop.f32.mrb[0].mxu0
      %v6292 = vadd.f32 0.0, %v6291
      %v6293 = vpop.f32.mrb[0].mxu0
      %6294 = vmatprep.mubr.bf16.mxu0 0
      %6295 = vmatmul.mubr.bf16.gmra.mrb[0].mxu0 %v6167
      %v6296 = vpop.f32.mrb[0].mxu0
      %v6297 = vadd.f32 0.0, %v6296
      %v6298 = vpop.f32.mrb[0].mxu0
      %v6299 = vpop.f32.mrb[0].mxu0
      %v6300 = vadd.f32 0.0, %v6299
      %v6301 = vpop.f32.mrb[0].mxu0
      %6302 = vmatprep.mubr.bf16.mxu0 0
      %6303 = vmatmul.mubr.bf16.gmra.mrb[0].mxu0 %v6170
      %v6304 = vpop.f32.mrb[0].mxu0
      %v6305 = vadd.f32 0.0, %v6304
      %v6306 = vpop.f32.mrb[0].mxu0
      %v6307 = vpop.f32.mrb[0].mxu0
      %v6308 = vadd.f32 0.0, %v6307
      %v6309 = vpop.f32.mrb[0].mxu0
      %6310 = vmatprep.mubr.bf16.mxu0 0
      %6311 = vmatmul.mubr.bf16.gmra.mrb[0].mxu0 %v6173
      %v6312 = vpop.f32.mrb[0].mxu0
      %v6313 = vadd.f32 0.0, %v6312
      %v6314 = vpop.f32.mrb[0].mxu0
      %v6315 = vpop.f32.mrb[0].mxu0
      %v6316 = vadd.f32 0.0, %v6315
      %v6317 = vpop.f32.mrb[0].mxu0
      %6318 = vmatprep.mubr.bf16.mxu0 0
      %6319 = vmatmul.mubr.bf16.gmra.mrb[0].mxu0 %v6176
      %v6320 = vpop.f32.mrb[0].mxu0
      %v6321 = vadd.f32 0.0, %v6320
      %v6322 = vpop.f32.mrb[0].mxu0
      %v6323 = vpop.f32.mrb[0].mxu0
      %v6324 = vadd.f32 0.0, %v6323
      %v6325 = vpop.f32.mrb[0].mxu0
      %6326 = vmatprep.mubr.bf16.mxu0 0
      %6327 = vmatmul.mubr.bf16.gmra.mrb[0].mxu0 %v6179
      %v6328 = vpop.f32.mrb[0].mxu0
      %v6329 = vadd.f32 0.0, %v6328
      %v6330 = vpop.f32.mrb[0].mxu0
      %v6331 = vpop.f32.mrb[0].mxu0
      %v6332 = vadd.f32 0.0, %v6331
      %v6333 = vpop.f32.mrb[0].mxu0
      %6334 = vmatprep.mubr.bf16.mxu0 0
      %6335 = vmatmul.mubr.bf16.gmra.mrb[0].mxu0 %v6182
      %v6336 = vpop.f32.mrb[0].mxu0
      %v6337 = vadd.f32 0.0, %v6336
      %v6338 = vpop.f32.mrb[0].mxu0
      %v6339 = vpop.f32.mrb[0].mxu0
      %v6340 = vadd.f32 0.0, %v6339
      %v6341 = vpop.f32.mrb[0].mxu0
      %6342 = vmatprep.mubr.bf16.mxu0 0
      %6343 = vmatmul.mubr.bf16.gmra.mrb[0].mxu0 %v6185
      %v6344 = vpop.f32.mrb[0].mxu0
      %v6345 = vadd.f32 0.0, %v6344
      %v6346 = vpop.f32.mrb[0].mxu0
      %v6347 = vpop.f32.mrb[0].mxu0
      %v6348 = vadd.f32 0.0, %v6347
      %v6349 = vpop.f32.mrb[0].mxu0
      %6350 = vdwg.mxu0
      %v6351 = vadd.f32 %v6057, %v6225
      %v6352 = vadd.f32 %v6058, %v6228
      %v6353 = vadd.f32 %v6059, %v6233
      %v6354 = vadd.f32 %v6060, %v6236
      %v6355 = vadd.f32 %v6061, %v6241
      %v6356 = vadd.f32 %v6062, %v6244
      %v6357 = vadd.f32 %v6063, %v6249
      %v6358 = vadd.f32 %v6064, %v6252
      %v6359 = vadd.f32 %v6065, %v6257
      %v6360 = vadd.f32 %v6066, %v6260
      %v6361 = vadd.f32 %v6067, %v6265
      %v6362 = vadd.f32 %v6068, %v6268
      %v6363 = vadd.f32 %v6069, %v6273
      %v6364 = vadd.f32 %v6070, %v6276
      %v6365 = vadd.f32 %v6071, %v6281
      %v6366 = vadd.f32 %v6072, %v6284
      %v6367 = vadd.f32 %v6073, %v6289
      %v6368 = vadd.f32 %v6074, %v6292
      %v6369 = vadd.f32 %v6075, %v6297
      %v6370 = vadd.f32 %v6076, %v6300
      %v6371 = vadd.f32 %v6077, %v6305
      %v6372 = vadd.f32 %v6078, %v6308
      %v6373 = vadd.f32 %v6079, %v6313
      %v6374 = vadd.f32 %v6080, %v6316
      %v6375 = vadd.f32 %v6081, %v6321
      %v6376 = vadd.f32 %v6082, %v6324
      %v6377 = vadd.f32 %v6083, %v6329
      %v6378 = vadd.f32 %v6084, %v6332
      %v6379 = vadd.f32 %v6085, %v6337
      %v6380 = vadd.f32 %v6086, %v6340
      %v6381 = vadd.f32 %v6087, %v6345
      %v6382 = vadd.f32 %v6088, %v6348
      %v6383 = vld [vmem:[%s4944 + $0x2] sm:$0xff]
      %v6384 = vld [vmem:[%s4944 + $0xa] sm:$0xff]
      %v6385 = vld [vmem:[%s4944 + $0x1a] sm:$0xff]
      %v6386 = vld [vmem:[%s4944 + $0x22] sm:$0xff]
      %v6387 = vld [vmem:[%s4944 + $0x32] sm:$0xff]
      %v6388 = vld [vmem:[%s4944 + $0x3a] sm:$0xff]
      %v6389 = vld [vmem:[%s4944 + $0x4a] sm:$0xff]
      %v6390 = vld [vmem:[%s4944 + $0x52] sm:$0xff]
      %v6391 = vld [vmem:[%s4944 + $0x62] sm:$0xff]
      %v6392 = vld [vmem:[%s4944 + $0x6a] sm:$0xff]
      %v6393 = vld [vmem:[%s4944 + $0x7a] sm:$0xff]
      %v6394 = vld [vmem:[%s4944 + $0x82] sm:$0xff]
      %v6395 = vld [vmem:[%s4944 + $0x92] sm:$0xff]
      %v6396 = vld [vmem:[%s4944 + $0x9a] sm:$0xff]
      %v6397 = vld [vmem:[%s4944 + $0xaa] sm:$0xff]
      %v6398 = vld [vmem:[%s4944 + $0xb2] sm:$0xff]
      %v6399 = vld [vmem:[%s4944 + $0xc2] sm:$0xff]
      %v6400 = vld [vmem:[%s4944 + $0xca] sm:$0xff]
      %v6401 = vld [vmem:[%s4944 + $0xda] sm:$0xff]
      %v6402 = vld [vmem:[%s4944 + $0xe2] sm:$0xff]
      %v6403 = vld [vmem:[%s4944 + $0xf2] sm:$0xff]
      %v6404 = vld [vmem:[%s4944 + $0xfa] sm:$0xff]
      %v6405 = vld [vmem:[%s4944 + $0x10a] sm:$0xff]
      %v6406 = vld [vmem:[%s4944 + $0x112] sm:$0xff]
      %v6407 = vld [vmem:[%s4944 + $0x122] sm:$0xff]
      %v6408 = vld [vmem:[%s4944 + $0x12a] sm:$0xff]
      %v6409 = vld [vmem:[%s4944 + $0x13a] sm:$0xff]
      %v6410 = vld [vmem:[%s4944 + $0x142] sm:$0xff]
      %v6411 = vld [vmem:[%s4944 + $0x152] sm:$0xff]
      %v6412 = vld [vmem:[%s4944 + $0x15a] sm:$0xff]
      %v6413 = vld [vmem:[%s4944 + $0x16a] sm:$0xff]
      %v6414 = vld [vmem:[%s4944 + $0x172] sm:$0xff]
      %v6415 = vpack.c.bf16 %v6384, %v6383
      %v6416 = vpack.c.bf16 %v6386, %v6385
      %v6417 = vpack.c.bf16 %v6388, %v6387
      %v6418 = vpack.c.bf16 %v6390, %v6389
      %v6419 = vpack.c.bf16 %v6392, %v6391
      %v6420 = vpack.c.bf16 %v6394, %v6393
      %v6421 = vpack.c.bf16 %v6396, %v6395
      %v6422 = vpack.c.bf16 %v6398, %v6397
      %v6423 = vpack.c.bf16 %v6400, %v6399
      %v6424 = vpack.c.bf16 %v6402, %v6401
      %v6425 = vpack.c.bf16 %v6404, %v6403
      %v6426 = vpack.c.bf16 %v6406, %v6405
      %v6427 = vpack.c.bf16 %v6408, %v6407
      %v6428 = vpack.c.bf16 %v6410, %v6409
      %v6429 = vpack.c.bf16 %v6412, %v6411
      %v6430 = vpack.c.bf16 %v6414, %v6413
      %s6431 = scalar_lea.vmem %s3, 20
      %v6432 = vld [vmem:[%s6431] sm:$0xf]
      %v6434 = vsel %vm4888, %v6415, 0
      %v6437 = vsel %vm4888, %v6416, 0
      %v6440 = vsel %vm4888, %v6417, 0
      %v6443 = vsel %vm4888, %v6418, 0
      %v6446 = vsel %vm4888, %v6419, 0
      %v6449 = vsel %vm4888, %v6420, 0
      %v6452 = vsel %vm4888, %v6421, 0
      %v6455 = vsel %vm4888, %v6422, 0
      %v6458 = vsel %vm4888, %v6423, 0
      %v6461 = vsel %vm4888, %v6424, 0
      %v6464 = vsel %vm4888, %v6425, 0
      %v6467 = vsel %vm4888, %v6426, 0
      %v6470 = vsel %vm4888, %v6427, 0
      %v6473 = vsel %vm4888, %v6428, 0
      %v6476 = vsel %vm4888, %v6429, 0
      %v6479 = vsel %vm4888, %v6430, 0
      %v6482 = vsel %vm5124, %v6432, 0
      %6484 = vmatprep.subr.bf16.mxu0 0
      %6485 = vmatpush1.bf16.msra.mxu0 %v6482
      %6486 = vmatprep.subr.bf16.mxu0 0
      %6487 = vmatpush1.bf16.msra.mxu0 0
      %6488 = vmatprep.subr.bf16.mxu0 0
      %6489 = vmatpush1.bf16.msra.mxu0 0
      %6490 = vmatprep.subr.bf16.mxu0 0
      %6491 = vmatpush1.bf16.msra.mxu0 0
      %6492 = vmatprep.subr.bf16.mxu0 0
      %6493 = vmatpush1.bf16.msra.mxu0 0
      %6494 = vmatprep.subr.bf16.mxu0 0
      %6495 = vmatpush1.bf16.msra.mxu0 0
      %6496 = vmatprep.subr.bf16.mxu0 0
      %6497 = vmatpush1.bf16.msra.mxu0 0
      %6498 = vmatprep.subr.bf16.mxu0 0
      %6499 = vmatpush1.bf16.msra.mxu0 0
      %6500 = vmatprep.subr.bf16.mxu0 0
      %6501 = vmatpush1.bf16.msra.mxu0 0
      %6502 = vmatprep.subr.bf16.mxu0 0
      %6503 = vmatpush1.bf16.msra.mxu0 0
      %6504 = vmatprep.subr.bf16.mxu0 0
      %6505 = vmatpush1.bf16.msra.mxu0 0
      %6506 = vmatprep.subr.bf16.mxu0 0
      %6507 = vmatpush1.bf16.msra.mxu0 0
      %6508 = vmatprep.subr.bf16.mxu0 0
      %6509 = vmatpush1.bf16.msra.mxu0 0
      %6510 = vmatprep.subr.bf16.mxu0 0
      %6511 = vmatpush1.bf16.msra.mxu0 0
      %6512 = vmatprep.subr.bf16.mxu0 0
      %6513 = vmatpush1.bf16.msra.mxu0 0
      %6514 = vmatprep.subr.bf16.mxu0 0
      %6515 = vmatpush1.bf16.msra.mxu0 0
      %6516 = vmatprep.mubr.bf16.mxu0 0
      %6517 = vmatmul.mubr.bf16.gmra.mrb[0].mxu0 %v6434
      %v6518 = vpop.f32.mrb[0].mxu0
      %v6519 = vadd.f32 0.0, %v6518
      %v6520 = vpop.f32.mrb[0].mxu0
      %v6521 = vpop.f32.mrb[0].mxu0
      %v6522 = vadd.f32 0.0, %v6521
      %v6523 = vpop.f32.mrb[0].mxu0
      %6524 = vmatprep.mubr.bf16.mxu0 0
      %6525 = vmatmul.mubr.bf16.gmra.mrb[0].mxu0 %v6437
      %v6526 = vpop.f32.mrb[0].mxu0
      %v6527 = vadd.f32 0.0, %v6526
      %v6528 = vpop.f32.mrb[0].mxu0
      %v6529 = vpop.f32.mrb[0].mxu0
      %v6530 = vadd.f32 0.0, %v6529
      %v6531 = vpop.f32.mrb[0].mxu0
      %6532 = vmatprep.mubr.bf16.mxu0 0
      %6533 = vmatmul.mubr.bf16.gmra.mrb[0].mxu0 %v6440
      %v6534 = vpop.f32.mrb[0].mxu0
      %v6535 = vadd.f32 0.0, %v6534
      %v6536 = vpop.f32.mrb[0].mxu0
      %v6537 = vpop.f32.mrb[0].mxu0
      %v6538 = vadd.f32 0.0, %v6537
      %v6539 = vpop.f32.mrb[0].mxu0
      %6540 = vmatprep.mubr.bf16.mxu0 0
      %6541 = vmatmul.mubr.bf16.gmra.mrb[0].mxu0 %v6443
      %v6542 = vpop.f32.mrb[0].mxu0
      %v6543 = vadd.f32 0.0, %v6542
      %v6544 = vpop.f32.mrb[0].mxu0
      %v6545 = vpop.f32.mrb[0].mxu0
      %v6546 = vadd.f32 0.0, %v6545
      %v6547 = vpop.f32.mrb[0].mxu0
      %6548 = vmatprep.mubr.bf16.mxu0 0
      %6549 = vmatmul.mubr.bf16.gmra.mrb[0].mxu0 %v6446
      %v6550 = vpop.f32.mrb[0].mxu0
      %v6551 = vadd.f32 0.0, %v6550
      %v6552 = vpop.f32.mrb[0].mxu0
      %v6553 = vpop.f32.mrb[0].mxu0
      %v6554 = vadd.f32 0.0, %v6553
      %v6555 = vpop.f32.mrb[0].mxu0
      %6556 = vmatprep.mubr.bf16.mxu0 0
      %6557 = vmatmul.mubr.bf16.gmra.mrb[0].mxu0 %v6449
      %v6558 = vpop.f32.mrb[0].mxu0
      %v6559 = vadd.f32 0.0, %v6558
      %v6560 = vpop.f32.mrb[0].mxu0
      %v6561 = vpop.f32.mrb[0].mxu0
      %v6562 = vadd.f32 0.0, %v6561
      %v6563 = vpop.f32.mrb[0].mxu0
      %6564 = vmatprep.mubr.bf16.mxu0 0
      %6565 = vmatmul.mubr.bf16.gmra.mrb[0].mxu0 %v6452
      %v6566 = vpop.f32.mrb[0].mxu0
      %v6567 = vadd.f32 0.0, %v6566
      %v6568 = vpop.f32.mrb[0].mxu0
      %v6569 = vpop.f32.mrb[0].mxu0
      %v6570 = vadd.f32 0.0, %v6569
      %v6571 = vpop.f32.mrb[0].mxu0
      %6572 = vmatprep.mubr.bf16.mxu0 0
      %6573 = vmatmul.mubr.bf16.gmra.mrb[0].mxu0 %v6455
      %v6574 = vpop.f32.mrb[0].mxu0
      %v6575 = vadd.f32 0.0, %v6574
      %v6576 = vpop.f32.mrb[0].mxu0
      %v6577 = vpop.f32.mrb[0].mxu0
      %v6578 = vadd.f32 0.0, %v6577
      %v6579 = vpop.f32.mrb[0].mxu0
      %6580 = vmatprep.mubr.bf16.mxu0 0
      %6581 = vmatmul.mubr.bf16.gmra.mrb[0].mxu0 %v6458
      %v6582 = vpop.f32.mrb[0].mxu0
      %v6583 = vadd.f32 0.0, %v6582
      %v6584 = vpop.f32.mrb[0].mxu0
      %v6585 = vpop.f32.mrb[0].mxu0
      %v6586 = vadd.f32 0.0, %v6585
      %v6587 = vpop.f32.mrb[0].mxu0
      %6588 = vmatprep.mubr.bf16.mxu0 0
      %6589 = vmatmul.mubr.bf16.gmra.mrb[0].mxu0 %v6461
      %v6590 = vpop.f32.mrb[0].mxu0
      %v6591 = vadd.f32 0.0, %v6590
      %v6592 = vpop.f32.mrb[0].mxu0
      %v6593 = vpop.f32.mrb[0].mxu0
      %v6594 = vadd.f32 0.0, %v6593
      %v6595 = vpop.f32.mrb[0].mxu0
      %6596 = vmatprep.mubr.bf16.mxu0 0
      %6597 = vmatmul.mubr.bf16.gmra.mrb[0].mxu0 %v6464
      %v6598 = vpop.f32.mrb[0].mxu0
      %v6599 = vadd.f32 0.0, %v6598
      %v6600 = vpop.f32.mrb[0].mxu0
      %v6601 = vpop.f32.mrb[0].mxu0
      %v6602 = vadd.f32 0.0, %v6601
      %v6603 = vpop.f32.mrb[0].mxu0
      %6604 = vmatprep.mubr.bf16.mxu0 0
      %6605 = vmatmul.mubr.bf16.gmra.mrb[0].mxu0 %v6467
      %v6606 = vpop.f32.mrb[0].mxu0
      %v6607 = vadd.f32 0.0, %v6606
      %v6608 = vpop.f32.mrb[0].mxu0
      %v6609 = vpop.f32.mrb[0].mxu0
      %v6610 = vadd.f32 0.0, %v6609
      %v6611 = vpop.f32.mrb[0].mxu0
      %6612 = vmatprep.mubr.bf16.mxu0 0
      %6613 = vmatmul.mubr.bf16.gmra.mrb[0].mxu0 %v6470
      %v6614 = vpop.f32.mrb[0].mxu0
      %v6615 = vadd.f32 0.0, %v6614
      %v6616 = vpop.f32.mrb[0].mxu0
      %v6617 = vpop.f32.mrb[0].mxu0
      %v6618 = vadd.f32 0.0, %v6617
      %v6619 = vpop.f32.mrb[0].mxu0
      %6620 = vmatprep.mubr.bf16.mxu0 0
      %6621 = vmatmul.mubr.bf16.gmra.mrb[0].mxu0 %v6473
      %v6622 = vpop.f32.mrb[0].mxu0
      %v6623 = vadd.f32 0.0, %v6622
      %v6624 = vpop.f32.mrb[0].mxu0
      %v6625 = vpop.f32.mrb[0].mxu0
      %v6626 = vadd.f32 0.0, %v6625
      %v6627 = vpop.f32.mrb[0].mxu0
      %6628 = vmatprep.mubr.bf16.mxu0 0
      %6629 = vmatmul.mubr.bf16.gmra.mrb[0].mxu0 %v6476
      %v6630 = vpop.f32.mrb[0].mxu0
      %v6631 = vadd.f32 0.0, %v6630
      %v6632 = vpop.f32.mrb[0].mxu0
      %v6633 = vpop.f32.mrb[0].mxu0
      %v6634 = vadd.f32 0.0, %v6633
      %v6635 = vpop.f32.mrb[0].mxu0
      %6636 = vmatprep.mubr.bf16.mxu0 0
      %6637 = vmatmul.mubr.bf16.gmra.mrb[0].mxu0 %v6479
      %v6638 = vpop.f32.mrb[0].mxu0
      %v6639 = vadd.f32 0.0, %v6638
      %v6640 = vpop.f32.mrb[0].mxu0
      %v6641 = vpop.f32.mrb[0].mxu0
      %v6642 = vadd.f32 0.0, %v6641
      %v6643 = vpop.f32.mrb[0].mxu0
      %6644 = vdwg.mxu0
      %v6645 = vadd.f32 %v6351, %v6519
      %v6646 = vadd.f32 %v6352, %v6522
      %v6647 = vadd.f32 %v6353, %v6527
      %v6648 = vadd.f32 %v6354, %v6530
      %v6649 = vadd.f32 %v6355, %v6535
      %v6650 = vadd.f32 %v6356, %v6538
      %v6651 = vadd.f32 %v6357, %v6543
      %v6652 = vadd.f32 %v6358, %v6546
      %v6653 = vadd.f32 %v6359, %v6551
      %v6654 = vadd.f32 %v6360, %v6554
      %v6655 = vadd.f32 %v6361, %v6559
      %v6656 = vadd.f32 %v6362, %v6562
      %v6657 = vadd.f32 %v6363, %v6567
      %v6658 = vadd.f32 %v6364, %v6570
      %v6659 = vadd.f32 %v6365, %v6575
      %v6660 = vadd.f32 %v6366, %v6578
      %v6661 = vadd.f32 %v6367, %v6583
      %v6662 = vadd.f32 %v6368, %v6586
      %v6663 = vadd.f32 %v6369, %v6591
      %v6664 = vadd.f32 %v6370, %v6594
      %v6665 = vadd.f32 %v6371, %v6599
      %v6666 = vadd.f32 %v6372, %v6602
      %v6667 = vadd.f32 %v6373, %v6607
      %v6668 = vadd.f32 %v6374, %v6610
      %v6669 = vadd.f32 %v6375, %v6615
      %v6670 = vadd.f32 %v6376, %v6618
      %v6671 = vadd.f32 %v6377, %v6623
      %v6672 = vadd.f32 %v6378, %v6626
      %v6673 = vadd.f32 %v6379, %v6631
      %v6674 = vadd.f32 %v6380, %v6634
      %v6675 = vadd.f32 %v6381, %v6639
      %v6676 = vadd.f32 %v6382, %v6642
      %s6677 = scalar_lea.vmem [#allocation2], 48
      %v6678 = vld [vmem:[%s6677] sm:$0xff]
      %v6679 = vld [vmem:[%s6677 + $0x8] sm:$0xff]
      %v6680 = vld [vmem:[%s6677 + $0x18] sm:$0xff]
      %v6681 = vld [vmem:[%s6677 + $0x20] sm:$0xff]
      %v6682 = vld [vmem:[%s6677 + $0x30] sm:$0xff]
      %v6683 = vld [vmem:[%s6677 + $0x38] sm:$0xff]
      %v6684 = vld [vmem:[%s6677 + $0x48] sm:$0xff]
      %v6685 = vld [vmem:[%s6677 + $0x50] sm:$0xff]
      %v6686 = vld [vmem:[%s6677 + $0x60] sm:$0xff]
      %v6687 = vld [vmem:[%s6677 + $0x68] sm:$0xff]
      %v6688 = vld [vmem:[%s6677 + $0x78] sm:$0xff]
      %v6689 = vld [vmem:[%s6677 + $0x80] sm:$0xff]
      %v6690 = vld [vmem:[%s6677 + $0x90] sm:$0xff]
      %v6691 = vld [vmem:[%s6677 + $0x98] sm:$0xff]
      %v6692 = vld [vmem:[%s6677 + $0xa8] sm:$0xff]
      %v6693 = vld [vmem:[%s6677 + $0xb0] sm:$0xff]
      %v6694 = vld [vmem:[%s6677 + $0xc0] sm:$0xff]
      %v6695 = vld [vmem:[%s6677 + $0xc8] sm:$0xff]
      %v6696 = vld [vmem:[%s6677 + $0xd8] sm:$0xff]
      %v6697 = vld [vmem:[%s6677 + $0xe0] sm:$0xff]
      %v6698 = vld [vmem:[%s6677 + $0xf0] sm:$0xff]
      %v6699 = vld [vmem:[%s6677 + $0xf8] sm:$0xff]
      %v6700 = vld [vmem:[%s6677 + $0x108] sm:$0xff]
      %v6701 = vld [vmem:[%s6677 + $0x110] sm:$0xff]
      %v6702 = vld [vmem:[%s6677 + $0x120] sm:$0xff]
      %v6703 = vld [vmem:[%s6677 + $0x128] sm:$0xff]
      %v6704 = vld [vmem:[%s6677 + $0x138] sm:$0xff]
      %v6705 = vld [vmem:[%s6677 + $0x140] sm:$0xff]
      %v6706 = vld [vmem:[%s6677 + $0x150] sm:$0xff]
      %v6707 = vld [vmem:[%s6677 + $0x158] sm:$0xff]
      %v6708 = vld [vmem:[%s6677 + $0x168] sm:$0xff]
      %v6709 = vld [vmem:[%s6677 + $0x170] sm:$0xff]
      %v6710 = vpack.c.bf16 %v6679, %v6678
      %v6711 = vpack.c.bf16 %v6681, %v6680
      %v6712 = vpack.c.bf16 %v6683, %v6682
      %v6713 = vpack.c.bf16 %v6685, %v6684
      %v6714 = vpack.c.bf16 %v6687, %v6686
      %v6715 = vpack.c.bf16 %v6689, %v6688
      %v6716 = vpack.c.bf16 %v6691, %v6690
      %v6717 = vpack.c.bf16 %v6693, %v6692
      %v6718 = vpack.c.bf16 %v6695, %v6694
      %v6719 = vpack.c.bf16 %v6697, %v6696
      %v6720 = vpack.c.bf16 %v6699, %v6698
      %v6721 = vpack.c.bf16 %v6701, %v6700
      %v6722 = vpack.c.bf16 %v6703, %v6702
      %v6723 = vpack.c.bf16 %v6705, %v6704
      %v6724 = vpack.c.bf16 %v6707, %v6706
      %v6725 = vpack.c.bf16 %v6709, %v6708
      %s6726 = scalar_lea.vmem %s3, 24
      %v6727 = vld [vmem:[%s6726] sm:$0xf]
      %v6729 = vsel %vm4888, %v6710, 0
      %v6732 = vsel %vm4888, %v6711, 0
      %v6735 = vsel %vm4888, %v6712, 0
      %v6738 = vsel %vm4888, %v6713, 0
      %v6741 = vsel %vm4888, %v6714, 0
      %v6744 = vsel %vm4888, %v6715, 0
      %v6747 = vsel %vm4888, %v6716, 0
      %v6750 = vsel %vm4888, %v6717, 0
      %v6753 = vsel %vm4888, %v6718, 0
      %v6756 = vsel %vm4888, %v6719, 0
      %v6759 = vsel %vm4888, %v6720, 0
      %v6762 = vsel %vm4888, %v6721, 0
      %v6765 = vsel %vm4888, %v6722, 0
      %v6768 = vsel %vm4888, %v6723, 0
      %v6771 = vsel %vm4888, %v6724, 0
      %v6774 = vsel %vm4888, %v6725, 0
      %v6777 = vsel %vm5124, %v6727, 0
      %6779 = vmatprep.subr.bf16.mxu0 0
      %6780 = vmatpush1.bf16.msra.mxu0 %v6777
      %6781 = vmatprep.subr.bf16.mxu0 0
      %6782 = vmatpush1.bf16.msra.mxu0 0
      %6783 = vmatprep.subr.bf16.mxu0 0
      %6784 = vmatpush1.bf16.msra.mxu0 0
      %6785 = vmatprep.subr.bf16.mxu0 0
      %6786 = vmatpush1.bf16.msra.mxu0 0
      %6787 = vmatprep.subr.bf16.mxu0 0
      %6788 = vmatpush1.bf16.msra.mxu0 0
      %6789 = vmatprep.subr.bf16.mxu0 0
      %6790 = vmatpush1.bf16.msra.mxu0 0
      %6791 = vmatprep.subr.bf16.mxu0 0
      %6792 = vmatpush1.bf16.msra.mxu0 0
      %6793 = vmatprep.subr.bf16.mxu0 0
      %6794 = vmatpush1.bf16.msra.mxu0 0
      %6795 = vmatprep.subr.bf16.mxu0 0
      %6796 = vmatpush1.bf16.msra.mxu0 0
      %6797 = vmatprep.subr.bf16.mxu0 0
      %6798 = vmatpush1.bf16.msra.mxu0 0
      %6799 = vmatprep.subr.bf16.mxu0 0
      %6800 = vmatpush1.bf16.msra.mxu0 0
      %6801 = vmatprep.subr.bf16.mxu0 0
      %6802 = vmatpush1.bf16.msra.mxu0 0
      %6803 = vmatprep.subr.bf16.mxu0 0
      %6804 = vmatpush1.bf16.msra.mxu0 0
      %6805 = vmatprep.subr.bf16.mxu0 0
      %6806 = vmatpush1.bf16.msra.mxu0 0
      %6807 = vmatprep.subr.bf16.mxu0 0
      %6808 = vmatpush1.bf16.msra.mxu0 0
      %6809 = vmatprep.subr.bf16.mxu0 0
      %6810 = vmatpush1.bf16.msra.mxu0 0
      %6811 = vmatprep.mubr.bf16.mxu0 0
      %6812 = vmatmul.mubr.bf16.gmra.mrb[0].mxu0 %v6729
      %v6813 = vpop.f32.mrb[0].mxu0
      %v6814 = vadd.f32 0.0, %v6813
      %v6815 = vpop.f32.mrb[0].mxu0
      %v6816 = vpop.f32.mrb[0].mxu0
      %v6817 = vadd.f32 0.0, %v6816
      %v6818 = vpop.f32.mrb[0].mxu0
      %6819 = vmatprep.mubr.bf16.mxu0 0
      %6820 = vmatmul.mubr.bf16.gmra.mrb[0].mxu0 %v6732
      %v6821 = vpop.f32.mrb[0].mxu0
      %v6822 = vadd.f32 0.0, %v6821
      %v6823 = vpop.f32.mrb[0].mxu0
      %v6824 = vpop.f32.mrb[0].mxu0
      %v6825 = vadd.f32 0.0, %v6824
      %v6826 = vpop.f32.mrb[0].mxu0
      %6827 = vmatprep.mubr.bf16.mxu0 0
      %6828 = vmatmul.mubr.bf16.gmra.mrb[0].mxu0 %v6735
      %v6829 = vpop.f32.mrb[0].mxu0
      %v6830 = vadd.f32 0.0, %v6829
      %v6831 = vpop.f32.mrb[0].mxu0
      %v6832 = vpop.f32.mrb[0].mxu0
      %v6833 = vadd.f32 0.0, %v6832
      %v6834 = vpop.f32.mrb[0].mxu0
      %6835 = vmatprep.mubr.bf16.mxu0 0
      %6836 = vmatmul.mubr.bf16.gmra.mrb[0].mxu0 %v6738
      %v6837 = vpop.f32.mrb[0].mxu0
      %v6838 = vadd.f32 0.0, %v6837
      %v6839 = vpop.f32.mrb[0].mxu0
      %v6840 = vpop.f32.mrb[0].mxu0
      %v6841 = vadd.f32 0.0, %v6840
      %v6842 = vpop.f32.mrb[0].mxu0
      %6843 = vmatprep.mubr.bf16.mxu0 0
      %6844 = vmatmul.mubr.bf16.gmra.mrb[0].mxu0 %v6741
      %v6845 = vpop.f32.mrb[0].mxu0
      %v6846 = vadd.f32 0.0, %v6845
      %v6847 = vpop.f32.mrb[0].mxu0
      %v6848 = vpop.f32.mrb[0].mxu0
      %v6849 = vadd.f32 0.0, %v6848
      %v6850 = vpop.f32.mrb[0].mxu0
      %6851 = vmatprep.mubr.bf16.mxu0 0
      %6852 = vmatmul.mubr.bf16.gmra.mrb[0].mxu0 %v6744
      %v6853 = vpop.f32.mrb[0].mxu0
      %v6854 = vadd.f32 0.0, %v6853
      %v6855 = vpop.f32.mrb[0].mxu0
      %v6856 = vpop.f32.mrb[0].mxu0
      %v6857 = vadd.f32 0.0, %v6856
      %v6858 = vpop.f32.mrb[0].mxu0
      %6859 = vmatprep.mubr.bf16.mxu0 0
      %6860 = vmatmul.mubr.bf16.gmra.mrb[0].mxu0 %v6747
      %v6861 = vpop.f32.mrb[0].mxu0
      %v6862 = vadd.f32 0.0, %v6861
      %v6863 = vpop.f32.mrb[0].mxu0
      %v6864 = vpop.f32.mrb[0].mxu0
      %v6865 = vadd.f32 0.0, %v6864
      %v6866 = vpop.f32.mrb[0].mxu0
      %6867 = vmatprep.mubr.bf16.mxu0 0
      %6868 = vmatmul.mubr.bf16.gmra.mrb[0].mxu0 %v6750
      %v6869 = vpop.f32.mrb[0].mxu0
      %v6870 = vadd.f32 0.0, %v6869
      %v6871 = vpop.f32.mrb[0].mxu0
      %v6872 = vpop.f32.mrb[0].mxu0
      %v6873 = vadd.f32 0.0, %v6872
      %v6874 = vpop.f32.mrb[0].mxu0
      %6875 = vmatprep.mubr.bf16.mxu0 0
      %6876 = vmatmul.mubr.bf16.gmra.mrb[0].mxu0 %v6753
      %v6877 = vpop.f32.mrb[0].mxu0
      %v6878 = vadd.f32 0.0, %v6877
      %v6879 = vpop.f32.mrb[0].mxu0
      %v6880 = vpop.f32.mrb[0].mxu0
      %v6881 = vadd.f32 0.0, %v6880
      %v6882 = vpop.f32.mrb[0].mxu0
      %6883 = vmatprep.mubr.bf16.mxu0 0
      %6884 = vmatmul.mubr.bf16.gmra.mrb[0].mxu0 %v6756
      %v6885 = vpop.f32.mrb[0].mxu0
      %v6886 = vadd.f32 0.0, %v6885
      %v6887 = vpop.f32.mrb[0].mxu0
      %v6888 = vpop.f32.mrb[0].mxu0
      %v6889 = vadd.f32 0.0, %v6888
      %v6890 = vpop.f32.mrb[0].mxu0
      %6891 = vmatprep.mubr.bf16.mxu0 0
      %6892 = vmatmul.mubr.bf16.gmra.mrb[0].mxu0 %v6759
      %v6893 = vpop.f32.mrb[0].mxu0
      %v6894 = vadd.f32 0.0, %v6893
      %v6895 = vpop.f32.mrb[0].mxu0
      %v6896 = vpop.f32.mrb[0].mxu0
      %v6897 = vadd.f32 0.0, %v6896
      %v6898 = vpop.f32.mrb[0].mxu0
      %6899 = vmatprep.mubr.bf16.mxu0 0
      %6900 = vmatmul.mubr.bf16.gmra.mrb[0].mxu0 %v6762
      %v6901 = vpop.f32.mrb[0].mxu0
      %v6902 = vadd.f32 0.0, %v6901
      %v6903 = vpop.f32.mrb[0].mxu0
      %v6904 = vpop.f32.mrb[0].mxu0
      %v6905 = vadd.f32 0.0, %v6904
      %v6906 = vpop.f32.mrb[0].mxu0
      %6907 = vmatprep.mubr.bf16.mxu0 0
      %6908 = vmatmul.mubr.bf16.gmra.mrb[0].mxu0 %v6765
      %v6909 = vpop.f32.mrb[0].mxu0
      %v6910 = vadd.f32 0.0, %v6909
      %v6911 = vpop.f32.mrb[0].mxu0
      %v6912 = vpop.f32.mrb[0].mxu0
      %v6913 = vadd.f32 0.0, %v6912
      %v6914 = vpop.f32.mrb[0].mxu0
      %6915 = vmatprep.mubr.bf16.mxu0 0
      %6916 = vmatmul.mubr.bf16.gmra.mrb[0].mxu0 %v6768
      %v6917 = vpop.f32.mrb[0].mxu0
      %v6918 = vadd.f32 0.0, %v6917
      %v6919 = vpop.f32.mrb[0].mxu0
      %v6920 = vpop.f32.mrb[0].mxu0
      %v6921 = vadd.f32 0.0, %v6920
      %v6922 = vpop.f32.mrb[0].mxu0
      %6923 = vmatprep.mubr.bf16.mxu0 0
      %6924 = vmatmul.mubr.bf16.gmra.mrb[0].mxu0 %v6771
      %v6925 = vpop.f32.mrb[0].mxu0
      %v6926 = vadd.f32 0.0, %v6925
      %v6927 = vpop.f32.mrb[0].mxu0
      %v6928 = vpop.f32.mrb[0].mxu0
      %v6929 = vadd.f32 0.0, %v6928
      %v6930 = vpop.f32.mrb[0].mxu0
      %6931 = vmatprep.mubr.bf16.mxu0 0
      %6932 = vmatmul.mubr.bf16.gmra.mrb[0].mxu0 %v6774
      %v6933 = vpop.f32.mrb[0].mxu0
      %v6934 = vadd.f32 0.0, %v6933
      %v6935 = vpop.f32.mrb[0].mxu0
      %v6936 = vpop.f32.mrb[0].mxu0
      %v6937 = vadd.f32 0.0, %v6936
      %v6938 = vpop.f32.mrb[0].mxu0
      %6939 = vdwg.mxu0
      %v6940 = vadd.f32 %v6645, %v6814
      %v6941 = vadd.f32 %v6646, %v6817
      %v6942 = vadd.f32 %v6647, %v6822
      %v6943 = vadd.f32 %v6648, %v6825
      %v6944 = vadd.f32 %v6649, %v6830
      %v6945 = vadd.f32 %v6650, %v6833
      %v6946 = vadd.f32 %v6651, %v6838
      %v6947 = vadd.f32 %v6652, %v6841
      %v6948 = vadd.f32 %v6653, %v6846
      %v6949 = vadd.f32 %v6654, %v6849
      %v6950 = vadd.f32 %v6655, %v6854
      %v6951 = vadd.f32 %v6656, %v6857
      %v6952 = vadd.f32 %v6657, %v6862
      %v6953 = vadd.f32 %v6658, %v6865
      %v6954 = vadd.f32 %v6659, %v6870
      %v6955 = vadd.f32 %v6660, %v6873
      %v6956 = vadd.f32 %v6661, %v6878
      %v6957 = vadd.f32 %v6662, %v6881
      %v6958 = vadd.f32 %v6663, %v6886
      %v6959 = vadd.f32 %v6664, %v6889
      %v6960 = vadd.f32 %v6665, %v6894
      %v6961 = vadd.f32 %v6666, %v6897
      %v6962 = vadd.f32 %v6667, %v6902
      %v6963 = vadd.f32 %v6668, %v6905
      %v6964 = vadd.f32 %v6669, %v6910
      %v6965 = vadd.f32 %v6670, %v6913
      %v6966 = vadd.f32 %v6671, %v6918
      %v6967 = vadd.f32 %v6672, %v6921
      %v6968 = vadd.f32 %v6673, %v6926
      %v6969 = vadd.f32 %v6674, %v6929
      %v6970 = vadd.f32 %v6675, %v6934
      %v6971 = vadd.f32 %v6676, %v6937
      %v6972 = vld [vmem:[%s6677 + $0x1] sm:$0xff]
      %v6973 = vld [vmem:[%s6677 + $0x9] sm:$0xff]
      %v6974 = vld [vmem:[%s6677 + $0x19] sm:$0xff]
      %v6975 = vld [vmem:[%s6677 + $0x21] sm:$0xff]
      %v6976 = vld [vmem:[%s6677 + $0x31] sm:$0xff]
      %v6977 = vld [vmem:[%s6677 + $0x39] sm:$0xff]
      %v6978 = vld [vmem:[%s6677 + $0x49] sm:$0xff]
      %v6979 = vld [vmem:[%s6677 + $0x51] sm:$0xff]
      %v6980 = vld [vmem:[%s6677 + $0x61] sm:$0xff]
      %v6981 = vld [vmem:[%s6677 + $0x69] sm:$0xff]
      %v6982 = vld [vmem:[%s6677 + $0x79] sm:$0xff]
      %v6983 = vld [vmem:[%s6677 + $0x81] sm:$0xff]
      %v6984 = vld [vmem:[%s6677 + $0x91] sm:$0xff]
      %v6985 = vld [vmem:[%s6677 + $0x99] sm:$0xff]
      %v6986 = vld [vmem:[%s6677 + $0xa9] sm:$0xff]
      %v6987 = vld [vmem:[%s6677 + $0xb1] sm:$0xff]
      %v6988 = vld [vmem:[%s6677 + $0xc1] sm:$0xff]
      %v6989 = vld [vmem:[%s6677 + $0xc9] sm:$0xff]
      %v6990 = vld [vmem:[%s6677 + $0xd9] sm:$0xff]
      %v6991 = vld [vmem:[%s6677 + $0xe1] sm:$0xff]
      %v6992 = vld [vmem:[%s6677 + $0xf1] sm:$0xff]
      %v6993 = vld [vmem:[%s6677 + $0xf9] sm:$0xff]
      %v6994 = vld [vmem:[%s6677 + $0x109] sm:$0xff]
      %v6995 = vld [vmem:[%s6677 + $0x111] sm:$0xff]
      %v6996 = vld [vmem:[%s6677 + $0x121] sm:$0xff]
      %v6997 = vld [vmem:[%s6677 + $0x129] sm:$0xff]
      %v6998 = vld [vmem:[%s6677 + $0x139] sm:$0xff]
      %v6999 = vld [vmem:[%s6677 + $0x141] sm:$0xff]
      %v7000 = vld [vmem:[%s6677 + $0x151] sm:$0xff]
      %v7001 = vld [vmem:[%s6677 + $0x159] sm:$0xff]
      %v7002 = vld [vmem:[%s6677 + $0x169] sm:$0xff]
      %v7003 = vld [vmem:[%s6677 + $0x171] sm:$0xff]
      %v7004 = vpack.c.bf16 %v6973, %v6972
      %v7005 = vpack.c.bf16 %v6975, %v6974
      %v7006 = vpack.c.bf16 %v6977, %v6976
      %v7007 = vpack.c.bf16 %v6979, %v6978
      %v7008 = vpack.c.bf16 %v6981, %v6980
      %v7009 = vpack.c.bf16 %v6983, %v6982
      %v7010 = vpack.c.bf16 %v6985, %v6984
      %v7011 = vpack.c.bf16 %v6987, %v6986
      %v7012 = vpack.c.bf16 %v6989, %v6988
      %v7013 = vpack.c.bf16 %v6991, %v6990
      %v7014 = vpack.c.bf16 %v6993, %v6992
      %v7015 = vpack.c.bf16 %v6995, %v6994
      %v7016 = vpack.c.bf16 %v6997, %v6996
      %v7017 = vpack.c.bf16 %v6999, %v6998
      %v7018 = vpack.c.bf16 %v7001, %v7000
      %v7019 = vpack.c.bf16 %v7003, %v7002
      %s7020 = scalar_lea.vmem %s3, 28
      %v7021 = vld [vmem:[%s7020] sm:$0xf]
      %v7023 = vsel %vm4888, %v7004, 0
      %v7026 = vsel %vm4888, %v7005, 0
      %v7029 = vsel %vm4888, %v7006, 0
      %v7032 = vsel %vm4888, %v7007, 0
      %v7035 = vsel %vm4888, %v7008, 0
      %v7038 = vsel %vm4888, %v7009, 0
      %v7041 = vsel %vm4888, %v7010, 0
      %v7044 = vsel %vm4888, %v7011, 0
      %v7047 = vsel %vm4888, %v7012, 0
      %v7050 = vsel %vm4888, %v7013, 0
      %v7053 = vsel %vm4888, %v7014, 0
      %v7056 = vsel %vm4888, %v7015, 0
      %v7059 = vsel %vm4888, %v7016, 0
      %v7062 = vsel %vm4888, %v7017, 0
      %v7065 = vsel %vm4888, %v7018, 0
      %v7068 = vsel %vm4888, %v7019, 0
      %v7071 = vsel %vm5124, %v7021, 0
      %7073 = vmatprep.subr.bf16.mxu0 0
      %7074 = vmatpush1.bf16.msra.mxu0 %v7071
      %7075 = vmatprep.subr.bf16.mxu0 0
      %7076 = vmatpush1.bf16.msra.mxu0 0
      %7077 = vmatprep.subr.bf16.mxu0 0
      %7078 = vmatpush1.bf16.msra.mxu0 0
      %7079 = vmatprep.subr.bf16.mxu0 0
      %7080 = vmatpush1.bf16.msra.mxu0 0
      %7081 = vmatprep.subr.bf16.mxu0 0
      %7082 = vmatpush1.bf16.msra.mxu0 0
      %7083 = vmatprep.subr.bf16.mxu0 0
      %7084 = vmatpush1.bf16.msra.mxu0 0
      %7085 = vmatprep.subr.bf16.mxu0 0
      %7086 = vmatpush1.bf16.msra.mxu0 0
      %7087 = vmatprep.subr.bf16.mxu0 0
      %7088 = vmatpush1.bf16.msra.mxu0 0
      %7089 = vmatprep.subr.bf16.mxu0 0
      %7090 = vmatpush1.bf16.msra.mxu0 0
      %7091 = vmatprep.subr.bf16.mxu0 0
      %7092 = vmatpush1.bf16.msra.mxu0 0
      %7093 = vmatprep.subr.bf16.mxu0 0
      %7094 = vmatpush1.bf16.msra.mxu0 0
      %7095 = vmatprep.subr.bf16.mxu0 0
      %7096 = vmatpush1.bf16.msra.mxu0 0
      %7097 = vmatprep.subr.bf16.mxu0 0
      %7098 = vmatpush1.bf16.msra.mxu0 0
      %7099 = vmatprep.subr.bf16.mxu0 0
      %7100 = vmatpush1.bf16.msra.mxu0 0
      %7101 = vmatprep.subr.bf16.mxu0 0
      %7102 = vmatpush1.bf16.msra.mxu0 0
      %7103 = vmatprep.subr.bf16.mxu0 0
      %7104 = vmatpush1.bf16.msra.mxu0 0
      %7105 = vmatprep.mubr.bf16.mxu0 0
      %7106 = vmatmul.mubr.bf16.gmra.mrb[0].mxu0 %v7023
      %v7107 = vpop.f32.mrb[0].mxu0
      %v7108 = vadd.f32 0.0, %v7107
      %v7109 = vpop.f32.mrb[0].mxu0
      %v7110 = vpop.f32.mrb[0].mxu0
      %v7111 = vadd.f32 0.0, %v7110
      %v7112 = vpop.f32.mrb[0].mxu0
      %7113 = vmatprep.mubr.bf16.mxu0 0
      %7114 = vmatmul.mubr.bf16.gmra.mrb[0].mxu0 %v7026
      %v7115 = vpop.f32.mrb[0].mxu0
      %v7116 = vadd.f32 0.0, %v7115
      %v7117 = vpop.f32.mrb[0].mxu0
      %v7118 = vpop.f32.mrb[0].mxu0
      %v7119 = vadd.f32 0.0, %v7118
      %v7120 = vpop.f32.mrb[0].mxu0
      %7121 = vmatprep.mubr.bf16.mxu0 0
      %7122 = vmatmul.mubr.bf16.gmra.mrb[0].mxu0 %v7029
      %v7123 = vpop.f32.mrb[0].mxu0
      %v7124 = vadd.f32 0.0, %v7123
      %v7125 = vpop.f32.mrb[0].mxu0
      %v7126 = vpop.f32.mrb[0].mxu0
      %v7127 = vadd.f32 0.0, %v7126
      %v7128 = vpop.f32.mrb[0].mxu0
      %7129 = vmatprep.mubr.bf16.mxu0 0
      %7130 = vmatmul.mubr.bf16.gmra.mrb[0].mxu0 %v7032
      %v7131 = vpop.f32.mrb[0].mxu0
      %v7132 = vadd.f32 0.0, %v7131
      %v7133 = vpop.f32.mrb[0].mxu0
      %v7134 = vpop.f32.mrb[0].mxu0
      %v7135 = vadd.f32 0.0, %v7134
      %v7136 = vpop.f32.mrb[0].mxu0
      %7137 = vmatprep.mubr.bf16.mxu0 0
      %7138 = vmatmul.mubr.bf16.gmra.mrb[0].mxu0 %v7035
      %v7139 = vpop.f32.mrb[0].mxu0
      %v7140 = vadd.f32 0.0, %v7139
      %v7141 = vpop.f32.mrb[0].mxu0
      %v7142 = vpop.f32.mrb[0].mxu0
      %v7143 = vadd.f32 0.0, %v7142
      %v7144 = vpop.f32.mrb[0].mxu0
      %7145 = vmatprep.mubr.bf16.mxu0 0
      %7146 = vmatmul.mubr.bf16.gmra.mrb[0].mxu0 %v7038
      %v7147 = vpop.f32.mrb[0].mxu0
      %v7148 = vadd.f32 0.0, %v7147
      %v7149 = vpop.f32.mrb[0].mxu0
      %v7150 = vpop.f32.mrb[0].mxu0
      %v7151 = vadd.f32 0.0, %v7150
      %v7152 = vpop.f32.mrb[0].mxu0
      %7153 = vmatprep.mubr.bf16.mxu0 0
      %7154 = vmatmul.mubr.bf16.gmra.mrb[0].mxu0 %v7041
      %v7155 = vpop.f32.mrb[0].mxu0
      %v7156 = vadd.f32 0.0, %v7155
      %v7157 = vpop.f32.mrb[0].mxu0
      %v7158 = vpop.f32.mrb[0].mxu0
      %v7159 = vadd.f32 0.0, %v7158
      %v7160 = vpop.f32.mrb[0].mxu0
      %7161 = vmatprep.mubr.bf16.mxu0 0
      %7162 = vmatmul.mubr.bf16.gmra.mrb[0].mxu0 %v7044
      %v7163 = vpop.f32.mrb[0].mxu0
      %v7164 = vadd.f32 0.0, %v7163
      %v7165 = vpop.f32.mrb[0].mxu0
      %v7166 = vpop.f32.mrb[0].mxu0
      %v7167 = vadd.f32 0.0, %v7166
      %v7168 = vpop.f32.mrb[0].mxu0
      %7169 = vmatprep.mubr.bf16.mxu0 0
      %7170 = vmatmul.mubr.bf16.gmra.mrb[0].mxu0 %v7047
      %v7171 = vpop.f32.mrb[0].mxu0
      %v7172 = vadd.f32 0.0, %v7171
      %v7173 = vpop.f32.mrb[0].mxu0
      %v7174 = vpop.f32.mrb[0].mxu0
      %v7175 = vadd.f32 0.0, %v7174
      %v7176 = vpop.f32.mrb[0].mxu0
      %7177 = vmatprep.mubr.bf16.mxu0 0
      %7178 = vmatmul.mubr.bf16.gmra.mrb[0].mxu0 %v7050
      %v7179 = vpop.f32.mrb[0].mxu0
      %v7180 = vadd.f32 0.0, %v7179
      %v7181 = vpop.f32.mrb[0].mxu0
      %v7182 = vpop.f32.mrb[0].mxu0
      %v7183 = vadd.f32 0.0, %v7182
      %v7184 = vpop.f32.mrb[0].mxu0
      %7185 = vmatprep.mubr.bf16.mxu0 0
      %7186 = vmatmul.mubr.bf16.gmra.mrb[0].mxu0 %v7053
      %v7187 = vpop.f32.mrb[0].mxu0
      %v7188 = vadd.f32 0.0, %v7187
      %v7189 = vpop.f32.mrb[0].mxu0
      %v7190 = vpop.f32.mrb[0].mxu0
      %v7191 = vadd.f32 0.0, %v7190
      %v7192 = vpop.f32.mrb[0].mxu0
      %7193 = vmatprep.mubr.bf16.mxu0 0
      %7194 = vmatmul.mubr.bf16.gmra.mrb[0].mxu0 %v7056
      %v7195 = vpop.f32.mrb[0].mxu0
      %v7196 = vadd.f32 0.0, %v7195
      %v7197 = vpop.f32.mrb[0].mxu0
      %v7198 = vpop.f32.mrb[0].mxu0
      %v7199 = vadd.f32 0.0, %v7198
      %v7200 = vpop.f32.mrb[0].mxu0
      %7201 = vmatprep.mubr.bf16.mxu0 0
      %7202 = vmatmul.mubr.bf16.gmra.mrb[0].mxu0 %v7059
      %v7203 = vpop.f32.mrb[0].mxu0
      %v7204 = vadd.f32 0.0, %v7203
      %v7205 = vpop.f32.mrb[0].mxu0
      %v7206 = vpop.f32.mrb[0].mxu0
      %v7207 = vadd.f32 0.0, %v7206
      %v7208 = vpop.f32.mrb[0].mxu0
      %7209 = vmatprep.mubr.bf16.mxu0 0
      %7210 = vmatmul.mubr.bf16.gmra.mrb[0].mxu0 %v7062
      %v7211 = vpop.f32.mrb[0].mxu0
      %v7212 = vadd.f32 0.0, %v7211
      %v7213 = vpop.f32.mrb[0].mxu0
      %v7214 = vpop.f32.mrb[0].mxu0
      %v7215 = vadd.f32 0.0, %v7214
      %v7216 = vpop.f32.mrb[0].mxu0
      %7217 = vmatprep.mubr.bf16.mxu0 0
      %7218 = vmatmul.mubr.bf16.gmra.mrb[0].mxu0 %v7065
      %v7219 = vpop.f32.mrb[0].mxu0
      %v7220 = vadd.f32 0.0, %v7219
      %v7221 = vpop.f32.mrb[0].mxu0
      %v7222 = vpop.f32.mrb[0].mxu0
      %v7223 = vadd.f32 0.0, %v7222
      %v7224 = vpop.f32.mrb[0].mxu0
      %7225 = vmatprep.mubr.bf16.mxu0 0
      %7226 = vmatmul.mubr.bf16.gmra.mrb[0].mxu0 %v7068
      %v7227 = vpop.f32.mrb[0].mxu0
      %v7228 = vadd.f32 0.0, %v7227
      %v7229 = vpop.f32.mrb[0].mxu0
      %v7230 = vpop.f32.mrb[0].mxu0
      %v7231 = vadd.f32 0.0, %v7230
      %v7232 = vpop.f32.mrb[0].mxu0
      %7233 = vdwg.mxu0
      %v7234 = vadd.f32 %v6940, %v7108
      %v7235 = vadd.f32 %v6941, %v7111
      %v7236 = vadd.f32 %v6942, %v7116
      %v7237 = vadd.f32 %v6943, %v7119
      %v7238 = vadd.f32 %v6944, %v7124
      %v7239 = vadd.f32 %v6945, %v7127
      %v7240 = vadd.f32 %v6946, %v7132
      %v7241 = vadd.f32 %v6947, %v7135
      %v7242 = vadd.f32 %v6948, %v7140
      %v7243 = vadd.f32 %v6949, %v7143
      %v7244 = vadd.f32 %v6950, %v7148
      %v7245 = vadd.f32 %v6951, %v7151
      %v7246 = vadd.f32 %v6952, %v7156
      %v7247 = vadd.f32 %v6953, %v7159
      %v7248 = vadd.f32 %v6954, %v7164
      %v7249 = vadd.f32 %v6955, %v7167
      %v7250 = vadd.f32 %v6956, %v7172
      %v7251 = vadd.f32 %v6957, %v7175
      %v7252 = vadd.f32 %v6958, %v7180
      %v7253 = vadd.f32 %v6959, %v7183
      %v7254 = vadd.f32 %v6960, %v7188
      %v7255 = vadd.f32 %v6961, %v7191
      %v7256 = vadd.f32 %v6962, %v7196
      %v7257 = vadd.f32 %v6963, %v7199
      %v7258 = vadd.f32 %v6964, %v7204
      %v7259 = vadd.f32 %v6965, %v7207
      %v7260 = vadd.f32 %v6966, %v7212
      %v7261 = vadd.f32 %v6967, %v7215
      %v7262 = vadd.f32 %v6968, %v7220
      %v7263 = vadd.f32 %v6969, %v7223
      %v7264 = vadd.f32 %v6970, %v7228
      %v7265 = vadd.f32 %v6971, %v7231
      %v7266 = vld [vmem:[%s6677 + $0x2] sm:$0xff]
      %v7267 = vld [vmem:[%s6677 + $0xa] sm:$0xff]
      %v7268 = vld [vmem:[%s6677 + $0x1a] sm:$0xff]
      %v7269 = vld [vmem:[%s6677 + $0x22] sm:$0xff]
      %v7270 = vld [vmem:[%s6677 + $0x32] sm:$0xff]
      %v7271 = vld [vmem:[%s6677 + $0x3a] sm:$0xff]
      %v7272 = vld [vmem:[%s6677 + $0x4a] sm:$0xff]
      %v7273 = vld [vmem:[%s6677 + $0x52] sm:$0xff]
      %v7274 = vld [vmem:[%s6677 + $0x62] sm:$0xff]
      %v7275 = vld [vmem:[%s6677 + $0x6a] sm:$0xff]
      %v7276 = vld [vmem:[%s6677 + $0x7a] sm:$0xff]
      %v7277 = vld [vmem:[%s6677 + $0x82] sm:$0xff]
      %v7278 = vld [vmem:[%s6677 + $0x92] sm:$0xff]
      %v7279 = vld [vmem:[%s6677 + $0x9a] sm:$0xff]
      %v7280 = vld [vmem:[%s6677 + $0xaa] sm:$0xff]
      %v7281 = vld [vmem:[%s6677 + $0xb2] sm:$0xff]
      %v7282 = vld [vmem:[%s6677 + $0xc2] sm:$0xff]
      %v7283 = vld [vmem:[%s6677 + $0xca] sm:$0xff]
      %v7284 = vld [vmem:[%s6677 + $0xda] sm:$0xff]
      %v7285 = vld [vmem:[%s6677 + $0xe2] sm:$0xff]
      %v7286 = vld [vmem:[%s6677 + $0xf2] sm:$0xff]
      %v7287 = vld [vmem:[%s6677 + $0xfa] sm:$0xff]
      %v7288 = vld [vmem:[%s6677 + $0x10a] sm:$0xff]
      %v7289 = vld [vmem:[%s6677 + $0x112] sm:$0xff]
      %v7290 = vld [vmem:[%s6677 + $0x122] sm:$0xff]
      %v7291 = vld [vmem:[%s6677 + $0x12a] sm:$0xff]
      %v7292 = vld [vmem:[%s6677 + $0x13a] sm:$0xff]
      %v7293 = vld [vmem:[%s6677 + $0x142] sm:$0xff]
      %v7294 = vld [vmem:[%s6677 + $0x152] sm:$0xff]
      %v7295 = vld [vmem:[%s6677 + $0x15a] sm:$0xff]
      %v7296 = vld [vmem:[%s6677 + $0x16a] sm:$0xff]
      %v7297 = vld [vmem:[%s6677 + $0x172] sm:$0xff]
      %v7298 = vpack.c.bf16 %v7267, %v7266
      %v7299 = vpack.c.bf16 %v7269, %v7268
      %v7300 = vpack.c.bf16 %v7271, %v7270
      %v7301 = vpack.c.bf16 %v7273, %v7272
      %v7302 = vpack.c.bf16 %v7275, %v7274
      %v7303 = vpack.c.bf16 %v7277, %v7276
      %v7304 = vpack.c.bf16 %v7279, %v7278
      %v7305 = vpack.c.bf16 %v7281, %v7280
      %v7306 = vpack.c.bf16 %v7283, %v7282
      %v7307 = vpack.c.bf16 %v7285, %v7284
      %v7308 = vpack.c.bf16 %v7287, %v7286
      %v7309 = vpack.c.bf16 %v7289, %v7288
      %v7310 = vpack.c.bf16 %v7291, %v7290
      %v7311 = vpack.c.bf16 %v7293, %v7292
      %v7312 = vpack.c.bf16 %v7295, %v7294
      %v7313 = vpack.c.bf16 %v7297, %v7296
      %s7314 = scalar_lea.vmem %s3, 32
      %v7315 = vld [vmem:[%s7314] sm:$0xf]
      %v7317 = vsel %vm4888, %v7298, 0
      %v7320 = vsel %vm4888, %v7299, 0
      %v7323 = vsel %vm4888, %v7300, 0
      %v7326 = vsel %vm4888, %v7301, 0
      %v7329 = vsel %vm4888, %v7302, 0
      %v7332 = vsel %vm4888, %v7303, 0
      %v7335 = vsel %vm4888, %v7304, 0
      %v7338 = vsel %vm4888, %v7305, 0
      %v7341 = vsel %vm4888, %v7306, 0
      %v7344 = vsel %vm4888, %v7307, 0
      %v7347 = vsel %vm4888, %v7308, 0
      %v7350 = vsel %vm4888, %v7309, 0
      %v7353 = vsel %vm4888, %v7310, 0
      %v7356 = vsel %vm4888, %v7311, 0
      %v7359 = vsel %vm4888, %v7312, 0
      %v7362 = vsel %vm4888, %v7313, 0
      %v7365 = vsel %vm5124, %v7315, 0
      %7367 = vmatprep.subr.bf16.mxu0 0
      %7368 = vmatpush1.bf16.msra.mxu0 %v7365
      %7369 = vmatprep.subr.bf16.mxu0 0
      %7370 = vmatpush1.bf16.msra.mxu0 0
      %7371 = vmatprep.subr.bf16.mxu0 0
      %7372 = vmatpush1.bf16.msra.mxu0 0
      %7373 = vmatprep.subr.bf16.mxu0 0
      %7374 = vmatpush1.bf16.msra.mxu0 0
      %7375 = vmatprep.subr.bf16.mxu0 0
      %7376 = vmatpush1.bf16.msra.mxu0 0
      %7377 = vmatprep.subr.bf16.mxu0 0
      %7378 = vmatpush1.bf16.msra.mxu0 0
      %7379 = vmatprep.subr.bf16.mxu0 0
      %7380 = vmatpush1.bf16.msra.mxu0 0
      %7381 = vmatprep.subr.bf16.mxu0 0
      %7382 = vmatpush1.bf16.msra.mxu0 0
      %7383 = vmatprep.subr.bf16.mxu0 0
      %7384 = vmatpush1.bf16.msra.mxu0 0
      %7385 = vmatprep.subr.bf16.mxu0 0
      %7386 = vmatpush1.bf16.msra.mxu0 0
      %7387 = vmatprep.subr.bf16.mxu0 0
      %7388 = vmatpush1.bf16.msra.mxu0 0
      %7389 = vmatprep.subr.bf16.mxu0 0
      %7390 = vmatpush1.bf16.msra.mxu0 0
      %7391 = vmatprep.subr.bf16.mxu0 0
      %7392 = vmatpush1.bf16.msra.mxu0 0
      %7393 = vmatprep.subr.bf16.mxu0 0
      %7394 = vmatpush1.bf16.msra.mxu0 0
      %7395 = vmatprep.subr.bf16.mxu0 0
      %7396 = vmatpush1.bf16.msra.mxu0 0
      %7397 = vmatprep.subr.bf16.mxu0 0
      %7398 = vmatpush1.bf16.msra.mxu0 0
      %7399 = vmatprep.mubr.bf16.mxu0 0
      %7400 = vmatmul.mubr.bf16.gmra.mrb[0].mxu0 %v7317
      %v7401 = vpop.f32.mrb[0].mxu0
      %v7402 = vadd.f32 0.0, %v7401
      %v7403 = vpop.f32.mrb[0].mxu0
      %v7404 = vpop.f32.mrb[0].mxu0
      %v7405 = vadd.f32 0.0, %v7404
      %v7406 = vpop.f32.mrb[0].mxu0
      %7407 = vmatprep.mubr.bf16.mxu0 0
      %7408 = vmatmul.mubr.bf16.gmra.mrb[0].mxu0 %v7320
      %v7409 = vpop.f32.mrb[0].mxu0
      %v7410 = vadd.f32 0.0, %v7409
      %v7411 = vpop.f32.mrb[0].mxu0
      %v7412 = vpop.f32.mrb[0].mxu0
      %v7413 = vadd.f32 0.0, %v7412
      %v7414 = vpop.f32.mrb[0].mxu0
      %7415 = vmatprep.mubr.bf16.mxu0 0
      %7416 = vmatmul.mubr.bf16.gmra.mrb[0].mxu0 %v7323
      %v7417 = vpop.f32.mrb[0].mxu0
      %v7418 = vadd.f32 0.0, %v7417
      %v7419 = vpop.f32.mrb[0].mxu0
      %v7420 = vpop.f32.mrb[0].mxu0
      %v7421 = vadd.f32 0.0, %v7420
      %v7422 = vpop.f32.mrb[0].mxu0
      %7423 = vmatprep.mubr.bf16.mxu0 0
      %7424 = vmatmul.mubr.bf16.gmra.mrb[0].mxu0 %v7326
      %v7425 = vpop.f32.mrb[0].mxu0
      %v7426 = vadd.f32 0.0, %v7425
      %v7427 = vpop.f32.mrb[0].mxu0
      %v7428 = vpop.f32.mrb[0].mxu0
      %v7429 = vadd.f32 0.0, %v7428
      %v7430 = vpop.f32.mrb[0].mxu0
      %7431 = vmatprep.mubr.bf16.mxu0 0
      %7432 = vmatmul.mubr.bf16.gmra.mrb[0].mxu0 %v7329
      %v7433 = vpop.f32.mrb[0].mxu0
      %v7434 = vadd.f32 0.0, %v7433
      %v7435 = vpop.f32.mrb[0].mxu0
      %v7436 = vpop.f32.mrb[0].mxu0
      %v7437 = vadd.f32 0.0, %v7436
      %v7438 = vpop.f32.mrb[0].mxu0
      %7439 = vmatprep.mubr.bf16.mxu0 0
      %7440 = vmatmul.mubr.bf16.gmra.mrb[0].mxu0 %v7332
      %v7441 = vpop.f32.mrb[0].mxu0
      %v7442 = vadd.f32 0.0, %v7441
      %v7443 = vpop.f32.mrb[0].mxu0
      %v7444 = vpop.f32.mrb[0].mxu0
      %v7445 = vadd.f32 0.0, %v7444
      %v7446 = vpop.f32.mrb[0].mxu0
      %7447 = vmatprep.mubr.bf16.mxu0 0
      %7448 = vmatmul.mubr.bf16.gmra.mrb[0].mxu0 %v7335
      %v7449 = vpop.f32.mrb[0].mxu0
      %v7450 = vadd.f32 0.0, %v7449
      %v7451 = vpop.f32.mrb[0].mxu0
      %v7452 = vpop.f32.mrb[0].mxu0
      %v7453 = vadd.f32 0.0, %v7452
      %v7454 = vpop.f32.mrb[0].mxu0
      %7455 = vmatprep.mubr.bf16.mxu0 0
      %7456 = vmatmul.mubr.bf16.gmra.mrb[0].mxu0 %v7338
      %v7457 = vpop.f32.mrb[0].mxu0
      %v7458 = vadd.f32 0.0, %v7457
      %v7459 = vpop.f32.mrb[0].mxu0
      %v7460 = vpop.f32.mrb[0].mxu0
      %v7461 = vadd.f32 0.0, %v7460
      %v7462 = vpop.f32.mrb[0].mxu0
      %7463 = vmatprep.mubr.bf16.mxu0 0
      %7464 = vmatmul.mubr.bf16.gmra.mrb[0].mxu0 %v7341
      %v7465 = vpop.f32.mrb[0].mxu0
      %v7466 = vadd.f32 0.0, %v7465
      %v7467 = vpop.f32.mrb[0].mxu0
      %v7468 = vpop.f32.mrb[0].mxu0
      %v7469 = vadd.f32 0.0, %v7468
      %v7470 = vpop.f32.mrb[0].mxu0
      %7471 = vmatprep.mubr.bf16.mxu0 0
      %7472 = vmatmul.mubr.bf16.gmra.mrb[0].mxu0 %v7344
      %v7473 = vpop.f32.mrb[0].mxu0
      %v7474 = vadd.f32 0.0, %v7473
      %v7475 = vpop.f32.mrb[0].mxu0
      %v7476 = vpop.f32.mrb[0].mxu0
      %v7477 = vadd.f32 0.0, %v7476
      %v7478 = vpop.f32.mrb[0].mxu0
      %7479 = vmatprep.mubr.bf16.mxu0 0
      %7480 = vmatmul.mubr.bf16.gmra.mrb[0].mxu0 %v7347
      %v7481 = vpop.f32.mrb[0].mxu0
      %v7482 = vadd.f32 0.0, %v7481
      %v7483 = vpop.f32.mrb[0].mxu0
      %v7484 = vpop.f32.mrb[0].mxu0
      %v7485 = vadd.f32 0.0, %v7484
      %v7486 = vpop.f32.mrb[0].mxu0
      %7487 = vmatprep.mubr.bf16.mxu0 0
      %7488 = vmatmul.mubr.bf16.gmra.mrb[0].mxu0 %v7350
      %v7489 = vpop.f32.mrb[0].mxu0
      %v7490 = vadd.f32 0.0, %v7489
      %v7491 = vpop.f32.mrb[0].mxu0
      %v7492 = vpop.f32.mrb[0].mxu0
      %v7493 = vadd.f32 0.0, %v7492
      %v7494 = vpop.f32.mrb[0].mxu0
      %7495 = vmatprep.mubr.bf16.mxu0 0
      %7496 = vmatmul.mubr.bf16.gmra.mrb[0].mxu0 %v7353
      %v7497 = vpop.f32.mrb[0].mxu0
      %v7498 = vadd.f32 0.0, %v7497
      %v7499 = vpop.f32.mrb[0].mxu0
      %v7500 = vpop.f32.mrb[0].mxu0
      %v7501 = vadd.f32 0.0, %v7500
      %v7502 = vpop.f32.mrb[0].mxu0
      %7503 = vmatprep.mubr.bf16.mxu0 0
      %7504 = vmatmul.mubr.bf16.gmra.mrb[0].mxu0 %v7356
      %v7505 = vpop.f32.mrb[0].mxu0
      %v7506 = vadd.f32 0.0, %v7505
      %v7507 = vpop.f32.mrb[0].mxu0
      %v7508 = vpop.f32.mrb[0].mxu0
      %v7509 = vadd.f32 0.0, %v7508
      %v7510 = vpop.f32.mrb[0].mxu0
      %7511 = vmatprep.mubr.bf16.mxu0 0
      %7512 = vmatmul.mubr.bf16.gmra.mrb[0].mxu0 %v7359
      %v7513 = vpop.f32.mrb[0].mxu0
      %v7514 = vadd.f32 0.0, %v7513
      %v7515 = vpop.f32.mrb[0].mxu0
      %v7516 = vpop.f32.mrb[0].mxu0
      %v7517 = vadd.f32 0.0, %v7516
      %v7518 = vpop.f32.mrb[0].mxu0
      %7519 = vmatprep.mubr.bf16.mxu0 0
      %7520 = vmatmul.mubr.bf16.gmra.mrb[0].mxu0 %v7362
      %v7521 = vpop.f32.mrb[0].mxu0
      %v7522 = vadd.f32 0.0, %v7521
      %v7523 = vpop.f32.mrb[0].mxu0
      %v7524 = vpop.f32.mrb[0].mxu0
      %v7525 = vadd.f32 0.0, %v7524
      %v7526 = vpop.f32.mrb[0].mxu0
      %7527 = vdwg.mxu0
      %v7528 = vadd.f32 %v7234, %v7402
      %v7529 = vadd.f32 %v7235, %v7405
      %v7530 = vadd.f32 %v7236, %v7410
      %v7531 = vadd.f32 %v7237, %v7413
      %v7532 = vadd.f32 %v7238, %v7418
      %v7533 = vadd.f32 %v7239, %v7421
      %v7534 = vadd.f32 %v7240, %v7426
      %v7535 = vadd.f32 %v7241, %v7429
      %v7536 = vadd.f32 %v7242, %v7434
      %v7537 = vadd.f32 %v7243, %v7437
      %v7538 = vadd.f32 %v7244, %v7442
      %v7539 = vadd.f32 %v7245, %v7445
      %v7540 = vadd.f32 %v7246, %v7450
      %v7541 = vadd.f32 %v7247, %v7453
      %v7542 = vadd.f32 %v7248, %v7458
      %v7543 = vadd.f32 %v7249, %v7461
      %v7544 = vadd.f32 %v7250, %v7466
      %v7545 = vadd.f32 %v7251, %v7469
      %v7546 = vadd.f32 %v7252, %v7474
      %v7547 = vadd.f32 %v7253, %v7477
      %v7548 = vadd.f32 %v7254, %v7482
      %v7549 = vadd.f32 %v7255, %v7485
      %v7550 = vadd.f32 %v7256, %v7490
      %v7551 = vadd.f32 %v7257, %v7493
      %v7552 = vadd.f32 %v7258, %v7498
      %v7553 = vadd.f32 %v7259, %v7501
      %v7554 = vadd.f32 %v7260, %v7506
      %v7555 = vadd.f32 %v7261, %v7509
      %v7556 = vadd.f32 %v7262, %v7514
      %v7557 = vadd.f32 %v7263, %v7517
      %v7558 = vadd.f32 %v7264, %v7522
      %v7559 = vadd.f32 %v7265, %v7525
      %v7560 = vld [vmem:[%s4] sm:$0x1]
      %v7562 = vlaneseq
      %v7563 = vshrl.u32 %v7562, 7
      %v7564 = vsub.s32 0, %v7563
      %v7565 = vrot.slane %v7560, %v7564
      %v7567 = vadd.f32 %v7528, %v7565
      %v7568 = vadd.f32 %v7529, %v7565
      %v7569 = vadd.f32 %v7530, %v7565
      %v7570 = vadd.f32 %v7531, %v7565
      %v7571 = vadd.f32 %v7532, %v7565
      %v7572 = vadd.f32 %v7533, %v7565
      %v7573 = vadd.f32 %v7534, %v7565
      %v7574 = vadd.f32 %v7535, %v7565
      %v7575 = vadd.f32 %v7536, %v7565
      %v7576 = vadd.f32 %v7537, %v7565
      %v7577 = vadd.f32 %v7538, %v7565
      %v7578 = vadd.f32 %v7539, %v7565
      %v7579 = vadd.f32 %v7540, %v7565
      %v7580 = vadd.f32 %v7541, %v7565
      %v7581 = vadd.f32 %v7542, %v7565
      %v7582 = vadd.f32 %v7543, %v7565
      %v7583 = vadd.f32 %v7544, %v7565
      %v7584 = vadd.f32 %v7545, %v7565
      %v7585 = vadd.f32 %v7546, %v7565
      %v7586 = vadd.f32 %v7547, %v7565
      %v7587 = vadd.f32 %v7548, %v7565
      %v7588 = vadd.f32 %v7549, %v7565
      %v7589 = vadd.f32 %v7550, %v7565
      %v7590 = vadd.f32 %v7551, %v7565
      %v7591 = vadd.f32 %v7552, %v7565
      %v7592 = vadd.f32 %v7553, %v7565
      %v7593 = vadd.f32 %v7554, %v7565
      %v7594 = vadd.f32 %v7555, %v7565
      %v7595 = vadd.f32 %v7556, %v7565
      %v7596 = vadd.f32 %v7557, %v7565
      %v7597 = vadd.f32 %v7558, %v7565
      %v7598 = vadd.f32 %v7559, %v7565
      %v7599 = vmul.f32 %v7567, 0.01
      %v7600 = vmul.f32 %v7568, 0.01
      %v7601 = vmul.f32 %v7569, 0.01
      %v7602 = vmul.f32 %v7570, 0.01
      %v7603 = vmul.f32 %v7571, 0.01
      %v7604 = vmul.f32 %v7572, 0.01
      %v7605 = vmul.f32 %v7573, 0.01
      %v7606 = vmul.f32 %v7574, 0.01
      %v7607 = vmul.f32 %v7575, 0.01
      %v7608 = vmul.f32 %v7576, 0.01
      %v7609 = vmul.f32 %v7577, 0.01
      %v7610 = vmul.f32 %v7578, 0.01
      %v7611 = vmul.f32 %v7579, 0.01
      %v7612 = vmul.f32 %v7580, 0.01
      %v7613 = vmul.f32 %v7581, 0.01
      %v7614 = vmul.f32 %v7582, 0.01
      %v7615 = vmul.f32 %v7583, 0.01
      %v7616 = vmul.f32 %v7584, 0.01
      %v7617 = vmul.f32 %v7585, 0.01
      %v7618 = vmul.f32 %v7586, 0.01
      %v7619 = vmul.f32 %v7587, 0.01
      %v7620 = vmul.f32 %v7588, 0.01
      %v7621 = vmul.f32 %v7589, 0.01
      %v7622 = vmul.f32 %v7590, 0.01
      %v7623 = vmul.f32 %v7591, 0.01
      %v7624 = vmul.f32 %v7592, 0.01
      %v7625 = vmul.f32 %v7593, 0.01
      %v7626 = vmul.f32 %v7594, 0.01
      %v7627 = vmul.f32 %v7595, 0.01
      %v7628 = vmul.f32 %v7596, 0.01
      %v7629 = vmul.f32 %v7597, 0.01
      %v7630 = vmul.f32 %v7598, 0.01
      %v7631 = vmax.f32 %v7567, %v7599
      %v7632 = vmax.f32 %v7568, %v7600
      %v7633 = vmax.f32 %v7569, %v7601
      %v7634 = vmax.f32 %v7570, %v7602
      %v7635 = vmax.f32 %v7571, %v7603
      %v7636 = vmax.f32 %v7572, %v7604
      %v7637 = vmax.f32 %v7573, %v7605
      %v7638 = vmax.f32 %v7574, %v7606
      %v7639 = vmax.f32 %v7575, %v7607
      %v7640 = vmax.f32 %v7576, %v7608
      %v7641 = vmax.f32 %v7577, %v7609
      %v7642 = vmax.f32 %v7578, %v7610
      %v7643 = vmax.f32 %v7579, %v7611
      %v7644 = vmax.f32 %v7580, %v7612
      %v7645 = vmax.f32 %v7581, %v7613
      %v7646 = vmax.f32 %v7582, %v7614
      %v7647 = vmax.f32 %v7583, %v7615
      %v7648 = vmax.f32 %v7584, %v7616
      %v7649 = vmax.f32 %v7585, %v7617
      %v7650 = vmax.f32 %v7586, %v7618
      %v7651 = vmax.f32 %v7587, %v7619
      %v7652 = vmax.f32 %v7588, %v7620
      %v7653 = vmax.f32 %v7589, %v7621
      %v7654 = vmax.f32 %v7590, %v7622
      %v7655 = vmax.f32 %v7591, %v7623
      %v7656 = vmax.f32 %v7592, %v7624
      %v7657 = vmax.f32 %v7593, %v7625
      %v7658 = vmax.f32 %v7594, %v7626
      %v7659 = vmax.f32 %v7595, %v7627
      %v7660 = vmax.f32 %v7596, %v7628
      %v7661 = vmax.f32 %v7597, %v7629
      %v7662 = vmax.f32 %v7598, %v7630
      %7663 = vst.msk [vmem:[%s224] sm:$0xff] %vm4888, %v7631
      %7664 = vst.msk [vmem:[%s224 + $0x8] sm:$0xff] %vm4888, %v7632
      %7665 = vst.msk [vmem:[%s224 + $0x10] sm:$0xff] %vm4888, %v7633
      %7666 = vst.msk [vmem:[%s224 + $0x18] sm:$0xff] %vm4888, %v7634
      %7667 = vst.msk [vmem:[%s224 + $0x20] sm:$0xff] %vm4888, %v7635
      %7668 = vst.msk [vmem:[%s224 + $0x28] sm:$0xff] %vm4888, %v7636
      %7669 = vst.msk [vmem:[%s224 + $0x30] sm:$0xff] %vm4888, %v7637
      %7670 = vst.msk [vmem:[%s224 + $0x38] sm:$0xff] %vm4888, %v7638
      %7671 = vst.msk [vmem:[%s224 + $0x40] sm:$0xff] %vm4888, %v7639
      %7672 = vst.msk [vmem:[%s224 + $0x48] sm:$0xff] %vm4888, %v7640
      %7673 = vst.msk [vmem:[%s224 + $0x50] sm:$0xff] %vm4888, %v7641
      %7674 = vst.msk [vmem:[%s224 + $0x58] sm:$0xff] %vm4888, %v7642
      %7675 = vst.msk [vmem:[%s224 + $0x60] sm:$0xff] %vm4888, %v7643
      %7676 = vst.msk [vmem:[%s224 + $0x68] sm:$0xff] %vm4888, %v7644
      %7677 = vst.msk [vmem:[%s224 + $0x70] sm:$0xff] %vm4888, %v7645
      %7678 = vst.msk [vmem:[%s224 + $0x78] sm:$0xff] %vm4888, %v7646
      %7679 = vst.msk [vmem:[%s224 + $0x80] sm:$0xff] %vm4888, %v7647
      %7680 = vst.msk [vmem:[%s224 + $0x88] sm:$0xff] %vm4888, %v7648
      %7681 = vst.msk [vmem:[%s224 + $0x90] sm:$0xff] %vm4888, %v7649
      %7682 = vst.msk [vmem:[%s224 + $0x98] sm:$0xff] %vm4888, %v7650
      %7683 = vst.msk [vmem:[%s224 + $0xa0] sm:$0xff] %vm4888, %v7651
      %7684 = vst.msk [vmem:[%s224 + $0xa8] sm:$0xff] %vm4888, %v7652
      %7685 = vst.msk [vmem:[%s224 + $0xb0] sm:$0xff] %vm4888, %v7653
      %7686 = vst.msk [vmem:[%s224 + $0xb8] sm:$0xff] %vm4888, %v7654
      %7687 = vst.msk [vmem:[%s224 + $0xc0] sm:$0xff] %vm4888, %v7655
      %7688 = vst.msk [vmem:[%s224 + $0xc8] sm:$0xff] %vm4888, %v7656
      %7689 = vst.msk [vmem:[%s224 + $0xd0] sm:$0xff] %vm4888, %v7657
      %7690 = vst.msk [vmem:[%s224 + $0xd8] sm:$0xff] %vm4888, %v7658
      %7691 = vst.msk [vmem:[%s224 + $0xe0] sm:$0xff] %vm4888, %v7659
      %7692 = vst.msk [vmem:[%s224 + $0xe8] sm:$0xff] %vm4888, %v7660
      %7693 = vst.msk [vmem:[%s224 + $0xf0] sm:$0xff] %vm4888, %v7661
      %7694 = vst.msk [vmem:[%s224 + $0xf8] sm:$0xff] %vm4888, %v7662
      %p7695 = scmp.lt.s32.totalorder %s16, 1
      %s7696 = scalar_select %p7695, %s16, 1
      %s7697 = smul.addr %s7696, 32
      %s7698 = smul.addr %s7697, 8
      %s7699 = scalar_lea.vmem %s5, %s7698
      // Predicated region
      $region41: #{conv_block_forward.1} parent=39 // pred_check
        %p7700 = pneg %p144
      $region42: #{conv_block_forward.1} parent=39 // pred_check_branch
        %7702 = sbr.rel (%p7700) target = $region44
      $region43: #{conv_block_forward.1} parent=39 // pred_region
        _
      $region44: #{conv_block_forward.1} parent=39 // pred_fallthru
        _
    $region40: #{conv_block_forward.1} parent=5 // pred_fallthru
      _
    %p7703 = scmp.le.s32.totalorder 2, %s11
    // Predicated region
    $region45: #{conv_block_forward.1} parent=5 // pred_check
      %p7704 = pneg %p7703
    $region46: #{conv_block_forward.1} parent=5 // pred_check_branch
      %7706 = sbr.rel (%p7704) target = $region48
    $region47: #{conv_block_forward.1} parent=5 // pred_region
      %s7707 = ssub.s32 %s11, 2
      // Predicated region
      $region49: #{conv_block_forward.1} parent=47 // pred_check
        %p7708 = pneg %p150
      $region50: #{conv_block_forward.1} parent=47 // pred_check_branch
        %7710 = sbr.rel (%p7708) target = $region52
      $region51: #{conv_block_forward.1} parent=47 // pred_region
        %p7711 = scmp.lt.s32.totalorder %s17, 1
        %s7712 = scalar_select %p7711, %s17, 1
        %s7713 = smul.addr %s7712, 32
        %s7714 = smul.addr %s7713, 8
        %s7715 = scalar_lea.vmem %s5, %s7714
      $region52: #{conv_block_forward.1} parent=47 // pred_fallthru
        _
    $region48: #{conv_block_forward.1} parent=5 // pred_fallthru
      _
  $region6: #{conv_block_forward.1} parent=0 // loop_footer
    %s15 = sadd.s32 1, %s11
  $region7: #{conv_block_forward.1} parent=0 // loop_footer_branch
    %10 = sbr.rel target = $region3
  $region8: #{conv_block_forward.1} parent=0 // loop_exit
    _

</llo_original>
